<compile_context>
chip_gen: v6e
topology: v6e:2x2x1
jax: 0.10.0
libtpu: 0.0.40
codegen_flags: <defaults>
</compile_context>

<pallas_src>
import jax
import jax.numpy as jnp
from jax.experimental import pallas as pl
from jax.experimental.pallas import tpu as pltpu


def _make_fused_kernel(Nb, H, W):
    HW = H * W
    M = Nb * HW
    Hp, Wp = H + 2, W + 2

    def zero_halo(p_ref, C):
        """Zero only the 1-px halo; interiors are rewritten every step."""
        p_ref[:, 0:1, :, :] = jnp.zeros((Nb, 1, Wp, C), jnp.float32)
        p_ref[:, Hp - 1:Hp, :, :] = jnp.zeros((Nb, 1, Wp, C), jnp.float32)
        p_ref[:, :, 0:1, :] = jnp.zeros((Nb, Hp, 1, C), jnp.float32)
        p_ref[:, :, Wp - 1:Wp, :] = jnp.zeros((Nb, Hp, 1, C), jnp.float32)

    def build_patch(p_ref, patch_ref, Cin):
        """Stage the full (M, 9*Cin) im2col patch for one 3x3 SAME layer.

        p_ref:     (Nb, H+2, W+2, Cin) zero-halo padded activation (VMEM)
        patch_ref: (M, 9*Cin)          destination scratch (VMEM)
        """
        for kh in range(3):
            for kw in range(3):
                j = kh * 3 + kw
                slab = p_ref[:, pl.ds(kh, H), pl.ds(kw, W), :].reshape(M, Cin)
                patch_ref[:, j * Cin:(j + 1) * Cin] = slab

    def kernel(xp_ref, w1_ref, b1_ref, w2_ref, b2_ref, w3_ref, b3_ref,
               w4_ref, b4_ref, o_ref, pa, pb, patch_s, patch_l):
        # Halo-only zeroing of the padded activation scratches (see header).
        zero_halo(pa, 32)
        zero_halo(pb, 64)

        # --- Layer 1: Conv2d(3, 32, 5x5, pad=2) ------------------------------
        # im2col patch pre-built in the wrapper (lane-dense K=128); one dot.
        a1 = jnp.dot(xp_ref[...], w1_ref[...],
                     preferred_element_type=jnp.float32) + b1_ref[...]
        pa[:, pl.ds(1, H), pl.ds(1, W), :] = a1.reshape(Nb, H, W, 32)

        # --- Layer 2: Conv2d(32, 64, 3x3, pad=1) + ReLU -----------------------
        build_patch(pa, patch_s, 32)
        a2 = jnp.dot(patch_s[...], w2_ref[...],
                     preferred_element_type=jnp.float32) + b2_ref[...]
        a2 = jnp.maximum(a2, 0.0)
        pb[:, pl.ds(1, H), pl.ds(1, W), :] = a2.reshape(Nb, H, W, 64)

        # --- Layer 3: Conv2d(64, 32, 3x3, pad=1) ------------------------------
        build_patch(pb, patch_l, 64)
        a3 = jnp.dot(patch_l[...], w3_ref[...],
                     preferred_element_type=jnp.float32) + b3_ref[...]
        pa[:, pl.ds(1, H), pl.ds(1, W), :] = a3.reshape(Nb, H, W, 32)

        # --- Layer 4: Conv2d(32, 3, 3x3, pad=1) + Tanh ------------------------
        build_patch(pa, patch_s, 32)
        a4 = jnp.tanh(jnp.dot(patch_s[...], w4_ref[...],
                              preferred_element_type=jnp.float32) + b4_ref[...])
        # Lane-dense (3, H*W) per image == the NCHW layout (small transpose).
        for n in range(Nb):
            o_ref[n] = jnp.transpose(a4[n * HW:(n + 1) * HW, :], (1, 0))

    return kernel


def regressor_forward(img_nchw, params, *, grid_blocks=None):
    """Forward pass matching the PyTorch Regressor. img_nchw: (N, 3, H, W)."""
    N, Cin, H, W = img_nchw.shape
    assert Cin == 3
    (w1, b1), (w2, b2), (w3, b3), (w4, b4) = params
    HW = H * W

    # Batch folding: G grid steps, Nb = N // G images folded into the matmul
    # M dim per step.  G = 2 keeps both v7x TCs busy; the extra step on
    # single-TC chips (v5e/v6e) costs ~0.35 us.
    if grid_blocks is None:
        grid_blocks = 2 if (N % 2 == 0 and N >= 2) else 1
    G = grid_blocks
    assert N % G == 0
    Nb = N // G

    # Layer-1 im2col in the wrapper (XLA): zero-padded to 128 lanes so the
    # kernel's first layer is a single lane-dense MXU dot.
    x = jnp.transpose(img_nchw, (0, 2, 3, 1))                  # NHWC
    xp = jnp.pad(x, ((0, 0), (2, 2), (2, 2), (0, 0)))
    taps = [xp[:, kh:kh + H, kw:kw + W, :]
            for kh in range(5) for kw in range(5)]
    x_patch = jnp.concatenate(taps, axis=-1).reshape(N * HW, 75)
    K1 = 128
    x_patch = jnp.pad(x_patch, ((0, 0), (0, K1 - 75)))

    # im2col weight layouts: (KH*KW*Cin, Cout), (kh, kw, ci) ordering matches
    # the patch column ordering above / in build_patch.
    w1r = jnp.pad(w1.reshape(75, 32), ((0, K1 - 75), (0, 0)))
    w2r = w2.reshape(9 * 32, 64)
    w3r = w3.reshape(9 * 64, 32)
    w4r = w4.reshape(9 * 32, 3)
    b1r, b2r, b3r, b4r = (b.reshape(1, -1) for b in (b1, b2, b3, b4))

    kernel = _make_fused_kernel(Nb, H, W)

    def full_spec(shape):
        return pl.BlockSpec(shape, lambda i, _r=len(shape): (0,) * _r)

    out = pl.pallas_call(
        kernel,
        out_shape=jax.ShapeDtypeStruct((N, 3, HW), jnp.float32),
        grid=(G,),
        in_specs=[
            pl.BlockSpec((Nb * HW, K1), lambda i: (i, 0)),
            full_spec(w1r.shape), full_spec(b1r.shape),
            full_spec(w2r.shape), full_spec(b2r.shape),
            full_spec(w3r.shape), full_spec(b3r.shape),
            full_spec(w4r.shape), full_spec(b4r.shape),
        ],
        out_specs=pl.BlockSpec((Nb, 3, HW), lambda i: (i, 0, 0)),
        scratch_shapes=[
            pltpu.VMEM((Nb, H + 2, W + 2, 32), jnp.float32),   # padded act1/3
            pltpu.VMEM((Nb, H + 2, W + 2, 64), jnp.float32),   # padded act2
            pltpu.VMEM((Nb * HW, 9 * 32), jnp.float32),        # patch L2 & L4
            pltpu.VMEM((Nb * HW, 9 * 64), jnp.float32),        # patch L3
        ],
        compiler_params=pltpu.CompilerParams(
            dimension_semantics=("parallel",),                 # v7x: 2 TCs
            vmem_limit_bytes=32 * 1024 * 1024),
    )(x_patch, w1r, b1r, w2r, b2r, w3r, b3r, w4r, b4r)

    # (N, 3, H*W) -> (N, 3, H, W): row-major compatible, effectively free.
    return out.reshape(N, 3, H, W)


def init_params(key):
    """Deterministic PyTorch-style (uniform +-1/sqrt(fan_in)) init, HWIO."""
    shapes = [
        (5, 5, 3, 32),
        (3, 3, 32, 64),
        (3, 3, 64, 32),
        (3, 3, 32, 3),
    ]
    params = []
    for i, s in enumerate(shapes):
        kw_, kb_ = jax.random.split(jax.random.fold_in(key, i))
        fan_in = s[0] * s[1] * s[2]
        bound = 1.0 / (fan_in ** 0.5)
        w = jax.random.uniform(kw_, s, jnp.float32, -bound, bound)
        b = jax.random.uniform(kb_, (s[3],), jnp.float32, -bound, bound)
        params.append((w, b))
    return params


def reference_forward(img_nchw, params):
    """Pure-JAX reference (lax conv) for correctness check."""
    x = img_nchw
    acts = ["none", "relu", "none", "tanh"]
    for (w, b), act in zip(params, acts):
        x = jax.lax.conv_general_dilated(
            x, w, window_strides=(1, 1), padding="SAME",
            dimension_numbers=("NCHW", "HWIO", "NCHW"))
        x = x + b.reshape(1, -1, 1, 1)
        if act == "relu":
            x = jnp.maximum(x, 0.0)
        elif act == "tanh":
            x = jnp.tanh(x)
    return x


if __name__ == "__main__":
    key = jax.random.PRNGKey(0)
    kx, kp = jax.random.split(key)
    img = jax.random.normal(kx, (2, 3, 16, 16), jnp.float32)   # NCHW like PyTorch
    params = init_params(kp)

    fwd = jax.jit(regressor_forward)
    out = jax.block_until_ready(fwd(img, params))

    assert out.shape == (2, 3, 16, 16), out.shape
    ref = reference_forward(img, params)
    assert jnp.allclose(out, ref, atol=1e-4, rtol=1e-4), float(
        jnp.max(jnp.abs(out - ref)))

    print("KERNEL_OK")
</pallas_src>

<mosaic_0001>
module attributes {stable_mosaic.version = 11 : i64} {
  func.func @kernel(%arg0: i32, %arg1: memref<256x128xf32, #tpu.memory_space<vmem>>, %arg2: memref<128x32xf32, #tpu.memory_space<vmem>>, %arg3: memref<1x32xf32, #tpu.memory_space<vmem>>, %arg4: memref<288x64xf32, #tpu.memory_space<vmem>>, %arg5: memref<1x64xf32, #tpu.memory_space<vmem>>, %arg6: memref<576x32xf32, #tpu.memory_space<vmem>>, %arg7: memref<1x32xf32, #tpu.memory_space<vmem>>, %arg8: memref<288x3xf32, #tpu.memory_space<vmem>>, %arg9: memref<1x3xf32, #tpu.memory_space<vmem>>, %arg10: memref<1x3x256xf32, #tpu.memory_space<vmem>>, %arg11: memref<1x18x18x32xf32, #tpu.memory_space<vmem>>, %arg12: memref<1x18x18x64xf32, #tpu.memory_space<vmem>>, %arg13: memref<256x288xf32, #tpu.memory_space<vmem>>, %arg14: memref<256x576xf32, #tpu.memory_space<vmem>>) attributes {dimension_semantics = [#tpu.dimension_semantics<parallel>], iteration_bounds = array<i64: 2>, scalar_prefetch = 0 : i64, scratch_operands = 4 : i64, tpu.core_type = #tpu.core_type<tc>, window_params = [{transform_indices = @transform_0, window_bounds = array<i64: 256, 128>}, {pipeline_mode = #tpu.pipeline_mode<synchronous>, transform_indices = @transform_1, window_bounds = array<i64: 128, 32>}, {pipeline_mode = #tpu.pipeline_mode<synchronous>, transform_indices = @transform_2, window_bounds = array<i64: 1, 32>}, {pipeline_mode = #tpu.pipeline_mode<synchronous>, transform_indices = @transform_3, window_bounds = array<i64: 288, 64>}, {pipeline_mode = #tpu.pipeline_mode<synchronous>, transform_indices = @transform_4, window_bounds = array<i64: 1, 64>}, {pipeline_mode = #tpu.pipeline_mode<synchronous>, transform_indices = @transform_5, window_bounds = array<i64: 576, 32>}, {pipeline_mode = #tpu.pipeline_mode<synchronous>, transform_indices = @transform_6, window_bounds = array<i64: 1, 32>}, {pipeline_mode = #tpu.pipeline_mode<synchronous>, transform_indices = @transform_7, window_bounds = array<i64: 288, 3>}, {pipeline_mode = #tpu.pipeline_mode<synchronous>, transform_indices = @transform_8, window_bounds = array<i64: 1, 3>}, {transform_indices = @transform_9, window_bounds = array<i64: 1, 3, 256>}]} {
    %cst = arith.constant 0.000000e+00 : f32
    %0 = vector.broadcast %cst : f32 to vector<1x1x18x32xf32>
    %c0 = arith.constant 0 : index
    %c0_0 = arith.constant 0 : index
    %c0_1 = arith.constant 0 : index
    %c0_2 = arith.constant 0 : index
    %1 = vector.load %arg11[%c0, %c0_0, %c0_1, %c0_2] : memref<1x18x18x32xf32, #tpu.memory_space<vmem>>, vector<1x1x18x32xf32>
    tpu.vector_store %arg11[%c0, %c0_0, %c0_1, %c0_2], %0 {strides = array<i32>} : memref<1x18x18x32xf32, #tpu.memory_space<vmem>>, vector<1x1x18x32xf32>,
    %cst_3 = arith.constant 0.000000e+00 : f32
    %2 = vector.broadcast %cst_3 : f32 to vector<1x1x18x32xf32>
    %c0_4 = arith.constant 0 : index
    %c17 = arith.constant 17 : index
    %c0_5 = arith.constant 0 : index
    %c0_6 = arith.constant 0 : index
    %3 = vector.load %arg11[%c0_4, %c17, %c0_5, %c0_6] : memref<1x18x18x32xf32, #tpu.memory_space<vmem>>, vector<1x1x18x32xf32>
    tpu.vector_store %arg11[%c0_4, %c17, %c0_5, %c0_6], %2 {strides = array<i32>} : memref<1x18x18x32xf32, #tpu.memory_space<vmem>>, vector<1x1x18x32xf32>,
    %cst_7 = arith.constant 0.000000e+00 : f32
    %4 = vector.broadcast %cst_7 : f32 to vector<1x18x1x32xf32>
    %c0_8 = arith.constant 0 : index
    %c0_9 = arith.constant 0 : index
    %c0_10 = arith.constant 0 : index
    %c0_11 = arith.constant 0 : index
    %5 = vector.load %arg11[%c0_8, %c0_9, %c0_10, %c0_11] : memref<1x18x18x32xf32, #tpu.memory_space<vmem>>, vector<1x18x1x32xf32>
    tpu.vector_store %arg11[%c0_8, %c0_9, %c0_10, %c0_11], %4 {strides = array<i32>} : memref<1x18x18x32xf32, #tpu.memory_space<vmem>>, vector<1x18x1x32xf32>,
    %cst_12 = arith.constant 0.000000e+00 : f32
    %6 = vector.broadcast %cst_12 : f32 to vector<1x18x1x32xf32>
    %c0_13 = arith.constant 0 : index
    %c0_14 = arith.constant 0 : index
    %c17_15 = arith.constant 17 : index
    %c0_16 = arith.constant 0 : index
    %7 = vector.load %arg11[%c0_13, %c0_14, %c17_15, %c0_16] : memref<1x18x18x32xf32, #tpu.memory_space<vmem>>, vector<1x18x1x32xf32>
    tpu.vector_store %arg11[%c0_13, %c0_14, %c17_15, %c0_16], %6 {strides = array<i32>} : memref<1x18x18x32xf32, #tpu.memory_space<vmem>>, vector<1x18x1x32xf32>,
    %cst_17 = arith.constant 0.000000e+00 : f32
    %8 = vector.broadcast %cst_17 : f32 to vector<1x1x18x64xf32>
    %c0_18 = arith.constant 0 : index
    %c0_19 = arith.constant 0 : index
    %c0_20 = arith.constant 0 : index
    %c0_21 = arith.constant 0 : index
    %9 = vector.load %arg12[%c0_18, %c0_19, %c0_20, %c0_21] : memref<1x18x18x64xf32, #tpu.memory_space<vmem>>, vector<1x1x18x64xf32>
    tpu.vector_store %arg12[%c0_18, %c0_19, %c0_20, %c0_21], %8 {strides = array<i32>} : memref<1x18x18x64xf32, #tpu.memory_space<vmem>>, vector<1x1x18x64xf32>,
    %cst_22 = arith.constant 0.000000e+00 : f32
    %10 = vector.broadcast %cst_22 : f32 to vector<1x1x18x64xf32>
    %c0_23 = arith.constant 0 : index
    %c17_24 = arith.constant 17 : index
    %c0_25 = arith.constant 0 : index
    %c0_26 = arith.constant 0 : index
    %11 = vector.load %arg12[%c0_23, %c17_24, %c0_25, %c0_26] : memref<1x18x18x64xf32, #tpu.memory_space<vmem>>, vector<1x1x18x64xf32>
    tpu.vector_store %arg12[%c0_23, %c17_24, %c0_25, %c0_26], %10 {strides = array<i32>} : memref<1x18x18x64xf32, #tpu.memory_space<vmem>>, vector<1x1x18x64xf32>,
    %cst_27 = arith.constant 0.000000e+00 : f32
    %12 = vector.broadcast %cst_27 : f32 to vector<1x18x1x64xf32>
    %c0_28 = arith.constant 0 : index
    %c0_29 = arith.constant 0 : index
    %c0_30 = arith.constant 0 : index
    %c0_31 = arith.constant 0 : index
    %13 = vector.load %arg12[%c0_28, %c0_29, %c0_30, %c0_31] : memref<1x18x18x64xf32, #tpu.memory_space<vmem>>, vector<1x18x1x64xf32>
    tpu.vector_store %arg12[%c0_28, %c0_29, %c0_30, %c0_31], %12 {strides = array<i32>} : memref<1x18x18x64xf32, #tpu.memory_space<vmem>>, vector<1x18x1x64xf32>,
    %cst_32 = arith.constant 0.000000e+00 : f32
    %14 = vector.broadcast %cst_32 : f32 to vector<1x18x1x64xf32>
    %c0_33 = arith.constant 0 : index
    %c0_34 = arith.constant 0 : index
    %c17_35 = arith.constant 17 : index
    %c0_36 = arith.constant 0 : index
    %15 = vector.load %arg12[%c0_33, %c0_34, %c17_35, %c0_36] : memref<1x18x18x64xf32, #tpu.memory_space<vmem>>, vector<1x18x1x64xf32>
    tpu.vector_store %arg12[%c0_33, %c0_34, %c17_35, %c0_36], %14 {strides = array<i32>} : memref<1x18x18x64xf32, #tpu.memory_space<vmem>>, vector<1x18x1x64xf32>,
    %c0_37 = arith.constant 0 : index
    %c0_38 = arith.constant 0 : index
    %16 = vector.load %arg1[%c0_37, %c0_38] : memref<256x128xf32, #tpu.memory_space<vmem>>, vector<256x128xf32>
    %c0_39 = arith.constant 0 : index
    %c0_40 = arith.constant 0 : index
    %17 = vector.load %arg2[%c0_39, %c0_40] : memref<128x32xf32, #tpu.memory_space<vmem>>, vector<128x32xf32>
    %cst_41 = arith.constant dense<0.000000e+00> : vector<256x32xf32>
    %18 = tpu.matmul %16, %17, %cst_41 {dimension_numbers = #tpu.dot_dimension_numbers<[1], [0], [0], [1], [0, 0, 1, 1], [], []>} : vector<256x128xf32>, vector<128x32xf32>, vector<256x32xf32> -> vector<256x32xf32>
    %c0_42 = arith.constant 0 : index
    %c0_43 = arith.constant 0 : index
    %19 = vector.load %arg3[%c0_42, %c0_43] : memref<1x32xf32, #tpu.memory_space<vmem>>, vector<1x32xf32>
    %20 = vector.broadcast %19 : vector<1x32xf32> to vector<256x32xf32>
    %21 = arith.addf %18, %20 : vector<256x32xf32>
    %22 = vector.shape_cast %21 : vector<256x32xf32> to vector<1x16x16x32xf32>
    %c0_44 = arith.constant 0 : index
    %c1 = arith.constant 1 : index
    %c1_45 = arith.constant 1 : index
    %c0_46 = arith.constant 0 : index
    %23 = vector.load %arg11[%c0_44, %c1, %c1_45, %c0_46] : memref<1x18x18x32xf32, #tpu.memory_space<vmem>>, vector<1x16x16x32xf32>
    tpu.vector_store %arg11[%c0_44, %c1, %c1_45, %c0_46], %22 {strides = array<i32>} : memref<1x18x18x32xf32, #tpu.memory_space<vmem>>, vector<1x16x16x32xf32>,
    %c0_47 = arith.constant 0 : index
    %c0_48 = arith.constant 0 : index
    %c0_49 = arith.constant 0 : index
    %c0_50 = arith.constant 0 : index
    %24 = vector.load %arg11[%c0_47, %c0_48, %c0_49, %c0_50] : memref<1x18x18x32xf32, #tpu.memory_space<vmem>>, vector<1x16x16x32xf32>
    %25 = vector.shape_cast %24 : vector<1x16x16x32xf32> to vector<256x32xf32>
    %c0_51 = arith.constant 0 : index
    %c0_52 = arith.constant 0 : index
    %26 = vector.load %arg13[%c0_51, %c0_52] : memref<256x288xf32, #tpu.memory_space<vmem>>, vector<256x32xf32>
    tpu.vector_store %arg13[%c0_51, %c0_52], %25 {strides = array<i32>} : memref<256x288xf32, #tpu.memory_space<vmem>>, vector<256x32xf32>,
    %c0_53 = arith.constant 0 : index
    %c0_54 = arith.constant 0 : index
    %c1_55 = arith.constant 1 : index
    %c0_56 = arith.constant 0 : index
    %27 = vector.load %arg11[%c0_53, %c0_54, %c1_55, %c0_56] : memref<1x18x18x32xf32, #tpu.memory_space<vmem>>, vector<1x16x16x32xf32>
    %28 = vector.shape_cast %27 : vector<1x16x16x32xf32> to vector<256x32xf32>
    %c0_57 = arith.constant 0 : index
    %c32 = arith.constant 32 : index
    %29 = vector.load %arg13[%c0_57, %c32] : memref<256x288xf32, #tpu.memory_space<vmem>>, vector<256x32xf32>
    tpu.vector_store %arg13[%c0_57, %c32], %28 {strides = array<i32>} : memref<256x288xf32, #tpu.memory_space<vmem>>, vector<256x32xf32>,
    %c0_58 = arith.constant 0 : index
    %c0_59 = arith.constant 0 : index
    %c2 = arith.constant 2 : index
    %c0_60 = arith.constant 0 : index
    %30 = vector.load %arg11[%c0_58, %c0_59, %c2, %c0_60] : memref<1x18x18x32xf32, #tpu.memory_space<vmem>>, vector<1x16x16x32xf32>
    %31 = vector.shape_cast %30 : vector<1x16x16x32xf32> to vector<256x32xf32>
    %c0_61 = arith.constant 0 : index
    %c64 = arith.constant 64 : index
    %32 = vector.load %arg13[%c0_61, %c64] : memref<256x288xf32, #tpu.memory_space<vmem>>, vector<256x32xf32>
    tpu.vector_store %arg13[%c0_61, %c64], %31 {strides = array<i32>} : memref<256x288xf32, #tpu.memory_space<vmem>>, vector<256x32xf32>,
    %c0_62 = arith.constant 0 : index
    %c1_63 = arith.constant 1 : index
    %c0_64 = arith.constant 0 : index
    %c0_65 = arith.constant 0 : index
    %33 = vector.load %arg11[%c0_62, %c1_63, %c0_64, %c0_65] : memref<1x18x18x32xf32, #tpu.memory_space<vmem>>, vector<1x16x16x32xf32>
    %34 = vector.shape_cast %33 : vector<1x16x16x32xf32> to vector<256x32xf32>
    %c0_66 = arith.constant 0 : index
    %c96 = arith.constant 96 : index
    %35 = vector.load %arg13[%c0_66, %c96] : memref<256x288xf32, #tpu.memory_space<vmem>>, vector<256x32xf32>
    tpu.vector_store %arg13[%c0_66, %c96], %34 {strides = array<i32>} : memref<256x288xf32, #tpu.memory_space<vmem>>, vector<256x32xf32>,
    %c0_67 = arith.constant 0 : index
    %c1_68 = arith.constant 1 : index
    %c1_69 = arith.constant 1 : index
    %c0_70 = arith.constant 0 : index
    %36 = vector.load %arg11[%c0_67, %c1_68, %c1_69, %c0_70] : memref<1x18x18x32xf32, #tpu.memory_space<vmem>>, vector<1x16x16x32xf32>
    %37 = vector.shape_cast %36 : vector<1x16x16x32xf32> to vector<256x32xf32>
    %c0_71 = arith.constant 0 : index
    %c128 = arith.constant 128 : index
    %38 = vector.load %arg13[%c0_71, %c128] : memref<256x288xf32, #tpu.memory_space<vmem>>, vector<256x32xf32>
    tpu.vector_store %arg13[%c0_71, %c128], %37 {strides = array<i32>} : memref<256x288xf32, #tpu.memory_space<vmem>>, vector<256x32xf32>,
    %c0_72 = arith.constant 0 : index
    %c1_73 = arith.constant 1 : index
    %c2_74 = arith.constant 2 : index
    %c0_75 = arith.constant 0 : index
    %39 = vector.load %arg11[%c0_72, %c1_73, %c2_74, %c0_75] : memref<1x18x18x32xf32, #tpu.memory_space<vmem>>, vector<1x16x16x32xf32>
    %40 = vector.shape_cast %39 : vector<1x16x16x32xf32> to vector<256x32xf32>
    %c0_76 = arith.constant 0 : index
    %c160 = arith.constant 160 : index
    %41 = vector.load %arg13[%c0_76, %c160] : memref<256x288xf32, #tpu.memory_space<vmem>>, vector<256x32xf32>
    tpu.vector_store %arg13[%c0_76, %c160], %40 {strides = array<i32>} : memref<256x288xf32, #tpu.memory_space<vmem>>, vector<256x32xf32>,
    %c0_77 = arith.constant 0 : index
    %c2_78 = arith.constant 2 : index
    %c0_79 = arith.constant 0 : index
    %c0_80 = arith.constant 0 : index
    %42 = vector.load %arg11[%c0_77, %c2_78, %c0_79, %c0_80] : memref<1x18x18x32xf32, #tpu.memory_space<vmem>>, vector<1x16x16x32xf32>
    %43 = vector.shape_cast %42 : vector<1x16x16x32xf32> to vector<256x32xf32>
    %c0_81 = arith.constant 0 : index
    %c192 = arith.constant 192 : index
    %44 = vector.load %arg13[%c0_81, %c192] : memref<256x288xf32, #tpu.memory_space<vmem>>, vector<256x32xf32>
    tpu.vector_store %arg13[%c0_81, %c192], %43 {strides = array<i32>} : memref<256x288xf32, #tpu.memory_space<vmem>>, vector<256x32xf32>,
    %c0_82 = arith.constant 0 : index
    %c2_83 = arith.constant 2 : index
    %c1_84 = arith.constant 1 : index
    %c0_85 = arith.constant 0 : index
    %45 = vector.load %arg11[%c0_82, %c2_83, %c1_84, %c0_85] : memref<1x18x18x32xf32, #tpu.memory_space<vmem>>, vector<1x16x16x32xf32>
    %46 = vector.shape_cast %45 : vector<1x16x16x32xf32> to vector<256x32xf32>
    %c0_86 = arith.constant 0 : index
    %c224 = arith.constant 224 : index
    %47 = vector.load %arg13[%c0_86, %c224] : memref<256x288xf32, #tpu.memory_space<vmem>>, vector<256x32xf32>
    tpu.vector_store %arg13[%c0_86, %c224], %46 {strides = array<i32>} : memref<256x288xf32, #tpu.memory_space<vmem>>, vector<256x32xf32>,
    %c0_87 = arith.constant 0 : index
    %c2_88 = arith.constant 2 : index
    %c2_89 = arith.constant 2 : index
    %c0_90 = arith.constant 0 : index
    %48 = vector.load %arg11[%c0_87, %c2_88, %c2_89, %c0_90] : memref<1x18x18x32xf32, #tpu.memory_space<vmem>>, vector<1x16x16x32xf32>
    %49 = vector.shape_cast %48 : vector<1x16x16x32xf32> to vector<256x32xf32>
    %c0_91 = arith.constant 0 : index
    %c256 = arith.constant 256 : index
    %50 = vector.load %arg13[%c0_91, %c256] : memref<256x288xf32, #tpu.memory_space<vmem>>, vector<256x32xf32>
    tpu.vector_store %arg13[%c0_91, %c256], %49 {strides = array<i32>} : memref<256x288xf32, #tpu.memory_space<vmem>>, vector<256x32xf32>,
    %c0_92 = arith.constant 0 : index
    %c0_93 = arith.constant 0 : index
    %51 = vector.load %arg13[%c0_92, %c0_93] : memref<256x288xf32, #tpu.memory_space<vmem>>, vector<256x288xf32>
    %c0_94 = arith.constant 0 : index
    %c0_95 = arith.constant 0 : index
    %52 = vector.load %arg4[%c0_94, %c0_95] : memref<288x64xf32, #tpu.memory_space<vmem>>, vector<288x64xf32>
    %cst_96 = arith.constant dense<0.000000e+00> : vector<256x64xf32>
    %53 = tpu.matmul %51, %52, %cst_96 {dimension_numbers = #tpu.dot_dimension_numbers<[1], [0], [0], [1], [0, 0, 1, 1], [], []>} : vector<256x288xf32>, vector<288x64xf32>, vector<256x64xf32> -> vector<256x64xf32>
    %c0_97 = arith.constant 0 : index
    %c0_98 = arith.constant 0 : index
    %54 = vector.load %arg5[%c0_97, %c0_98] : memref<1x64xf32, #tpu.memory_space<vmem>>, vector<1x64xf32>
    %55 = vector.broadcast %54 : vector<1x64xf32> to vector<256x64xf32>
    %56 = arith.addf %53, %55 : vector<256x64xf32>
    %cst_99 = arith.constant 0.000000e+00 : f32
    %57 = vector.broadcast %cst_99 : f32 to vector<256x64xf32>
    %58 = arith.maximumf %56, %57 : vector<256x64xf32>
    %59 = vector.shape_cast %58 : vector<256x64xf32> to vector<1x16x16x64xf32>
    %c0_100 = arith.constant 0 : index
    %c1_101 = arith.constant 1 : index
    %c1_102 = arith.constant 1 : index
    %c0_103 = arith.constant 0 : index
    %60 = vector.load %arg12[%c0_100, %c1_101, %c1_102, %c0_103] : memref<1x18x18x64xf32, #tpu.memory_space<vmem>>, vector<1x16x16x64xf32>
    tpu.vector_store %arg12[%c0_100, %c1_101, %c1_102, %c0_103], %59 {strides = array<i32>} : memref<1x18x18x64xf32, #tpu.memory_space<vmem>>, vector<1x16x16x64xf32>,
    %c0_104 = arith.constant 0 : index
    %c0_105 = arith.constant 0 : index
    %c0_106 = arith.constant 0 : index
    %c0_107 = arith.constant 0 : index
    %61 = vector.load %arg12[%c0_104, %c0_105, %c0_106, %c0_107] : memref<1x18x18x64xf32, #tpu.memory_space<vmem>>, vector<1x16x16x64xf32>
    %62 = vector.shape_cast %61 : vector<1x16x16x64xf32> to vector<256x64xf32>
    %c0_108 = arith.constant 0 : index
    %c0_109 = arith.constant 0 : index
    %63 = vector.load %arg14[%c0_108, %c0_109] : memref<256x576xf32, #tpu.memory_space<vmem>>, vector<256x64xf32>
    tpu.vector_store %arg14[%c0_108, %c0_109], %62 {strides = array<i32>} : memref<256x576xf32, #tpu.memory_space<vmem>>, vector<256x64xf32>,
    %c0_110 = arith.constant 0 : index
    %c0_111 = arith.constant 0 : index
    %c1_112 = arith.constant 1 : index
    %c0_113 = arith.constant 0 : index
    %64 = vector.load %arg12[%c0_110, %c0_111, %c1_112, %c0_113] : memref<1x18x18x64xf32, #tpu.memory_space<vmem>>, vector<1x16x16x64xf32>
    %65 = vector.shape_cast %64 : vector<1x16x16x64xf32> to vector<256x64xf32>
    %c0_114 = arith.constant 0 : index
    %c64_115 = arith.constant 64 : index
    %66 = vector.load %arg14[%c0_114, %c64_115] : memref<256x576xf32, #tpu.memory_space<vmem>>, vector<256x64xf32>
    tpu.vector_store %arg14[%c0_114, %c64_115], %65 {strides = array<i32>} : memref<256x576xf32, #tpu.memory_space<vmem>>, vector<256x64xf32>,
    %c0_116 = arith.constant 0 : index
    %c0_117 = arith.constant 0 : index
    %c2_118 = arith.constant 2 : index
    %c0_119 = arith.constant 0 : index
    %67 = vector.load %arg12[%c0_116, %c0_117, %c2_118, %c0_119] : memref<1x18x18x64xf32, #tpu.memory_space<vmem>>, vector<1x16x16x64xf32>
    %68 = vector.shape_cast %67 : vector<1x16x16x64xf32> to vector<256x64xf32>
    %c0_120 = arith.constant 0 : index
    %c128_121 = arith.constant 128 : index
    %69 = vector.load %arg14[%c0_120, %c128_121] : memref<256x576xf32, #tpu.memory_space<vmem>>, vector<256x64xf32>
    tpu.vector_store %arg14[%c0_120, %c128_121], %68 {strides = array<i32>} : memref<256x576xf32, #tpu.memory_space<vmem>>, vector<256x64xf32>,
    %c0_122 = arith.constant 0 : index
    %c1_123 = arith.constant 1 : index
    %c0_124 = arith.constant 0 : index
    %c0_125 = arith.constant 0 : index
    %70 = vector.load %arg12[%c0_122, %c1_123, %c0_124, %c0_125] : memref<1x18x18x64xf32, #tpu.memory_space<vmem>>, vector<1x16x16x64xf32>
    %71 = vector.shape_cast %70 : vector<1x16x16x64xf32> to vector<256x64xf32>
    %c0_126 = arith.constant 0 : index
    %c192_127 = arith.constant 192 : index
    %72 = vector.load %arg14[%c0_126, %c192_127] : memref<256x576xf32, #tpu.memory_space<vmem>>, vector<256x64xf32>
    tpu.vector_store %arg14[%c0_126, %c192_127], %71 {strides = array<i32>} : memref<256x576xf32, #tpu.memory_space<vmem>>, vector<256x64xf32>,
    %c0_128 = arith.constant 0 : index
    %c1_129 = arith.constant 1 : index
    %c1_130 = arith.constant 1 : index
    %c0_131 = arith.constant 0 : index
    %73 = vector.load %arg12[%c0_128, %c1_129, %c1_130, %c0_131] : memref<1x18x18x64xf32, #tpu.memory_space<vmem>>, vector<1x16x16x64xf32>
    %74 = vector.shape_cast %73 : vector<1x16x16x64xf32> to vector<256x64xf32>
    %c0_132 = arith.constant 0 : index
    %c256_133 = arith.constant 256 : index
    %75 = vector.load %arg14[%c0_132, %c256_133] : memref<256x576xf32, #tpu.memory_space<vmem>>, vector<256x64xf32>
    tpu.vector_store %arg14[%c0_132, %c256_133], %74 {strides = array<i32>} : memref<256x576xf32, #tpu.memory_space<vmem>>, vector<256x64xf32>,
    %c0_134 = arith.constant 0 : index
    %c1_135 = arith.constant 1 : index
    %c2_136 = arith.constant 2 : index
    %c0_137 = arith.constant 0 : index
    %76 = vector.load %arg12[%c0_134, %c1_135, %c2_136, %c0_137] : memref<1x18x18x64xf32, #tpu.memory_space<vmem>>, vector<1x16x16x64xf32>
    %77 = vector.shape_cast %76 : vector<1x16x16x64xf32> to vector<256x64xf32>
    %c0_138 = arith.constant 0 : index
    %c320 = arith.constant 320 : index
    %78 = vector.load %arg14[%c0_138, %c320] : memref<256x576xf32, #tpu.memory_space<vmem>>, vector<256x64xf32>
    tpu.vector_store %arg14[%c0_138, %c320], %77 {strides = array<i32>} : memref<256x576xf32, #tpu.memory_space<vmem>>, vector<256x64xf32>,
    %c0_139 = arith.constant 0 : index
    %c2_140 = arith.constant 2 : index
    %c0_141 = arith.constant 0 : index
    %c0_142 = arith.constant 0 : index
    %79 = vector.load %arg12[%c0_139, %c2_140, %c0_141, %c0_142] : memref<1x18x18x64xf32, #tpu.memory_space<vmem>>, vector<1x16x16x64xf32>
    %80 = vector.shape_cast %79 : vector<1x16x16x64xf32> to vector<256x64xf32>
    %c0_143 = arith.constant 0 : index
    %c384 = arith.constant 384 : index
    %81 = vector.load %arg14[%c0_143, %c384] : memref<256x576xf32, #tpu.memory_space<vmem>>, vector<256x64xf32>
    tpu.vector_store %arg14[%c0_143, %c384], %80 {strides = array<i32>} : memref<256x576xf32, #tpu.memory_space<vmem>>, vector<256x64xf32>,
    %c0_144 = arith.constant 0 : index
    %c2_145 = arith.constant 2 : index
    %c1_146 = arith.constant 1 : index
    %c0_147 = arith.constant 0 : index
    %82 = vector.load %arg12[%c0_144, %c2_145, %c1_146, %c0_147] : memref<1x18x18x64xf32, #tpu.memory_space<vmem>>, vector<1x16x16x64xf32>
    %83 = vector.shape_cast %82 : vector<1x16x16x64xf32> to vector<256x64xf32>
    %c0_148 = arith.constant 0 : index
    %c448 = arith.constant 448 : index
    %84 = vector.load %arg14[%c0_148, %c448] : memref<256x576xf32, #tpu.memory_space<vmem>>, vector<256x64xf32>
    tpu.vector_store %arg14[%c0_148, %c448], %83 {strides = array<i32>} : memref<256x576xf32, #tpu.memory_space<vmem>>, vector<256x64xf32>,
    %c0_149 = arith.constant 0 : index
    %c2_150 = arith.constant 2 : index
    %c2_151 = arith.constant 2 : index
    %c0_152 = arith.constant 0 : index
    %85 = vector.load %arg12[%c0_149, %c2_150, %c2_151, %c0_152] : memref<1x18x18x64xf32, #tpu.memory_space<vmem>>, vector<1x16x16x64xf32>
    %86 = vector.shape_cast %85 : vector<1x16x16x64xf32> to vector<256x64xf32>
    %c0_153 = arith.constant 0 : index
    %c512 = arith.constant 512 : index
    %87 = vector.load %arg14[%c0_153, %c512] : memref<256x576xf32, #tpu.memory_space<vmem>>, vector<256x64xf32>
    tpu.vector_store %arg14[%c0_153, %c512], %86 {strides = array<i32>} : memref<256x576xf32, #tpu.memory_space<vmem>>, vector<256x64xf32>,
    %c0_154 = arith.constant 0 : index
    %c0_155 = arith.constant 0 : index
    %88 = vector.load %arg14[%c0_154, %c0_155] : memref<256x576xf32, #tpu.memory_space<vmem>>, vector<256x576xf32>
    %c0_156 = arith.constant 0 : index
    %c0_157 = arith.constant 0 : index
    %89 = vector.load %arg6[%c0_156, %c0_157] : memref<576x32xf32, #tpu.memory_space<vmem>>, vector<576x32xf32>
    %cst_158 = arith.constant dense<0.000000e+00> : vector<256x32xf32>
    %90 = tpu.matmul %88, %89, %cst_158 {dimension_numbers = #tpu.dot_dimension_numbers<[1], [0], [0], [1], [0, 0, 1, 1], [], []>} : vector<256x576xf32>, vector<576x32xf32>, vector<256x32xf32> -> vector<256x32xf32>
    %c0_159 = arith.constant 0 : index
    %c0_160 = arith.constant 0 : index
    %91 = vector.load %arg7[%c0_159, %c0_160] : memref<1x32xf32, #tpu.memory_space<vmem>>, vector<1x32xf32>
    %92 = vector.broadcast %91 : vector<1x32xf32> to vector<256x32xf32>
    %93 = arith.addf %90, %92 : vector<256x32xf32>
    %94 = vector.shape_cast %93 : vector<256x32xf32> to vector<1x16x16x32xf32>
    %c0_161 = arith.constant 0 : index
    %c1_162 = arith.constant 1 : index
    %c1_163 = arith.constant 1 : index
    %c0_164 = arith.constant 0 : index
    %95 = vector.load %arg11[%c0_161, %c1_162, %c1_163, %c0_164] : memref<1x18x18x32xf32, #tpu.memory_space<vmem>>, vector<1x16x16x32xf32>
    tpu.vector_store %arg11[%c0_161, %c1_162, %c1_163, %c0_164], %94 {strides = array<i32>} : memref<1x18x18x32xf32, #tpu.memory_space<vmem>>, vector<1x16x16x32xf32>,
    %c0_165 = arith.constant 0 : index
    %c0_166 = arith.constant 0 : index
    %c0_167 = arith.constant 0 : index
    %c0_168 = arith.constant 0 : index
    %96 = vector.load %arg11[%c0_165, %c0_166, %c0_167, %c0_168] : memref<1x18x18x32xf32, #tpu.memory_space<vmem>>, vector<1x16x16x32xf32>
    %97 = vector.shape_cast %96 : vector<1x16x16x32xf32> to vector<256x32xf32>
    %c0_169 = arith.constant 0 : index
    %c0_170 = arith.constant 0 : index
    %98 = vector.load %arg13[%c0_169, %c0_170] : memref<256x288xf32, #tpu.memory_space<vmem>>, vector<256x32xf32>
    tpu.vector_store %arg13[%c0_169, %c0_170], %97 {strides = array<i32>} : memref<256x288xf32, #tpu.memory_space<vmem>>, vector<256x32xf32>,
    %c0_171 = arith.constant 0 : index
    %c0_172 = arith.constant 0 : index
    %c1_173 = arith.constant 1 : index
    %c0_174 = arith.constant 0 : index
    %99 = vector.load %arg11[%c0_171, %c0_172, %c1_173, %c0_174] : memref<1x18x18x32xf32, #tpu.memory_space<vmem>>, vector<1x16x16x32xf32>
    %100 = vector.shape_cast %99 : vector<1x16x16x32xf32> to vector<256x32xf32>
    %c0_175 = arith.constant 0 : index
    %c32_176 = arith.constant 32 : index
    %101 = vector.load %arg13[%c0_175, %c32_176] : memref<256x288xf32, #tpu.memory_space<vmem>>, vector<256x32xf32>
    tpu.vector_store %arg13[%c0_175, %c32_176], %100 {strides = array<i32>} : memref<256x288xf32, #tpu.memory_space<vmem>>, vector<256x32xf32>,
    %c0_177 = arith.constant 0 : index
    %c0_178 = arith.constant 0 : index
    %c2_179 = arith.constant 2 : index
    %c0_180 = arith.constant 0 : index
    %102 = vector.load %arg11[%c0_177, %c0_178, %c2_179, %c0_180] : memref<1x18x18x32xf32, #tpu.memory_space<vmem>>, vector<1x16x16x32xf32>
    %103 = vector.shape_cast %102 : vector<1x16x16x32xf32> to vector<256x32xf32>
    %c0_181 = arith.constant 0 : index
    %c64_182 = arith.constant 64 : index
    %104 = vector.load %arg13[%c0_181, %c64_182] : memref<256x288xf32, #tpu.memory_space<vmem>>, vector<256x32xf32>
    tpu.vector_store %arg13[%c0_181, %c64_182], %103 {strides = array<i32>} : memref<256x288xf32, #tpu.memory_space<vmem>>, vector<256x32xf32>,
    %c0_183 = arith.constant 0 : index
    %c1_184 = arith.constant 1 : index
    %c0_185 = arith.constant 0 : index
    %c0_186 = arith.constant 0 : index
    %105 = vector.load %arg11[%c0_183, %c1_184, %c0_185, %c0_186] : memref<1x18x18x32xf32, #tpu.memory_space<vmem>>, vector<1x16x16x32xf32>
    %106 = vector.shape_cast %105 : vector<1x16x16x32xf32> to vector<256x32xf32>
    %c0_187 = arith.constant 0 : index
    %c96_188 = arith.constant 96 : index
    %107 = vector.load %arg13[%c0_187, %c96_188] : memref<256x288xf32, #tpu.memory_space<vmem>>, vector<256x32xf32>
    tpu.vector_store %arg13[%c0_187, %c96_188], %106 {strides = array<i32>} : memref<256x288xf32, #tpu.memory_space<vmem>>, vector<256x32xf32>,
    %c0_189 = arith.constant 0 : index
    %c1_190 = arith.constant 1 : index
    %c1_191 = arith.constant 1 : index
    %c0_192 = arith.constant 0 : index
    %108 = vector.load %arg11[%c0_189, %c1_190, %c1_191, %c0_192] : memref<1x18x18x32xf32, #tpu.memory_space<vmem>>, vector<1x16x16x32xf32>
    %109 = vector.shape_cast %108 : vector<1x16x16x32xf32> to vector<256x32xf32>
    %c0_193 = arith.constant 0 : index
    %c128_194 = arith.constant 128 : index
    %110 = vector.load %arg13[%c0_193, %c128_194] : memref<256x288xf32, #tpu.memory_space<vmem>>, vector<256x32xf32>
    tpu.vector_store %arg13[%c0_193, %c128_194], %109 {strides = array<i32>} : memref<256x288xf32, #tpu.memory_space<vmem>>, vector<256x32xf32>,
    %c0_195 = arith.constant 0 : index
    %c1_196 = arith.constant 1 : index
    %c2_197 = arith.constant 2 : index
    %c0_198 = arith.constant 0 : index
    %111 = vector.load %arg11[%c0_195, %c1_196, %c2_197, %c0_198] : memref<1x18x18x32xf32, #tpu.memory_space<vmem>>, vector<1x16x16x32xf32>
    %112 = vector.shape_cast %111 : vector<1x16x16x32xf32> to vector<256x32xf32>
    %c0_199 = arith.constant 0 : index
    %c160_200 = arith.constant 160 : index
    %113 = vector.load %arg13[%c0_199, %c160_200] : memref<256x288xf32, #tpu.memory_space<vmem>>, vector<256x32xf32>
    tpu.vector_store %arg13[%c0_199, %c160_200], %112 {strides = array<i32>} : memref<256x288xf32, #tpu.memory_space<vmem>>, vector<256x32xf32>,
    %c0_201 = arith.constant 0 : index
    %c2_202 = arith.constant 2 : index
    %c0_203 = arith.constant 0 : index
    %c0_204 = arith.constant 0 : index
    %114 = vector.load %arg11[%c0_201, %c2_202, %c0_203, %c0_204] : memref<1x18x18x32xf32, #tpu.memory_space<vmem>>, vector<1x16x16x32xf32>
    %115 = vector.shape_cast %114 : vector<1x16x16x32xf32> to vector<256x32xf32>
    %c0_205 = arith.constant 0 : index
    %c192_206 = arith.constant 192 : index
    %116 = vector.load %arg13[%c0_205, %c192_206] : memref<256x288xf32, #tpu.memory_space<vmem>>, vector<256x32xf32>
    tpu.vector_store %arg13[%c0_205, %c192_206], %115 {strides = array<i32>} : memref<256x288xf32, #tpu.memory_space<vmem>>, vector<256x32xf32>,
    %c0_207 = arith.constant 0 : index
    %c2_208 = arith.constant 2 : index
    %c1_209 = arith.constant 1 : index
    %c0_210 = arith.constant 0 : index
    %117 = vector.load %arg11[%c0_207, %c2_208, %c1_209, %c0_210] : memref<1x18x18x32xf32, #tpu.memory_space<vmem>>, vector<1x16x16x32xf32>
    %118 = vector.shape_cast %117 : vector<1x16x16x32xf32> to vector<256x32xf32>
    %c0_211 = arith.constant 0 : index
    %c224_212 = arith.constant 224 : index
    %119 = vector.load %arg13[%c0_211, %c224_212] : memref<256x288xf32, #tpu.memory_space<vmem>>, vector<256x32xf32>
    tpu.vector_store %arg13[%c0_211, %c224_212], %118 {strides = array<i32>} : memref<256x288xf32, #tpu.memory_space<vmem>>, vector<256x32xf32>,
    %c0_213 = arith.constant 0 : index
    %c2_214 = arith.constant 2 : index
    %c2_215 = arith.constant 2 : index
    %c0_216 = arith.constant 0 : index
    %120 = vector.load %arg11[%c0_213, %c2_214, %c2_215, %c0_216] : memref<1x18x18x32xf32, #tpu.memory_space<vmem>>, vector<1x16x16x32xf32>
    %121 = vector.shape_cast %120 : vector<1x16x16x32xf32> to vector<256x32xf32>
    %c0_217 = arith.constant 0 : index
    %c256_218 = arith.constant 256 : index
    %122 = vector.load %arg13[%c0_217, %c256_218] : memref<256x288xf32, #tpu.memory_space<vmem>>, vector<256x32xf32>
    tpu.vector_store %arg13[%c0_217, %c256_218], %121 {strides = array<i32>} : memref<256x288xf32, #tpu.memory_space<vmem>>, vector<256x32xf32>,
    %c0_219 = arith.constant 0 : index
    %c0_220 = arith.constant 0 : index
    %123 = vector.load %arg13[%c0_219, %c0_220] : memref<256x288xf32, #tpu.memory_space<vmem>>, vector<256x288xf32>
    %c0_221 = arith.constant 0 : index
    %c0_222 = arith.constant 0 : index
    %124 = vector.load %arg8[%c0_221, %c0_222] : memref<288x3xf32, #tpu.memory_space<vmem>>, vector<288x3xf32>
    %cst_223 = arith.constant dense<0.000000e+00> : vector<256x3xf32>
    %125 = tpu.matmul %123, %124, %cst_223 {dimension_numbers = #tpu.dot_dimension_numbers<[1], [0], [0], [1], [0, 0, 1, 1], [], []>} : vector<256x288xf32>, vector<288x3xf32>, vector<256x3xf32> -> vector<256x3xf32>
    %c0_224 = arith.constant 0 : index
    %c0_225 = arith.constant 0 : index
    %126 = vector.load %arg9[%c0_224, %c0_225] : memref<1x3xf32, #tpu.memory_space<vmem>>, vector<1x3xf32>
    %127 = vector.broadcast %126 : vector<1x3xf32> to vector<256x3xf32>
    %128 = arith.addf %125, %127 : vector<256x3xf32>
    %129 = math.tanh %128 : vector<256x3xf32>
    %130 = tpu.transpose %129, [1, 0] : vector<256x3xf32> -> vector<3x256xf32>
    %c0_226 = arith.constant 0 : index
    %c0_227 = arith.constant 0 : index
    %c0_228 = arith.constant 0 : index
    %131 = vector.load %arg10[%c0_226, %c0_227, %c0_228] : memref<1x3x256xf32, #tpu.memory_space<vmem>>, vector<1x3x256xf32>
    %132 = vector.shape_cast %131 : vector<1x3x256xf32> to vector<3x256xf32>
    %133 = vector.shape_cast %130 : vector<3x256xf32> to vector<1x3x256xf32>
    tpu.vector_store %arg10[%c0_226, %c0_227, %c0_228], %133 {strides = array<i32>} : memref<1x3x256xf32, #tpu.memory_space<vmem>>, vector<1x3x256xf32>,
    return
  }
  func.func @transform_0(%arg0: i32) -> (i32, i32) {
    %c0_i32 = arith.constant 0 : i32
    %c0_i32_0 = arith.constant 0 : i32
    return %arg0, %c0_i32 : i32, i32
  }
  func.func @transform_1(%arg0: i32) -> (i32, i32) {
    %c0_i32 = arith.constant 0 : i32
    %c0_i32_0 = arith.constant 0 : i32
    %c0_i32_1 = arith.constant 0 : i32
    return %c0_i32, %c0_i32_0 : i32, i32
  }
  func.func @transform_2(%arg0: i32) -> (i32, i32) {
    %c0_i32 = arith.constant 0 : i32
    %c0_i32_0 = arith.constant 0 : i32
    %c0_i32_1 = arith.constant 0 : i32
    return %c0_i32, %c0_i32_0 : i32, i32
  }
  func.func @transform_3(%arg0: i32) -> (i32, i32) {
    %c0_i32 = arith.constant 0 : i32
    %c0_i32_0 = arith.constant 0 : i32
    %c0_i32_1 = arith.constant 0 : i32
    return %c0_i32, %c0_i32_0 : i32, i32
  }
  func.func @transform_4(%arg0: i32) -> (i32, i32) {
    %c0_i32 = arith.constant 0 : i32
    %c0_i32_0 = arith.constant 0 : i32
    %c0_i32_1 = arith.constant 0 : i32
    return %c0_i32, %c0_i32_0 : i32, i32
  }
  func.func @transform_5(%arg0: i32) -> (i32, i32) {
    %c0_i32 = arith.constant 0 : i32
    %c0_i32_0 = arith.constant 0 : i32
    %c0_i32_1 = arith.constant 0 : i32
    return %c0_i32, %c0_i32_0 : i32, i32
  }
  func.func @transform_6(%arg0: i32) -> (i32, i32) {
    %c0_i32 = arith.constant 0 : i32
    %c0_i32_0 = arith.constant 0 : i32
    %c0_i32_1 = arith.constant 0 : i32
    return %c0_i32, %c0_i32_0 : i32, i32
  }
  func.func @transform_7(%arg0: i32) -> (i32, i32) {
    %c0_i32 = arith.constant 0 : i32
    %c0_i32_0 = arith.constant 0 : i32
    %c0_i32_1 = arith.constant 0 : i32
    return %c0_i32, %c0_i32_0 : i32, i32
  }
  func.func @transform_8(%arg0: i32) -> (i32, i32) {
    %c0_i32 = arith.constant 0 : i32
    %c0_i32_0 = arith.constant 0 : i32
    %c0_i32_1 = arith.constant 0 : i32
    return %c0_i32, %c0_i32_0 : i32, i32
  }
  func.func @transform_9(%arg0: i32) -> (i32, i32, i32) {
    %c0_i32 = arith.constant 0 : i32
    %c0_i32_0 = arith.constant 0 : i32
    %c0_i32_1 = arith.constant 0 : i32
    return %arg0, %c0_i32, %c0_i32_0 : i32, i32, i32
  }
}

</mosaic_0001>

<llo_original>
// kernel: regressor_forward.1
$region0: #{regressor_forward.1}
  #allocation0 [shape = 'u32[]', space=smem, size = 0x4, offset = 0x4, fixed_abs, tag = 'smem constant byte address 0x4 - core index']
  #allocation1 [shape = 'u32[144,128]{1,0:T(1,128)}', space=vmem, size = 0x12000, scoped, tag = 'internal scratch']
  #allocation2 [shape = 'f32[1,18,18,32]{3,2,1,0:T(8,128)}', space=vmem, size = 0x36000, scoped, tag = 'scratch operand']
  #allocation3 [shape = 'f32[1,18,18,64]{3,2,1,0:T(8,128)}', space=vmem, size = 0x36000, scoped, tag = 'scratch operand']
  #allocation4 [shape = 'f32[256,288]{1,0:T(8,128)}', space=vmem, size = 0x60000, scoped, tag = 'scratch operand']
  #allocation5 [shape = 'f32[256,576]{1,0:T(8,128)}', space=vmem, size = 0xa0000, scoped, tag = 'scratch operand']
  %s0 = inlined_call_operand.vmem [shape: f32[512,128], index: 0, kind: input, shape index: {}]
  %s1 = inlined_call_operand.vmem [shape: f32[128,32], index: 1, kind: input, shape index: {}]
  %s2 = inlined_call_operand.vmem [shape: f32[1,32], index: 2, kind: input, shape index: {}]
  %s3 = inlined_call_operand.vmem [shape: f32[288,64], index: 3, kind: input, shape index: {}]
  %s4 = inlined_call_operand.vmem [shape: f32[1,64], index: 4, kind: input, shape index: {}]
  %s5 = inlined_call_operand.vmem [shape: f32[576,32], index: 5, kind: input, shape index: {}]
  %s6 = inlined_call_operand.vmem [shape: f32[1,32], index: 6, kind: input, shape index: {}]
  %s7 = inlined_call_operand.vmem [shape: f32[288,3], index: 7, kind: input, shape index: {}]
  %s8 = inlined_call_operand.vmem [shape: f32[1,3], index: 8, kind: input, shape index: {}]
  %s9 = inlined_call_operand.vmem [shape: f32[2,3,256], index: 9, kind: output, shape index: {}]
  %s10 = sld [smem:[#allocation0]]
  $region69: #{regressor_forward.1} parent=0
    _
  %s12 = ssub.s32 1, %s10
  %s13 = scalar_select 0, %s12, %s10
  loop: start=0, step=1, limit=4
  $region2: #{regressor_forward.1} parent=0 // loop_pre_header
    _
  $region3: #{regressor_forward.1} parent=0 // loop_header
    %s15 = sphi 0, %s19
    %p16 = scmp.ge.s32.totalorder %s15, 4
    %s25 = sphi 0, %s27
    %s28 = sphi 0, %s25
    %s29 = sphi 0, %s28
    %s45 = sphi 0, %s29
    %s49 = sphi 0, %s49
    %s51 = sphi 0, %s49
    %s52 = sphi 0, %s51
    %s66 = sphi 0, %s52
    %s70 = sphi 0, %s70
    %s72 = sphi 0, %s70
    %s73 = sphi 0, %s72
    %s87 = sphi 0, %s73
    %s91 = sphi 0, %s91
    %s93 = sphi 0, %s91
    %s94 = sphi 0, %s93
    %s108 = sphi 0, %s94
    %s112 = sphi 0, %s112
    %s114 = sphi 0, %s112
    %s115 = sphi 0, %s114
    %s129 = sphi 0, %s115
    %s133 = sphi 0, %s133
    %s135 = sphi 0, %s133
    %s136 = sphi 0, %s135
    %s150 = sphi 0, %s136
    %s154 = sphi 0, %s154
    %s156 = sphi 0, %s154
    %s157 = sphi 0, %s156
    %s171 = sphi 0, %s157
    %s175 = sphi 0, %s175
    %s177 = sphi 0, %s175
    %s178 = sphi 0, %s177
    %s192 = sphi 0, %s178
    %s196 = sphi 0, %s196
    %s198 = sphi 0, %s196
    %s199 = sphi 0, %s198
    %s213 = sphi 0, %s199
    %s219 = sphi 0, %s221
    %s222 = sphi 0, %s219
    %s223 = sphi 0, %s222
    %s239 = sphi 0, %s223
  $region4: #{regressor_forward.1} parent=0 // loop_header_branch
    %18 = sbr.rel (%p16) target = $region8
  $region5: #{regressor_forward.1} parent=0 // loop_body
    %s20 = ssub.s32 %s15, 1
    %s21 = ssub.s32 %s15, 2
    %s22 = sadd.s32 %s15, 1
    %s23 = ssub.s32 %s15, %s22
    %p24 = scmp.eq.s32.totalorder %s23, 0
    %s26 = sadd.s32 %s25, 1
    %s27 = scalar_select %p24, %s25, %s26
    %p30 = pneg %p24
    %p31 = scmp.eq.s32.totalorder %s15, 1
    %p32 = por %p30, %p31
    %p33 = scmp.ne.s32.totalorder %s25, %s28
    %p34 = scmp.eq.s32.totalorder %s15, 0
    %p35 = por %p33, %p34
    %p36 = scmp.ne.s32.totalorder %s25, %s28
    %p37 = scmp.eq.s32.totalorder %s20, 1
    %p38 = por %p36, %p37
    %p39 = scmp.ne.s32.totalorder %s28, %s29
    %p40 = scmp.eq.s32.totalorder %s20, 0
    %p41 = por %p39, %p40
    %p42 = scmp.ne.s32.totalorder %s28, %s29
    %p43 = scmp.eq.s32.totalorder %s21, 1
    %p44 = por %p42, %p43
    %p46 = scmp.ne.s32.totalorder %s29, %s45
    %p47 = scmp.eq.s32.totalorder %s21, 0
    %p48 = por %p46, %p47
    %s50 = sadd.s32 %s49, 1
    %p53 = scmp.eq.s32.totalorder %s15, 1
    %p54 = scmp.ne.s32.totalorder %s49, %s51
    %p55 = scmp.eq.s32.totalorder %s15, 0
    %p56 = por %p54, %p55
    %p57 = scmp.ne.s32.totalorder %s49, %s51
    %p58 = scmp.eq.s32.totalorder %s20, 1
    %p59 = por %p57, %p58
    %p60 = scmp.ne.s32.totalorder %s51, %s52
    %p61 = scmp.eq.s32.totalorder %s20, 0
    %p62 = por %p60, %p61
    %p63 = scmp.ne.s32.totalorder %s51, %s52
    %p64 = scmp.eq.s32.totalorder %s21, 1
    %p65 = por %p63, %p64
    %p67 = scmp.ne.s32.totalorder %s52, %s66
    %p68 = scmp.eq.s32.totalorder %s21, 0
    %p69 = por %p67, %p68
    %s71 = sadd.s32 %s70, 1
    %p74 = scmp.eq.s32.totalorder %s15, 1
    %p75 = scmp.ne.s32.totalorder %s70, %s72
    %p76 = scmp.eq.s32.totalorder %s15, 0
    %p77 = por %p75, %p76
    %p78 = scmp.ne.s32.totalorder %s70, %s72
    %p79 = scmp.eq.s32.totalorder %s20, 1
    %p80 = por %p78, %p79
    %p81 = scmp.ne.s32.totalorder %s72, %s73
    %p82 = scmp.eq.s32.totalorder %s20, 0
    %p83 = por %p81, %p82
    %p84 = scmp.ne.s32.totalorder %s72, %s73
    %p85 = scmp.eq.s32.totalorder %s21, 1
    %p86 = por %p84, %p85
    %p88 = scmp.ne.s32.totalorder %s73, %s87
    %p89 = scmp.eq.s32.totalorder %s21, 0
    %p90 = por %p88, %p89
    %s92 = sadd.s32 %s91, 1
    %p95 = scmp.eq.s32.totalorder %s15, 1
    %p96 = scmp.ne.s32.totalorder %s91, %s93
    %p97 = scmp.eq.s32.totalorder %s15, 0
    %p98 = por %p96, %p97
    %p99 = scmp.ne.s32.totalorder %s91, %s93
    %p100 = scmp.eq.s32.totalorder %s20, 1
    %p101 = por %p99, %p100
    %p102 = scmp.ne.s32.totalorder %s93, %s94
    %p103 = scmp.eq.s32.totalorder %s20, 0
    %p104 = por %p102, %p103
    %p105 = scmp.ne.s32.totalorder %s93, %s94
    %p106 = scmp.eq.s32.totalorder %s21, 1
    %p107 = por %p105, %p106
    %p109 = scmp.ne.s32.totalorder %s94, %s108
    %p110 = scmp.eq.s32.totalorder %s21, 0
    %p111 = por %p109, %p110
    %s113 = sadd.s32 %s112, 1
    %p116 = scmp.eq.s32.totalorder %s15, 1
    %p117 = scmp.ne.s32.totalorder %s112, %s114
    %p118 = scmp.eq.s32.totalorder %s15, 0
    %p119 = por %p117, %p118
    %p120 = scmp.ne.s32.totalorder %s112, %s114
    %p121 = scmp.eq.s32.totalorder %s20, 1
    %p122 = por %p120, %p121
    %p123 = scmp.ne.s32.totalorder %s114, %s115
    %p124 = scmp.eq.s32.totalorder %s20, 0
    %p125 = por %p123, %p124
    %p126 = scmp.ne.s32.totalorder %s114, %s115
    %p127 = scmp.eq.s32.totalorder %s21, 1
    %p128 = por %p126, %p127
    %p130 = scmp.ne.s32.totalorder %s115, %s129
    %p131 = scmp.eq.s32.totalorder %s21, 0
    %p132 = por %p130, %p131
    %s134 = sadd.s32 %s133, 1
    %p137 = scmp.eq.s32.totalorder %s15, 1
    %p138 = scmp.ne.s32.totalorder %s133, %s135
    %p139 = scmp.eq.s32.totalorder %s15, 0
    %p140 = por %p138, %p139
    %p141 = scmp.ne.s32.totalorder %s133, %s135
    %p142 = scmp.eq.s32.totalorder %s20, 1
    %p143 = por %p141, %p142
    %p144 = scmp.ne.s32.totalorder %s135, %s136
    %p145 = scmp.eq.s32.totalorder %s20, 0
    %p146 = por %p144, %p145
    %p147 = scmp.ne.s32.totalorder %s135, %s136
    %p148 = scmp.eq.s32.totalorder %s21, 1
    %p149 = por %p147, %p148
    %p151 = scmp.ne.s32.totalorder %s136, %s150
    %p152 = scmp.eq.s32.totalorder %s21, 0
    %p153 = por %p151, %p152
    %s155 = sadd.s32 %s154, 1
    %p158 = scmp.eq.s32.totalorder %s15, 1
    %p159 = scmp.ne.s32.totalorder %s154, %s156
    %p160 = scmp.eq.s32.totalorder %s15, 0
    %p161 = por %p159, %p160
    %p162 = scmp.ne.s32.totalorder %s154, %s156
    %p163 = scmp.eq.s32.totalorder %s20, 1
    %p164 = por %p162, %p163
    %p165 = scmp.ne.s32.totalorder %s156, %s157
    %p166 = scmp.eq.s32.totalorder %s20, 0
    %p167 = por %p165, %p166
    %p168 = scmp.ne.s32.totalorder %s156, %s157
    %p169 = scmp.eq.s32.totalorder %s21, 1
    %p170 = por %p168, %p169
    %p172 = scmp.ne.s32.totalorder %s157, %s171
    %p173 = scmp.eq.s32.totalorder %s21, 0
    %p174 = por %p172, %p173
    %s176 = sadd.s32 %s175, 1
    %p179 = scmp.eq.s32.totalorder %s15, 1
    %p180 = scmp.ne.s32.totalorder %s175, %s177
    %p181 = scmp.eq.s32.totalorder %s15, 0
    %p182 = por %p180, %p181
    %p183 = scmp.ne.s32.totalorder %s175, %s177
    %p184 = scmp.eq.s32.totalorder %s20, 1
    %p185 = por %p183, %p184
    %p186 = scmp.ne.s32.totalorder %s177, %s178
    %p187 = scmp.eq.s32.totalorder %s20, 0
    %p188 = por %p186, %p187
    %p189 = scmp.ne.s32.totalorder %s177, %s178
    %p190 = scmp.eq.s32.totalorder %s21, 1
    %p191 = por %p189, %p190
    %p193 = scmp.ne.s32.totalorder %s178, %s192
    %p194 = scmp.eq.s32.totalorder %s21, 0
    %p195 = por %p193, %p194
    %s197 = sadd.s32 %s196, 1
    %p200 = scmp.eq.s32.totalorder %s15, 1
    %p201 = scmp.ne.s32.totalorder %s196, %s198
    %p202 = scmp.eq.s32.totalorder %s15, 0
    %p203 = por %p201, %p202
    %p204 = scmp.ne.s32.totalorder %s196, %s198
    %p205 = scmp.eq.s32.totalorder %s20, 1
    %p206 = por %p204, %p205
    %p207 = scmp.ne.s32.totalorder %s198, %s199
    %p208 = scmp.eq.s32.totalorder %s20, 0
    %p209 = por %p207, %p208
    %p210 = scmp.ne.s32.totalorder %s198, %s199
    %p211 = scmp.eq.s32.totalorder %s21, 1
    %p212 = por %p210, %p211
    %p214 = scmp.ne.s32.totalorder %s199, %s213
    %p215 = scmp.eq.s32.totalorder %s21, 0
    %p216 = por %p214, %p215
    %s217 = ssub.s32 %s15, %s22
    %p218 = scmp.eq.s32.totalorder %s217, 0
    %s220 = sadd.s32 %s219, 1
    %s221 = scalar_select %p218, %s219, %s220
    %p224 = pneg %p218
    %p225 = scmp.eq.s32.totalorder %s15, 1
    %p226 = por %p224, %p225
    %p227 = scmp.ne.s32.totalorder %s219, %s222
    %p228 = scmp.eq.s32.totalorder %s15, 0
    %p229 = por %p227, %p228
    %p230 = scmp.ne.s32.totalorder %s219, %s222
    %p231 = scmp.eq.s32.totalorder %s20, 1
    %p232 = por %p230, %p231
    %p233 = scmp.ne.s32.totalorder %s222, %s223
    %p234 = scmp.eq.s32.totalorder %s20, 0
    %p235 = por %p233, %p234
    %p236 = scmp.ne.s32.totalorder %s222, %s223
    %p237 = scmp.eq.s32.totalorder %s21, 1
    %p238 = por %p236, %p237
    %p240 = scmp.ne.s32.totalorder %s223, %s239
    %p241 = scmp.eq.s32.totalorder %s21, 0
    %p242 = por %p240, %p241
    %p243 = scmp.le.s32.totalorder 1, %s15
    %p244 = scmp.lt.s32.totalorder %s15, 3
    %p245 = pnand %p243, %p244
    %p246 = pneg %p245
    // Predicated region
    $region9: #{regressor_forward.1} parent=5 // pred_check
      _
    $region10: #{regressor_forward.1} parent=5 // pred_check_branch
      %248 = sbr.rel (%p245) target = $region12
    $region11: #{regressor_forward.1} parent=5 // pred_region
      %s249 = ssub.s32 %s15, 1
      // Predicated region
      $region13: #{regressor_forward.1} parent=11 // pred_check
        %p250 = pneg %p62
      $region14: #{regressor_forward.1} parent=11 // pred_check_branch
        %252 = sbr.rel (%p250) target = $region16
      $region15: #{regressor_forward.1} parent=11 // pred_region
        _
      $region16: #{regressor_forward.1} parent=11 // pred_fallthru
        _
      // Predicated region
      $region17: #{regressor_forward.1} parent=11 // pred_check
        %p253 = pneg %p83
      $region18: #{regressor_forward.1} parent=11 // pred_check_branch
        %255 = sbr.rel (%p253) target = $region20
      $region19: #{regressor_forward.1} parent=11 // pred_region
        _
      $region20: #{regressor_forward.1} parent=11 // pred_fallthru
        _
      // Predicated region
      $region21: #{regressor_forward.1} parent=11 // pred_check
        %p256 = pneg %p104
      $region22: #{regressor_forward.1} parent=11 // pred_check_branch
        %258 = sbr.rel (%p256) target = $region24
      $region23: #{regressor_forward.1} parent=11 // pred_region
        _
      $region24: #{regressor_forward.1} parent=11 // pred_fallthru
        _
      // Predicated region
      $region25: #{regressor_forward.1} parent=11 // pred_check
        %p259 = pneg %p125
      $region26: #{regressor_forward.1} parent=11 // pred_check_branch
        %261 = sbr.rel (%p259) target = $region28
      $region27: #{regressor_forward.1} parent=11 // pred_region
        _
      $region28: #{regressor_forward.1} parent=11 // pred_fallthru
        _
      // Predicated region
      $region29: #{regressor_forward.1} parent=11 // pred_check
        %p262 = pneg %p146
      $region30: #{regressor_forward.1} parent=11 // pred_check_branch
        %264 = sbr.rel (%p262) target = $region32
      $region31: #{regressor_forward.1} parent=11 // pred_region
        _
      $region32: #{regressor_forward.1} parent=11 // pred_fallthru
        _
      // Predicated region
      $region33: #{regressor_forward.1} parent=11 // pred_check
        %p265 = pneg %p167
      $region34: #{regressor_forward.1} parent=11 // pred_check_branch
        %267 = sbr.rel (%p265) target = $region36
      $region35: #{regressor_forward.1} parent=11 // pred_region
        _
      $region36: #{regressor_forward.1} parent=11 // pred_fallthru
        _
      // Predicated region
      $region37: #{regressor_forward.1} parent=11 // pred_check
        %p268 = pneg %p188
      $region38: #{regressor_forward.1} parent=11 // pred_check_branch
        %270 = sbr.rel (%p268) target = $region40
      $region39: #{regressor_forward.1} parent=11 // pred_region
        _
      $region40: #{regressor_forward.1} parent=11 // pred_fallthru
        _
      // Predicated region
      $region41: #{regressor_forward.1} parent=11 // pred_check
        %p271 = pneg %p209
      $region42: #{regressor_forward.1} parent=11 // pred_check_branch
        %273 = sbr.rel (%p271) target = $region44
      $region43: #{regressor_forward.1} parent=11 // pred_region
        _
      $region44: #{regressor_forward.1} parent=11 // pred_fallthru
        _
    $region12: #{regressor_forward.1} parent=5 // pred_fallthru
      _
    %p274 = scmp.lt.s32.totalorder %s15, 2
    // Predicated region
    $region45: #{regressor_forward.1} parent=5 // pred_check
      %p275 = pneg %p274
    $region46: #{regressor_forward.1} parent=5 // pred_check_branch
      %277 = sbr.rel (%p275) target = $region48
    $region47: #{regressor_forward.1} parent=5 // pred_region
      // Predicated region
      $region49: #{regressor_forward.1} parent=47 // pred_check
        %p278 = pneg %p35
      $region50: #{regressor_forward.1} parent=47 // pred_check_branch
        %280 = sbr.rel (%p278) target = $region52
      $region51: #{regressor_forward.1} parent=47 // pred_region
        %s281 = smul.u32 32, %s15
        %p282 = scmp.lt.s32.totalorder %s281, 63
        %s283 = scalar_select %p282, %s281, 63
        %s284 = smul.addr %s283, 8
        %s285 = scalar_lea.vmem %s0, %s284
        %s286 = smul.u32 32, %s15
      $region52: #{regressor_forward.1} parent=47 // pred_fallthru
        _
    $region48: #{regressor_forward.1} parent=5 // pred_fallthru
      _
    %p287 = scmp.le.s32.totalorder 1, %s15
    %p288 = scmp.lt.s32.totalorder %s15, 3
    %p289 = pnand %p287, %p288
    %p290 = pneg %p289
    // Predicated region
    $region53: #{regressor_forward.1} parent=5 // pred_check
      _
    $region54: #{regressor_forward.1} parent=5 // pred_check_branch
      %292 = sbr.rel (%p289) target = $region56
    $region55: #{regressor_forward.1} parent=5 // pred_region
      %s293 = ssub.s32 %s15, 1
      %s294 = smul.u32 32, %s20
      %p295 = scmp.lt.s32.totalorder %s294, 63
      %s296 = scalar_select %p295, %s294, 63
      %s297 = smul.addr %s296, 8
      %s298 = scalar_lea.vmem %s0, %s297
      %p299 = pneg %p41
      %p300 = pneg %p38
      %p301 = pneg %p62
      %p302 = pneg %p59
      %p303 = pneg %p83
      %p304 = pneg %p80
      %p305 = pneg %p104
      %p306 = pneg %p101
      %p307 = pneg %p125
      %p308 = pneg %p122
      %p309 = pneg %p146
      %p310 = pneg %p143
      %p311 = pneg %p167
      %p312 = pneg %p164
      %p313 = pneg %p188
      %p314 = pneg %p185
      %p315 = pneg %p209
      %p316 = pneg %p206
      %p317 = pneg %p235
      %p318 = pneg %p232
      %p319 = scmp.lt.s32.totalorder %s20, 1
      %s320 = scalar_select %p319, %s20, 1
      %s321 = smul.addr %s320, 2
      %s322 = smul.addr %s321, 4
      %s323 = scalar_lea.vmem %s9, %s322
      %s324 = smul.u32 32, %s20
      %p325 = scmp.lt.s32.totalorder %s324, 63
      %s326 = scalar_select %p325, %s324, 63
      %s327 = smul.addr %s326, 8
      %s328 = scalar_lea.vmem %s0, %s327
      %s329 = smul.u32 32, %s20
      %p330 = scmp.lt.s32.totalorder %s20, 1
      %s331 = scalar_select %p330, %s20, 1
      %s332 = smul.addr %s331, 2
      %s333 = smul.addr %s332, 4
      %s334 = scalar_lea.vmem %s9, %s333
      %vm335 = vcmask 261120
      %336 = vst.msk [vmem:[#allocation2] sm:$0xff] %vm335, 0.0
      %337 = vst.msk [vmem:[#allocation2 + $0x8] sm:$0xff] %vm335, 0.0
      %vm338 = vcmask 254976
      %339 = vst.msk [vmem:[#allocation2 + $0x10] sm:$0x3] %vm338, 0.0
      %s340 = scalar_lea.vmem [#allocation2], 408
      %341 = vst.msk [vmem:[%s340] sm:$0xff] %vm335, 0.0
      %342 = vst.msk [vmem:[%s340 + $0x8] sm:$0xff] %vm335, 0.0
      %343 = vst.msk [vmem:[%s340 + $0x10] sm:$0x3] %vm338, 0.0
      %vm344 = vcmask 253952
      %345 = vst.msk [vmem:[#allocation2] sm:$0x1] %vm344, 0.0
      %346 = vst.msk [vmem:[#allocation2 + $0x18] sm:$0x1] %vm344, 0.0
      %347 = vst.msk [vmem:[#allocation2 + $0x30] sm:$0x1] %vm344, 0.0
      %348 = vst.msk [vmem:[#allocation2 + $0x48] sm:$0x1] %vm344, 0.0
      %349 = vst.msk [vmem:[#allocation2 + $0x60] sm:$0x1] %vm344, 0.0
      %350 = vst.msk [vmem:[#allocation2 + $0x78] sm:$0x1] %vm344, 0.0
      %351 = vst.msk [vmem:[#allocation2 + $0x90] sm:$0x1] %vm344, 0.0
      %352 = vst.msk [vmem:[#allocation2 + $0xa8] sm:$0x1] %vm344, 0.0
      %353 = vst.msk [vmem:[#allocation2 + $0xc0] sm:$0x1] %vm344, 0.0
      %354 = vst.msk [vmem:[#allocation2 + $0xd8] sm:$0x1] %vm344, 0.0
      %355 = vst.msk [vmem:[#allocation2 + $0xf0] sm:$0x1] %vm344, 0.0
      %356 = vst.msk [vmem:[#allocation2 + $0x108] sm:$0x1] %vm344, 0.0
      %357 = vst.msk [vmem:[#allocation2 + $0x120] sm:$0x1] %vm344, 0.0
      %358 = vst.msk [vmem:[#allocation2 + $0x138] sm:$0x1] %vm344, 0.0
      %359 = vst.msk [vmem:[#allocation2 + $0x150] sm:$0x1] %vm344, 0.0
      %360 = vst.msk [vmem:[#allocation2 + $0x168] sm:$0x1] %vm344, 0.0
      %361 = vst.msk [vmem:[#allocation2 + $0x180] sm:$0x1] %vm344, 0.0
      %362 = vst.msk [vmem:[#allocation2 + $0x198] sm:$0x1] %vm344, 0.0
      %363 = vst.msk [vmem:[#allocation2 + $0x11] sm:$0x1] %vm344, 0.0
      %364 = vst.msk [vmem:[#allocation2 + $0x29] sm:$0x1] %vm344, 0.0
      %365 = vst.msk [vmem:[#allocation2 + $0x41] sm:$0x1] %vm344, 0.0
      %366 = vst.msk [vmem:[#allocation2 + $0x59] sm:$0x1] %vm344, 0.0
      %367 = vst.msk [vmem:[#allocation2 + $0x71] sm:$0x1] %vm344, 0.0
      %368 = vst.msk [vmem:[#allocation2 + $0x89] sm:$0x1] %vm344, 0.0
      %369 = vst.msk [vmem:[#allocation2 + $0xa1] sm:$0x1] %vm344, 0.0
      %370 = vst.msk [vmem:[#allocation2 + $0xb9] sm:$0x1] %vm344, 0.0
      %371 = vst.msk [vmem:[#allocation2 + $0xd1] sm:$0x1] %vm344, 0.0
      %372 = vst.msk [vmem:[#allocation2 + $0xe9] sm:$0x1] %vm344, 0.0
      %373 = vst.msk [vmem:[#allocation2 + $0x101] sm:$0x1] %vm344, 0.0
      %374 = vst.msk [vmem:[#allocation2 + $0x119] sm:$0x1] %vm344, 0.0
      %375 = vst.msk [vmem:[#allocation2 + $0x131] sm:$0x1] %vm344, 0.0
      %376 = vst.msk [vmem:[#allocation2 + $0x149] sm:$0x1] %vm344, 0.0
      %377 = vst.msk [vmem:[#allocation2 + $0x161] sm:$0x1] %vm344, 0.0
      %378 = vst.msk [vmem:[#allocation2 + $0x179] sm:$0x1] %vm344, 0.0
      %379 = vst.msk [vmem:[#allocation2 + $0x191] sm:$0x1] %vm344, 0.0
      %380 = vst.msk [vmem:[#allocation2 + $0x1a9] sm:$0x1] %vm344, 0.0
      %vm381 = vcmask 523264
      %382 = vst.msk [vmem:[#allocation3] sm:$0xff] %vm381, 0.0
      %383 = vst.msk [vmem:[#allocation3 + $0x8] sm:$0xff] %vm381, 0.0
      %vm384 = vcmask 517120
      %385 = vst.msk [vmem:[#allocation3 + $0x10] sm:$0x3] %vm384, 0.0
      %s386 = scalar_lea.vmem [#allocation3], 408
      %387 = vst.msk [vmem:[%s386] sm:$0xff] %vm381, 0.0
      %388 = vst.msk [vmem:[%s386 + $0x8] sm:$0xff] %vm381, 0.0
      %389 = vst.msk [vmem:[%s386 + $0x10] sm:$0x3] %vm384, 0.0
      %vm390 = vcmask 516096
      %391 = vst.msk [vmem:[#allocation3] sm:$0x1] %vm390, 0.0
      %392 = vst.msk [vmem:[#allocation3 + $0x18] sm:$0x1] %vm390, 0.0
      %393 = vst.msk [vmem:[#allocation3 + $0x30] sm:$0x1] %vm390, 0.0
      %394 = vst.msk [vmem:[#allocation3 + $0x48] sm:$0x1] %vm390, 0.0
      %395 = vst.msk [vmem:[#allocation3 + $0x60] sm:$0x1] %vm390, 0.0
      %396 = vst.msk [vmem:[#allocation3 + $0x78] sm:$0x1] %vm390, 0.0
      %397 = vst.msk [vmem:[#allocation3 + $0x90] sm:$0x1] %vm390, 0.0
      %398 = vst.msk [vmem:[#allocation3 + $0xa8] sm:$0x1] %vm390, 0.0
      %399 = vst.msk [vmem:[#allocation3 + $0xc0] sm:$0x1] %vm390, 0.0
      %400 = vst.msk [vmem:[#allocation3 + $0xd8] sm:$0x1] %vm390, 0.0
      %401 = vst.msk [vmem:[#allocation3 + $0xf0] sm:$0x1] %vm390, 0.0
      %402 = vst.msk [vmem:[#allocation3 + $0x108] sm:$0x1] %vm390, 0.0
      %403 = vst.msk [vmem:[#allocation3 + $0x120] sm:$0x1] %vm390, 0.0
      %404 = vst.msk [vmem:[#allocation3 + $0x138] sm:$0x1] %vm390, 0.0
      %405 = vst.msk [vmem:[#allocation3 + $0x150] sm:$0x1] %vm390, 0.0
      %406 = vst.msk [vmem:[#allocation3 + $0x168] sm:$0x1] %vm390, 0.0
      %407 = vst.msk [vmem:[#allocation3 + $0x180] sm:$0x1] %vm390, 0.0
      %408 = vst.msk [vmem:[#allocation3 + $0x198] sm:$0x1] %vm390, 0.0
      %409 = vst.msk [vmem:[#allocation3 + $0x11] sm:$0x1] %vm390, 0.0
      %410 = vst.msk [vmem:[#allocation3 + $0x29] sm:$0x1] %vm390, 0.0
      %411 = vst.msk [vmem:[#allocation3 + $0x41] sm:$0x1] %vm390, 0.0
      %412 = vst.msk [vmem:[#allocation3 + $0x59] sm:$0x1] %vm390, 0.0
      %413 = vst.msk [vmem:[#allocation3 + $0x71] sm:$0x1] %vm390, 0.0
      %414 = vst.msk [vmem:[#allocation3 + $0x89] sm:$0x1] %vm390, 0.0
      %415 = vst.msk [vmem:[#allocation3 + $0xa1] sm:$0x1] %vm390, 0.0
      %416 = vst.msk [vmem:[#allocation3 + $0xb9] sm:$0x1] %vm390, 0.0
      %417 = vst.msk [vmem:[#allocation3 + $0xd1] sm:$0x1] %vm390, 0.0
      %418 = vst.msk [vmem:[#allocation3 + $0xe9] sm:$0x1] %vm390, 0.0
      %419 = vst.msk [vmem:[#allocation3 + $0x101] sm:$0x1] %vm390, 0.0
      %420 = vst.msk [vmem:[#allocation3 + $0x119] sm:$0x1] %vm390, 0.0
      %421 = vst.msk [vmem:[#allocation3 + $0x131] sm:$0x1] %vm390, 0.0
      %422 = vst.msk [vmem:[#allocation3 + $0x149] sm:$0x1] %vm390, 0.0
      %423 = vst.msk [vmem:[#allocation3 + $0x161] sm:$0x1] %vm390, 0.0
      %424 = vst.msk [vmem:[#allocation3 + $0x179] sm:$0x1] %vm390, 0.0
      %425 = vst.msk [vmem:[#allocation3 + $0x191] sm:$0x1] %vm390, 0.0
      %426 = vst.msk [vmem:[#allocation3 + $0x1a9] sm:$0x1] %vm390, 0.0
      %v427 = vld [vmem:[%s328] sm:$0xff]
      %v428 = vld [vmem:[%s328 + $0x8] sm:$0xff]
      %v429 = vld [vmem:[%s328 + $0x10] sm:$0xff]
      %v430 = vld [vmem:[%s328 + $0x18] sm:$0xff]
      %v431 = vld [vmem:[%s328 + $0x20] sm:$0xff]
      %v432 = vld [vmem:[%s328 + $0x28] sm:$0xff]
      %v433 = vld [vmem:[%s328 + $0x30] sm:$0xff]
      %v434 = vld [vmem:[%s328 + $0x38] sm:$0xff]
      %v435 = vld [vmem:[%s328 + $0x40] sm:$0xff]
      %v436 = vld [vmem:[%s328 + $0x48] sm:$0xff]
      %v437 = vld [vmem:[%s328 + $0x50] sm:$0xff]
      %v438 = vld [vmem:[%s328 + $0x58] sm:$0xff]
      %v439 = vld [vmem:[%s328 + $0x60] sm:$0xff]
      %v440 = vld [vmem:[%s328 + $0x68] sm:$0xff]
      %v441 = vld [vmem:[%s328 + $0x70] sm:$0xff]
      %v442 = vld [vmem:[%s328 + $0x78] sm:$0xff]
      %v443 = vld [vmem:[%s328 + $0x80] sm:$0xff]
      %v444 = vld [vmem:[%s328 + $0x88] sm:$0xff]
      %v445 = vld [vmem:[%s328 + $0x90] sm:$0xff]
      %v446 = vld [vmem:[%s328 + $0x98] sm:$0xff]
      %v447 = vld [vmem:[%s328 + $0xa0] sm:$0xff]
      %v448 = vld [vmem:[%s328 + $0xa8] sm:$0xff]
      %v449 = vld [vmem:[%s328 + $0xb0] sm:$0xff]
      %v450 = vld [vmem:[%s328 + $0xb8] sm:$0xff]
      %v451 = vld [vmem:[%s328 + $0xc0] sm:$0xff]
      %v452 = vld [vmem:[%s328 + $0xc8] sm:$0xff]
      %v453 = vld [vmem:[%s328 + $0xd0] sm:$0xff]
      %v454 = vld [vmem:[%s328 + $0xd8] sm:$0xff]
      %v455 = vld [vmem:[%s328 + $0xe0] sm:$0xff]
      %v456 = vld [vmem:[%s328 + $0xe8] sm:$0xff]
      %v457 = vld [vmem:[%s328 + $0xf0] sm:$0xff]
      %v458 = vld [vmem:[%s328 + $0xf8] sm:$0xff]
      %v459 = vld [vmem:[%s1] sm:$0xff]
      %v460 = vld [vmem:[%s1 + $0x8] sm:$0xff]
      %v461 = vld [vmem:[%s1 + $0x10] sm:$0xff]
      %v462 = vld [vmem:[%s1 + $0x18] sm:$0xff]
      %v463 = vld [vmem:[%s1 + $0x20] sm:$0xff]
      %v464 = vld [vmem:[%s1 + $0x28] sm:$0xff]
      %v465 = vld [vmem:[%s1 + $0x30] sm:$0xff]
      %v466 = vld [vmem:[%s1 + $0x38] sm:$0xff]
      %v467 = vld [vmem:[%s1 + $0x40] sm:$0xff]
      %v468 = vld [vmem:[%s1 + $0x48] sm:$0xff]
      %v469 = vld [vmem:[%s1 + $0x50] sm:$0xff]
      %v470 = vld [vmem:[%s1 + $0x58] sm:$0xff]
      %v471 = vld [vmem:[%s1 + $0x60] sm:$0xff]
      %v472 = vld [vmem:[%s1 + $0x68] sm:$0xff]
      %v473 = vld [vmem:[%s1 + $0x70] sm:$0xff]
      %v474 = vld [vmem:[%s1 + $0x78] sm:$0xff]
      %v475 = vld [vmem:[%s2] sm:$0x1]
      %v477 = vlaneseq
      %v478 = vshrl.u32 %v477, 7
      %v479 = vsub.s32 0, %v478
      %v480 = vrot.slane %v475, %v479
      %482 = vmatprep.subr.mxu0 0.0
      %483 = vmatpush1.msra.mxu0 %v474
      %484 = vmatprep.subr.mxu0 0.0
      %485 = vmatpush1.msra.mxu0 %v473
      %486 = vmatprep.subr.mxu0 0.0
      %487 = vmatpush1.msra.mxu0 %v472
      %488 = vmatprep.subr.mxu0 0.0
      %489 = vmatpush1.msra.mxu0 %v471
      %490 = vmatprep.subr.mxu0 0.0
      %491 = vmatpush1.msra.mxu0 %v470
      %492 = vmatprep.subr.mxu0 0.0
      %493 = vmatpush1.msra.mxu0 %v469
      %494 = vmatprep.subr.mxu0 0.0
      %495 = vmatpush1.msra.mxu0 %v468
      %496 = vmatprep.subr.mxu0 0.0
      %497 = vmatpush1.msra.mxu0 %v467
      %498 = vmatprep.subr.mxu0 0.0
      %499 = vmatpush1.msra.mxu0 %v466
      %500 = vmatprep.subr.mxu0 0.0
      %501 = vmatpush1.msra.mxu0 %v465
      %502 = vmatprep.subr.mxu0 0.0
      %503 = vmatpush1.msra.mxu0 %v464
      %504 = vmatprep.subr.mxu0 0.0
      %505 = vmatpush1.msra.mxu0 %v463
      %506 = vmatprep.subr.mxu0 0.0
      %507 = vmatpush1.msra.mxu0 %v462
      %508 = vmatprep.subr.mxu0 0.0
      %509 = vmatpush1.msra.mxu0 %v461
      %510 = vmatprep.subr.mxu0 0.0
      %511 = vmatpush1.msra.mxu0 %v460
      %512 = vmatprep.subr.mxu0 0.0
      %513 = vmatpush1.msra.mxu0 %v459
      %514 = vmatprep.subr.mxu0 0.0
      %515 = vmatpush2.msra.mxu0 0.0
      %516 = vmatprep.subr.mxu0 0.0
      %517 = vmatpush2.msra.mxu0 0.0
      %518 = vmatprep.subr.mxu0 0.0
      %519 = vmatpush2.msra.mxu0 0.0
      %520 = vmatprep.subr.mxu0 0.0
      %521 = vmatpush2.msra.mxu0 0.0
      %522 = vmatprep.subr.mxu0 0.0
      %523 = vmatpush2.msra.mxu0 0.0
      %524 = vmatprep.subr.mxu0 0.0
      %525 = vmatpush2.msra.mxu0 0.0
      %526 = vmatprep.subr.mxu0 0.0
      %527 = vmatpush2.msra.mxu0 0.0
      %528 = vmatprep.subr.mxu0 0.0
      %529 = vmatpush2.msra.mxu0 0.0
      %530 = vmatprep.subr.mxu0 0.0
      %531 = vmatpush2.msra.mxu0 0.0
      %532 = vmatprep.subr.mxu0 0.0
      %533 = vmatpush2.msra.mxu0 0.0
      %534 = vmatprep.subr.mxu0 0.0
      %535 = vmatpush2.msra.mxu0 0.0
      %536 = vmatprep.subr.mxu0 0.0
      %537 = vmatpush2.msra.mxu0 0.0
      %538 = vmatprep.subr.mxu0 0.0
      %539 = vmatpush2.msra.mxu0 0.0
      %540 = vmatprep.subr.mxu0 0.0
      %541 = vmatpush2.msra.mxu0 0.0
      %542 = vmatprep.subr.mxu0 0.0
      %543 = vmatpush2.msra.mxu0 0.0
      %544 = vmatprep.subr.mxu0 0.0
      %545 = vmatpush2.msra.mxu0 0.0
      %546 = vmatprep.mubr.f32.mxu0 0.0
      %547 = vmatmul.mubr.f32.gmra.mxu0 %v427
      %v548 = vpop.f32.mrf.mxu0
      %v549 = vadd.f32 %v480, %v548
      %v550 = vpop.f32.mrf.mxu0
      %551 = vmatprep.mubr.f32.mxu0 0.0
      %552 = vmatmul.mubr.f32.gmra.mxu0 %v428
      %v553 = vpop.f32.mrf.mxu0
      %v554 = vadd.f32 %v480, %v553
      %v555 = vpop.f32.mrf.mxu0
      %556 = vmatprep.mubr.f32.mxu0 0.0
      %557 = vmatmul.mubr.f32.gmra.mxu0 %v429
      %v558 = vpop.f32.mrf.mxu0
      %v559 = vadd.f32 %v480, %v558
      %v560 = vpop.f32.mrf.mxu0
      %561 = vmatprep.mubr.f32.mxu0 0.0
      %562 = vmatmul.mubr.f32.gmra.mxu0 %v430
      %v563 = vpop.f32.mrf.mxu0
      %v564 = vadd.f32 %v480, %v563
      %v565 = vpop.f32.mrf.mxu0
      %566 = vmatprep.mubr.f32.mxu0 0.0
      %567 = vmatmul.mubr.f32.gmra.mxu0 %v431
      %v568 = vpop.f32.mrf.mxu0
      %v569 = vadd.f32 %v480, %v568
      %v570 = vpop.f32.mrf.mxu0
      %571 = vmatprep.mubr.f32.mxu0 0.0
      %572 = vmatmul.mubr.f32.gmra.mxu0 %v432
      %v573 = vpop.f32.mrf.mxu0
      %v574 = vadd.f32 %v480, %v573
      %v575 = vpop.f32.mrf.mxu0
      %576 = vmatprep.mubr.f32.mxu0 0.0
      %577 = vmatmul.mubr.f32.gmra.mxu0 %v433
      %v578 = vpop.f32.mrf.mxu0
      %v579 = vadd.f32 %v480, %v578
      %v580 = vpop.f32.mrf.mxu0
      %581 = vmatprep.mubr.f32.mxu0 0.0
      %582 = vmatmul.mubr.f32.gmra.mxu0 %v434
      %v583 = vpop.f32.mrf.mxu0
      %v584 = vadd.f32 %v480, %v583
      %v585 = vpop.f32.mrf.mxu0
      %586 = vmatprep.mubr.f32.mxu0 0.0
      %587 = vmatmul.mubr.f32.gmra.mxu0 %v435
      %v588 = vpop.f32.mrf.mxu0
      %v589 = vadd.f32 %v480, %v588
      %v590 = vpop.f32.mrf.mxu0
      %591 = vmatprep.mubr.f32.mxu0 0.0
      %592 = vmatmul.mubr.f32.gmra.mxu0 %v436
      %v593 = vpop.f32.mrf.mxu0
      %v594 = vadd.f32 %v480, %v593
      %v595 = vpop.f32.mrf.mxu0
      %596 = vmatprep.mubr.f32.mxu0 0.0
      %597 = vmatmul.mubr.f32.gmra.mxu0 %v437
      %v598 = vpop.f32.mrf.mxu0
      %v599 = vadd.f32 %v480, %v598
      %v600 = vpop.f32.mrf.mxu0
      %601 = vmatprep.mubr.f32.mxu0 0.0
      %602 = vmatmul.mubr.f32.gmra.mxu0 %v438
      %v603 = vpop.f32.mrf.mxu0
      %v604 = vadd.f32 %v480, %v603
      %v605 = vpop.f32.mrf.mxu0
      %606 = vmatprep.mubr.f32.mxu0 0.0
      %607 = vmatmul.mubr.f32.gmra.mxu0 %v439
      %v608 = vpop.f32.mrf.mxu0
      %v609 = vadd.f32 %v480, %v608
      %v610 = vpop.f32.mrf.mxu0
      %611 = vmatprep.mubr.f32.mxu0 0.0
      %612 = vmatmul.mubr.f32.gmra.mxu0 %v440
      %v613 = vpop.f32.mrf.mxu0
      %v614 = vadd.f32 %v480, %v613
      %v615 = vpop.f32.mrf.mxu0
      %616 = vmatprep.mubr.f32.mxu0 0.0
      %617 = vmatmul.mubr.f32.gmra.mxu0 %v441
      %v618 = vpop.f32.mrf.mxu0
      %v619 = vadd.f32 %v480, %v618
      %v620 = vpop.f32.mrf.mxu0
      %621 = vmatprep.mubr.f32.mxu0 0.0
      %622 = vmatmul.mubr.f32.gmra.mxu0 %v442
      %v623 = vpop.f32.mrf.mxu0
      %v624 = vadd.f32 %v480, %v623
      %v625 = vpop.f32.mrf.mxu0
      %626 = vmatprep.mubr.f32.mxu0 0.0
      %627 = vmatmul.mubr.f32.gmra.mxu0 %v443
      %v628 = vpop.f32.mrf.mxu0
      %v629 = vadd.f32 %v480, %v628
      %v630 = vpop.f32.mrf.mxu0
      %631 = vmatprep.mubr.f32.mxu0 0.0
      %632 = vmatmul.mubr.f32.gmra.mxu0 %v444
      %v633 = vpop.f32.mrf.mxu0
      %v634 = vadd.f32 %v480, %v633
      %v635 = vpop.f32.mrf.mxu0
      %636 = vmatprep.mubr.f32.mxu0 0.0
      %637 = vmatmul.mubr.f32.gmra.mxu0 %v445
      %v638 = vpop.f32.mrf.mxu0
      %v639 = vadd.f32 %v480, %v638
      %v640 = vpop.f32.mrf.mxu0
      %641 = vmatprep.mubr.f32.mxu0 0.0
      %642 = vmatmul.mubr.f32.gmra.mxu0 %v446
      %v643 = vpop.f32.mrf.mxu0
      %v644 = vadd.f32 %v480, %v643
      %v645 = vpop.f32.mrf.mxu0
      %646 = vmatprep.mubr.f32.mxu0 0.0
      %647 = vmatmul.mubr.f32.gmra.mxu0 %v447
      %v648 = vpop.f32.mrf.mxu0
      %v649 = vadd.f32 %v480, %v648
      %v650 = vpop.f32.mrf.mxu0
      %651 = vmatprep.mubr.f32.mxu0 0.0
      %652 = vmatmul.mubr.f32.gmra.mxu0 %v448
      %v653 = vpop.f32.mrf.mxu0
      %v654 = vadd.f32 %v480, %v653
      %v655 = vpop.f32.mrf.mxu0
      %656 = vmatprep.mubr.f32.mxu0 0.0
      %657 = vmatmul.mubr.f32.gmra.mxu0 %v449
      %v658 = vpop.f32.mrf.mxu0
      %v659 = vadd.f32 %v480, %v658
      %v660 = vpop.f32.mrf.mxu0
      %661 = vmatprep.mubr.f32.mxu0 0.0
      %662 = vmatmul.mubr.f32.gmra.mxu0 %v450
      %v663 = vpop.f32.mrf.mxu0
      %v664 = vadd.f32 %v480, %v663
      %v665 = vpop.f32.mrf.mxu0
      %666 = vmatprep.mubr.f32.mxu0 0.0
      %667 = vmatmul.mubr.f32.gmra.mxu0 %v451
      %v668 = vpop.f32.mrf.mxu0
      %v669 = vadd.f32 %v480, %v668
      %v670 = vpop.f32.mrf.mxu0
      %671 = vmatprep.mubr.f32.mxu0 0.0
      %672 = vmatmul.mubr.f32.gmra.mxu0 %v452
      %v673 = vpop.f32.mrf.mxu0
      %v674 = vadd.f32 %v480, %v673
      %v675 = vpop.f32.mrf.mxu0
      %676 = vmatprep.mubr.f32.mxu0 0.0
      %677 = vmatmul.mubr.f32.gmra.mxu0 %v453
      %v678 = vpop.f32.mrf.mxu0
      %v679 = vadd.f32 %v480, %v678
      %v680 = vpop.f32.mrf.mxu0
      %681 = vmatprep.mubr.f32.mxu0 0.0
      %682 = vmatmul.mubr.f32.gmra.mxu0 %v454
      %v683 = vpop.f32.mrf.mxu0
      %v684 = vadd.f32 %v480, %v683
      %v685 = vpop.f32.mrf.mxu0
      %686 = vmatprep.mubr.f32.mxu0 0.0
      %687 = vmatmul.mubr.f32.gmra.mxu0 %v455
      %v688 = vpop.f32.mrf.mxu0
      %v689 = vadd.f32 %v480, %v688
      %v690 = vpop.f32.mrf.mxu0
      %691 = vmatprep.mubr.f32.mxu0 0.0
      %692 = vmatmul.mubr.f32.gmra.mxu0 %v456
      %v693 = vpop.f32.mrf.mxu0
      %v694 = vadd.f32 %v480, %v693
      %v695 = vpop.f32.mrf.mxu0
      %696 = vmatprep.mubr.f32.mxu0 0.0
      %697 = vmatmul.mubr.f32.gmra.mxu0 %v457
      %v698 = vpop.f32.mrf.mxu0
      %v699 = vadd.f32 %v480, %v698
      %v700 = vpop.f32.mrf.mxu0
      %701 = vmatprep.mubr.f32.mxu0 0.0
      %702 = vmatmul.mubr.f32.gmra.mxu0 %v458
      %v703 = vpop.f32.mrf.mxu0
      %v704 = vadd.f32 %v480, %v703
      %v705 = vpop.f32.mrf.mxu0
      %706 = vdwg.mxu0
      %s707 = scalar_lea.vmem [#allocation2], 24
      %708 = vst.msk [vmem:[%s707 + $0x1] sm:$0xff] %vm335, %v549
      %709 = vst.msk [vmem:[%s707 + $0x9] sm:$0xff] %vm335, %v554
      %710 = vst.msk [vmem:[%s707 + $0x19] sm:$0xff] %vm335, %v559
      %711 = vst.msk [vmem:[%s707 + $0x21] sm:$0xff] %vm335, %v564
      %712 = vst.msk [vmem:[%s707 + $0x31] sm:$0xff] %vm335, %v569
      %713 = vst.msk [vmem:[%s707 + $0x39] sm:$0xff] %vm335, %v574
      %714 = vst.msk [vmem:[%s707 + $0x49] sm:$0xff] %vm335, %v579
      %715 = vst.msk [vmem:[%s707 + $0x51] sm:$0xff] %vm335, %v584
      %716 = vst.msk [vmem:[%s707 + $0x61] sm:$0xff] %vm335, %v589
      %717 = vst.msk [vmem:[%s707 + $0x69] sm:$0xff] %vm335, %v594
      %718 = vst.msk [vmem:[%s707 + $0x79] sm:$0xff] %vm335, %v599
      %719 = vst.msk [vmem:[%s707 + $0x81] sm:$0xff] %vm335, %v604
      %720 = vst.msk [vmem:[%s707 + $0x91] sm:$0xff] %vm335, %v609
      %721 = vst.msk [vmem:[%s707 + $0x99] sm:$0xff] %vm335, %v614
      %722 = vst.msk [vmem:[%s707 + $0xa9] sm:$0xff] %vm335, %v619
      %723 = vst.msk [vmem:[%s707 + $0xb1] sm:$0xff] %vm335, %v624
      %724 = vst.msk [vmem:[%s707 + $0xc1] sm:$0xff] %vm335, %v629
      %725 = vst.msk [vmem:[%s707 + $0xc9] sm:$0xff] %vm335, %v634
      %726 = vst.msk [vmem:[%s707 + $0xd9] sm:$0xff] %vm335, %v639
      %727 = vst.msk [vmem:[%s707 + $0xe1] sm:$0xff] %vm335, %v644
      %728 = vst.msk [vmem:[%s707 + $0xf1] sm:$0xff] %vm335, %v649
      %729 = vst.msk [vmem:[%s707 + $0xf9] sm:$0xff] %vm335, %v654
      %730 = vst.msk [vmem:[%s707 + $0x109] sm:$0xff] %vm335, %v659
      %731 = vst.msk [vmem:[%s707 + $0x111] sm:$0xff] %vm335, %v664
      %732 = vst.msk [vmem:[%s707 + $0x121] sm:$0xff] %vm335, %v669
      %733 = vst.msk [vmem:[%s707 + $0x129] sm:$0xff] %vm335, %v674
      %734 = vst.msk [vmem:[%s707 + $0x139] sm:$0xff] %vm335, %v679
      %735 = vst.msk [vmem:[%s707 + $0x141] sm:$0xff] %vm335, %v684
      %736 = vst.msk [vmem:[%s707 + $0x151] sm:$0xff] %vm335, %v689
      %737 = vst.msk [vmem:[%s707 + $0x159] sm:$0xff] %vm335, %v694
      %738 = vst.msk [vmem:[%s707 + $0x169] sm:$0xff] %vm335, %v699
      %739 = vst.msk [vmem:[%s707 + $0x171] sm:$0xff] %vm335, %v704
      %v740 = vld [vmem:[#allocation2] sm:$0xff]
      %v741 = vld [vmem:[#allocation2 + $0x8] sm:$0xff]
      %v742 = vld [vmem:[#allocation2 + $0x18] sm:$0xff]
      %v743 = vld [vmem:[#allocation2 + $0x20] sm:$0xff]
      %v744 = vld [vmem:[#allocation2 + $0x30] sm:$0xff]
      %v745 = vld [vmem:[#allocation2 + $0x38] sm:$0xff]
      %v746 = vld [vmem:[#allocation2 + $0x48] sm:$0xff]
      %v747 = vld [vmem:[#allocation2 + $0x50] sm:$0xff]
      %v748 = vld [vmem:[#allocation2 + $0x60] sm:$0xff]
      %v749 = vld [vmem:[#allocation2 + $0x68] sm:$0xff]
      %v750 = vld [vmem:[#allocation2 + $0x78] sm:$0xff]
      %v751 = vld [vmem:[#allocation2 + $0x80] sm:$0xff]
      %v752 = vld [vmem:[#allocation2 + $0x90] sm:$0xff]
      %v753 = vld [vmem:[#allocation2 + $0x98] sm:$0xff]
      %v754 = vld [vmem:[#allocation2 + $0xa8] sm:$0xff]
      %v755 = vld [vmem:[#allocation2 + $0xb0] sm:$0xff]
      %v756 = vld [vmem:[#allocation2 + $0xc0] sm:$0xff]
      %v757 = vld [vmem:[#allocation2 + $0xc8] sm:$0xff]
      %v758 = vld [vmem:[#allocation2 + $0xd8] sm:$0xff]
      %v759 = vld [vmem:[#allocation2 + $0xe0] sm:$0xff]
      %v760 = vld [vmem:[#allocation2 + $0xf0] sm:$0xff]
      %v761 = vld [vmem:[#allocation2 + $0xf8] sm:$0xff]
      %v762 = vld [vmem:[#allocation2 + $0x108] sm:$0xff]
      %v763 = vld [vmem:[#allocation2 + $0x110] sm:$0xff]
      %v764 = vld [vmem:[#allocation2 + $0x120] sm:$0xff]
      %v765 = vld [vmem:[#allocation2 + $0x128] sm:$0xff]
      %v766 = vld [vmem:[#allocation2 + $0x138] sm:$0xff]
      %v767 = vld [vmem:[#allocation2 + $0x140] sm:$0xff]
      %v768 = vld [vmem:[#allocation2 + $0x150] sm:$0xff]
      %v769 = vld [vmem:[#allocation2 + $0x158] sm:$0xff]
      %v770 = vld [vmem:[#allocation2 + $0x168] sm:$0xff]
      %v771 = vld [vmem:[#allocation2 + $0x170] sm:$0xff]
      %772 = vst.msk [vmem:[#allocation4] sm:$0xff] %vm335, %v740
      %773 = vst.msk [vmem:[#allocation4 + $0x18] sm:$0xff] %vm335, %v741
      %774 = vst.msk [vmem:[#allocation4 + $0x30] sm:$0xff] %vm335, %v742
      %775 = vst.msk [vmem:[#allocation4 + $0x48] sm:$0xff] %vm335, %v743
      %776 = vst.msk [vmem:[#allocation4 + $0x60] sm:$0xff] %vm335, %v744
      %777 = vst.msk [vmem:[#allocation4 + $0x78] sm:$0xff] %vm335, %v745
      %778 = vst.msk [vmem:[#allocation4 + $0x90] sm:$0xff] %vm335, %v746
      %779 = vst.msk [vmem:[#allocation4 + $0xa8] sm:$0xff] %vm335, %v747
      %780 = vst.msk [vmem:[#allocation4 + $0xc0] sm:$0xff] %vm335, %v748
      %781 = vst.msk [vmem:[#allocation4 + $0xd8] sm:$0xff] %vm335, %v749
      %782 = vst.msk [vmem:[#allocation4 + $0xf0] sm:$0xff] %vm335, %v750
      %783 = vst.msk [vmem:[#allocation4 + $0x108] sm:$0xff] %vm335, %v751
      %784 = vst.msk [vmem:[#allocation4 + $0x120] sm:$0xff] %vm335, %v752
      %785 = vst.msk [vmem:[#allocation4 + $0x138] sm:$0xff] %vm335, %v753
      %786 = vst.msk [vmem:[#allocation4 + $0x150] sm:$0xff] %vm335, %v754
      %787 = vst.msk [vmem:[#allocation4 + $0x168] sm:$0xff] %vm335, %v755
      %788 = vst.msk [vmem:[#allocation4 + $0x180] sm:$0xff] %vm335, %v756
      %789 = vst.msk [vmem:[#allocation4 + $0x198] sm:$0xff] %vm335, %v757
      %790 = vst.msk [vmem:[#allocation4 + $0x1b0] sm:$0xff] %vm335, %v758
      %791 = vst.msk [vmem:[#allocation4 + $0x1c8] sm:$0xff] %vm335, %v759
      %792 = vst.msk [vmem:[#allocation4 + $0x1e0] sm:$0xff] %vm335, %v760
      %793 = vst.msk [vmem:[#allocation4 + $0x1f8] sm:$0xff] %vm335, %v761
      %794 = vst.msk [vmem:[#allocation4 + $0x210] sm:$0xff] %vm335, %v762
      %795 = vst.msk [vmem:[#allocation4 + $0x228] sm:$0xff] %vm335, %v763
      %796 = vst.msk [vmem:[#allocation4 + $0x240] sm:$0xff] %vm335, %v764
      %797 = vst.msk [vmem:[#allocation4 + $0x258] sm:$0xff] %vm335, %v765
      %798 = vst.msk [vmem:[#allocation4 + $0x270] sm:$0xff] %vm335, %v766
      %799 = vst.msk [vmem:[#allocation4 + $0x288] sm:$0xff] %vm335, %v767
      %800 = vst.msk [vmem:[#allocation4 + $0x2a0] sm:$0xff] %vm335, %v768
      %801 = vst.msk [vmem:[#allocation4 + $0x2b8] sm:$0xff] %vm335, %v769
      %802 = vst.msk [vmem:[#allocation4 + $0x2d0] sm:$0xff] %vm335, %v770
      %803 = vst.msk [vmem:[#allocation4 + $0x2e8] sm:$0xff] %vm335, %v771
      %v804 = vld [vmem:[#allocation2 + $0x1] sm:$0xff]
      %v805 = vld [vmem:[#allocation2 + $0x9] sm:$0xff]
      %v806 = vld [vmem:[#allocation2 + $0x19] sm:$0xff]
      %v807 = vld [vmem:[#allocation2 + $0x21] sm:$0xff]
      %v808 = vld [vmem:[#allocation2 + $0x31] sm:$0xff]
      %v809 = vld [vmem:[#allocation2 + $0x39] sm:$0xff]
      %v810 = vld [vmem:[#allocation2 + $0x49] sm:$0xff]
      %v811 = vld [vmem:[#allocation2 + $0x51] sm:$0xff]
      %v812 = vld [vmem:[#allocation2 + $0x61] sm:$0xff]
      %v813 = vld [vmem:[#allocation2 + $0x69] sm:$0xff]
      %v814 = vld [vmem:[#allocation2 + $0x79] sm:$0xff]
      %v815 = vld [vmem:[#allocation2 + $0x81] sm:$0xff]
      %v816 = vld [vmem:[#allocation2 + $0x91] sm:$0xff]
      %v817 = vld [vmem:[#allocation2 + $0x99] sm:$0xff]
      %v818 = vld [vmem:[#allocation2 + $0xa9] sm:$0xff]
      %v819 = vld [vmem:[#allocation2 + $0xb1] sm:$0xff]
      %v820 = vld [vmem:[#allocation2 + $0xc1] sm:$0xff]
      %v821 = vld [vmem:[#allocation2 + $0xc9] sm:$0xff]
      %v822 = vld [vmem:[#allocation2 + $0xd9] sm:$0xff]
      %v823 = vld [vmem:[#allocation2 + $0xe1] sm:$0xff]
      %v824 = vld [vmem:[#allocation2 + $0xf1] sm:$0xff]
      %v825 = vld [vmem:[#allocation2 + $0xf9] sm:$0xff]
      %v826 = vld [vmem:[#allocation2 + $0x109] sm:$0xff]
      %v827 = vld [vmem:[#allocation2 + $0x111] sm:$0xff]
      %v828 = vld [vmem:[#allocation2 + $0x121] sm:$0xff]
      %v829 = vld [vmem:[#allocation2 + $0x129] sm:$0xff]
      %v830 = vld [vmem:[#allocation2 + $0x139] sm:$0xff]
      %v831 = vld [vmem:[#allocation2 + $0x141] sm:$0xff]
      %v832 = vld [vmem:[#allocation2 + $0x151] sm:$0xff]
      %v833 = vld [vmem:[#allocation2 + $0x159] sm:$0xff]
      %v834 = vld [vmem:[#allocation2 + $0x169] sm:$0xff]
      %v835 = vld [vmem:[#allocation2 + $0x171] sm:$0xff]
      %868 = vrot.lane.b32.xlu0 %v804, 32
      %v869 = vpop.permute.xlu0 %868
      %870 = vrot.lane.b32.xlu0 %v805, 32
      %v871 = vpop.permute.xlu0 %870
      %872 = vrot.lane.b32.xlu0 %v806, 32
      %v873 = vpop.permute.xlu0 %872
      %874 = vrot.lane.b32.xlu0 %v807, 32
      %v875 = vpop.permute.xlu0 %874
      %876 = vrot.lane.b32.xlu0 %v808, 32
      %v877 = vpop.permute.xlu0 %876
      %878 = vrot.lane.b32.xlu0 %v809, 32
      %v879 = vpop.permute.xlu0 %878
      %880 = vrot.lane.b32.xlu0 %v810, 32
      %v881 = vpop.permute.xlu0 %880
      %882 = vrot.lane.b32.xlu0 %v811, 32
      %v883 = vpop.permute.xlu0 %882
      %884 = vrot.lane.b32.xlu0 %v812, 32
      %v885 = vpop.permute.xlu0 %884
      %886 = vrot.lane.b32.xlu0 %v813, 32
      %v887 = vpop.permute.xlu0 %886
      %888 = vrot.lane.b32.xlu0 %v814, 32
      %v889 = vpop.permute.xlu0 %888
      %890 = vrot.lane.b32.xlu0 %v815, 32
      %v891 = vpop.permute.xlu0 %890
      %892 = vrot.lane.b32.xlu0 %v816, 32
      %v893 = vpop.permute.xlu0 %892
      %894 = vrot.lane.b32.xlu0 %v817, 32
      %v895 = vpop.permute.xlu0 %894
      %896 = vrot.lane.b32.xlu0 %v818, 32
      %v897 = vpop.permute.xlu0 %896
      %898 = vrot.lane.b32.xlu0 %v819, 32
      %v899 = vpop.permute.xlu0 %898
      %900 = vrot.lane.b32.xlu0 %v820, 32
      %v901 = vpop.permute.xlu0 %900
      %902 = vrot.lane.b32.xlu0 %v821, 32
      %v903 = vpop.permute.xlu0 %902
      %904 = vrot.lane.b32.xlu0 %v822, 32
      %v905 = vpop.permute.xlu0 %904
      %906 = vrot.lane.b32.xlu0 %v823, 32
      %v907 = vpop.permute.xlu0 %906
      %908 = vrot.lane.b32.xlu0 %v824, 32
      %v909 = vpop.permute.xlu0 %908
      %910 = vrot.lane.b32.xlu0 %v825, 32
      %v911 = vpop.permute.xlu0 %910
      %912 = vrot.lane.b32.xlu0 %v826, 32
      %v913 = vpop.permute.xlu0 %912
      %914 = vrot.lane.b32.xlu0 %v827, 32
      %v915 = vpop.permute.xlu0 %914
      %916 = vrot.lane.b32.xlu0 %v828, 32
      %v917 = vpop.permute.xlu0 %916
      %918 = vrot.lane.b32.xlu0 %v829, 32
      %v919 = vpop.permute.xlu0 %918
      %920 = vrot.lane.b32.xlu0 %v830, 32
      %v921 = vpop.permute.xlu0 %920
      %922 = vrot.lane.b32.xlu0 %v831, 32
      %v923 = vpop.permute.xlu0 %922
      %924 = vrot.lane.b32.xlu0 %v832, 32
      %v925 = vpop.permute.xlu0 %924
      %926 = vrot.lane.b32.xlu0 %v833, 32
      %v927 = vpop.permute.xlu0 %926
      %928 = vrot.lane.b32.xlu0 %v834, 32
      %v929 = vpop.permute.xlu0 %928
      %930 = vrot.lane.b32.xlu0 %v835, 32
      %v931 = vpop.permute.xlu0 %930
      %vm964 = vcmask 523520
      %965 = vst.msk [vmem:[#allocation4] sm:$0xff] %vm964, %v869
      %966 = vst.msk [vmem:[#allocation4 + $0x18] sm:$0xff] %vm964, %v871
      %967 = vst.msk [vmem:[#allocation4 + $0x30] sm:$0xff] %vm964, %v873
      %968 = vst.msk [vmem:[#allocation4 + $0x48] sm:$0xff] %vm964, %v875
      %969 = vst.msk [vmem:[#allocation4 + $0x60] sm:$0xff] %vm964, %v877
      %970 = vst.msk [vmem:[#allocation4 + $0x78] sm:$0xff] %vm964, %v879
      %971 = vst.msk [vmem:[#allocation4 + $0x90] sm:$0xff] %vm964, %v881
      %972 = vst.msk [vmem:[#allocation4 + $0xa8] sm:$0xff] %vm964, %v883
      %973 = vst.msk [vmem:[#allocation4 + $0xc0] sm:$0xff] %vm964, %v885
      %974 = vst.msk [vmem:[#allocation4 + $0xd8] sm:$0xff] %vm964, %v887
      %975 = vst.msk [vmem:[#allocation4 + $0xf0] sm:$0xff] %vm964, %v889
      %976 = vst.msk [vmem:[#allocation4 + $0x108] sm:$0xff] %vm964, %v891
      %977 = vst.msk [vmem:[#allocation4 + $0x120] sm:$0xff] %vm964, %v893
      %978 = vst.msk [vmem:[#allocation4 + $0x138] sm:$0xff] %vm964, %v895
      %979 = vst.msk [vmem:[#allocation4 + $0x150] sm:$0xff] %vm964, %v897
      %980 = vst.msk [vmem:[#allocation4 + $0x168] sm:$0xff] %vm964, %v899
      %981 = vst.msk [vmem:[#allocation4 + $0x180] sm:$0xff] %vm964, %v901
      %982 = vst.msk [vmem:[#allocation4 + $0x198] sm:$0xff] %vm964, %v903
      %983 = vst.msk [vmem:[#allocation4 + $0x1b0] sm:$0xff] %vm964, %v905
      %984 = vst.msk [vmem:[#allocation4 + $0x1c8] sm:$0xff] %vm964, %v907
      %985 = vst.msk [vmem:[#allocation4 + $0x1e0] sm:$0xff] %vm964, %v909
      %986 = vst.msk [vmem:[#allocation4 + $0x1f8] sm:$0xff] %vm964, %v911
      %987 = vst.msk [vmem:[#allocation4 + $0x210] sm:$0xff] %vm964, %v913
      %988 = vst.msk [vmem:[#allocation4 + $0x228] sm:$0xff] %vm964, %v915
      %989 = vst.msk [vmem:[#allocation4 + $0x240] sm:$0xff] %vm964, %v917
      %990 = vst.msk [vmem:[#allocation4 + $0x258] sm:$0xff] %vm964, %v919
      %991 = vst.msk [vmem:[#allocation4 + $0x270] sm:$0xff] %vm964, %v921
      %992 = vst.msk [vmem:[#allocation4 + $0x288] sm:$0xff] %vm964, %v923
      %993 = vst.msk [vmem:[#allocation4 + $0x2a0] sm:$0xff] %vm964, %v925
      %994 = vst.msk [vmem:[#allocation4 + $0x2b8] sm:$0xff] %vm964, %v927
      %995 = vst.msk [vmem:[#allocation4 + $0x2d0] sm:$0xff] %vm964, %v929
      %996 = vst.msk [vmem:[#allocation4 + $0x2e8] sm:$0xff] %vm964, %v931
      %v997 = vld [vmem:[#allocation2 + $0x2] sm:$0xff]
      %v998 = vld [vmem:[#allocation2 + $0xa] sm:$0xff]
      %v999 = vld [vmem:[#allocation2 + $0x1a] sm:$0xff]
      %v1000 = vld [vmem:[#allocation2 + $0x22] sm:$0xff]
      %v1001 = vld [vmem:[#allocation2 + $0x32] sm:$0xff]
      %v1002 = vld [vmem:[#allocation2 + $0x3a] sm:$0xff]
      %v1003 = vld [vmem:[#allocation2 + $0x4a] sm:$0xff]
      %v1004 = vld [vmem:[#allocation2 + $0x52] sm:$0xff]
      %v1005 = vld [vmem:[#allocation2 + $0x62] sm:$0xff]
      %v1006 = vld [vmem:[#allocation2 + $0x6a] sm:$0xff]
      %v1007 = vld [vmem:[#allocation2 + $0x7a] sm:$0xff]
      %v1008 = vld [vmem:[#allocation2 + $0x82] sm:$0xff]
      %v1009 = vld [vmem:[#allocation2 + $0x92] sm:$0xff]
      %v1010 = vld [vmem:[#allocation2 + $0x9a] sm:$0xff]
      %v1011 = vld [vmem:[#allocation2 + $0xaa] sm:$0xff]
      %v1012 = vld [vmem:[#allocation2 + $0xb2] sm:$0xff]
      %v1013 = vld [vmem:[#allocation2 + $0xc2] sm:$0xff]
      %v1014 = vld [vmem:[#allocation2 + $0xca] sm:$0xff]
      %v1015 = vld [vmem:[#allocation2 + $0xda] sm:$0xff]
      %v1016 = vld [vmem:[#allocation2 + $0xe2] sm:$0xff]
      %v1017 = vld [vmem:[#allocation2 + $0xf2] sm:$0xff]
      %v1018 = vld [vmem:[#allocation2 + $0xfa] sm:$0xff]
      %v1019 = vld [vmem:[#allocation2 + $0x10a] sm:$0xff]
      %v1020 = vld [vmem:[#allocation2 + $0x112] sm:$0xff]
      %v1021 = vld [vmem:[#allocation2 + $0x122] sm:$0xff]
      %v1022 = vld [vmem:[#allocation2 + $0x12a] sm:$0xff]
      %v1023 = vld [vmem:[#allocation2 + $0x13a] sm:$0xff]
      %v1024 = vld [vmem:[#allocation2 + $0x142] sm:$0xff]
      %v1025 = vld [vmem:[#allocation2 + $0x152] sm:$0xff]
      %v1026 = vld [vmem:[#allocation2 + $0x15a] sm:$0xff]
      %v1027 = vld [vmem:[#allocation2 + $0x16a] sm:$0xff]
      %v1028 = vld [vmem:[#allocation2 + $0x172] sm:$0xff]
      %1061 = vrot.lane.b32.xlu0 %v997, 64
      %v1062 = vpop.permute.xlu0 %1061
      %1063 = vrot.lane.b32.xlu0 %v998, 64
      %v1064 = vpop.permute.xlu0 %1063
      %1065 = vrot.lane.b32.xlu0 %v999, 64
      %v1066 = vpop.permute.xlu0 %1065
      %1067 = vrot.lane.b32.xlu0 %v1000, 64
      %v1068 = vpop.permute.xlu0 %1067
      %1069 = vrot.lane.b32.xlu0 %v1001, 64
      %v1070 = vpop.permute.xlu0 %1069
      %1071 = vrot.lane.b32.xlu0 %v1002, 64
      %v1072 = vpop.permute.xlu0 %1071
      %1073 = vrot.lane.b32.xlu0 %v1003, 64
      %v1074 = vpop.permute.xlu0 %1073
      %1075 = vrot.lane.b32.xlu0 %v1004, 64
      %v1076 = vpop.permute.xlu0 %1075
      %1077 = vrot.lane.b32.xlu0 %v1005, 64
      %v1078 = vpop.permute.xlu0 %1077
      %1079 = vrot.lane.b32.xlu0 %v1006, 64
      %v1080 = vpop.permute.xlu0 %1079
      %1081 = vrot.lane.b32.xlu0 %v1007, 64
      %v1082 = vpop.permute.xlu0 %1081
      %1083 = vrot.lane.b32.xlu0 %v1008, 64
      %v1084 = vpop.permute.xlu0 %1083
      %1085 = vrot.lane.b32.xlu0 %v1009, 64
      %v1086 = vpop.permute.xlu0 %1085
      %1087 = vrot.lane.b32.xlu0 %v1010, 64
      %v1088 = vpop.permute.xlu0 %1087
      %1089 = vrot.lane.b32.xlu0 %v1011, 64
      %v1090 = vpop.permute.xlu0 %1089
      %1091 = vrot.lane.b32.xlu0 %v1012, 64
      %v1092 = vpop.permute.xlu0 %1091
      %1093 = vrot.lane.b32.xlu0 %v1013, 64
      %v1094 = vpop.permute.xlu0 %1093
      %1095 = vrot.lane.b32.xlu0 %v1014, 64
      %v1096 = vpop.permute.xlu0 %1095
      %1097 = vrot.lane.b32.xlu0 %v1015, 64
      %v1098 = vpop.permute.xlu0 %1097
      %1099 = vrot.lane.b32.xlu0 %v1016, 64
      %v1100 = vpop.permute.xlu0 %1099
      %1101 = vrot.lane.b32.xlu0 %v1017, 64
      %v1102 = vpop.permute.xlu0 %1101
      %1103 = vrot.lane.b32.xlu0 %v1018, 64
      %v1104 = vpop.permute.xlu0 %1103
      %1105 = vrot.lane.b32.xlu0 %v1019, 64
      %v1106 = vpop.permute.xlu0 %1105
      %1107 = vrot.lane.b32.xlu0 %v1020, 64
      %v1108 = vpop.permute.xlu0 %1107
      %1109 = vrot.lane.b32.xlu0 %v1021, 64
      %v1110 = vpop.permute.xlu0 %1109
      %1111 = vrot.lane.b32.xlu0 %v1022, 64
      %v1112 = vpop.permute.xlu0 %1111
      %1113 = vrot.lane.b32.xlu0 %v1023, 64
      %v1114 = vpop.permute.xlu0 %1113
      %1115 = vrot.lane.b32.xlu0 %v1024, 64
      %v1116 = vpop.permute.xlu0 %1115
      %1117 = vrot.lane.b32.xlu0 %v1025, 64
      %v1118 = vpop.permute.xlu0 %1117
      %1119 = vrot.lane.b32.xlu0 %v1026, 64
      %v1120 = vpop.permute.xlu0 %1119
      %1121 = vrot.lane.b32.xlu0 %v1027, 64
      %v1122 = vpop.permute.xlu0 %1121
      %1123 = vrot.lane.b32.xlu0 %v1028, 64
      %v1124 = vpop.permute.xlu0 %1123
      %vm1157 = vcmask 785920
      %1158 = vst.msk [vmem:[#allocation4] sm:$0xff] %vm1157, %v1062
      %1159 = vst.msk [vmem:[#allocation4 + $0x18] sm:$0xff] %vm1157, %v1064
      %1160 = vst.msk [vmem:[#allocation4 + $0x30] sm:$0xff] %vm1157, %v1066
      %1161 = vst.msk [vmem:[#allocation4 + $0x48] sm:$0xff] %vm1157, %v1068
      %1162 = vst.msk [vmem:[#allocation4 + $0x60] sm:$0xff] %vm1157, %v1070
      %1163 = vst.msk [vmem:[#allocation4 + $0x78] sm:$0xff] %vm1157, %v1072
      %1164 = vst.msk [vmem:[#allocation4 + $0x90] sm:$0xff] %vm1157, %v1074
      %1165 = vst.msk [vmem:[#allocation4 + $0xa8] sm:$0xff] %vm1157, %v1076
      %1166 = vst.msk [vmem:[#allocation4 + $0xc0] sm:$0xff] %vm1157, %v1078
      %1167 = vst.msk [vmem:[#allocation4 + $0xd8] sm:$0xff] %vm1157, %v1080
      %1168 = vst.msk [vmem:[#allocation4 + $0xf0] sm:$0xff] %vm1157, %v1082
      %1169 = vst.msk [vmem:[#allocation4 + $0x108] sm:$0xff] %vm1157, %v1084
      %1170 = vst.msk [vmem:[#allocation4 + $0x120] sm:$0xff] %vm1157, %v1086
      %1171 = vst.msk [vmem:[#allocation4 + $0x138] sm:$0xff] %vm1157, %v1088
      %1172 = vst.msk [vmem:[#allocation4 + $0x150] sm:$0xff] %vm1157, %v1090
      %1173 = vst.msk [vmem:[#allocation4 + $0x168] sm:$0xff] %vm1157, %v1092
      %1174 = vst.msk [vmem:[#allocation4 + $0x180] sm:$0xff] %vm1157, %v1094
      %1175 = vst.msk [vmem:[#allocation4 + $0x198] sm:$0xff] %vm1157, %v1096
      %1176 = vst.msk [vmem:[#allocation4 + $0x1b0] sm:$0xff] %vm1157, %v1098
      %1177 = vst.msk [vmem:[#allocation4 + $0x1c8] sm:$0xff] %vm1157, %v1100
      %1178 = vst.msk [vmem:[#allocation4 + $0x1e0] sm:$0xff] %vm1157, %v1102
      %1179 = vst.msk [vmem:[#allocation4 + $0x1f8] sm:$0xff] %vm1157, %v1104
      %1180 = vst.msk [vmem:[#allocation4 + $0x210] sm:$0xff] %vm1157, %v1106
      %1181 = vst.msk [vmem:[#allocation4 + $0x228] sm:$0xff] %vm1157, %v1108
      %1182 = vst.msk [vmem:[#allocation4 + $0x240] sm:$0xff] %vm1157, %v1110
      %1183 = vst.msk [vmem:[#allocation4 + $0x258] sm:$0xff] %vm1157, %v1112
      %1184 = vst.msk [vmem:[#allocation4 + $0x270] sm:$0xff] %vm1157, %v1114
      %1185 = vst.msk [vmem:[#allocation4 + $0x288] sm:$0xff] %vm1157, %v1116
      %1186 = vst.msk [vmem:[#allocation4 + $0x2a0] sm:$0xff] %vm1157, %v1118
      %1187 = vst.msk [vmem:[#allocation4 + $0x2b8] sm:$0xff] %vm1157, %v1120
      %1188 = vst.msk [vmem:[#allocation4 + $0x2d0] sm:$0xff] %vm1157, %v1122
      %1189 = vst.msk [vmem:[#allocation4 + $0x2e8] sm:$0xff] %vm1157, %v1124
      %v1190 = vld [vmem:[%s707] sm:$0xff]
      %v1191 = vld [vmem:[%s707 + $0x8] sm:$0xff]
      %v1192 = vld [vmem:[%s707 + $0x18] sm:$0xff]
      %v1193 = vld [vmem:[%s707 + $0x20] sm:$0xff]
      %v1194 = vld [vmem:[%s707 + $0x30] sm:$0xff]
      %v1195 = vld [vmem:[%s707 + $0x38] sm:$0xff]
      %v1196 = vld [vmem:[%s707 + $0x48] sm:$0xff]
      %v1197 = vld [vmem:[%s707 + $0x50] sm:$0xff]
      %v1198 = vld [vmem:[%s707 + $0x60] sm:$0xff]
      %v1199 = vld [vmem:[%s707 + $0x68] sm:$0xff]
      %v1200 = vld [vmem:[%s707 + $0x78] sm:$0xff]
      %v1201 = vld [vmem:[%s707 + $0x80] sm:$0xff]
      %v1202 = vld [vmem:[%s707 + $0x90] sm:$0xff]
      %v1203 = vld [vmem:[%s707 + $0x98] sm:$0xff]
      %v1204 = vld [vmem:[%s707 + $0xa8] sm:$0xff]
      %v1205 = vld [vmem:[%s707 + $0xb0] sm:$0xff]
      %v1206 = vld [vmem:[%s707 + $0xc0] sm:$0xff]
      %v1207 = vld [vmem:[%s707 + $0xc8] sm:$0xff]
      %v1208 = vld [vmem:[%s707 + $0xd8] sm:$0xff]
      %v1209 = vld [vmem:[%s707 + $0xe0] sm:$0xff]
      %v1210 = vld [vmem:[%s707 + $0xf0] sm:$0xff]
      %v1211 = vld [vmem:[%s707 + $0xf8] sm:$0xff]
      %v1212 = vld [vmem:[%s707 + $0x108] sm:$0xff]
      %v1213 = vld [vmem:[%s707 + $0x110] sm:$0xff]
      %v1214 = vld [vmem:[%s707 + $0x120] sm:$0xff]
      %v1215 = vld [vmem:[%s707 + $0x128] sm:$0xff]
      %v1216 = vld [vmem:[%s707 + $0x138] sm:$0xff]
      %v1217 = vld [vmem:[%s707 + $0x140] sm:$0xff]
      %v1218 = vld [vmem:[%s707 + $0x150] sm:$0xff]
      %v1219 = vld [vmem:[%s707 + $0x158] sm:$0xff]
      %v1220 = vld [vmem:[%s707 + $0x168] sm:$0xff]
      %v1221 = vld [vmem:[%s707 + $0x170] sm:$0xff]
      %1254 = vrot.lane.b32.xlu0 %v1190, 96
      %v1255 = vpop.permute.xlu0 %1254
      %1256 = vrot.lane.b32.xlu0 %v1191, 96
      %v1257 = vpop.permute.xlu0 %1256
      %1258 = vrot.lane.b32.xlu0 %v1192, 96
      %v1259 = vpop.permute.xlu0 %1258
      %1260 = vrot.lane.b32.xlu0 %v1193, 96
      %v1261 = vpop.permute.xlu0 %1260
      %1262 = vrot.lane.b32.xlu0 %v1194, 96
      %v1263 = vpop.permute.xlu0 %1262
      %1264 = vrot.lane.b32.xlu0 %v1195, 96
      %v1265 = vpop.permute.xlu0 %1264
      %1266 = vrot.lane.b32.xlu0 %v1196, 96
      %v1267 = vpop.permute.xlu0 %1266
      %1268 = vrot.lane.b32.xlu0 %v1197, 96
      %v1269 = vpop.permute.xlu0 %1268
      %1270 = vrot.lane.b32.xlu0 %v1198, 96
      %v1271 = vpop.permute.xlu0 %1270
      %1272 = vrot.lane.b32.xlu0 %v1199, 96
      %v1273 = vpop.permute.xlu0 %1272
      %1274 = vrot.lane.b32.xlu0 %v1200, 96
      %v1275 = vpop.permute.xlu0 %1274
      %1276 = vrot.lane.b32.xlu0 %v1201, 96
      %v1277 = vpop.permute.xlu0 %1276
      %1278 = vrot.lane.b32.xlu0 %v1202, 96
      %v1279 = vpop.permute.xlu0 %1278
      %1280 = vrot.lane.b32.xlu0 %v1203, 96
      %v1281 = vpop.permute.xlu0 %1280
      %1282 = vrot.lane.b32.xlu0 %v1204, 96
      %v1283 = vpop.permute.xlu0 %1282
      %1284 = vrot.lane.b32.xlu0 %v1205, 96
      %v1285 = vpop.permute.xlu0 %1284
      %1286 = vrot.lane.b32.xlu0 %v1206, 96
      %v1287 = vpop.permute.xlu0 %1286
      %1288 = vrot.lane.b32.xlu0 %v1207, 96
      %v1289 = vpop.permute.xlu0 %1288
      %1290 = vrot.lane.b32.xlu0 %v1208, 96
      %v1291 = vpop.permute.xlu0 %1290
      %1292 = vrot.lane.b32.xlu0 %v1209, 96
      %v1293 = vpop.permute.xlu0 %1292
      %1294 = vrot.lane.b32.xlu0 %v1210, 96
      %v1295 = vpop.permute.xlu0 %1294
      %1296 = vrot.lane.b32.xlu0 %v1211, 96
      %v1297 = vpop.permute.xlu0 %1296
      %1298 = vrot.lane.b32.xlu0 %v1212, 96
      %v1299 = vpop.permute.xlu0 %1298
      %1300 = vrot.lane.b32.xlu0 %v1213, 96
      %v1301 = vpop.permute.xlu0 %1300
      %1302 = vrot.lane.b32.xlu0 %v1214, 96
      %v1303 = vpop.permute.xlu0 %1302
      %1304 = vrot.lane.b32.xlu0 %v1215, 96
      %v1305 = vpop.permute.xlu0 %1304
      %1306 = vrot.lane.b32.xlu0 %v1216, 96
      %v1307 = vpop.permute.xlu0 %1306
      %1308 = vrot.lane.b32.xlu0 %v1217, 96
      %v1309 = vpop.permute.xlu0 %1308
      %1310 = vrot.lane.b32.xlu0 %v1218, 96
      %v1311 = vpop.permute.xlu0 %1310
      %1312 = vrot.lane.b32.xlu0 %v1219, 96
      %v1313 = vpop.permute.xlu0 %1312
      %1314 = vrot.lane.b32.xlu0 %v1220, 96
      %v1315 = vpop.permute.xlu0 %1314
      %1316 = vrot.lane.b32.xlu0 %v1221, 96
      %v1317 = vpop.permute.xlu0 %1316
      %vm1350 = vcmask 1048320
      %1351 = vst.msk [vmem:[#allocation4] sm:$0xff] %vm1350, %v1255
      %1352 = vst.msk [vmem:[#allocation4 + $0x18] sm:$0xff] %vm1350, %v1257
      %1353 = vst.msk [vmem:[#allocation4 + $0x30] sm:$0xff] %vm1350, %v1259
      %1354 = vst.msk [vmem:[#allocation4 + $0x48] sm:$0xff] %vm1350, %v1261
      %1355 = vst.msk [vmem:[#allocation4 + $0x60] sm:$0xff] %vm1350, %v1263
      %1356 = vst.msk [vmem:[#allocation4 + $0x78] sm:$0xff] %vm1350, %v1265
      %1357 = vst.msk [vmem:[#allocation4 + $0x90] sm:$0xff] %vm1350, %v1267
      %1358 = vst.msk [vmem:[#allocation4 + $0xa8] sm:$0xff] %vm1350, %v1269
      %1359 = vst.msk [vmem:[#allocation4 + $0xc0] sm:$0xff] %vm1350, %v1271
      %1360 = vst.msk [vmem:[#allocation4 + $0xd8] sm:$0xff] %vm1350, %v1273
      %1361 = vst.msk [vmem:[#allocation4 + $0xf0] sm:$0xff] %vm1350, %v1275
      %1362 = vst.msk [vmem:[#allocation4 + $0x108] sm:$0xff] %vm1350, %v1277
      %1363 = vst.msk [vmem:[#allocation4 + $0x120] sm:$0xff] %vm1350, %v1279
      %1364 = vst.msk [vmem:[#allocation4 + $0x138] sm:$0xff] %vm1350, %v1281
      %1365 = vst.msk [vmem:[#allocation4 + $0x150] sm:$0xff] %vm1350, %v1283
      %1366 = vst.msk [vmem:[#allocation4 + $0x168] sm:$0xff] %vm1350, %v1285
      %1367 = vst.msk [vmem:[#allocation4 + $0x180] sm:$0xff] %vm1350, %v1287
      %1368 = vst.msk [vmem:[#allocation4 + $0x198] sm:$0xff] %vm1350, %v1289
      %1369 = vst.msk [vmem:[#allocation4 + $0x1b0] sm:$0xff] %vm1350, %v1291
      %1370 = vst.msk [vmem:[#allocation4 + $0x1c8] sm:$0xff] %vm1350, %v1293
      %1371 = vst.msk [vmem:[#allocation4 + $0x1e0] sm:$0xff] %vm1350, %v1295
      %1372 = vst.msk [vmem:[#allocation4 + $0x1f8] sm:$0xff] %vm1350, %v1297
      %1373 = vst.msk [vmem:[#allocation4 + $0x210] sm:$0xff] %vm1350, %v1299
      %1374 = vst.msk [vmem:[#allocation4 + $0x228] sm:$0xff] %vm1350, %v1301
      %1375 = vst.msk [vmem:[#allocation4 + $0x240] sm:$0xff] %vm1350, %v1303
      %1376 = vst.msk [vmem:[#allocation4 + $0x258] sm:$0xff] %vm1350, %v1305
      %1377 = vst.msk [vmem:[#allocation4 + $0x270] sm:$0xff] %vm1350, %v1307
      %1378 = vst.msk [vmem:[#allocation4 + $0x288] sm:$0xff] %vm1350, %v1309
      %1379 = vst.msk [vmem:[#allocation4 + $0x2a0] sm:$0xff] %vm1350, %v1311
      %1380 = vst.msk [vmem:[#allocation4 + $0x2b8] sm:$0xff] %vm1350, %v1313
      %1381 = vst.msk [vmem:[#allocation4 + $0x2d0] sm:$0xff] %vm1350, %v1315
      %1382 = vst.msk [vmem:[#allocation4 + $0x2e8] sm:$0xff] %vm1350, %v1317
      %v1383 = vld [vmem:[%s707 + $0x1] sm:$0xff]
      %v1384 = vld [vmem:[%s707 + $0x9] sm:$0xff]
      %v1385 = vld [vmem:[%s707 + $0x19] sm:$0xff]
      %v1386 = vld [vmem:[%s707 + $0x21] sm:$0xff]
      %v1387 = vld [vmem:[%s707 + $0x31] sm:$0xff]
      %v1388 = vld [vmem:[%s707 + $0x39] sm:$0xff]
      %v1389 = vld [vmem:[%s707 + $0x49] sm:$0xff]
      %v1390 = vld [vmem:[%s707 + $0x51] sm:$0xff]
      %v1391 = vld [vmem:[%s707 + $0x61] sm:$0xff]
      %v1392 = vld [vmem:[%s707 + $0x69] sm:$0xff]
      %v1393 = vld [vmem:[%s707 + $0x79] sm:$0xff]
      %v1394 = vld [vmem:[%s707 + $0x81] sm:$0xff]
      %v1395 = vld [vmem:[%s707 + $0x91] sm:$0xff]
      %v1396 = vld [vmem:[%s707 + $0x99] sm:$0xff]
      %v1397 = vld [vmem:[%s707 + $0xa9] sm:$0xff]
      %v1398 = vld [vmem:[%s707 + $0xb1] sm:$0xff]
      %v1399 = vld [vmem:[%s707 + $0xc1] sm:$0xff]
      %v1400 = vld [vmem:[%s707 + $0xc9] sm:$0xff]
      %v1401 = vld [vmem:[%s707 + $0xd9] sm:$0xff]
      %v1402 = vld [vmem:[%s707 + $0xe1] sm:$0xff]
      %v1403 = vld [vmem:[%s707 + $0xf1] sm:$0xff]
      %v1404 = vld [vmem:[%s707 + $0xf9] sm:$0xff]
      %v1405 = vld [vmem:[%s707 + $0x109] sm:$0xff]
      %v1406 = vld [vmem:[%s707 + $0x111] sm:$0xff]
      %v1407 = vld [vmem:[%s707 + $0x121] sm:$0xff]
      %v1408 = vld [vmem:[%s707 + $0x129] sm:$0xff]
      %v1409 = vld [vmem:[%s707 + $0x139] sm:$0xff]
      %v1410 = vld [vmem:[%s707 + $0x141] sm:$0xff]
      %v1411 = vld [vmem:[%s707 + $0x151] sm:$0xff]
      %v1412 = vld [vmem:[%s707 + $0x159] sm:$0xff]
      %v1413 = vld [vmem:[%s707 + $0x169] sm:$0xff]
      %v1414 = vld [vmem:[%s707 + $0x171] sm:$0xff]
      %1415 = vst.msk [vmem:[#allocation4 + $0x8] sm:$0xff] %vm335, %v1383
      %1416 = vst.msk [vmem:[#allocation4 + $0x20] sm:$0xff] %vm335, %v1384
      %1417 = vst.msk [vmem:[#allocation4 + $0x38] sm:$0xff] %vm335, %v1385
      %1418 = vst.msk [vmem:[#allocation4 + $0x50] sm:$0xff] %vm335, %v1386
      %1419 = vst.msk [vmem:[#allocation4 + $0x68] sm:$0xff] %vm335, %v1387
      %1420 = vst.msk [vmem:[#allocation4 + $0x80] sm:$0xff] %vm335, %v1388
      %1421 = vst.msk [vmem:[#allocation4 + $0x98] sm:$0xff] %vm335, %v1389
      %1422 = vst.msk [vmem:[#allocation4 + $0xb0] sm:$0xff] %vm335, %v1390
      %1423 = vst.msk [vmem:[#allocation4 + $0xc8] sm:$0xff] %vm335, %v1391
      %1424 = vst.msk [vmem:[#allocation4 + $0xe0] sm:$0xff] %vm335, %v1392
      %1425 = vst.msk [vmem:[#allocation4 + $0xf8] sm:$0xff] %vm335, %v1393
      %1426 = vst.msk [vmem:[#allocation4 + $0x110] sm:$0xff] %vm335, %v1394
      %1427 = vst.msk [vmem:[#allocation4 + $0x128] sm:$0xff] %vm335, %v1395
      %1428 = vst.msk [vmem:[#allocation4 + $0x140] sm:$0xff] %vm335, %v1396
      %1429 = vst.msk [vmem:[#allocation4 + $0x158] sm:$0xff] %vm335, %v1397
      %1430 = vst.msk [vmem:[#allocation4 + $0x170] sm:$0xff] %vm335, %v1398
      %1431 = vst.msk [vmem:[#allocation4 + $0x188] sm:$0xff] %vm335, %v1399
      %1432 = vst.msk [vmem:[#allocation4 + $0x1a0] sm:$0xff] %vm335, %v1400
      %1433 = vst.msk [vmem:[#allocation4 + $0x1b8] sm:$0xff] %vm335, %v1401
      %1434 = vst.msk [vmem:[#allocation4 + $0x1d0] sm:$0xff] %vm335, %v1402
      %1435 = vst.msk [vmem:[#allocation4 + $0x1e8] sm:$0xff] %vm335, %v1403
      %1436 = vst.msk [vmem:[#allocation4 + $0x200] sm:$0xff] %vm335, %v1404
      %1437 = vst.msk [vmem:[#allocation4 + $0x218] sm:$0xff] %vm335, %v1405
      %1438 = vst.msk [vmem:[#allocation4 + $0x230] sm:$0xff] %vm335, %v1406
      %1439 = vst.msk [vmem:[#allocation4 + $0x248] sm:$0xff] %vm335, %v1407
      %1440 = vst.msk [vmem:[#allocation4 + $0x260] sm:$0xff] %vm335, %v1408
      %1441 = vst.msk [vmem:[#allocation4 + $0x278] sm:$0xff] %vm335, %v1409
      %1442 = vst.msk [vmem:[#allocation4 + $0x290] sm:$0xff] %vm335, %v1410
      %1443 = vst.msk [vmem:[#allocation4 + $0x2a8] sm:$0xff] %vm335, %v1411
      %1444 = vst.msk [vmem:[#allocation4 + $0x2c0] sm:$0xff] %vm335, %v1412
      %1445 = vst.msk [vmem:[#allocation4 + $0x2d8] sm:$0xff] %vm335, %v1413
      %1446 = vst.msk [vmem:[#allocation4 + $0x2f0] sm:$0xff] %vm335, %v1414
      %v1447 = vld [vmem:[%s707 + $0x2] sm:$0xff]
      %v1448 = vld [vmem:[%s707 + $0xa] sm:$0xff]
      %v1449 = vld [vmem:[%s707 + $0x1a] sm:$0xff]
      %v1450 = vld [vmem:[%s707 + $0x22] sm:$0xff]
      %v1451 = vld [vmem:[%s707 + $0x32] sm:$0xff]
      %v1452 = vld [vmem:[%s707 + $0x3a] sm:$0xff]
      %v1453 = vld [vmem:[%s707 + $0x4a] sm:$0xff]
      %v1454 = vld [vmem:[%s707 + $0x52] sm:$0xff]
      %v1455 = vld [vmem:[%s707 + $0x62] sm:$0xff]
      %v1456 = vld [vmem:[%s707 + $0x6a] sm:$0xff]
      %v1457 = vld [vmem:[%s707 + $0x7a] sm:$0xff]
      %v1458 = vld [vmem:[%s707 + $0x82] sm:$0xff]
      %v1459 = vld [vmem:[%s707 + $0x92] sm:$0xff]
      %v1460 = vld [vmem:[%s707 + $0x9a] sm:$0xff]
      %v1461 = vld [vmem:[%s707 + $0xaa] sm:$0xff]
      %v1462 = vld [vmem:[%s707 + $0xb2] sm:$0xff]
      %v1463 = vld [vmem:[%s707 + $0xc2] sm:$0xff]
      %v1464 = vld [vmem:[%s707 + $0xca] sm:$0xff]
      %v1465 = vld [vmem:[%s707 + $0xda] sm:$0xff]
      %v1466 = vld [vmem:[%s707 + $0xe2] sm:$0xff]
      %v1467 = vld [vmem:[%s707 + $0xf2] sm:$0xff]
      %v1468 = vld [vmem:[%s707 + $0xfa] sm:$0xff]
      %v1469 = vld [vmem:[%s707 + $0x10a] sm:$0xff]
      %v1470 = vld [vmem:[%s707 + $0x112] sm:$0xff]
      %v1471 = vld [vmem:[%s707 + $0x122] sm:$0xff]
      %v1472 = vld [vmem:[%s707 + $0x12a] sm:$0xff]
      %v1473 = vld [vmem:[%s707 + $0x13a] sm:$0xff]
      %v1474 = vld [vmem:[%s707 + $0x142] sm:$0xff]
      %v1475 = vld [vmem:[%s707 + $0x152] sm:$0xff]
      %v1476 = vld [vmem:[%s707 + $0x15a] sm:$0xff]
      %v1477 = vld [vmem:[%s707 + $0x16a] sm:$0xff]
      %v1478 = vld [vmem:[%s707 + $0x172] sm:$0xff]
      %1511 = vrot.lane.b32.xlu0 %v1447, 32
      %v1512 = vpop.permute.xlu0 %1511
      %1513 = vrot.lane.b32.xlu0 %v1448, 32
      %v1514 = vpop.permute.xlu0 %1513
      %1515 = vrot.lane.b32.xlu0 %v1449, 32
      %v1516 = vpop.permute.xlu0 %1515
      %1517 = vrot.lane.b32.xlu0 %v1450, 32
      %v1518 = vpop.permute.xlu0 %1517
      %1519 = vrot.lane.b32.xlu0 %v1451, 32
      %v1520 = vpop.permute.xlu0 %1519
      %1521 = vrot.lane.b32.xlu0 %v1452, 32
      %v1522 = vpop.permute.xlu0 %1521
      %1523 = vrot.lane.b32.xlu0 %v1453, 32
      %v1524 = vpop.permute.xlu0 %1523
      %1525 = vrot.lane.b32.xlu0 %v1454, 32
      %v1526 = vpop.permute.xlu0 %1525
      %1527 = vrot.lane.b32.xlu0 %v1455, 32
      %v1528 = vpop.permute.xlu0 %1527
      %1529 = vrot.lane.b32.xlu0 %v1456, 32
      %v1530 = vpop.permute.xlu0 %1529
      %1531 = vrot.lane.b32.xlu0 %v1457, 32
      %v1532 = vpop.permute.xlu0 %1531
      %1533 = vrot.lane.b32.xlu0 %v1458, 32
      %v1534 = vpop.permute.xlu0 %1533
      %1535 = vrot.lane.b32.xlu0 %v1459, 32
      %v1536 = vpop.permute.xlu0 %1535
      %1537 = vrot.lane.b32.xlu0 %v1460, 32
      %v1538 = vpop.permute.xlu0 %1537
      %1539 = vrot.lane.b32.xlu0 %v1461, 32
      %v1540 = vpop.permute.xlu0 %1539
      %1541 = vrot.lane.b32.xlu0 %v1462, 32
      %v1542 = vpop.permute.xlu0 %1541
      %1543 = vrot.lane.b32.xlu0 %v1463, 32
      %v1544 = vpop.permute.xlu0 %1543
      %1545 = vrot.lane.b32.xlu0 %v1464, 32
      %v1546 = vpop.permute.xlu0 %1545
      %1547 = vrot.lane.b32.xlu0 %v1465, 32
      %v1548 = vpop.permute.xlu0 %1547
      %1549 = vrot.lane.b32.xlu0 %v1466, 32
      %v1550 = vpop.permute.xlu0 %1549
      %1551 = vrot.lane.b32.xlu0 %v1467, 32
      %v1552 = vpop.permute.xlu0 %1551
      %1553 = vrot.lane.b32.xlu0 %v1468, 32
      %v1554 = vpop.permute.xlu0 %1553
      %1555 = vrot.lane.b32.xlu0 %v1469, 32
      %v1556 = vpop.permute.xlu0 %1555
      %1557 = vrot.lane.b32.xlu0 %v1470, 32
      %v1558 = vpop.permute.xlu0 %1557
      %1559 = vrot.lane.b32.xlu0 %v1471, 32
      %v1560 = vpop.permute.xlu0 %1559
      %1561 = vrot.lane.b32.xlu0 %v1472, 32
      %v1562 = vpop.permute.xlu0 %1561
      %1563 = vrot.lane.b32.xlu0 %v1473, 32
      %v1564 = vpop.permute.xlu0 %1563
      %1565 = vrot.lane.b32.xlu0 %v1474, 32
      %v1566 = vpop.permute.xlu0 %1565
      %1567 = vrot.lane.b32.xlu0 %v1475, 32
      %v1568 = vpop.permute.xlu0 %1567
      %1569 = vrot.lane.b32.xlu0 %v1476, 32
      %v1570 = vpop.permute.xlu0 %1569
      %1571 = vrot.lane.b32.xlu0 %v1477, 32
      %v1572 = vpop.permute.xlu0 %1571
      %1573 = vrot.lane.b32.xlu0 %v1478, 32
      %v1574 = vpop.permute.xlu0 %1573
      %1607 = vst.msk [vmem:[#allocation4 + $0x8] sm:$0xff] %vm964, %v1512
      %1608 = vst.msk [vmem:[#allocation4 + $0x20] sm:$0xff] %vm964, %v1514
      %1609 = vst.msk [vmem:[#allocation4 + $0x38] sm:$0xff] %vm964, %v1516
      %1610 = vst.msk [vmem:[#allocation4 + $0x50] sm:$0xff] %vm964, %v1518
      %1611 = vst.msk [vmem:[#allocation4 + $0x68] sm:$0xff] %vm964, %v1520
      %1612 = vst.msk [vmem:[#allocation4 + $0x80] sm:$0xff] %vm964, %v1522
      %1613 = vst.msk [vmem:[#allocation4 + $0x98] sm:$0xff] %vm964, %v1524
      %1614 = vst.msk [vmem:[#allocation4 + $0xb0] sm:$0xff] %vm964, %v1526
      %1615 = vst.msk [vmem:[#allocation4 + $0xc8] sm:$0xff] %vm964, %v1528
      %1616 = vst.msk [vmem:[#allocation4 + $0xe0] sm:$0xff] %vm964, %v1530
      %1617 = vst.msk [vmem:[#allocation4 + $0xf8] sm:$0xff] %vm964, %v1532
      %1618 = vst.msk [vmem:[#allocation4 + $0x110] sm:$0xff] %vm964, %v1534
      %1619 = vst.msk [vmem:[#allocation4 + $0x128] sm:$0xff] %vm964, %v1536
      %1620 = vst.msk [vmem:[#allocation4 + $0x140] sm:$0xff] %vm964, %v1538
      %1621 = vst.msk [vmem:[#allocation4 + $0x158] sm:$0xff] %vm964, %v1540
      %1622 = vst.msk [vmem:[#allocation4 + $0x170] sm:$0xff] %vm964, %v1542
      %1623 = vst.msk [vmem:[#allocation4 + $0x188] sm:$0xff] %vm964, %v1544
      %1624 = vst.msk [vmem:[#allocation4 + $0x1a0] sm:$0xff] %vm964, %v1546
      %1625 = vst.msk [vmem:[#allocation4 + $0x1b8] sm:$0xff] %vm964, %v1548
      %1626 = vst.msk [vmem:[#allocation4 + $0x1d0] sm:$0xff] %vm964, %v1550
      %1627 = vst.msk [vmem:[#allocation4 + $0x1e8] sm:$0xff] %vm964, %v1552
      %1628 = vst.msk [vmem:[#allocation4 + $0x200] sm:$0xff] %vm964, %v1554
      %1629 = vst.msk [vmem:[#allocation4 + $0x218] sm:$0xff] %vm964, %v1556
      %1630 = vst.msk [vmem:[#allocation4 + $0x230] sm:$0xff] %vm964, %v1558
      %1631 = vst.msk [vmem:[#allocation4 + $0x248] sm:$0xff] %vm964, %v1560
      %1632 = vst.msk [vmem:[#allocation4 + $0x260] sm:$0xff] %vm964, %v1562
      %1633 = vst.msk [vmem:[#allocation4 + $0x278] sm:$0xff] %vm964, %v1564
      %1634 = vst.msk [vmem:[#allocation4 + $0x290] sm:$0xff] %vm964, %v1566
      %1635 = vst.msk [vmem:[#allocation4 + $0x2a8] sm:$0xff] %vm964, %v1568
      %1636 = vst.msk [vmem:[#allocation4 + $0x2c0] sm:$0xff] %vm964, %v1570
      %1637 = vst.msk [vmem:[#allocation4 + $0x2d8] sm:$0xff] %vm964, %v1572
      %1638 = vst.msk [vmem:[#allocation4 + $0x2f0] sm:$0xff] %vm964, %v1574
      %s1639 = scalar_lea.vmem [#allocation2], 48
      %v1640 = vld [vmem:[%s1639] sm:$0xff]
      %v1641 = vld [vmem:[%s1639 + $0x8] sm:$0xff]
      %v1642 = vld [vmem:[%s1639 + $0x18] sm:$0xff]
      %v1643 = vld [vmem:[%s1639 + $0x20] sm:$0xff]
      %v1644 = vld [vmem:[%s1639 + $0x30] sm:$0xff]
      %v1645 = vld [vmem:[%s1639 + $0x38] sm:$0xff]
      %v1646 = vld [vmem:[%s1639 + $0x48] sm:$0xff]
      %v1647 = vld [vmem:[%s1639 + $0x50] sm:$0xff]
      %v1648 = vld [vmem:[%s1639 + $0x60] sm:$0xff]
      %v1649 = vld [vmem:[%s1639 + $0x68] sm:$0xff]
      %v1650 = vld [vmem:[%s1639 + $0x78] sm:$0xff]
      %v1651 = vld [vmem:[%s1639 + $0x80] sm:$0xff]
      %v1652 = vld [vmem:[%s1639 + $0x90] sm:$0xff]
      %v1653 = vld [vmem:[%s1639 + $0x98] sm:$0xff]
      %v1654 = vld [vmem:[%s1639 + $0xa8] sm:$0xff]
      %v1655 = vld [vmem:[%s1639 + $0xb0] sm:$0xff]
      %v1656 = vld [vmem:[%s1639 + $0xc0] sm:$0xff]
      %v1657 = vld [vmem:[%s1639 + $0xc8] sm:$0xff]
      %v1658 = vld [vmem:[%s1639 + $0xd8] sm:$0xff]
      %v1659 = vld [vmem:[%s1639 + $0xe0] sm:$0xff]
      %v1660 = vld [vmem:[%s1639 + $0xf0] sm:$0xff]
      %v1661 = vld [vmem:[%s1639 + $0xf8] sm:$0xff]
      %v1662 = vld [vmem:[%s1639 + $0x108] sm:$0xff]
      %v1663 = vld [vmem:[%s1639 + $0x110] sm:$0xff]
      %v1664 = vld [vmem:[%s1639 + $0x120] sm:$0xff]
      %v1665 = vld [vmem:[%s1639 + $0x128] sm:$0xff]
      %v1666 = vld [vmem:[%s1639 + $0x138] sm:$0xff]
      %v1667 = vld [vmem:[%s1639 + $0x140] sm:$0xff]
      %v1668 = vld [vmem:[%s1639 + $0x150] sm:$0xff]
      %v1669 = vld [vmem:[%s1639 + $0x158] sm:$0xff]
      %v1670 = vld [vmem:[%s1639 + $0x168] sm:$0xff]
      %v1671 = vld [vmem:[%s1639 + $0x170] sm:$0xff]
      %1704 = vrot.lane.b32.xlu0 %v1640, 64
      %v1705 = vpop.permute.xlu0 %1704
      %1706 = vrot.lane.b32.xlu0 %v1641, 64
      %v1707 = vpop.permute.xlu0 %1706
      %1708 = vrot.lane.b32.xlu0 %v1642, 64
      %v1709 = vpop.permute.xlu0 %1708
      %1710 = vrot.lane.b32.xlu0 %v1643, 64
      %v1711 = vpop.permute.xlu0 %1710
      %1712 = vrot.lane.b32.xlu0 %v1644, 64
      %v1713 = vpop.permute.xlu0 %1712
      %1714 = vrot.lane.b32.xlu0 %v1645, 64
      %v1715 = vpop.permute.xlu0 %1714
      %1716 = vrot.lane.b32.xlu0 %v1646, 64
      %v1717 = vpop.permute.xlu0 %1716
      %1718 = vrot.lane.b32.xlu0 %v1647, 64
      %v1719 = vpop.permute.xlu0 %1718
      %1720 = vrot.lane.b32.xlu0 %v1648, 64
      %v1721 = vpop.permute.xlu0 %1720
      %1722 = vrot.lane.b32.xlu0 %v1649, 64
      %v1723 = vpop.permute.xlu0 %1722
      %1724 = vrot.lane.b32.xlu0 %v1650, 64
      %v1725 = vpop.permute.xlu0 %1724
      %1726 = vrot.lane.b32.xlu0 %v1651, 64
      %v1727 = vpop.permute.xlu0 %1726
      %1728 = vrot.lane.b32.xlu0 %v1652, 64
      %v1729 = vpop.permute.xlu0 %1728
      %1730 = vrot.lane.b32.xlu0 %v1653, 64
      %v1731 = vpop.permute.xlu0 %1730
      %1732 = vrot.lane.b32.xlu0 %v1654, 64
      %v1733 = vpop.permute.xlu0 %1732
      %1734 = vrot.lane.b32.xlu0 %v1655, 64
      %v1735 = vpop.permute.xlu0 %1734
      %1736 = vrot.lane.b32.xlu0 %v1656, 64
      %v1737 = vpop.permute.xlu0 %1736
      %1738 = vrot.lane.b32.xlu0 %v1657, 64
      %v1739 = vpop.permute.xlu0 %1738
      %1740 = vrot.lane.b32.xlu0 %v1658, 64
      %v1741 = vpop.permute.xlu0 %1740
      %1742 = vrot.lane.b32.xlu0 %v1659, 64
      %v1743 = vpop.permute.xlu0 %1742
      %1744 = vrot.lane.b32.xlu0 %v1660, 64
      %v1745 = vpop.permute.xlu0 %1744
      %1746 = vrot.lane.b32.xlu0 %v1661, 64
      %v1747 = vpop.permute.xlu0 %1746
      %1748 = vrot.lane.b32.xlu0 %v1662, 64
      %v1749 = vpop.permute.xlu0 %1748
      %1750 = vrot.lane.b32.xlu0 %v1663, 64
      %v1751 = vpop.permute.xlu0 %1750
      %1752 = vrot.lane.b32.xlu0 %v1664, 64
      %v1753 = vpop.permute.xlu0 %1752
      %1754 = vrot.lane.b32.xlu0 %v1665, 64
      %v1755 = vpop.permute.xlu0 %1754
      %1756 = vrot.lane.b32.xlu0 %v1666, 64
      %v1757 = vpop.permute.xlu0 %1756
      %1758 = vrot.lane.b32.xlu0 %v1667, 64
      %v1759 = vpop.permute.xlu0 %1758
      %1760 = vrot.lane.b32.xlu0 %v1668, 64
      %v1761 = vpop.permute.xlu0 %1760
      %1762 = vrot.lane.b32.xlu0 %v1669, 64
      %v1763 = vpop.permute.xlu0 %1762
      %1764 = vrot.lane.b32.xlu0 %v1670, 64
      %v1765 = vpop.permute.xlu0 %1764
      %1766 = vrot.lane.b32.xlu0 %v1671, 64
      %v1767 = vpop.permute.xlu0 %1766
      %1800 = vst.msk [vmem:[#allocation4 + $0x8] sm:$0xff] %vm1157, %v1705
      %1801 = vst.msk [vmem:[#allocation4 + $0x20] sm:$0xff] %vm1157, %v1707
      %1802 = vst.msk [vmem:[#allocation4 + $0x38] sm:$0xff] %vm1157, %v1709
      %1803 = vst.msk [vmem:[#allocation4 + $0x50] sm:$0xff] %vm1157, %v1711
      %1804 = vst.msk [vmem:[#allocation4 + $0x68] sm:$0xff] %vm1157, %v1713
      %1805 = vst.msk [vmem:[#allocation4 + $0x80] sm:$0xff] %vm1157, %v1715
      %1806 = vst.msk [vmem:[#allocation4 + $0x98] sm:$0xff] %vm1157, %v1717
      %1807 = vst.msk [vmem:[#allocation4 + $0xb0] sm:$0xff] %vm1157, %v1719
      %1808 = vst.msk [vmem:[#allocation4 + $0xc8] sm:$0xff] %vm1157, %v1721
      %1809 = vst.msk [vmem:[#allocation4 + $0xe0] sm:$0xff] %vm1157, %v1723
      %1810 = vst.msk [vmem:[#allocation4 + $0xf8] sm:$0xff] %vm1157, %v1725
      %1811 = vst.msk [vmem:[#allocation4 + $0x110] sm:$0xff] %vm1157, %v1727
      %1812 = vst.msk [vmem:[#allocation4 + $0x128] sm:$0xff] %vm1157, %v1729
      %1813 = vst.msk [vmem:[#allocation4 + $0x140] sm:$0xff] %vm1157, %v1731
      %1814 = vst.msk [vmem:[#allocation4 + $0x158] sm:$0xff] %vm1157, %v1733
      %1815 = vst.msk [vmem:[#allocation4 + $0x170] sm:$0xff] %vm1157, %v1735
      %1816 = vst.msk [vmem:[#allocation4 + $0x188] sm:$0xff] %vm1157, %v1737
      %1817 = vst.msk [vmem:[#allocation4 + $0x1a0] sm:$0xff] %vm1157, %v1739
      %1818 = vst.msk [vmem:[#allocation4 + $0x1b8] sm:$0xff] %vm1157, %v1741
      %1819 = vst.msk [vmem:[#allocation4 + $0x1d0] sm:$0xff] %vm1157, %v1743
      %1820 = vst.msk [vmem:[#allocation4 + $0x1e8] sm:$0xff] %vm1157, %v1745
      %1821 = vst.msk [vmem:[#allocation4 + $0x200] sm:$0xff] %vm1157, %v1747
      %1822 = vst.msk [vmem:[#allocation4 + $0x218] sm:$0xff] %vm1157, %v1749
      %1823 = vst.msk [vmem:[#allocation4 + $0x230] sm:$0xff] %vm1157, %v1751
      %1824 = vst.msk [vmem:[#allocation4 + $0x248] sm:$0xff] %vm1157, %v1753
      %1825 = vst.msk [vmem:[#allocation4 + $0x260] sm:$0xff] %vm1157, %v1755
      %1826 = vst.msk [vmem:[#allocation4 + $0x278] sm:$0xff] %vm1157, %v1757
      %1827 = vst.msk [vmem:[#allocation4 + $0x290] sm:$0xff] %vm1157, %v1759
      %1828 = vst.msk [vmem:[#allocation4 + $0x2a8] sm:$0xff] %vm1157, %v1761
      %1829 = vst.msk [vmem:[#allocation4 + $0x2c0] sm:$0xff] %vm1157, %v1763
      %1830 = vst.msk [vmem:[#allocation4 + $0x2d8] sm:$0xff] %vm1157, %v1765
      %1831 = vst.msk [vmem:[#allocation4 + $0x2f0] sm:$0xff] %vm1157, %v1767
      %v1832 = vld [vmem:[%s1639 + $0x1] sm:$0xff]
      %v1833 = vld [vmem:[%s1639 + $0x9] sm:$0xff]
      %v1834 = vld [vmem:[%s1639 + $0x19] sm:$0xff]
      %v1835 = vld [vmem:[%s1639 + $0x21] sm:$0xff]
      %v1836 = vld [vmem:[%s1639 + $0x31] sm:$0xff]
      %v1837 = vld [vmem:[%s1639 + $0x39] sm:$0xff]
      %v1838 = vld [vmem:[%s1639 + $0x49] sm:$0xff]
      %v1839 = vld [vmem:[%s1639 + $0x51] sm:$0xff]
      %v1840 = vld [vmem:[%s1639 + $0x61] sm:$0xff]
      %v1841 = vld [vmem:[%s1639 + $0x69] sm:$0xff]
      %v1842 = vld [vmem:[%s1639 + $0x79] sm:$0xff]
      %v1843 = vld [vmem:[%s1639 + $0x81] sm:$0xff]
      %v1844 = vld [vmem:[%s1639 + $0x91] sm:$0xff]
      %v1845 = vld [vmem:[%s1639 + $0x99] sm:$0xff]
      %v1846 = vld [vmem:[%s1639 + $0xa9] sm:$0xff]
      %v1847 = vld [vmem:[%s1639 + $0xb1] sm:$0xff]
      %v1848 = vld [vmem:[%s1639 + $0xc1] sm:$0xff]
      %v1849 = vld [vmem:[%s1639 + $0xc9] sm:$0xff]
      %v1850 = vld [vmem:[%s1639 + $0xd9] sm:$0xff]
      %v1851 = vld [vmem:[%s1639 + $0xe1] sm:$0xff]
      %v1852 = vld [vmem:[%s1639 + $0xf1] sm:$0xff]
      %v1853 = vld [vmem:[%s1639 + $0xf9] sm:$0xff]
      %v1854 = vld [vmem:[%s1639 + $0x109] sm:$0xff]
      %v1855 = vld [vmem:[%s1639 + $0x111] sm:$0xff]
      %v1856 = vld [vmem:[%s1639 + $0x121] sm:$0xff]
      %v1857 = vld [vmem:[%s1639 + $0x129] sm:$0xff]
      %v1858 = vld [vmem:[%s1639 + $0x139] sm:$0xff]
      %v1859 = vld [vmem:[%s1639 + $0x141] sm:$0xff]
      %v1860 = vld [vmem:[%s1639 + $0x151] sm:$0xff]
      %v1861 = vld [vmem:[%s1639 + $0x159] sm:$0xff]
      %v1862 = vld [vmem:[%s1639 + $0x169] sm:$0xff]
      %v1863 = vld [vmem:[%s1639 + $0x171] sm:$0xff]
      %1896 = vrot.lane.b32.xlu0 %v1832, 96
      %v1897 = vpop.permute.xlu0 %1896
      %1898 = vrot.lane.b32.xlu0 %v1833, 96
      %v1899 = vpop.permute.xlu0 %1898
      %1900 = vrot.lane.b32.xlu0 %v1834, 96
      %v1901 = vpop.permute.xlu0 %1900
      %1902 = vrot.lane.b32.xlu0 %v1835, 96
      %v1903 = vpop.permute.xlu0 %1902
      %1904 = vrot.lane.b32.xlu0 %v1836, 96
      %v1905 = vpop.permute.xlu0 %1904
      %1906 = vrot.lane.b32.xlu0 %v1837, 96
      %v1907 = vpop.permute.xlu0 %1906
      %1908 = vrot.lane.b32.xlu0 %v1838, 96
      %v1909 = vpop.permute.xlu0 %1908
      %1910 = vrot.lane.b32.xlu0 %v1839, 96
      %v1911 = vpop.permute.xlu0 %1910
      %1912 = vrot.lane.b32.xlu0 %v1840, 96
      %v1913 = vpop.permute.xlu0 %1912
      %1914 = vrot.lane.b32.xlu0 %v1841, 96
      %v1915 = vpop.permute.xlu0 %1914
      %1916 = vrot.lane.b32.xlu0 %v1842, 96
      %v1917 = vpop.permute.xlu0 %1916
      %1918 = vrot.lane.b32.xlu0 %v1843, 96
      %v1919 = vpop.permute.xlu0 %1918
      %1920 = vrot.lane.b32.xlu0 %v1844, 96
      %v1921 = vpop.permute.xlu0 %1920
      %1922 = vrot.lane.b32.xlu0 %v1845, 96
      %v1923 = vpop.permute.xlu0 %1922
      %1924 = vrot.lane.b32.xlu0 %v1846, 96
      %v1925 = vpop.permute.xlu0 %1924
      %1926 = vrot.lane.b32.xlu0 %v1847, 96
      %v1927 = vpop.permute.xlu0 %1926
      %1928 = vrot.lane.b32.xlu0 %v1848, 96
      %v1929 = vpop.permute.xlu0 %1928
      %1930 = vrot.lane.b32.xlu0 %v1849, 96
      %v1931 = vpop.permute.xlu0 %1930
      %1932 = vrot.lane.b32.xlu0 %v1850, 96
      %v1933 = vpop.permute.xlu0 %1932
      %1934 = vrot.lane.b32.xlu0 %v1851, 96
      %v1935 = vpop.permute.xlu0 %1934
      %1936 = vrot.lane.b32.xlu0 %v1852, 96
      %v1937 = vpop.permute.xlu0 %1936
      %1938 = vrot.lane.b32.xlu0 %v1853, 96
      %v1939 = vpop.permute.xlu0 %1938
      %1940 = vrot.lane.b32.xlu0 %v1854, 96
      %v1941 = vpop.permute.xlu0 %1940
      %1942 = vrot.lane.b32.xlu0 %v1855, 96
      %v1943 = vpop.permute.xlu0 %1942
      %1944 = vrot.lane.b32.xlu0 %v1856, 96
      %v1945 = vpop.permute.xlu0 %1944
      %1946 = vrot.lane.b32.xlu0 %v1857, 96
      %v1947 = vpop.permute.xlu0 %1946
      %1948 = vrot.lane.b32.xlu0 %v1858, 96
      %v1949 = vpop.permute.xlu0 %1948
      %1950 = vrot.lane.b32.xlu0 %v1859, 96
      %v1951 = vpop.permute.xlu0 %1950
      %1952 = vrot.lane.b32.xlu0 %v1860, 96
      %v1953 = vpop.permute.xlu0 %1952
      %1954 = vrot.lane.b32.xlu0 %v1861, 96
      %v1955 = vpop.permute.xlu0 %1954
      %1956 = vrot.lane.b32.xlu0 %v1862, 96
      %v1957 = vpop.permute.xlu0 %1956
      %1958 = vrot.lane.b32.xlu0 %v1863, 96
      %v1959 = vpop.permute.xlu0 %1958
      %1992 = vst.msk [vmem:[#allocation4 + $0x8] sm:$0xff] %vm1350, %v1897
      %1993 = vst.msk [vmem:[#allocation4 + $0x20] sm:$0xff] %vm1350, %v1899
      %1994 = vst.msk [vmem:[#allocation4 + $0x38] sm:$0xff] %vm1350, %v1901
      %1995 = vst.msk [vmem:[#allocation4 + $0x50] sm:$0xff] %vm1350, %v1903
      %1996 = vst.msk [vmem:[#allocation4 + $0x68] sm:$0xff] %vm1350, %v1905
      %1997 = vst.msk [vmem:[#allocation4 + $0x80] sm:$0xff] %vm1350, %v1907
      %1998 = vst.msk [vmem:[#allocation4 + $0x98] sm:$0xff] %vm1350, %v1909
      %1999 = vst.msk [vmem:[#allocation4 + $0xb0] sm:$0xff] %vm1350, %v1911
      %2000 = vst.msk [vmem:[#allocation4 + $0xc8] sm:$0xff] %vm1350, %v1913
      %2001 = vst.msk [vmem:[#allocation4 + $0xe0] sm:$0xff] %vm1350, %v1915
      %2002 = vst.msk [vmem:[#allocation4 + $0xf8] sm:$0xff] %vm1350, %v1917
      %2003 = vst.msk [vmem:[#allocation4 + $0x110] sm:$0xff] %vm1350, %v1919
      %2004 = vst.msk [vmem:[#allocation4 + $0x128] sm:$0xff] %vm1350, %v1921
      %2005 = vst.msk [vmem:[#allocation4 + $0x140] sm:$0xff] %vm1350, %v1923
      %2006 = vst.msk [vmem:[#allocation4 + $0x158] sm:$0xff] %vm1350, %v1925
      %2007 = vst.msk [vmem:[#allocation4 + $0x170] sm:$0xff] %vm1350, %v1927
      %2008 = vst.msk [vmem:[#allocation4 + $0x188] sm:$0xff] %vm1350, %v1929
      %2009 = vst.msk [vmem:[#allocation4 + $0x1a0] sm:$0xff] %vm1350, %v1931
      %2010 = vst.msk [vmem:[#allocation4 + $0x1b8] sm:$0xff] %vm1350, %v1933
      %2011 = vst.msk [vmem:[#allocation4 + $0x1d0] sm:$0xff] %vm1350, %v1935
      %2012 = vst.msk [vmem:[#allocation4 + $0x1e8] sm:$0xff] %vm1350, %v1937
      %2013 = vst.msk [vmem:[#allocation4 + $0x200] sm:$0xff] %vm1350, %v1939
      %2014 = vst.msk [vmem:[#allocation4 + $0x218] sm:$0xff] %vm1350, %v1941
      %2015 = vst.msk [vmem:[#allocation4 + $0x230] sm:$0xff] %vm1350, %v1943
      %2016 = vst.msk [vmem:[#allocation4 + $0x248] sm:$0xff] %vm1350, %v1945
      %2017 = vst.msk [vmem:[#allocation4 + $0x260] sm:$0xff] %vm1350, %v1947
      %2018 = vst.msk [vmem:[#allocation4 + $0x278] sm:$0xff] %vm1350, %v1949
      %2019 = vst.msk [vmem:[#allocation4 + $0x290] sm:$0xff] %vm1350, %v1951
      %2020 = vst.msk [vmem:[#allocation4 + $0x2a8] sm:$0xff] %vm1350, %v1953
      %2021 = vst.msk [vmem:[#allocation4 + $0x2c0] sm:$0xff] %vm1350, %v1955
      %2022 = vst.msk [vmem:[#allocation4 + $0x2d8] sm:$0xff] %vm1350, %v1957
      %2023 = vst.msk [vmem:[#allocation4 + $0x2f0] sm:$0xff] %vm1350, %v1959
      %v2024 = vld [vmem:[%s1639 + $0x2] sm:$0xff]
      %v2025 = vld [vmem:[%s1639 + $0xa] sm:$0xff]
      %v2026 = vld [vmem:[%s1639 + $0x1a] sm:$0xff]
      %v2027 = vld [vmem:[%s1639 + $0x22] sm:$0xff]
      %v2028 = vld [vmem:[%s1639 + $0x32] sm:$0xff]
      %v2029 = vld [vmem:[%s1639 + $0x3a] sm:$0xff]
      %v2030 = vld [vmem:[%s1639 + $0x4a] sm:$0xff]
      %v2031 = vld [vmem:[%s1639 + $0x52] sm:$0xff]
      %v2032 = vld [vmem:[%s1639 + $0x62] sm:$0xff]
      %v2033 = vld [vmem:[%s1639 + $0x6a] sm:$0xff]
      %v2034 = vld [vmem:[%s1639 + $0x7a] sm:$0xff]
      %v2035 = vld [vmem:[%s1639 + $0x82] sm:$0xff]
      %v2036 = vld [vmem:[%s1639 + $0x92] sm:$0xff]
      %v2037 = vld [vmem:[%s1639 + $0x9a] sm:$0xff]
      %v2038 = vld [vmem:[%s1639 + $0xaa] sm:$0xff]
      %v2039 = vld [vmem:[%s1639 + $0xb2] sm:$0xff]
      %v2040 = vld [vmem:[%s1639 + $0xc2] sm:$0xff]
      %v2041 = vld [vmem:[%s1639 + $0xca] sm:$0xff]
      %v2042 = vld [vmem:[%s1639 + $0xda] sm:$0xff]
      %v2043 = vld [vmem:[%s1639 + $0xe2] sm:$0xff]
      %v2044 = vld [vmem:[%s1639 + $0xf2] sm:$0xff]
      %v2045 = vld [vmem:[%s1639 + $0xfa] sm:$0xff]
      %v2046 = vld [vmem:[%s1639 + $0x10a] sm:$0xff]
      %v2047 = vld [vmem:[%s1639 + $0x112] sm:$0xff]
      %v2048 = vld [vmem:[%s1639 + $0x122] sm:$0xff]
      %v2049 = vld [vmem:[%s1639 + $0x12a] sm:$0xff]
      %v2050 = vld [vmem:[%s1639 + $0x13a] sm:$0xff]
      %v2051 = vld [vmem:[%s1639 + $0x142] sm:$0xff]
      %v2052 = vld [vmem:[%s1639 + $0x152] sm:$0xff]
      %v2053 = vld [vmem:[%s1639 + $0x15a] sm:$0xff]
      %v2054 = vld [vmem:[%s1639 + $0x16a] sm:$0xff]
      %v2055 = vld [vmem:[%s1639 + $0x172] sm:$0xff]
      %2056 = vst.msk [vmem:[#allocation4 + $0x10] sm:$0xff] %vm335, %v2024
      %2057 = vst.msk [vmem:[#allocation4 + $0x28] sm:$0xff] %vm335, %v2025
      %2058 = vst.msk [vmem:[#allocation4 + $0x40] sm:$0xff] %vm335, %v2026
      %2059 = vst.msk [vmem:[#allocation4 + $0x58] sm:$0xff] %vm335, %v2027
      %2060 = vst.msk [vmem:[#allocation4 + $0x70] sm:$0xff] %vm335, %v2028
      %2061 = vst.msk [vmem:[#allocation4 + $0x88] sm:$0xff] %vm335, %v2029
      %2062 = vst.msk [vmem:[#allocation4 + $0xa0] sm:$0xff] %vm335, %v2030
      %2063 = vst.msk [vmem:[#allocation4 + $0xb8] sm:$0xff] %vm335, %v2031
      %2064 = vst.msk [vmem:[#allocation4 + $0xd0] sm:$0xff] %vm335, %v2032
      %2065 = vst.msk [vmem:[#allocation4 + $0xe8] sm:$0xff] %vm335, %v2033
      %2066 = vst.msk [vmem:[#allocation4 + $0x100] sm:$0xff] %vm335, %v2034
      %2067 = vst.msk [vmem:[#allocation4 + $0x118] sm:$0xff] %vm335, %v2035
      %2068 = vst.msk [vmem:[#allocation4 + $0x130] sm:$0xff] %vm335, %v2036
      %2069 = vst.msk [vmem:[#allocation4 + $0x148] sm:$0xff] %vm335, %v2037
      %2070 = vst.msk [vmem:[#allocation4 + $0x160] sm:$0xff] %vm335, %v2038
      %2071 = vst.msk [vmem:[#allocation4 + $0x178] sm:$0xff] %vm335, %v2039
      %2072 = vst.msk [vmem:[#allocation4 + $0x190] sm:$0xff] %vm335, %v2040
      %2073 = vst.msk [vmem:[#allocation4 + $0x1a8] sm:$0xff] %vm335, %v2041
      %2074 = vst.msk [vmem:[#allocation4 + $0x1c0] sm:$0xff] %vm335, %v2042
      %2075 = vst.msk [vmem:[#allocation4 + $0x1d8] sm:$0xff] %vm335, %v2043
      %2076 = vst.msk [vmem:[#allocation4 + $0x1f0] sm:$0xff] %vm335, %v2044
      %2077 = vst.msk [vmem:[#allocation4 + $0x208] sm:$0xff] %vm335, %v2045
      %2078 = vst.msk [vmem:[#allocation4 + $0x220] sm:$0xff] %vm335, %v2046
      %2079 = vst.msk [vmem:[#allocation4 + $0x238] sm:$0xff] %vm335, %v2047
      %2080 = vst.msk [vmem:[#allocation4 + $0x250] sm:$0xff] %vm335, %v2048
      %2081 = vst.msk [vmem:[#allocation4 + $0x268] sm:$0xff] %vm335, %v2049
      %2082 = vst.msk [vmem:[#allocation4 + $0x280] sm:$0xff] %vm335, %v2050
      %2083 = vst.msk [vmem:[#allocation4 + $0x298] sm:$0xff] %vm335, %v2051
      %2084 = vst.msk [vmem:[#allocation4 + $0x2b0] sm:$0xff] %vm335, %v2052
      %2085 = vst.msk [vmem:[#allocation4 + $0x2c8] sm:$0xff] %vm335, %v2053
      %2086 = vst.msk [vmem:[#allocation4 + $0x2e0] sm:$0xff] %vm335, %v2054
      %2087 = vst.msk [vmem:[#allocation4 + $0x2f8] sm:$0xff] %vm335, %v2055
      %v2088 = vld [vmem:[#allocation4] sm:$0xff]
      %v2089 = vld [vmem:[#allocation4 + $0x8] sm:$0xff]
      %v2090 = vld [vmem:[#allocation4 + $0x10] sm:$0xff]
      %v2091 = vld [vmem:[#allocation4 + $0x18] sm:$0xff]
      %v2092 = vld [vmem:[#allocation4 + $0x20] sm:$0xff]
      %v2093 = vld [vmem:[#allocation4 + $0x28] sm:$0xff]
      %v2094 = vld [vmem:[#allocation4 + $0x30] sm:$0xff]
      %v2095 = vld [vmem:[#allocation4 + $0x38] sm:$0xff]
      %v2096 = vld [vmem:[#allocation4 + $0x40] sm:$0xff]
      %v2097 = vld [vmem:[#allocation4 + $0x48] sm:$0xff]
      %v2098 = vld [vmem:[#allocation4 + $0x50] sm:$0xff]
      %v2099 = vld [vmem:[#allocation4 + $0x58] sm:$0xff]
      %v2100 = vld [vmem:[#allocation4 + $0x60] sm:$0xff]
      %v2101 = vld [vmem:[#allocation4 + $0x68] sm:$0xff]
      %v2102 = vld [vmem:[#allocation4 + $0x70] sm:$0xff]
      %v2103 = vld [vmem:[#allocation4 + $0x78] sm:$0xff]
      %v2104 = vld [vmem:[#allocation4 + $0x80] sm:$0xff]
      %v2105 = vld [vmem:[#allocation4 + $0x88] sm:$0xff]
      %v2106 = vld [vmem:[#allocation4 + $0x90] sm:$0xff]
      %v2107 = vld [vmem:[#allocation4 + $0x98] sm:$0xff]
      %v2108 = vld [vmem:[#allocation4 + $0xa0] sm:$0xff]
      %v2109 = vld [vmem:[#allocation4 + $0xa8] sm:$0xff]
      %v2110 = vld [vmem:[#allocation4 + $0xb0] sm:$0xff]
      %v2111 = vld [vmem:[#allocation4 + $0xb8] sm:$0xff]
      %v2112 = vld [vmem:[#allocation4 + $0xc0] sm:$0xff]
      %v2113 = vld [vmem:[#allocation4 + $0xc8] sm:$0xff]
      %v2114 = vld [vmem:[#allocation4 + $0xd0] sm:$0xff]
      %v2115 = vld [vmem:[#allocation4 + $0xd8] sm:$0xff]
      %v2116 = vld [vmem:[#allocation4 + $0xe0] sm:$0xff]
      %v2117 = vld [vmem:[#allocation4 + $0xe8] sm:$0xff]
      %v2118 = vld [vmem:[#allocation4 + $0xf0] sm:$0xff]
      %v2119 = vld [vmem:[#allocation4 + $0xf8] sm:$0xff]
      %v2120 = vld [vmem:[#allocation4 + $0x100] sm:$0xff]
      %v2121 = vld [vmem:[#allocation4 + $0x108] sm:$0xff]
      %v2122 = vld [vmem:[#allocation4 + $0x110] sm:$0xff]
      %v2123 = vld [vmem:[#allocation4 + $0x118] sm:$0xff]
      %v2124 = vld [vmem:[#allocation4 + $0x120] sm:$0xff]
      %v2125 = vld [vmem:[#allocation4 + $0x128] sm:$0xff]
      %v2126 = vld [vmem:[#allocation4 + $0x130] sm:$0xff]
      %v2127 = vld [vmem:[#allocation4 + $0x138] sm:$0xff]
      %v2128 = vld [vmem:[#allocation4 + $0x140] sm:$0xff]
      %v2129 = vld [vmem:[#allocation4 + $0x148] sm:$0xff]
      %v2130 = vld [vmem:[#allocation4 + $0x150] sm:$0xff]
      %v2131 = vld [vmem:[#allocation4 + $0x158] sm:$0xff]
      %v2132 = vld [vmem:[#allocation4 + $0x160] sm:$0xff]
      %v2133 = vld [vmem:[#allocation4 + $0x168] sm:$0xff]
      %v2134 = vld [vmem:[#allocation4 + $0x170] sm:$0xff]
      %v2135 = vld [vmem:[#allocation4 + $0x178] sm:$0xff]
      %v2136 = vld [vmem:[#allocation4 + $0x180] sm:$0xff]
      %v2137 = vld [vmem:[#allocation4 + $0x188] sm:$0xff]
      %v2138 = vld [vmem:[#allocation4 + $0x190] sm:$0xff]
      %v2139 = vld [vmem:[#allocation4 + $0x198] sm:$0xff]
      %v2140 = vld [vmem:[#allocation4 + $0x1a0] sm:$0xff]
      %v2141 = vld [vmem:[#allocation4 + $0x1a8] sm:$0xff]
      %v2142 = vld [vmem:[#allocation4 + $0x1b0] sm:$0xff]
      %v2143 = vld [vmem:[#allocation4 + $0x1b8] sm:$0xff]
      %v2144 = vld [vmem:[#allocation4 + $0x1c0] sm:$0xff]
      %v2145 = vld [vmem:[#allocation4 + $0x1c8] sm:$0xff]
      %v2146 = vld [vmem:[#allocation4 + $0x1d0] sm:$0xff]
      %v2147 = vld [vmem:[#allocation4 + $0x1d8] sm:$0xff]
      %v2148 = vld [vmem:[#allocation4 + $0x1e0] sm:$0xff]
      %v2149 = vld [vmem:[#allocation4 + $0x1e8] sm:$0xff]
      %v2150 = vld [vmem:[#allocation4 + $0x1f0] sm:$0xff]
      %v2151 = vld [vmem:[#allocation4 + $0x1f8] sm:$0xff]
      %v2152 = vld [vmem:[#allocation4 + $0x200] sm:$0xff]
      %v2153 = vld [vmem:[#allocation4 + $0x208] sm:$0xff]
      %v2154 = vld [vmem:[#allocation4 + $0x210] sm:$0xff]
      %v2155 = vld [vmem:[#allocation4 + $0x218] sm:$0xff]
      %v2156 = vld [vmem:[#allocation4 + $0x220] sm:$0xff]
      %v2157 = vld [vmem:[#allocation4 + $0x228] sm:$0xff]
      %v2158 = vld [vmem:[#allocation4 + $0x230] sm:$0xff]
      %v2159 = vld [vmem:[#allocation4 + $0x238] sm:$0xff]
      %v2160 = vld [vmem:[#allocation4 + $0x240] sm:$0xff]
      %v2161 = vld [vmem:[#allocation4 + $0x248] sm:$0xff]
      %v2162 = vld [vmem:[#allocation4 + $0x250] sm:$0xff]
      %v2163 = vld [vmem:[#allocation4 + $0x258] sm:$0xff]
      %v2164 = vld [vmem:[#allocation4 + $0x260] sm:$0xff]
      %v2165 = vld [vmem:[#allocation4 + $0x268] sm:$0xff]
      %v2166 = vld [vmem:[#allocation4 + $0x270] sm:$0xff]
      %v2167 = vld [vmem:[#allocation4 + $0x278] sm:$0xff]
      %v2168 = vld [vmem:[#allocation4 + $0x280] sm:$0xff]
      %v2169 = vld [vmem:[#allocation4 + $0x288] sm:$0xff]
      %v2170 = vld [vmem:[#allocation4 + $0x290] sm:$0xff]
      %v2171 = vld [vmem:[#allocation4 + $0x298] sm:$0xff]
      %v2172 = vld [vmem:[#allocation4 + $0x2a0] sm:$0xff]
      %v2173 = vld [vmem:[#allocation4 + $0x2a8] sm:$0xff]
      %v2174 = vld [vmem:[#allocation4 + $0x2b0] sm:$0xff]
      %v2175 = vld [vmem:[#allocation4 + $0x2b8] sm:$0xff]
      %v2176 = vld [vmem:[#allocation4 + $0x2c0] sm:$0xff]
      %v2177 = vld [vmem:[#allocation4 + $0x2c8] sm:$0xff]
      %v2178 = vld [vmem:[#allocation4 + $0x2d0] sm:$0xff]
      %v2179 = vld [vmem:[#allocation4 + $0x2d8] sm:$0xff]
      %v2180 = vld [vmem:[#allocation4 + $0x2e0] sm:$0xff]
      %v2181 = vld [vmem:[#allocation4 + $0x2e8] sm:$0xff]
      %v2182 = vld [vmem:[#allocation4 + $0x2f0] sm:$0xff]
      %v2183 = vld [vmem:[#allocation4 + $0x2f8] sm:$0xff]
      %v2184 = vld [vmem:[%s3] sm:$0xff]
      %v2185 = vld [vmem:[%s3 + $0x8] sm:$0xff]
      %v2186 = vld [vmem:[%s3 + $0x10] sm:$0xff]
      %v2187 = vld [vmem:[%s3 + $0x18] sm:$0xff]
      %v2188 = vld [vmem:[%s3 + $0x20] sm:$0xff]
      %v2189 = vld [vmem:[%s3 + $0x28] sm:$0xff]
      %v2190 = vld [vmem:[%s3 + $0x30] sm:$0xff]
      %v2191 = vld [vmem:[%s3 + $0x38] sm:$0xff]
      %v2192 = vld [vmem:[%s3 + $0x40] sm:$0xff]
      %v2193 = vld [vmem:[%s3 + $0x48] sm:$0xff]
      %v2194 = vld [vmem:[%s3 + $0x50] sm:$0xff]
      %v2195 = vld [vmem:[%s3 + $0x58] sm:$0xff]
      %v2196 = vld [vmem:[%s3 + $0x60] sm:$0xff]
      %v2197 = vld [vmem:[%s3 + $0x68] sm:$0xff]
      %v2198 = vld [vmem:[%s3 + $0x70] sm:$0xff]
      %v2199 = vld [vmem:[%s3 + $0x78] sm:$0xff]
      %v2200 = vld [vmem:[%s3 + $0x80] sm:$0xff]
      %v2201 = vld [vmem:[%s3 + $0x88] sm:$0xff]
      %v2202 = vld [vmem:[%s3 + $0x90] sm:$0xff]
      %v2203 = vld [vmem:[%s3 + $0x98] sm:$0xff]
      %v2204 = vld [vmem:[%s3 + $0xa0] sm:$0xff]
      %v2205 = vld [vmem:[%s3 + $0xa8] sm:$0xff]
      %v2206 = vld [vmem:[%s3 + $0xb0] sm:$0xff]
      %v2207 = vld [vmem:[%s3 + $0xb8] sm:$0xff]
      %v2208 = vld [vmem:[%s3 + $0xc0] sm:$0xff]
      %v2209 = vld [vmem:[%s3 + $0xc8] sm:$0xff]
      %v2210 = vld [vmem:[%s3 + $0xd0] sm:$0xff]
      %v2211 = vld [vmem:[%s3 + $0xd8] sm:$0xff]
      %v2212 = vld [vmem:[%s3 + $0xe0] sm:$0xff]
      %v2213 = vld [vmem:[%s3 + $0xe8] sm:$0xff]
      %v2214 = vld [vmem:[%s3 + $0xf0] sm:$0xff]
      %v2215 = vld [vmem:[%s3 + $0xf8] sm:$0xff]
      %v2216 = vld [vmem:[%s3 + $0x100] sm:$0xff]
      %v2217 = vld [vmem:[%s3 + $0x108] sm:$0xff]
      %v2218 = vld [vmem:[%s3 + $0x110] sm:$0xff]
      %v2219 = vld [vmem:[%s3 + $0x118] sm:$0xff]
      %v2220 = vld [vmem:[%s4] sm:$0x1]
      %v2222 = vlaneseq
      %v2223 = vshrl.u32 %v2222, 7
      %v2224 = vsub.s32 0, %v2223
      %v2225 = vrot.slane %v2220, %v2224
      %v2228 = vsel %vm335, %v2090, 0
      %v2231 = vsel %vm335, %v2093, 0
      %v2234 = vsel %vm335, %v2096, 0
      %v2237 = vsel %vm335, %v2099, 0
      %v2240 = vsel %vm335, %v2102, 0
      %v2243 = vsel %vm335, %v2105, 0
      %v2246 = vsel %vm335, %v2108, 0
      %v2249 = vsel %vm335, %v2111, 0
      %v2252 = vsel %vm335, %v2114, 0
      %v2255 = vsel %vm335, %v2117, 0
      %v2258 = vsel %vm335, %v2120, 0
      %v2261 = vsel %vm335, %v2123, 0
      %v2264 = vsel %vm335, %v2126, 0
      %v2267 = vsel %vm335, %v2129, 0
      %v2270 = vsel %vm335, %v2132, 0
      %v2273 = vsel %vm335, %v2135, 0
      %v2276 = vsel %vm335, %v2138, 0
      %v2279 = vsel %vm335, %v2141, 0
      %v2282 = vsel %vm335, %v2144, 0
      %v2285 = vsel %vm335, %v2147, 0
      %v2288 = vsel %vm335, %v2150, 0
      %v2291 = vsel %vm335, %v2153, 0
      %v2294 = vsel %vm335, %v2156, 0
      %v2297 = vsel %vm335, %v2159, 0
      %v2300 = vsel %vm335, %v2162, 0
      %v2303 = vsel %vm335, %v2165, 0
      %v2306 = vsel %vm335, %v2168, 0
      %v2309 = vsel %vm335, %v2171, 0
      %v2312 = vsel %vm335, %v2174, 0
      %v2315 = vsel %vm335, %v2177, 0
      %v2318 = vsel %vm335, %v2180, 0
      %v2321 = vsel %vm335, %v2183, 0
      %2323 = vmatprep.subr.mxu0 0.0
      %2324 = vmatpush1.msra.mxu0 %v2199
      %2325 = vmatprep.subr.mxu0 0.0
      %2326 = vmatpush1.msra.mxu0 %v2198
      %2327 = vmatprep.subr.mxu0 0.0
      %2328 = vmatpush1.msra.mxu0 %v2197
      %2329 = vmatprep.subr.mxu0 0.0
      %2330 = vmatpush1.msra.mxu0 %v2196
      %2331 = vmatprep.subr.mxu0 0.0
      %2332 = vmatpush1.msra.mxu0 %v2195
      %2333 = vmatprep.subr.mxu0 0.0
      %2334 = vmatpush1.msra.mxu0 %v2194
      %2335 = vmatprep.subr.mxu0 0.0
      %2336 = vmatpush1.msra.mxu0 %v2193
      %2337 = vmatprep.subr.mxu0 0.0
      %2338 = vmatpush1.msra.mxu0 %v2192
      %2339 = vmatprep.subr.mxu0 0.0
      %2340 = vmatpush1.msra.mxu0 %v2191
      %2341 = vmatprep.subr.mxu0 0.0
      %2342 = vmatpush1.msra.mxu0 %v2190
      %2343 = vmatprep.subr.mxu0 0.0
      %2344 = vmatpush1.msra.mxu0 %v2189
      %2345 = vmatprep.subr.mxu0 0.0
      %2346 = vmatpush1.msra.mxu0 %v2188
      %2347 = vmatprep.subr.mxu0 0.0
      %2348 = vmatpush1.msra.mxu0 %v2187
      %2349 = vmatprep.subr.mxu0 0.0
      %2350 = vmatpush1.msra.mxu0 %v2186
      %2351 = vmatprep.subr.mxu0 0.0
      %2352 = vmatpush1.msra.mxu0 %v2185
      %2353 = vmatprep.subr.mxu0 0.0
      %2354 = vmatpush1.msra.mxu0 %v2184
      %2355 = vmatprep.subr.mxu0 0.0
      %2356 = vmatpush2.msra.mxu0 %v2215
      %2357 = vmatprep.subr.mxu0 0.0
      %2358 = vmatpush2.msra.mxu0 %v2214
      %2359 = vmatprep.subr.mxu0 0.0
      %2360 = vmatpush2.msra.mxu0 %v2213
      %2361 = vmatprep.subr.mxu0 0.0
      %2362 = vmatpush2.msra.mxu0 %v2212
      %2363 = vmatprep.subr.mxu0 0.0
      %2364 = vmatpush2.msra.mxu0 %v2211
      %2365 = vmatprep.subr.mxu0 0.0
      %2366 = vmatpush2.msra.mxu0 %v2210
      %2367 = vmatprep.subr.mxu0 0.0
      %2368 = vmatpush2.msra.mxu0 %v2209
      %2369 = vmatprep.subr.mxu0 0.0
      %2370 = vmatpush2.msra.mxu0 %v2208
      %2371 = vmatprep.subr.mxu0 0.0
      %2372 = vmatpush2.msra.mxu0 %v2207
      %2373 = vmatprep.subr.mxu0 0.0
      %2374 = vmatpush2.msra.mxu0 %v2206
      %2375 = vmatprep.subr.mxu0 0.0
      %2376 = vmatpush2.msra.mxu0 %v2205
      %2377 = vmatprep.subr.mxu0 0.0
      %2378 = vmatpush2.msra.mxu0 %v2204
      %2379 = vmatprep.subr.mxu0 0.0
      %2380 = vmatpush2.msra.mxu0 %v2203
      %2381 = vmatprep.subr.mxu0 0.0
      %2382 = vmatpush2.msra.mxu0 %v2202
      %2383 = vmatprep.subr.mxu0 0.0
      %2384 = vmatpush2.msra.mxu0 %v2201
      %2385 = vmatprep.subr.mxu0 0.0
      %2386 = vmatpush2.msra.mxu0 %v2200
      %2387 = vmatprep.mubr.f32.mxu0 %v2089
      %2388 = vmatmul.mubr.f32.gmra.mxu0 %v2088
      %v2389 = vpop.f32.mrf.mxu0
      %v2390 = vadd.f32 %v2225, %v2389
      %v2391 = vpop.f32.mrf.mxu0
      %2392 = vmatprep.mubr.f32.mxu0 %v2092
      %2393 = vmatmul.mubr.f32.gmra.mxu0 %v2091
      %v2394 = vpop.f32.mrf.mxu0
      %v2395 = vadd.f32 %v2225, %v2394
      %v2396 = vpop.f32.mrf.mxu0
      %2397 = vmatprep.mubr.f32.mxu0 %v2095
      %2398 = vmatmul.mubr.f32.gmra.mxu0 %v2094
      %v2399 = vpop.f32.mrf.mxu0
      %v2400 = vadd.f32 %v2225, %v2399
      %v2401 = vpop.f32.mrf.mxu0
      %2402 = vmatprep.mubr.f32.mxu0 %v2098
      %2403 = vmatmul.mubr.f32.gmra.mxu0 %v2097
      %v2404 = vpop.f32.mrf.mxu0
      %v2405 = vadd.f32 %v2225, %v2404
      %v2406 = vpop.f32.mrf.mxu0
      %2407 = vmatprep.mubr.f32.mxu0 %v2101
      %2408 = vmatmul.mubr.f32.gmra.mxu0 %v2100
      %v2409 = vpop.f32.mrf.mxu0
      %v2410 = vadd.f32 %v2225, %v2409
      %v2411 = vpop.f32.mrf.mxu0
      %2412 = vmatprep.mubr.f32.mxu0 %v2104
      %2413 = vmatmul.mubr.f32.gmra.mxu0 %v2103
      %v2414 = vpop.f32.mrf.mxu0
      %v2415 = vadd.f32 %v2225, %v2414
      %v2416 = vpop.f32.mrf.mxu0
      %2417 = vmatprep.mubr.f32.mxu0 %v2107
      %2418 = vmatmul.mubr.f32.gmra.mxu0 %v2106
      %v2419 = vpop.f32.mrf.mxu0
      %v2420 = vadd.f32 %v2225, %v2419
      %v2421 = vpop.f32.mrf.mxu0
      %2422 = vmatprep.mubr.f32.mxu0 %v2110
      %2423 = vmatmul.mubr.f32.gmra.mxu0 %v2109
      %v2424 = vpop.f32.mrf.mxu0
      %v2425 = vadd.f32 %v2225, %v2424
      %v2426 = vpop.f32.mrf.mxu0
      %2427 = vmatprep.mubr.f32.mxu0 %v2113
      %2428 = vmatmul.mubr.f32.gmra.mxu0 %v2112
      %v2429 = vpop.f32.mrf.mxu0
      %v2430 = vadd.f32 %v2225, %v2429
      %v2431 = vpop.f32.mrf.mxu0
      %2432 = vmatprep.mubr.f32.mxu0 %v2116
      %2433 = vmatmul.mubr.f32.gmra.mxu0 %v2115
      %v2434 = vpop.f32.mrf.mxu0
      %v2435 = vadd.f32 %v2225, %v2434
      %v2436 = vpop.f32.mrf.mxu0
      %2437 = vmatprep.mubr.f32.mxu0 %v2119
      %2438 = vmatmul.mubr.f32.gmra.mxu0 %v2118
      %v2439 = vpop.f32.mrf.mxu0
      %v2440 = vadd.f32 %v2225, %v2439
      %v2441 = vpop.f32.mrf.mxu0
      %2442 = vmatprep.mubr.f32.mxu0 %v2122
      %2443 = vmatmul.mubr.f32.gmra.mxu0 %v2121
      %v2444 = vpop.f32.mrf.mxu0
      %v2445 = vadd.f32 %v2225, %v2444
      %v2446 = vpop.f32.mrf.mxu0
      %2447 = vmatprep.mubr.f32.mxu0 %v2125
      %2448 = vmatmul.mubr.f32.gmra.mxu0 %v2124
      %v2449 = vpop.f32.mrf.mxu0
      %v2450 = vadd.f32 %v2225, %v2449
      %v2451 = vpop.f32.mrf.mxu0
      %2452 = vmatprep.mubr.f32.mxu0 %v2128
      %2453 = vmatmul.mubr.f32.gmra.mxu0 %v2127
      %v2454 = vpop.f32.mrf.mxu0
      %v2455 = vadd.f32 %v2225, %v2454
      %v2456 = vpop.f32.mrf.mxu0
      %2457 = vmatprep.mubr.f32.mxu0 %v2131
      %2458 = vmatmul.mubr.f32.gmra.mxu0 %v2130
      %v2459 = vpop.f32.mrf.mxu0
      %v2460 = vadd.f32 %v2225, %v2459
      %v2461 = vpop.f32.mrf.mxu0
      %2462 = vmatprep.mubr.f32.mxu0 %v2134
      %2463 = vmatmul.mubr.f32.gmra.mxu0 %v2133
      %v2464 = vpop.f32.mrf.mxu0
      %v2465 = vadd.f32 %v2225, %v2464
      %v2466 = vpop.f32.mrf.mxu0
      %2467 = vmatprep.mubr.f32.mxu0 %v2137
      %2468 = vmatmul.mubr.f32.gmra.mxu0 %v2136
      %v2469 = vpop.f32.mrf.mxu0
      %v2470 = vadd.f32 %v2225, %v2469
      %v2471 = vpop.f32.mrf.mxu0
      %2472 = vmatprep.mubr.f32.mxu0 %v2140
      %2473 = vmatmul.mubr.f32.gmra.mxu0 %v2139
      %v2474 = vpop.f32.mrf.mxu0
      %v2475 = vadd.f32 %v2225, %v2474
      %v2476 = vpop.f32.mrf.mxu0
      %2477 = vmatprep.mubr.f32.mxu0 %v2143
      %2478 = vmatmul.mubr.f32.gmra.mxu0 %v2142
      %v2479 = vpop.f32.mrf.mxu0
      %v2480 = vadd.f32 %v2225, %v2479
      %v2481 = vpop.f32.mrf.mxu0
      %2482 = vmatprep.mubr.f32.mxu0 %v2146
      %2483 = vmatmul.mubr.f32.gmra.mxu0 %v2145
      %v2484 = vpop.f32.mrf.mxu0
      %v2485 = vadd.f32 %v2225, %v2484
      %v2486 = vpop.f32.mrf.mxu0
      %2487 = vmatprep.mubr.f32.mxu0 %v2149
      %2488 = vmatmul.mubr.f32.gmra.mxu0 %v2148
      %v2489 = vpop.f32.mrf.mxu0
      %v2490 = vadd.f32 %v2225, %v2489
      %v2491 = vpop.f32.mrf.mxu0
      %2492 = vmatprep.mubr.f32.mxu0 %v2152
      %2493 = vmatmul.mubr.f32.gmra.mxu0 %v2151
      %v2494 = vpop.f32.mrf.mxu0
      %v2495 = vadd.f32 %v2225, %v2494
      %v2496 = vpop.f32.mrf.mxu0
      %2497 = vmatprep.mubr.f32.mxu0 %v2155
      %2498 = vmatmul.mubr.f32.gmra.mxu0 %v2154
      %v2499 = vpop.f32.mrf.mxu0
      %v2500 = vadd.f32 %v2225, %v2499
      %v2501 = vpop.f32.mrf.mxu0
      %2502 = vmatprep.mubr.f32.mxu0 %v2158
      %2503 = vmatmul.mubr.f32.gmra.mxu0 %v2157
      %v2504 = vpop.f32.mrf.mxu0
      %v2505 = vadd.f32 %v2225, %v2504
      %v2506 = vpop.f32.mrf.mxu0
      %2507 = vmatprep.mubr.f32.mxu0 %v2161
      %2508 = vmatmul.mubr.f32.gmra.mxu0 %v2160
      %v2509 = vpop.f32.mrf.mxu0
      %v2510 = vadd.f32 %v2225, %v2509
      %v2511 = vpop.f32.mrf.mxu0
      %2512 = vmatprep.mubr.f32.mxu0 %v2164
      %2513 = vmatmul.mubr.f32.gmra.mxu0 %v2163
      %v2514 = vpop.f32.mrf.mxu0
      %v2515 = vadd.f32 %v2225, %v2514
      %v2516 = vpop.f32.mrf.mxu0
      %2517 = vmatprep.mubr.f32.mxu0 %v2167
      %2518 = vmatmul.mubr.f32.gmra.mxu0 %v2166
      %v2519 = vpop.f32.mrf.mxu0
      %v2520 = vadd.f32 %v2225, %v2519
      %v2521 = vpop.f32.mrf.mxu0
      %2522 = vmatprep.mubr.f32.mxu0 %v2170
      %2523 = vmatmul.mubr.f32.gmra.mxu0 %v2169
      %v2524 = vpop.f32.mrf.mxu0
      %v2525 = vadd.f32 %v2225, %v2524
      %v2526 = vpop.f32.mrf.mxu0
      %2527 = vmatprep.mubr.f32.mxu0 %v2173
      %2528 = vmatmul.mubr.f32.gmra.mxu0 %v2172
      %v2529 = vpop.f32.mrf.mxu0
      %v2530 = vadd.f32 %v2225, %v2529
      %v2531 = vpop.f32.mrf.mxu0
      %2532 = vmatprep.mubr.f32.mxu0 %v2176
      %2533 = vmatmul.mubr.f32.gmra.mxu0 %v2175
      %v2534 = vpop.f32.mrf.mxu0
      %v2535 = vadd.f32 %v2225, %v2534
      %v2536 = vpop.f32.mrf.mxu0
      %2537 = vmatprep.mubr.f32.mxu0 %v2179
      %2538 = vmatmul.mubr.f32.gmra.mxu0 %v2178
      %v2539 = vpop.f32.mrf.mxu0
      %v2540 = vadd.f32 %v2225, %v2539
      %v2541 = vpop.f32.mrf.mxu0
      %2542 = vmatprep.mubr.f32.mxu0 %v2182
      %2543 = vmatmul.mubr.f32.gmra.mxu0 %v2181
      %v2544 = vpop.f32.mrf.mxu0
      %v2545 = vadd.f32 %v2225, %v2544
      %v2546 = vpop.f32.mrf.mxu0
      %2547 = vdwg.mxu0
      %2548 = vmatprep.subr.mxu0 0.0
      %2549 = vmatpush1.msra.mxu0 0.0
      %2550 = vmatprep.subr.mxu0 0.0
      %2551 = vmatpush1.msra.mxu0 0.0
      %2552 = vmatprep.subr.mxu0 0.0
      %2553 = vmatpush1.msra.mxu0 0.0
      %2554 = vmatprep.subr.mxu0 0.0
      %2555 = vmatpush1.msra.mxu0 0.0
      %2556 = vmatprep.subr.mxu0 0.0
      %2557 = vmatpush1.msra.mxu0 0.0
      %2558 = vmatprep.subr.mxu0 0.0
      %2559 = vmatpush1.msra.mxu0 0.0
      %2560 = vmatprep.subr.mxu0 0.0
      %2561 = vmatpush1.msra.mxu0 0.0
      %2562 = vmatprep.subr.mxu0 0.0
      %2563 = vmatpush1.msra.mxu0 0.0
      %2564 = vmatprep.subr.mxu0 0.0
      %2565 = vmatpush1.msra.mxu0 0.0
      %2566 = vmatprep.subr.mxu0 0.0
      %2567 = vmatpush1.msra.mxu0 0.0
      %2568 = vmatprep.subr.mxu0 0.0
      %2569 = vmatpush1.msra.mxu0 0.0
      %2570 = vmatprep.subr.mxu0 0.0
      %2571 = vmatpush1.msra.mxu0 0.0
      %2572 = vmatprep.subr.mxu0 0.0
      %2573 = vmatpush1.msra.mxu0 %v2219
      %2574 = vmatprep.subr.mxu0 0.0
      %2575 = vmatpush1.msra.mxu0 %v2218
      %2576 = vmatprep.subr.mxu0 0.0
      %2577 = vmatpush1.msra.mxu0 %v2217
      %2578 = vmatprep.subr.mxu0 0.0
      %2579 = vmatpush1.msra.mxu0 %v2216
      %2580 = vmatprep.subr.mxu0 0.0
      %2581 = vmatpush2.msra.mxu0 0.0
      %2582 = vmatprep.subr.mxu0 0.0
      %2583 = vmatpush2.msra.mxu0 0.0
      %2584 = vmatprep.subr.mxu0 0.0
      %2585 = vmatpush2.msra.mxu0 0.0
      %2586 = vmatprep.subr.mxu0 0.0
      %2587 = vmatpush2.msra.mxu0 0.0
      %2588 = vmatprep.subr.mxu0 0.0
      %2589 = vmatpush2.msra.mxu0 0.0
      %2590 = vmatprep.subr.mxu0 0.0
      %2591 = vmatpush2.msra.mxu0 0.0
      %2592 = vmatprep.subr.mxu0 0.0
      %2593 = vmatpush2.msra.mxu0 0.0
      %2594 = vmatprep.subr.mxu0 0.0
      %2595 = vmatpush2.msra.mxu0 0.0
      %2596 = vmatprep.subr.mxu0 0.0
      %2597 = vmatpush2.msra.mxu0 0.0
      %2598 = vmatprep.subr.mxu0 0.0
      %2599 = vmatpush2.msra.mxu0 0.0
      %2600 = vmatprep.subr.mxu0 0.0
      %2601 = vmatpush2.msra.mxu0 0.0
      %2602 = vmatprep.subr.mxu0 0.0
      %2603 = vmatpush2.msra.mxu0 0.0
      %2604 = vmatprep.subr.mxu0 0.0
      %2605 = vmatpush2.msra.mxu0 0.0
      %2606 = vmatprep.subr.mxu0 0.0
      %2607 = vmatpush2.msra.mxu0 0.0
      %2608 = vmatprep.subr.mxu0 0.0
      %2609 = vmatpush2.msra.mxu0 0.0
      %2610 = vmatprep.subr.mxu0 0.0
      %2611 = vmatpush2.msra.mxu0 0.0
      %2612 = vmatprep.mubr.f32.mxu0 0.0
      %2613 = vmatmul.mubr.f32.gmra.mxu0 %v2228
      %v2614 = vpop.f32.mrf.mxu0
      %v2615 = vadd.f32 %v2390, %v2614
      %v2616 = vpop.f32.mrf.mxu0
      %2617 = vmatprep.mubr.f32.mxu0 0.0
      %2618 = vmatmul.mubr.f32.gmra.mxu0 %v2231
      %v2619 = vpop.f32.mrf.mxu0
      %v2620 = vadd.f32 %v2395, %v2619
      %v2621 = vpop.f32.mrf.mxu0
      %2622 = vmatprep.mubr.f32.mxu0 0.0
      %2623 = vmatmul.mubr.f32.gmra.mxu0 %v2234
      %v2624 = vpop.f32.mrf.mxu0
      %v2625 = vadd.f32 %v2400, %v2624
      %v2626 = vpop.f32.mrf.mxu0
      %2627 = vmatprep.mubr.f32.mxu0 0.0
      %2628 = vmatmul.mubr.f32.gmra.mxu0 %v2237
      %v2629 = vpop.f32.mrf.mxu0
      %v2630 = vadd.f32 %v2405, %v2629
      %v2631 = vpop.f32.mrf.mxu0
      %2632 = vmatprep.mubr.f32.mxu0 0.0
      %2633 = vmatmul.mubr.f32.gmra.mxu0 %v2240
      %v2634 = vpop.f32.mrf.mxu0
      %v2635 = vadd.f32 %v2410, %v2634
      %v2636 = vpop.f32.mrf.mxu0
      %2637 = vmatprep.mubr.f32.mxu0 0.0
      %2638 = vmatmul.mubr.f32.gmra.mxu0 %v2243
      %v2639 = vpop.f32.mrf.mxu0
      %v2640 = vadd.f32 %v2415, %v2639
      %v2641 = vpop.f32.mrf.mxu0
      %2642 = vmatprep.mubr.f32.mxu0 0.0
      %2643 = vmatmul.mubr.f32.gmra.mxu0 %v2246
      %v2644 = vpop.f32.mrf.mxu0
      %v2645 = vadd.f32 %v2420, %v2644
      %v2646 = vpop.f32.mrf.mxu0
      %2647 = vmatprep.mubr.f32.mxu0 0.0
      %2648 = vmatmul.mubr.f32.gmra.mxu0 %v2249
      %v2649 = vpop.f32.mrf.mxu0
      %v2650 = vadd.f32 %v2425, %v2649
      %v2651 = vpop.f32.mrf.mxu0
      %2652 = vmatprep.mubr.f32.mxu0 0.0
      %2653 = vmatmul.mubr.f32.gmra.mxu0 %v2252
      %v2654 = vpop.f32.mrf.mxu0
      %v2655 = vadd.f32 %v2430, %v2654
      %v2656 = vpop.f32.mrf.mxu0
      %2657 = vmatprep.mubr.f32.mxu0 0.0
      %2658 = vmatmul.mubr.f32.gmra.mxu0 %v2255
      %v2659 = vpop.f32.mrf.mxu0
      %v2660 = vadd.f32 %v2435, %v2659
      %v2661 = vpop.f32.mrf.mxu0
      %2662 = vmatprep.mubr.f32.mxu0 0.0
      %2663 = vmatmul.mubr.f32.gmra.mxu0 %v2258
      %v2664 = vpop.f32.mrf.mxu0
      %v2665 = vadd.f32 %v2440, %v2664
      %v2666 = vpop.f32.mrf.mxu0
      %2667 = vmatprep.mubr.f32.mxu0 0.0
      %2668 = vmatmul.mubr.f32.gmra.mxu0 %v2261
      %v2669 = vpop.f32.mrf.mxu0
      %v2670 = vadd.f32 %v2445, %v2669
      %v2671 = vpop.f32.mrf.mxu0
      %2672 = vmatprep.mubr.f32.mxu0 0.0
      %2673 = vmatmul.mubr.f32.gmra.mxu0 %v2264
      %v2674 = vpop.f32.mrf.mxu0
      %v2675 = vadd.f32 %v2450, %v2674
      %v2676 = vpop.f32.mrf.mxu0
      %2677 = vmatprep.mubr.f32.mxu0 0.0
      %2678 = vmatmul.mubr.f32.gmra.mxu0 %v2267
      %v2679 = vpop.f32.mrf.mxu0
      %v2680 = vadd.f32 %v2455, %v2679
      %v2681 = vpop.f32.mrf.mxu0
      %2682 = vmatprep.mubr.f32.mxu0 0.0
      %2683 = vmatmul.mubr.f32.gmra.mxu0 %v2270
      %v2684 = vpop.f32.mrf.mxu0
      %v2685 = vadd.f32 %v2460, %v2684
      %v2686 = vpop.f32.mrf.mxu0
      %2687 = vmatprep.mubr.f32.mxu0 0.0
      %2688 = vmatmul.mubr.f32.gmra.mxu0 %v2273
      %v2689 = vpop.f32.mrf.mxu0
      %v2690 = vadd.f32 %v2465, %v2689
      %v2691 = vpop.f32.mrf.mxu0
      %2692 = vmatprep.mubr.f32.mxu0 0.0
      %2693 = vmatmul.mubr.f32.gmra.mxu0 %v2276
      %v2694 = vpop.f32.mrf.mxu0
      %v2695 = vadd.f32 %v2470, %v2694
      %v2696 = vpop.f32.mrf.mxu0
      %2697 = vmatprep.mubr.f32.mxu0 0.0
      %2698 = vmatmul.mubr.f32.gmra.mxu0 %v2279
      %v2699 = vpop.f32.mrf.mxu0
      %v2700 = vadd.f32 %v2475, %v2699
      %v2701 = vpop.f32.mrf.mxu0
      %2702 = vmatprep.mubr.f32.mxu0 0.0
      %2703 = vmatmul.mubr.f32.gmra.mxu0 %v2282
      %v2704 = vpop.f32.mrf.mxu0
      %v2705 = vadd.f32 %v2480, %v2704
      %v2706 = vpop.f32.mrf.mxu0
      %2707 = vmatprep.mubr.f32.mxu0 0.0
      %2708 = vmatmul.mubr.f32.gmra.mxu0 %v2285
      %v2709 = vpop.f32.mrf.mxu0
      %v2710 = vadd.f32 %v2485, %v2709
      %v2711 = vpop.f32.mrf.mxu0
      %2712 = vmatprep.mubr.f32.mxu0 0.0
      %2713 = vmatmul.mubr.f32.gmra.mxu0 %v2288
      %v2714 = vpop.f32.mrf.mxu0
      %v2715 = vadd.f32 %v2490, %v2714
      %v2716 = vpop.f32.mrf.mxu0
      %2717 = vmatprep.mubr.f32.mxu0 0.0
      %2718 = vmatmul.mubr.f32.gmra.mxu0 %v2291
      %v2719 = vpop.f32.mrf.mxu0
      %v2720 = vadd.f32 %v2495, %v2719
      %v2721 = vpop.f32.mrf.mxu0
      %2722 = vmatprep.mubr.f32.mxu0 0.0
      %2723 = vmatmul.mubr.f32.gmra.mxu0 %v2294
      %v2724 = vpop.f32.mrf.mxu0
      %v2725 = vadd.f32 %v2500, %v2724
      %v2726 = vpop.f32.mrf.mxu0
      %2727 = vmatprep.mubr.f32.mxu0 0.0
      %2728 = vmatmul.mubr.f32.gmra.mxu0 %v2297
      %v2729 = vpop.f32.mrf.mxu0
      %v2730 = vadd.f32 %v2505, %v2729
      %v2731 = vpop.f32.mrf.mxu0
      %2732 = vmatprep.mubr.f32.mxu0 0.0
      %2733 = vmatmul.mubr.f32.gmra.mxu0 %v2300
      %v2734 = vpop.f32.mrf.mxu0
      %v2735 = vadd.f32 %v2510, %v2734
      %v2736 = vpop.f32.mrf.mxu0
      %2737 = vmatprep.mubr.f32.mxu0 0.0
      %2738 = vmatmul.mubr.f32.gmra.mxu0 %v2303
      %v2739 = vpop.f32.mrf.mxu0
      %v2740 = vadd.f32 %v2515, %v2739
      %v2741 = vpop.f32.mrf.mxu0
      %2742 = vmatprep.mubr.f32.mxu0 0.0
      %2743 = vmatmul.mubr.f32.gmra.mxu0 %v2306
      %v2744 = vpop.f32.mrf.mxu0
      %v2745 = vadd.f32 %v2520, %v2744
      %v2746 = vpop.f32.mrf.mxu0
      %2747 = vmatprep.mubr.f32.mxu0 0.0
      %2748 = vmatmul.mubr.f32.gmra.mxu0 %v2309
      %v2749 = vpop.f32.mrf.mxu0
      %v2750 = vadd.f32 %v2525, %v2749
      %v2751 = vpop.f32.mrf.mxu0
      %2752 = vmatprep.mubr.f32.mxu0 0.0
      %2753 = vmatmul.mubr.f32.gmra.mxu0 %v2312
      %v2754 = vpop.f32.mrf.mxu0
      %v2755 = vadd.f32 %v2530, %v2754
      %v2756 = vpop.f32.mrf.mxu0
      %2757 = vmatprep.mubr.f32.mxu0 0.0
      %2758 = vmatmul.mubr.f32.gmra.mxu0 %v2315
      %v2759 = vpop.f32.mrf.mxu0
      %v2760 = vadd.f32 %v2535, %v2759
      %v2761 = vpop.f32.mrf.mxu0
      %2762 = vmatprep.mubr.f32.mxu0 0.0
      %2763 = vmatmul.mubr.f32.gmra.mxu0 %v2318
      %v2764 = vpop.f32.mrf.mxu0
      %v2765 = vadd.f32 %v2540, %v2764
      %v2766 = vpop.f32.mrf.mxu0
      %2767 = vmatprep.mubr.f32.mxu0 0.0
      %2768 = vmatmul.mubr.f32.gmra.mxu0 %v2321
      %v2769 = vpop.f32.mrf.mxu0
      %v2770 = vadd.f32 %v2545, %v2769
      %v2771 = vpop.f32.mrf.mxu0
      %2772 = vdwg.mxu0
      %v2773 = vmax.f32 %v2615, 0.0
      %v2774 = vmax.f32 %v2620, 0.0
      %v2775 = vmax.f32 %v2625, 0.0
      %v2776 = vmax.f32 %v2630, 0.0
      %v2777 = vmax.f32 %v2635, 0.0
      %v2778 = vmax.f32 %v2640, 0.0
      %v2779 = vmax.f32 %v2645, 0.0
      %v2780 = vmax.f32 %v2650, 0.0
      %v2781 = vmax.f32 %v2655, 0.0
      %v2782 = vmax.f32 %v2660, 0.0
      %v2783 = vmax.f32 %v2665, 0.0
      %v2784 = vmax.f32 %v2670, 0.0
      %v2785 = vmax.f32 %v2675, 0.0
      %v2786 = vmax.f32 %v2680, 0.0
      %v2787 = vmax.f32 %v2685, 0.0
      %v2788 = vmax.f32 %v2690, 0.0
      %v2789 = vmax.f32 %v2695, 0.0
      %v2790 = vmax.f32 %v2700, 0.0
      %v2791 = vmax.f32 %v2705, 0.0
      %v2792 = vmax.f32 %v2710, 0.0
      %v2793 = vmax.f32 %v2715, 0.0
      %v2794 = vmax.f32 %v2720, 0.0
      %v2795 = vmax.f32 %v2725, 0.0
      %v2796 = vmax.f32 %v2730, 0.0
      %v2797 = vmax.f32 %v2735, 0.0
      %v2798 = vmax.f32 %v2740, 0.0
      %v2799 = vmax.f32 %v2745, 0.0
      %v2800 = vmax.f32 %v2750, 0.0
      %v2801 = vmax.f32 %v2755, 0.0
      %v2802 = vmax.f32 %v2760, 0.0
      %v2803 = vmax.f32 %v2765, 0.0
      %v2804 = vmax.f32 %v2770, 0.0
      %s2805 = scalar_lea.vmem [#allocation3], 24
      %2806 = vst.msk [vmem:[%s2805 + $0x1] sm:$0xff] %vm381, %v2773
      %2807 = vst.msk [vmem:[%s2805 + $0x9] sm:$0xff] %vm381, %v2774
      %2808 = vst.msk [vmem:[%s2805 + $0x19] sm:$0xff] %vm381, %v2775
      %2809 = vst.msk [vmem:[%s2805 + $0x21] sm:$0xff] %vm381, %v2776
      %2810 = vst.msk [vmem:[%s2805 + $0x31] sm:$0xff] %vm381, %v2777
      %2811 = vst.msk [vmem:[%s2805 + $0x39] sm:$0xff] %vm381, %v2778
      %2812 = vst.msk [vmem:[%s2805 + $0x49] sm:$0xff] %vm381, %v2779
      %2813 = vst.msk [vmem:[%s2805 + $0x51] sm:$0xff] %vm381, %v2780
      %2814 = vst.msk [vmem:[%s2805 + $0x61] sm:$0xff] %vm381, %v2781
      %2815 = vst.msk [vmem:[%s2805 + $0x69] sm:$0xff] %vm381, %v2782
      %2816 = vst.msk [vmem:[%s2805 + $0x79] sm:$0xff] %vm381, %v2783
      %2817 = vst.msk [vmem:[%s2805 + $0x81] sm:$0xff] %vm381, %v2784
      %2818 = vst.msk [vmem:[%s2805 + $0x91] sm:$0xff] %vm381, %v2785
      %2819 = vst.msk [vmem:[%s2805 + $0x99] sm:$0xff] %vm381, %v2786
      %2820 = vst.msk [vmem:[%s2805 + $0xa9] sm:$0xff] %vm381, %v2787
      %2821 = vst.msk [vmem:[%s2805 + $0xb1] sm:$0xff] %vm381, %v2788
      %2822 = vst.msk [vmem:[%s2805 + $0xc1] sm:$0xff] %vm381, %v2789
      %2823 = vst.msk [vmem:[%s2805 + $0xc9] sm:$0xff] %vm381, %v2790
      %2824 = vst.msk [vmem:[%s2805 + $0xd9] sm:$0xff] %vm381, %v2791
      %2825 = vst.msk [vmem:[%s2805 + $0xe1] sm:$0xff] %vm381, %v2792
      %2826 = vst.msk [vmem:[%s2805 + $0xf1] sm:$0xff] %vm381, %v2793
      %2827 = vst.msk [vmem:[%s2805 + $0xf9] sm:$0xff] %vm381, %v2794
      %2828 = vst.msk [vmem:[%s2805 + $0x109] sm:$0xff] %vm381, %v2795
      %2829 = vst.msk [vmem:[%s2805 + $0x111] sm:$0xff] %vm381, %v2796
      %2830 = vst.msk [vmem:[%s2805 + $0x121] sm:$0xff] %vm381, %v2797
      %2831 = vst.msk [vmem:[%s2805 + $0x129] sm:$0xff] %vm381, %v2798
      %2832 = vst.msk [vmem:[%s2805 + $0x139] sm:$0xff] %vm381, %v2799
      %2833 = vst.msk [vmem:[%s2805 + $0x141] sm:$0xff] %vm381, %v2800
      %2834 = vst.msk [vmem:[%s2805 + $0x151] sm:$0xff] %vm381, %v2801
      %2835 = vst.msk [vmem:[%s2805 + $0x159] sm:$0xff] %vm381, %v2802
      %2836 = vst.msk [vmem:[%s2805 + $0x169] sm:$0xff] %vm381, %v2803
      %2837 = vst.msk [vmem:[%s2805 + $0x171] sm:$0xff] %vm381, %v2804
      %v2838 = vld [vmem:[#allocation3] sm:$0xff]
      %v2839 = vld [vmem:[#allocation3 + $0x8] sm:$0xff]
      %v2840 = vld [vmem:[#allocation3 + $0x18] sm:$0xff]
      %v2841 = vld [vmem:[#allocation3 + $0x20] sm:$0xff]
      %v2842 = vld [vmem:[#allocation3 + $0x30] sm:$0xff]
      %v2843 = vld [vmem:[#allocation3 + $0x38] sm:$0xff]
      %v2844 = vld [vmem:[#allocation3 + $0x48] sm:$0xff]
      %v2845 = vld [vmem:[#allocation3 + $0x50] sm:$0xff]
      %v2846 = vld [vmem:[#allocation3 + $0x60] sm:$0xff]
      %v2847 = vld [vmem:[#allocation3 + $0x68] sm:$0xff]
      %v2848 = vld [vmem:[#allocation3 + $0x78] sm:$0xff]
      %v2849 = vld [vmem:[#allocation3 + $0x80] sm:$0xff]
      %v2850 = vld [vmem:[#allocation3 + $0x90] sm:$0xff]
      %v2851 = vld [vmem:[#allocation3 + $0x98] sm:$0xff]
      %v2852 = vld [vmem:[#allocation3 + $0xa8] sm:$0xff]
      %v2853 = vld [vmem:[#allocation3 + $0xb0] sm:$0xff]
      %v2854 = vld [vmem:[#allocation3 + $0xc0] sm:$0xff]
      %v2855 = vld [vmem:[#allocation3 + $0xc8] sm:$0xff]
      %v2856 = vld [vmem:[#allocation3 + $0xd8] sm:$0xff]
      %v2857 = vld [vmem:[#allocation3 + $0xe0] sm:$0xff]
      %v2858 = vld [vmem:[#allocation3 + $0xf0] sm:$0xff]
      %v2859 = vld [vmem:[#allocation3 + $0xf8] sm:$0xff]
      %v2860 = vld [vmem:[#allocation3 + $0x108] sm:$0xff]
      %v2861 = vld [vmem:[#allocation3 + $0x110] sm:$0xff]
      %v2862 = vld [vmem:[#allocation3 + $0x120] sm:$0xff]
      %v2863 = vld [vmem:[#allocation3 + $0x128] sm:$0xff]
      %v2864 = vld [vmem:[#allocation3 + $0x138] sm:$0xff]
      %v2865 = vld [vmem:[#allocation3 + $0x140] sm:$0xff]
      %v2866 = vld [vmem:[#allocation3 + $0x150] sm:$0xff]
      %v2867 = vld [vmem:[#allocation3 + $0x158] sm:$0xff]
      %v2868 = vld [vmem:[#allocation3 + $0x168] sm:$0xff]
      %v2869 = vld [vmem:[#allocation3 + $0x170] sm:$0xff]
      %2870 = vst.msk [vmem:[#allocation5] sm:$0xff] %vm381, %v2838
      %2871 = vst.msk [vmem:[#allocation5 + $0x28] sm:$0xff] %vm381, %v2839
      %2872 = vst.msk [vmem:[#allocation5 + $0x50] sm:$0xff] %vm381, %v2840
      %2873 = vst.msk [vmem:[#allocation5 + $0x78] sm:$0xff] %vm381, %v2841
      %2874 = vst.msk [vmem:[#allocation5 + $0xa0] sm:$0xff] %vm381, %v2842
      %2875 = vst.msk [vmem:[#allocation5 + $0xc8] sm:$0xff] %vm381, %v2843
      %2876 = vst.msk [vmem:[#allocation5 + $0xf0] sm:$0xff] %vm381, %v2844
      %2877 = vst.msk [vmem:[#allocation5 + $0x118] sm:$0xff] %vm381, %v2845
      %2878 = vst.msk [vmem:[#allocation5 + $0x140] sm:$0xff] %vm381, %v2846
      %2879 = vst.msk [vmem:[#allocation5 + $0x168] sm:$0xff] %vm381, %v2847
      %2880 = vst.msk [vmem:[#allocation5 + $0x190] sm:$0xff] %vm381, %v2848
      %2881 = vst.msk [vmem:[#allocation5 + $0x1b8] sm:$0xff] %vm381, %v2849
      %2882 = vst.msk [vmem:[#allocation5 + $0x1e0] sm:$0xff] %vm381, %v2850
      %2883 = vst.msk [vmem:[#allocation5 + $0x208] sm:$0xff] %vm381, %v2851
      %2884 = vst.msk [vmem:[#allocation5 + $0x230] sm:$0xff] %vm381, %v2852
      %2885 = vst.msk [vmem:[#allocation5 + $0x258] sm:$0xff] %vm381, %v2853
      %2886 = vst.msk [vmem:[#allocation5 + $0x280] sm:$0xff] %vm381, %v2854
      %2887 = vst.msk [vmem:[#allocation5 + $0x2a8] sm:$0xff] %vm381, %v2855
      %2888 = vst.msk [vmem:[#allocation5 + $0x2d0] sm:$0xff] %vm381, %v2856
      %2889 = vst.msk [vmem:[#allocation5 + $0x2f8] sm:$0xff] %vm381, %v2857
      %2890 = vst.msk [vmem:[#allocation5 + $0x320] sm:$0xff] %vm381, %v2858
      %2891 = vst.msk [vmem:[#allocation5 + $0x348] sm:$0xff] %vm381, %v2859
      %2892 = vst.msk [vmem:[#allocation5 + $0x370] sm:$0xff] %vm381, %v2860
      %2893 = vst.msk [vmem:[#allocation5 + $0x398] sm:$0xff] %vm381, %v2861
      %2894 = vst.msk [vmem:[#allocation5 + $0x3c0] sm:$0xff] %vm381, %v2862
      %2895 = vst.msk [vmem:[#allocation5 + $0x3e8] sm:$0xff] %vm381, %v2863
      %2896 = vst.msk [vmem:[#allocation5 + $0x410] sm:$0xff] %vm381, %v2864
      %2897 = vst.msk [vmem:[#allocation5 + $0x438] sm:$0xff] %vm381, %v2865
      %2898 = vst.msk [vmem:[#allocation5 + $0x460] sm:$0xff] %vm381, %v2866
      %2899 = vst.msk [vmem:[#allocation5 + $0x488] sm:$0xff] %vm381, %v2867
      %2900 = vst.msk [vmem:[#allocation5 + $0x4b0] sm:$0xff] %vm381, %v2868
      %2901 = vst.msk [vmem:[#allocation5 + $0x4d8] sm:$0xff] %vm381, %v2869
      %v2902 = vld [vmem:[#allocation3 + $0x1] sm:$0xff]
      %v2903 = vld [vmem:[#allocation3 + $0x9] sm:$0xff]
      %v2904 = vld [vmem:[#allocation3 + $0x19] sm:$0xff]
      %v2905 = vld [vmem:[#allocation3 + $0x21] sm:$0xff]
      %v2906 = vld [vmem:[#allocation3 + $0x31] sm:$0xff]
      %v2907 = vld [vmem:[#allocation3 + $0x39] sm:$0xff]
      %v2908 = vld [vmem:[#allocation3 + $0x49] sm:$0xff]
      %v2909 = vld [vmem:[#allocation3 + $0x51] sm:$0xff]
      %v2910 = vld [vmem:[#allocation3 + $0x61] sm:$0xff]
      %v2911 = vld [vmem:[#allocation3 + $0x69] sm:$0xff]
      %v2912 = vld [vmem:[#allocation3 + $0x79] sm:$0xff]
      %v2913 = vld [vmem:[#allocation3 + $0x81] sm:$0xff]
      %v2914 = vld [vmem:[#allocation3 + $0x91] sm:$0xff]
      %v2915 = vld [vmem:[#allocation3 + $0x99] sm:$0xff]
      %v2916 = vld [vmem:[#allocation3 + $0xa9] sm:$0xff]
      %v2917 = vld [vmem:[#allocation3 + $0xb1] sm:$0xff]
      %v2918 = vld [vmem:[#allocation3 + $0xc1] sm:$0xff]
      %v2919 = vld [vmem:[#allocation3 + $0xc9] sm:$0xff]
      %v2920 = vld [vmem:[#allocation3 + $0xd9] sm:$0xff]
      %v2921 = vld [vmem:[#allocation3 + $0xe1] sm:$0xff]
      %v2922 = vld [vmem:[#allocation3 + $0xf1] sm:$0xff]
      %v2923 = vld [vmem:[#allocation3 + $0xf9] sm:$0xff]
      %v2924 = vld [vmem:[#allocation3 + $0x109] sm:$0xff]
      %v2925 = vld [vmem:[#allocation3 + $0x111] sm:$0xff]
      %v2926 = vld [vmem:[#allocation3 + $0x121] sm:$0xff]
      %v2927 = vld [vmem:[#allocation3 + $0x129] sm:$0xff]
      %v2928 = vld [vmem:[#allocation3 + $0x139] sm:$0xff]
      %v2929 = vld [vmem:[#allocation3 + $0x141] sm:$0xff]
      %v2930 = vld [vmem:[#allocation3 + $0x151] sm:$0xff]
      %v2931 = vld [vmem:[#allocation3 + $0x159] sm:$0xff]
      %v2932 = vld [vmem:[#allocation3 + $0x169] sm:$0xff]
      %v2933 = vld [vmem:[#allocation3 + $0x171] sm:$0xff]
      %2966 = vrot.lane.b32.xlu0 %v2902, 64
      %v2967 = vpop.permute.xlu0 %2966
      %2968 = vrot.lane.b32.xlu0 %v2903, 64
      %v2969 = vpop.permute.xlu0 %2968
      %2970 = vrot.lane.b32.xlu0 %v2904, 64
      %v2971 = vpop.permute.xlu0 %2970
      %2972 = vrot.lane.b32.xlu0 %v2905, 64
      %v2973 = vpop.permute.xlu0 %2972
      %2974 = vrot.lane.b32.xlu0 %v2906, 64
      %v2975 = vpop.permute.xlu0 %2974
      %2976 = vrot.lane.b32.xlu0 %v2907, 64
      %v2977 = vpop.permute.xlu0 %2976
      %2978 = vrot.lane.b32.xlu0 %v2908, 64
      %v2979 = vpop.permute.xlu0 %2978
      %2980 = vrot.lane.b32.xlu0 %v2909, 64
      %v2981 = vpop.permute.xlu0 %2980
      %2982 = vrot.lane.b32.xlu0 %v2910, 64
      %v2983 = vpop.permute.xlu0 %2982
      %2984 = vrot.lane.b32.xlu0 %v2911, 64
      %v2985 = vpop.permute.xlu0 %2984
      %2986 = vrot.lane.b32.xlu0 %v2912, 64
      %v2987 = vpop.permute.xlu0 %2986
      %2988 = vrot.lane.b32.xlu0 %v2913, 64
      %v2989 = vpop.permute.xlu0 %2988
      %2990 = vrot.lane.b32.xlu0 %v2914, 64
      %v2991 = vpop.permute.xlu0 %2990
      %2992 = vrot.lane.b32.xlu0 %v2915, 64
      %v2993 = vpop.permute.xlu0 %2992
      %2994 = vrot.lane.b32.xlu0 %v2916, 64
      %v2995 = vpop.permute.xlu0 %2994
      %2996 = vrot.lane.b32.xlu0 %v2917, 64
      %v2997 = vpop.permute.xlu0 %2996
      %2998 = vrot.lane.b32.xlu0 %v2918, 64
      %v2999 = vpop.permute.xlu0 %2998
      %3000 = vrot.lane.b32.xlu0 %v2919, 64
      %v3001 = vpop.permute.xlu0 %3000
      %3002 = vrot.lane.b32.xlu0 %v2920, 64
      %v3003 = vpop.permute.xlu0 %3002
      %3004 = vrot.lane.b32.xlu0 %v2921, 64
      %v3005 = vpop.permute.xlu0 %3004
      %3006 = vrot.lane.b32.xlu0 %v2922, 64
      %v3007 = vpop.permute.xlu0 %3006
      %3008 = vrot.lane.b32.xlu0 %v2923, 64
      %v3009 = vpop.permute.xlu0 %3008
      %3010 = vrot.lane.b32.xlu0 %v2924, 64
      %v3011 = vpop.permute.xlu0 %3010
      %3012 = vrot.lane.b32.xlu0 %v2925, 64
      %v3013 = vpop.permute.xlu0 %3012
      %3014 = vrot.lane.b32.xlu0 %v2926, 64
      %v3015 = vpop.permute.xlu0 %3014
      %3016 = vrot.lane.b32.xlu0 %v2927, 64
      %v3017 = vpop.permute.xlu0 %3016
      %3018 = vrot.lane.b32.xlu0 %v2928, 64
      %v3019 = vpop.permute.xlu0 %3018
      %3020 = vrot.lane.b32.xlu0 %v2929, 64
      %v3021 = vpop.permute.xlu0 %3020
      %3022 = vrot.lane.b32.xlu0 %v2930, 64
      %v3023 = vpop.permute.xlu0 %3022
      %3024 = vrot.lane.b32.xlu0 %v2931, 64
      %v3025 = vpop.permute.xlu0 %3024
      %3026 = vrot.lane.b32.xlu0 %v2932, 64
      %v3027 = vpop.permute.xlu0 %3026
      %3028 = vrot.lane.b32.xlu0 %v2933, 64
      %v3029 = vpop.permute.xlu0 %3028
      %vm3062 = vcmask 1048064
      %3063 = vst.msk [vmem:[#allocation5] sm:$0xff] %vm3062, %v2967
      %3064 = vst.msk [vmem:[#allocation5 + $0x28] sm:$0xff] %vm3062, %v2969
      %3065 = vst.msk [vmem:[#allocation5 + $0x50] sm:$0xff] %vm3062, %v2971
      %3066 = vst.msk [vmem:[#allocation5 + $0x78] sm:$0xff] %vm3062, %v2973
      %3067 = vst.msk [vmem:[#allocation5 + $0xa0] sm:$0xff] %vm3062, %v2975
      %3068 = vst.msk [vmem:[#allocation5 + $0xc8] sm:$0xff] %vm3062, %v2977
      %3069 = vst.msk [vmem:[#allocation5 + $0xf0] sm:$0xff] %vm3062, %v2979
      %3070 = vst.msk [vmem:[#allocation5 + $0x118] sm:$0xff] %vm3062, %v2981
      %3071 = vst.msk [vmem:[#allocation5 + $0x140] sm:$0xff] %vm3062, %v2983
      %3072 = vst.msk [vmem:[#allocation5 + $0x168] sm:$0xff] %vm3062, %v2985
      %3073 = vst.msk [vmem:[#allocation5 + $0x190] sm:$0xff] %vm3062, %v2987
      %3074 = vst.msk [vmem:[#allocation5 + $0x1b8] sm:$0xff] %vm3062, %v2989
      %3075 = vst.msk [vmem:[#allocation5 + $0x1e0] sm:$0xff] %vm3062, %v2991
      %3076 = vst.msk [vmem:[#allocation5 + $0x208] sm:$0xff] %vm3062, %v2993
      %3077 = vst.msk [vmem:[#allocation5 + $0x230] sm:$0xff] %vm3062, %v2995
      %3078 = vst.msk [vmem:[#allocation5 + $0x258] sm:$0xff] %vm3062, %v2997
      %3079 = vst.msk [vmem:[#allocation5 + $0x280] sm:$0xff] %vm3062, %v2999
      %3080 = vst.msk [vmem:[#allocation5 + $0x2a8] sm:$0xff] %vm3062, %v3001
      %3081 = vst.msk [vmem:[#allocation5 + $0x2d0] sm:$0xff] %vm3062, %v3003
      %3082 = vst.msk [vmem:[#allocation5 + $0x2f8] sm:$0xff] %vm3062, %v3005
      %3083 = vst.msk [vmem:[#allocation5 + $0x320] sm:$0xff] %vm3062, %v3007
      %3084 = vst.msk [vmem:[#allocation5 + $0x348] sm:$0xff] %vm3062, %v3009
      %3085 = vst.msk [vmem:[#allocation5 + $0x370] sm:$0xff] %vm3062, %v3011
      %3086 = vst.msk [vmem:[#allocation5 + $0x398] sm:$0xff] %vm3062, %v3013
      %3087 = vst.msk [vmem:[#allocation5 + $0x3c0] sm:$0xff] %vm3062, %v3015
      %3088 = vst.msk [vmem:[#allocation5 + $0x3e8] sm:$0xff] %vm3062, %v3017
      %3089 = vst.msk [vmem:[#allocation5 + $0x410] sm:$0xff] %vm3062, %v3019
      %3090 = vst.msk [vmem:[#allocation5 + $0x438] sm:$0xff] %vm3062, %v3021
      %3091 = vst.msk [vmem:[#allocation5 + $0x460] sm:$0xff] %vm3062, %v3023
      %3092 = vst.msk [vmem:[#allocation5 + $0x488] sm:$0xff] %vm3062, %v3025
      %3093 = vst.msk [vmem:[#allocation5 + $0x4b0] sm:$0xff] %vm3062, %v3027
      %3094 = vst.msk [vmem:[#allocation5 + $0x4d8] sm:$0xff] %vm3062, %v3029
      %v3095 = vld [vmem:[#allocation3 + $0x2] sm:$0xff]
      %v3096 = vld [vmem:[#allocation3 + $0xa] sm:$0xff]
      %v3097 = vld [vmem:[#allocation3 + $0x1a] sm:$0xff]
      %v3098 = vld [vmem:[#allocation3 + $0x22] sm:$0xff]
      %v3099 = vld [vmem:[#allocation3 + $0x32] sm:$0xff]
      %v3100 = vld [vmem:[#allocation3 + $0x3a] sm:$0xff]
      %v3101 = vld [vmem:[#allocation3 + $0x4a] sm:$0xff]
      %v3102 = vld [vmem:[#allocation3 + $0x52] sm:$0xff]
      %v3103 = vld [vmem:[#allocation3 + $0x62] sm:$0xff]
      %v3104 = vld [vmem:[#allocation3 + $0x6a] sm:$0xff]
      %v3105 = vld [vmem:[#allocation3 + $0x7a] sm:$0xff]
      %v3106 = vld [vmem:[#allocation3 + $0x82] sm:$0xff]
      %v3107 = vld [vmem:[#allocation3 + $0x92] sm:$0xff]
      %v3108 = vld [vmem:[#allocation3 + $0x9a] sm:$0xff]
      %v3109 = vld [vmem:[#allocation3 + $0xaa] sm:$0xff]
      %v3110 = vld [vmem:[#allocation3 + $0xb2] sm:$0xff]
      %v3111 = vld [vmem:[#allocation3 + $0xc2] sm:$0xff]
      %v3112 = vld [vmem:[#allocation3 + $0xca] sm:$0xff]
      %v3113 = vld [vmem:[#allocation3 + $0xda] sm:$0xff]
      %v3114 = vld [vmem:[#allocation3 + $0xe2] sm:$0xff]
      %v3115 = vld [vmem:[#allocation3 + $0xf2] sm:$0xff]
      %v3116 = vld [vmem:[#allocation3 + $0xfa] sm:$0xff]
      %v3117 = vld [vmem:[#allocation3 + $0x10a] sm:$0xff]
      %v3118 = vld [vmem:[#allocation3 + $0x112] sm:$0xff]
      %v3119 = vld [vmem:[#allocation3 + $0x122] sm:$0xff]
      %v3120 = vld [vmem:[#allocation3 + $0x12a] sm:$0xff]
      %v3121 = vld [vmem:[#allocation3 + $0x13a] sm:$0xff]
      %v3122 = vld [vmem:[#allocation3 + $0x142] sm:$0xff]
      %v3123 = vld [vmem:[#allocation3 + $0x152] sm:$0xff]
      %v3124 = vld [vmem:[#allocation3 + $0x15a] sm:$0xff]
      %v3125 = vld [vmem:[#allocation3 + $0x16a] sm:$0xff]
      %v3126 = vld [vmem:[#allocation3 + $0x172] sm:$0xff]
      %3127 = vst.msk [vmem:[#allocation5 + $0x8] sm:$0xff] %vm381, %v3095
      %3128 = vst.msk [vmem:[#allocation5 + $0x30] sm:$0xff] %vm381, %v3096
      %3129 = vst.msk [vmem:[#allocation5 + $0x58] sm:$0xff] %vm381, %v3097
      %3130 = vst.msk [vmem:[#allocation5 + $0x80] sm:$0xff] %vm381, %v3098
      %3131 = vst.msk [vmem:[#allocation5 + $0xa8] sm:$0xff] %vm381, %v3099
      %3132 = vst.msk [vmem:[#allocation5 + $0xd0] sm:$0xff] %vm381, %v3100
      %3133 = vst.msk [vmem:[#allocation5 + $0xf8] sm:$0xff] %vm381, %v3101
      %3134 = vst.msk [vmem:[#allocation5 + $0x120] sm:$0xff] %vm381, %v3102
      %3135 = vst.msk [vmem:[#allocation5 + $0x148] sm:$0xff] %vm381, %v3103
      %3136 = vst.msk [vmem:[#allocation5 + $0x170] sm:$0xff] %vm381, %v3104
      %3137 = vst.msk [vmem:[#allocation5 + $0x198] sm:$0xff] %vm381, %v3105
      %3138 = vst.msk [vmem:[#allocation5 + $0x1c0] sm:$0xff] %vm381, %v3106
      %3139 = vst.msk [vmem:[#allocation5 + $0x1e8] sm:$0xff] %vm381, %v3107
      %3140 = vst.msk [vmem:[#allocation5 + $0x210] sm:$0xff] %vm381, %v3108
      %3141 = vst.msk [vmem:[#allocation5 + $0x238] sm:$0xff] %vm381, %v3109
      %3142 = vst.msk [vmem:[#allocation5 + $0x260] sm:$0xff] %vm381, %v3110
      %3143 = vst.msk [vmem:[#allocation5 + $0x288] sm:$0xff] %vm381, %v3111
      %3144 = vst.msk [vmem:[#allocation5 + $0x2b0] sm:$0xff] %vm381, %v3112
      %3145 = vst.msk [vmem:[#allocation5 + $0x2d8] sm:$0xff] %vm381, %v3113
      %3146 = vst.msk [vmem:[#allocation5 + $0x300] sm:$0xff] %vm381, %v3114
      %3147 = vst.msk [vmem:[#allocation5 + $0x328] sm:$0xff] %vm381, %v3115
      %3148 = vst.msk [vmem:[#allocation5 + $0x350] sm:$0xff] %vm381, %v3116
      %3149 = vst.msk [vmem:[#allocation5 + $0x378] sm:$0xff] %vm381, %v3117
      %3150 = vst.msk [vmem:[#allocation5 + $0x3a0] sm:$0xff] %vm381, %v3118
      %3151 = vst.msk [vmem:[#allocation5 + $0x3c8] sm:$0xff] %vm381, %v3119
      %3152 = vst.msk [vmem:[#allocation5 + $0x3f0] sm:$0xff] %vm381, %v3120
      %3153 = vst.msk [vmem:[#allocation5 + $0x418] sm:$0xff] %vm381, %v3121
      %3154 = vst.msk [vmem:[#allocation5 + $0x440] sm:$0xff] %vm381, %v3122
      %3155 = vst.msk [vmem:[#allocation5 + $0x468] sm:$0xff] %vm381, %v3123
      %3156 = vst.msk [vmem:[#allocation5 + $0x490] sm:$0xff] %vm381, %v3124
      %3157 = vst.msk [vmem:[#allocation5 + $0x4b8] sm:$0xff] %vm381, %v3125
      %3158 = vst.msk [vmem:[#allocation5 + $0x4e0] sm:$0xff] %vm381, %v3126
      %v3159 = vld [vmem:[%s2805] sm:$0xff]
      %v3160 = vld [vmem:[%s2805 + $0x8] sm:$0xff]
      %v3161 = vld [vmem:[%s2805 + $0x18] sm:$0xff]
      %v3162 = vld [vmem:[%s2805 + $0x20] sm:$0xff]
      %v3163 = vld [vmem:[%s2805 + $0x30] sm:$0xff]
      %v3164 = vld [vmem:[%s2805 + $0x38] sm:$0xff]
      %v3165 = vld [vmem:[%s2805 + $0x48] sm:$0xff]
      %v3166 = vld [vmem:[%s2805 + $0x50] sm:$0xff]
      %v3167 = vld [vmem:[%s2805 + $0x60] sm:$0xff]
      %v3168 = vld [vmem:[%s2805 + $0x68] sm:$0xff]
      %v3169 = vld [vmem:[%s2805 + $0x78] sm:$0xff]
      %v3170 = vld [vmem:[%s2805 + $0x80] sm:$0xff]
      %v3171 = vld [vmem:[%s2805 + $0x90] sm:$0xff]
      %v3172 = vld [vmem:[%s2805 + $0x98] sm:$0xff]
      %v3173 = vld [vmem:[%s2805 + $0xa8] sm:$0xff]
      %v3174 = vld [vmem:[%s2805 + $0xb0] sm:$0xff]
      %v3175 = vld [vmem:[%s2805 + $0xc0] sm:$0xff]
      %v3176 = vld [vmem:[%s2805 + $0xc8] sm:$0xff]
      %v3177 = vld [vmem:[%s2805 + $0xd8] sm:$0xff]
      %v3178 = vld [vmem:[%s2805 + $0xe0] sm:$0xff]
      %v3179 = vld [vmem:[%s2805 + $0xf0] sm:$0xff]
      %v3180 = vld [vmem:[%s2805 + $0xf8] sm:$0xff]
      %v3181 = vld [vmem:[%s2805 + $0x108] sm:$0xff]
      %v3182 = vld [vmem:[%s2805 + $0x110] sm:$0xff]
      %v3183 = vld [vmem:[%s2805 + $0x120] sm:$0xff]
      %v3184 = vld [vmem:[%s2805 + $0x128] sm:$0xff]
      %v3185 = vld [vmem:[%s2805 + $0x138] sm:$0xff]
      %v3186 = vld [vmem:[%s2805 + $0x140] sm:$0xff]
      %v3187 = vld [vmem:[%s2805 + $0x150] sm:$0xff]
      %v3188 = vld [vmem:[%s2805 + $0x158] sm:$0xff]
      %v3189 = vld [vmem:[%s2805 + $0x168] sm:$0xff]
      %v3190 = vld [vmem:[%s2805 + $0x170] sm:$0xff]
      %3223 = vrot.lane.b32.xlu0 %v3159, 64
      %v3224 = vpop.permute.xlu0 %3223
      %3225 = vrot.lane.b32.xlu0 %v3160, 64
      %v3226 = vpop.permute.xlu0 %3225
      %3227 = vrot.lane.b32.xlu0 %v3161, 64
      %v3228 = vpop.permute.xlu0 %3227
      %3229 = vrot.lane.b32.xlu0 %v3162, 64
      %v3230 = vpop.permute.xlu0 %3229
      %3231 = vrot.lane.b32.xlu0 %v3163, 64
      %v3232 = vpop.permute.xlu0 %3231
      %3233 = vrot.lane.b32.xlu0 %v3164, 64
      %v3234 = vpop.permute.xlu0 %3233
      %3235 = vrot.lane.b32.xlu0 %v3165, 64
      %v3236 = vpop.permute.xlu0 %3235
      %3237 = vrot.lane.b32.xlu0 %v3166, 64
      %v3238 = vpop.permute.xlu0 %3237
      %3239 = vrot.lane.b32.xlu0 %v3167, 64
      %v3240 = vpop.permute.xlu0 %3239
      %3241 = vrot.lane.b32.xlu0 %v3168, 64
      %v3242 = vpop.permute.xlu0 %3241
      %3243 = vrot.lane.b32.xlu0 %v3169, 64
      %v3244 = vpop.permute.xlu0 %3243
      %3245 = vrot.lane.b32.xlu0 %v3170, 64
      %v3246 = vpop.permute.xlu0 %3245
      %3247 = vrot.lane.b32.xlu0 %v3171, 64
      %v3248 = vpop.permute.xlu0 %3247
      %3249 = vrot.lane.b32.xlu0 %v3172, 64
      %v3250 = vpop.permute.xlu0 %3249
      %3251 = vrot.lane.b32.xlu0 %v3173, 64
      %v3252 = vpop.permute.xlu0 %3251
      %3253 = vrot.lane.b32.xlu0 %v3174, 64
      %v3254 = vpop.permute.xlu0 %3253
      %3255 = vrot.lane.b32.xlu0 %v3175, 64
      %v3256 = vpop.permute.xlu0 %3255
      %3257 = vrot.lane.b32.xlu0 %v3176, 64
      %v3258 = vpop.permute.xlu0 %3257
      %3259 = vrot.lane.b32.xlu0 %v3177, 64
      %v3260 = vpop.permute.xlu0 %3259
      %3261 = vrot.lane.b32.xlu0 %v3178, 64
      %v3262 = vpop.permute.xlu0 %3261
      %3263 = vrot.lane.b32.xlu0 %v3179, 64
      %v3264 = vpop.permute.xlu0 %3263
      %3265 = vrot.lane.b32.xlu0 %v3180, 64
      %v3266 = vpop.permute.xlu0 %3265
      %3267 = vrot.lane.b32.xlu0 %v3181, 64
      %v3268 = vpop.permute.xlu0 %3267
      %3269 = vrot.lane.b32.xlu0 %v3182, 64
      %v3270 = vpop.permute.xlu0 %3269
      %3271 = vrot.lane.b32.xlu0 %v3183, 64
      %v3272 = vpop.permute.xlu0 %3271
      %3273 = vrot.lane.b32.xlu0 %v3184, 64
      %v3274 = vpop.permute.xlu0 %3273
      %3275 = vrot.lane.b32.xlu0 %v3185, 64
      %v3276 = vpop.permute.xlu0 %3275
      %3277 = vrot.lane.b32.xlu0 %v3186, 64
      %v3278 = vpop.permute.xlu0 %3277
      %3279 = vrot.lane.b32.xlu0 %v3187, 64
      %v3280 = vpop.permute.xlu0 %3279
      %3281 = vrot.lane.b32.xlu0 %v3188, 64
      %v3282 = vpop.permute.xlu0 %3281
      %3283 = vrot.lane.b32.xlu0 %v3189, 64
      %v3284 = vpop.permute.xlu0 %3283
      %3285 = vrot.lane.b32.xlu0 %v3190, 64
      %v3286 = vpop.permute.xlu0 %3285
      %3319 = vst.msk [vmem:[#allocation5 + $0x8] sm:$0xff] %vm3062, %v3224
      %3320 = vst.msk [vmem:[#allocation5 + $0x30] sm:$0xff] %vm3062, %v3226
      %3321 = vst.msk [vmem:[#allocation5 + $0x58] sm:$0xff] %vm3062, %v3228
      %3322 = vst.msk [vmem:[#allocation5 + $0x80] sm:$0xff] %vm3062, %v3230
      %3323 = vst.msk [vmem:[#allocation5 + $0xa8] sm:$0xff] %vm3062, %v3232
      %3324 = vst.msk [vmem:[#allocation5 + $0xd0] sm:$0xff] %vm3062, %v3234
      %3325 = vst.msk [vmem:[#allocation5 + $0xf8] sm:$0xff] %vm3062, %v3236
      %3326 = vst.msk [vmem:[#allocation5 + $0x120] sm:$0xff] %vm3062, %v3238
      %3327 = vst.msk [vmem:[#allocation5 + $0x148] sm:$0xff] %vm3062, %v3240
      %3328 = vst.msk [vmem:[#allocation5 + $0x170] sm:$0xff] %vm3062, %v3242
      %3329 = vst.msk [vmem:[#allocation5 + $0x198] sm:$0xff] %vm3062, %v3244
      %3330 = vst.msk [vmem:[#allocation5 + $0x1c0] sm:$0xff] %vm3062, %v3246
      %3331 = vst.msk [vmem:[#allocation5 + $0x1e8] sm:$0xff] %vm3062, %v3248
      %3332 = vst.msk [vmem:[#allocation5 + $0x210] sm:$0xff] %vm3062, %v3250
      %3333 = vst.msk [vmem:[#allocation5 + $0x238] sm:$0xff] %vm3062, %v3252
      %3334 = vst.msk [vmem:[#allocation5 + $0x260] sm:$0xff] %vm3062, %v3254
      %3335 = vst.msk [vmem:[#allocation5 + $0x288] sm:$0xff] %vm3062, %v3256
      %3336 = vst.msk [vmem:[#allocation5 + $0x2b0] sm:$0xff] %vm3062, %v3258
      %3337 = vst.msk [vmem:[#allocation5 + $0x2d8] sm:$0xff] %vm3062, %v3260
      %3338 = vst.msk [vmem:[#allocation5 + $0x300] sm:$0xff] %vm3062, %v3262
      %3339 = vst.msk [vmem:[#allocation5 + $0x328] sm:$0xff] %vm3062, %v3264
      %3340 = vst.msk [vmem:[#allocation5 + $0x350] sm:$0xff] %vm3062, %v3266
      %3341 = vst.msk [vmem:[#allocation5 + $0x378] sm:$0xff] %vm3062, %v3268
      %3342 = vst.msk [vmem:[#allocation5 + $0x3a0] sm:$0xff] %vm3062, %v3270
      %3343 = vst.msk [vmem:[#allocation5 + $0x3c8] sm:$0xff] %vm3062, %v3272
      %3344 = vst.msk [vmem:[#allocation5 + $0x3f0] sm:$0xff] %vm3062, %v3274
      %3345 = vst.msk [vmem:[#allocation5 + $0x418] sm:$0xff] %vm3062, %v3276
      %3346 = vst.msk [vmem:[#allocation5 + $0x440] sm:$0xff] %vm3062, %v3278
      %3347 = vst.msk [vmem:[#allocation5 + $0x468] sm:$0xff] %vm3062, %v3280
      %3348 = vst.msk [vmem:[#allocation5 + $0x490] sm:$0xff] %vm3062, %v3282
      %3349 = vst.msk [vmem:[#allocation5 + $0x4b8] sm:$0xff] %vm3062, %v3284
      %3350 = vst.msk [vmem:[#allocation5 + $0x4e0] sm:$0xff] %vm3062, %v3286
      %v3351 = vld [vmem:[%s2805 + $0x1] sm:$0xff]
      %v3352 = vld [vmem:[%s2805 + $0x9] sm:$0xff]
      %v3353 = vld [vmem:[%s2805 + $0x19] sm:$0xff]
      %v3354 = vld [vmem:[%s2805 + $0x21] sm:$0xff]
      %v3355 = vld [vmem:[%s2805 + $0x31] sm:$0xff]
      %v3356 = vld [vmem:[%s2805 + $0x39] sm:$0xff]
      %v3357 = vld [vmem:[%s2805 + $0x49] sm:$0xff]
      %v3358 = vld [vmem:[%s2805 + $0x51] sm:$0xff]
      %v3359 = vld [vmem:[%s2805 + $0x61] sm:$0xff]
      %v3360 = vld [vmem:[%s2805 + $0x69] sm:$0xff]
      %v3361 = vld [vmem:[%s2805 + $0x79] sm:$0xff]
      %v3362 = vld [vmem:[%s2805 + $0x81] sm:$0xff]
      %v3363 = vld [vmem:[%s2805 + $0x91] sm:$0xff]
      %v3364 = vld [vmem:[%s2805 + $0x99] sm:$0xff]
      %v3365 = vld [vmem:[%s2805 + $0xa9] sm:$0xff]
      %v3366 = vld [vmem:[%s2805 + $0xb1] sm:$0xff]
      %v3367 = vld [vmem:[%s2805 + $0xc1] sm:$0xff]
      %v3368 = vld [vmem:[%s2805 + $0xc9] sm:$0xff]
      %v3369 = vld [vmem:[%s2805 + $0xd9] sm:$0xff]
      %v3370 = vld [vmem:[%s2805 + $0xe1] sm:$0xff]
      %v3371 = vld [vmem:[%s2805 + $0xf1] sm:$0xff]
      %v3372 = vld [vmem:[%s2805 + $0xf9] sm:$0xff]
      %v3373 = vld [vmem:[%s2805 + $0x109] sm:$0xff]
      %v3374 = vld [vmem:[%s2805 + $0x111] sm:$0xff]
      %v3375 = vld [vmem:[%s2805 + $0x121] sm:$0xff]
      %v3376 = vld [vmem:[%s2805 + $0x129] sm:$0xff]
      %v3377 = vld [vmem:[%s2805 + $0x139] sm:$0xff]
      %v3378 = vld [vmem:[%s2805 + $0x141] sm:$0xff]
      %v3379 = vld [vmem:[%s2805 + $0x151] sm:$0xff]
      %v3380 = vld [vmem:[%s2805 + $0x159] sm:$0xff]
      %v3381 = vld [vmem:[%s2805 + $0x169] sm:$0xff]
      %v3382 = vld [vmem:[%s2805 + $0x171] sm:$0xff]
      %3383 = vst.msk [vmem:[#allocation5 + $0x10] sm:$0xff] %vm381, %v3351
      %3384 = vst.msk [vmem:[#allocation5 + $0x38] sm:$0xff] %vm381, %v3352
      %3385 = vst.msk [vmem:[#allocation5 + $0x60] sm:$0xff] %vm381, %v3353
      %3386 = vst.msk [vmem:[#allocation5 + $0x88] sm:$0xff] %vm381, %v3354
      %3387 = vst.msk [vmem:[#allocation5 + $0xb0] sm:$0xff] %vm381, %v3355
      %3388 = vst.msk [vmem:[#allocation5 + $0xd8] sm:$0xff] %vm381, %v3356
      %3389 = vst.msk [vmem:[#allocation5 + $0x100] sm:$0xff] %vm381, %v3357
      %3390 = vst.msk [vmem:[#allocation5 + $0x128] sm:$0xff] %vm381, %v3358
      %3391 = vst.msk [vmem:[#allocation5 + $0x150] sm:$0xff] %vm381, %v3359
      %3392 = vst.msk [vmem:[#allocation5 + $0x178] sm:$0xff] %vm381, %v3360
      %3393 = vst.msk [vmem:[#allocation5 + $0x1a0] sm:$0xff] %vm381, %v3361
      %3394 = vst.msk [vmem:[#allocation5 + $0x1c8] sm:$0xff] %vm381, %v3362
      %3395 = vst.msk [vmem:[#allocation5 + $0x1f0] sm:$0xff] %vm381, %v3363
      %3396 = vst.msk [vmem:[#allocation5 + $0x218] sm:$0xff] %vm381, %v3364
      %3397 = vst.msk [vmem:[#allocation5 + $0x240] sm:$0xff] %vm381, %v3365
      %3398 = vst.msk [vmem:[#allocation5 + $0x268] sm:$0xff] %vm381, %v3366
      %3399 = vst.msk [vmem:[#allocation5 + $0x290] sm:$0xff] %vm381, %v3367
      %3400 = vst.msk [vmem:[#allocation5 + $0x2b8] sm:$0xff] %vm381, %v3368
      %3401 = vst.msk [vmem:[#allocation5 + $0x2e0] sm:$0xff] %vm381, %v3369
      %3402 = vst.msk [vmem:[#allocation5 + $0x308] sm:$0xff] %vm381, %v3370
      %3403 = vst.msk [vmem:[#allocation5 + $0x330] sm:$0xff] %vm381, %v3371
      %3404 = vst.msk [vmem:[#allocation5 + $0x358] sm:$0xff] %vm381, %v3372
      %3405 = vst.msk [vmem:[#allocation5 + $0x380] sm:$0xff] %vm381, %v3373
      %3406 = vst.msk [vmem:[#allocation5 + $0x3a8] sm:$0xff] %vm381, %v3374
      %3407 = vst.msk [vmem:[#allocation5 + $0x3d0] sm:$0xff] %vm381, %v3375
      %3408 = vst.msk [vmem:[#allocation5 + $0x3f8] sm:$0xff] %vm381, %v3376
      %3409 = vst.msk [vmem:[#allocation5 + $0x420] sm:$0xff] %vm381, %v3377
      %3410 = vst.msk [vmem:[#allocation5 + $0x448] sm:$0xff] %vm381, %v3378
      %3411 = vst.msk [vmem:[#allocation5 + $0x470] sm:$0xff] %vm381, %v3379
      %3412 = vst.msk [vmem:[#allocation5 + $0x498] sm:$0xff] %vm381, %v3380
      %3413 = vst.msk [vmem:[#allocation5 + $0x4c0] sm:$0xff] %vm381, %v3381
      %3414 = vst.msk [vmem:[#allocation5 + $0x4e8] sm:$0xff] %vm381, %v3382
      %v3415 = vld [vmem:[%s2805 + $0x2] sm:$0xff]
      %v3416 = vld [vmem:[%s2805 + $0xa] sm:$0xff]
      %v3417 = vld [vmem:[%s2805 + $0x1a] sm:$0xff]
      %v3418 = vld [vmem:[%s2805 + $0x22] sm:$0xff]
      %v3419 = vld [vmem:[%s2805 + $0x32] sm:$0xff]
      %v3420 = vld [vmem:[%s2805 + $0x3a] sm:$0xff]
      %v3421 = vld [vmem:[%s2805 + $0x4a] sm:$0xff]
      %v3422 = vld [vmem:[%s2805 + $0x52] sm:$0xff]
      %v3423 = vld [vmem:[%s2805 + $0x62] sm:$0xff]
      %v3424 = vld [vmem:[%s2805 + $0x6a] sm:$0xff]
      %v3425 = vld [vmem:[%s2805 + $0x7a] sm:$0xff]
      %v3426 = vld [vmem:[%s2805 + $0x82] sm:$0xff]
      %v3427 = vld [vmem:[%s2805 + $0x92] sm:$0xff]
      %v3428 = vld [vmem:[%s2805 + $0x9a] sm:$0xff]
      %v3429 = vld [vmem:[%s2805 + $0xaa] sm:$0xff]
      %v3430 = vld [vmem:[%s2805 + $0xb2] sm:$0xff]
      %v3431 = vld [vmem:[%s2805 + $0xc2] sm:$0xff]
      %v3432 = vld [vmem:[%s2805 + $0xca] sm:$0xff]
      %v3433 = vld [vmem:[%s2805 + $0xda] sm:$0xff]
      %v3434 = vld [vmem:[%s2805 + $0xe2] sm:$0xff]
      %v3435 = vld [vmem:[%s2805 + $0xf2] sm:$0xff]
      %v3436 = vld [vmem:[%s2805 + $0xfa] sm:$0xff]
      %v3437 = vld [vmem:[%s2805 + $0x10a] sm:$0xff]
      %v3438 = vld [vmem:[%s2805 + $0x112] sm:$0xff]
      %v3439 = vld [vmem:[%s2805 + $0x122] sm:$0xff]
      %v3440 = vld [vmem:[%s2805 + $0x12a] sm:$0xff]
      %v3441 = vld [vmem:[%s2805 + $0x13a] sm:$0xff]
      %v3442 = vld [vmem:[%s2805 + $0x142] sm:$0xff]
      %v3443 = vld [vmem:[%s2805 + $0x152] sm:$0xff]
      %v3444 = vld [vmem:[%s2805 + $0x15a] sm:$0xff]
      %v3445 = vld [vmem:[%s2805 + $0x16a] sm:$0xff]
      %v3446 = vld [vmem:[%s2805 + $0x172] sm:$0xff]
      %3479 = vrot.lane.b32.xlu0 %v3415, 64
      %v3480 = vpop.permute.xlu0 %3479
      %3481 = vrot.lane.b32.xlu0 %v3416, 64
      %v3482 = vpop.permute.xlu0 %3481
      %3483 = vrot.lane.b32.xlu0 %v3417, 64
      %v3484 = vpop.permute.xlu0 %3483
      %3485 = vrot.lane.b32.xlu0 %v3418, 64
      %v3486 = vpop.permute.xlu0 %3485
      %3487 = vrot.lane.b32.xlu0 %v3419, 64
      %v3488 = vpop.permute.xlu0 %3487
      %3489 = vrot.lane.b32.xlu0 %v3420, 64
      %v3490 = vpop.permute.xlu0 %3489
      %3491 = vrot.lane.b32.xlu0 %v3421, 64
      %v3492 = vpop.permute.xlu0 %3491
      %3493 = vrot.lane.b32.xlu0 %v3422, 64
      %v3494 = vpop.permute.xlu0 %3493
      %3495 = vrot.lane.b32.xlu0 %v3423, 64
      %v3496 = vpop.permute.xlu0 %3495
      %3497 = vrot.lane.b32.xlu0 %v3424, 64
      %v3498 = vpop.permute.xlu0 %3497
      %3499 = vrot.lane.b32.xlu0 %v3425, 64
      %v3500 = vpop.permute.xlu0 %3499
      %3501 = vrot.lane.b32.xlu0 %v3426, 64
      %v3502 = vpop.permute.xlu0 %3501
      %3503 = vrot.lane.b32.xlu0 %v3427, 64
      %v3504 = vpop.permute.xlu0 %3503
      %3505 = vrot.lane.b32.xlu0 %v3428, 64
      %v3506 = vpop.permute.xlu0 %3505
      %3507 = vrot.lane.b32.xlu0 %v3429, 64
      %v3508 = vpop.permute.xlu0 %3507
      %3509 = vrot.lane.b32.xlu0 %v3430, 64
      %v3510 = vpop.permute.xlu0 %3509
      %3511 = vrot.lane.b32.xlu0 %v3431, 64
      %v3512 = vpop.permute.xlu0 %3511
      %3513 = vrot.lane.b32.xlu0 %v3432, 64
      %v3514 = vpop.permute.xlu0 %3513
      %3515 = vrot.lane.b32.xlu0 %v3433, 64
      %v3516 = vpop.permute.xlu0 %3515
      %3517 = vrot.lane.b32.xlu0 %v3434, 64
      %v3518 = vpop.permute.xlu0 %3517
      %3519 = vrot.lane.b32.xlu0 %v3435, 64
      %v3520 = vpop.permute.xlu0 %3519
      %3521 = vrot.lane.b32.xlu0 %v3436, 64
      %v3522 = vpop.permute.xlu0 %3521
      %3523 = vrot.lane.b32.xlu0 %v3437, 64
      %v3524 = vpop.permute.xlu0 %3523
      %3525 = vrot.lane.b32.xlu0 %v3438, 64
      %v3526 = vpop.permute.xlu0 %3525
      %3527 = vrot.lane.b32.xlu0 %v3439, 64
      %v3528 = vpop.permute.xlu0 %3527
      %3529 = vrot.lane.b32.xlu0 %v3440, 64
      %v3530 = vpop.permute.xlu0 %3529
      %3531 = vrot.lane.b32.xlu0 %v3441, 64
      %v3532 = vpop.permute.xlu0 %3531
      %3533 = vrot.lane.b32.xlu0 %v3442, 64
      %v3534 = vpop.permute.xlu0 %3533
      %3535 = vrot.lane.b32.xlu0 %v3443, 64
      %v3536 = vpop.permute.xlu0 %3535
      %3537 = vrot.lane.b32.xlu0 %v3444, 64
      %v3538 = vpop.permute.xlu0 %3537
      %3539 = vrot.lane.b32.xlu0 %v3445, 64
      %v3540 = vpop.permute.xlu0 %3539
      %3541 = vrot.lane.b32.xlu0 %v3446, 64
      %v3542 = vpop.permute.xlu0 %3541
      %3575 = vst.msk [vmem:[#allocation5 + $0x10] sm:$0xff] %vm3062, %v3480
      %3576 = vst.msk [vmem:[#allocation5 + $0x38] sm:$0xff] %vm3062, %v3482
      %3577 = vst.msk [vmem:[#allocation5 + $0x60] sm:$0xff] %vm3062, %v3484
      %3578 = vst.msk [vmem:[#allocation5 + $0x88] sm:$0xff] %vm3062, %v3486
      %3579 = vst.msk [vmem:[#allocation5 + $0xb0] sm:$0xff] %vm3062, %v3488
      %3580 = vst.msk [vmem:[#allocation5 + $0xd8] sm:$0xff] %vm3062, %v3490
      %3581 = vst.msk [vmem:[#allocation5 + $0x100] sm:$0xff] %vm3062, %v3492
      %3582 = vst.msk [vmem:[#allocation5 + $0x128] sm:$0xff] %vm3062, %v3494
      %3583 = vst.msk [vmem:[#allocation5 + $0x150] sm:$0xff] %vm3062, %v3496
      %3584 = vst.msk [vmem:[#allocation5 + $0x178] sm:$0xff] %vm3062, %v3498
      %3585 = vst.msk [vmem:[#allocation5 + $0x1a0] sm:$0xff] %vm3062, %v3500
      %3586 = vst.msk [vmem:[#allocation5 + $0x1c8] sm:$0xff] %vm3062, %v3502
      %3587 = vst.msk [vmem:[#allocation5 + $0x1f0] sm:$0xff] %vm3062, %v3504
      %3588 = vst.msk [vmem:[#allocation5 + $0x218] sm:$0xff] %vm3062, %v3506
      %3589 = vst.msk [vmem:[#allocation5 + $0x240] sm:$0xff] %vm3062, %v3508
      %3590 = vst.msk [vmem:[#allocation5 + $0x268] sm:$0xff] %vm3062, %v3510
      %3591 = vst.msk [vmem:[#allocation5 + $0x290] sm:$0xff] %vm3062, %v3512
      %3592 = vst.msk [vmem:[#allocation5 + $0x2b8] sm:$0xff] %vm3062, %v3514
      %3593 = vst.msk [vmem:[#allocation5 + $0x2e0] sm:$0xff] %vm3062, %v3516
      %3594 = vst.msk [vmem:[#allocation5 + $0x308] sm:$0xff] %vm3062, %v3518
      %3595 = vst.msk [vmem:[#allocation5 + $0x330] sm:$0xff] %vm3062, %v3520
      %3596 = vst.msk [vmem:[#allocation5 + $0x358] sm:$0xff] %vm3062, %v3522
      %3597 = vst.msk [vmem:[#allocation5 + $0x380] sm:$0xff] %vm3062, %v3524
      %3598 = vst.msk [vmem:[#allocation5 + $0x3a8] sm:$0xff] %vm3062, %v3526
      %3599 = vst.msk [vmem:[#allocation5 + $0x3d0] sm:$0xff] %vm3062, %v3528
      %3600 = vst.msk [vmem:[#allocation5 + $0x3f8] sm:$0xff] %vm3062, %v3530
      %3601 = vst.msk [vmem:[#allocation5 + $0x420] sm:$0xff] %vm3062, %v3532
      %3602 = vst.msk [vmem:[#allocation5 + $0x448] sm:$0xff] %vm3062, %v3534
      %3603 = vst.msk [vmem:[#allocation5 + $0x470] sm:$0xff] %vm3062, %v3536
      %3604 = vst.msk [vmem:[#allocation5 + $0x498] sm:$0xff] %vm3062, %v3538
      %3605 = vst.msk [vmem:[#allocation5 + $0x4c0] sm:$0xff] %vm3062, %v3540
      %3606 = vst.msk [vmem:[#allocation5 + $0x4e8] sm:$0xff] %vm3062, %v3542
      %s3607 = scalar_lea.vmem [#allocation3], 48
      %v3608 = vld [vmem:[%s3607] sm:$0xff]
      %v3609 = vld [vmem:[%s3607 + $0x8] sm:$0xff]
      %v3610 = vld [vmem:[%s3607 + $0x18] sm:$0xff]
      %v3611 = vld [vmem:[%s3607 + $0x20] sm:$0xff]
      %v3612 = vld [vmem:[%s3607 + $0x30] sm:$0xff]
      %v3613 = vld [vmem:[%s3607 + $0x38] sm:$0xff]
      %v3614 = vld [vmem:[%s3607 + $0x48] sm:$0xff]
      %v3615 = vld [vmem:[%s3607 + $0x50] sm:$0xff]
      %v3616 = vld [vmem:[%s3607 + $0x60] sm:$0xff]
      %v3617 = vld [vmem:[%s3607 + $0x68] sm:$0xff]
      %v3618 = vld [vmem:[%s3607 + $0x78] sm:$0xff]
      %v3619 = vld [vmem:[%s3607 + $0x80] sm:$0xff]
      %v3620 = vld [vmem:[%s3607 + $0x90] sm:$0xff]
      %v3621 = vld [vmem:[%s3607 + $0x98] sm:$0xff]
      %v3622 = vld [vmem:[%s3607 + $0xa8] sm:$0xff]
      %v3623 = vld [vmem:[%s3607 + $0xb0] sm:$0xff]
      %v3624 = vld [vmem:[%s3607 + $0xc0] sm:$0xff]
      %v3625 = vld [vmem:[%s3607 + $0xc8] sm:$0xff]
      %v3626 = vld [vmem:[%s3607 + $0xd8] sm:$0xff]
      %v3627 = vld [vmem:[%s3607 + $0xe0] sm:$0xff]
      %v3628 = vld [vmem:[%s3607 + $0xf0] sm:$0xff]
      %v3629 = vld [vmem:[%s3607 + $0xf8] sm:$0xff]
      %v3630 = vld [vmem:[%s3607 + $0x108] sm:$0xff]
      %v3631 = vld [vmem:[%s3607 + $0x110] sm:$0xff]
      %v3632 = vld [vmem:[%s3607 + $0x120] sm:$0xff]
      %v3633 = vld [vmem:[%s3607 + $0x128] sm:$0xff]
      %v3634 = vld [vmem:[%s3607 + $0x138] sm:$0xff]
      %v3635 = vld [vmem:[%s3607 + $0x140] sm:$0xff]
      %v3636 = vld [vmem:[%s3607 + $0x150] sm:$0xff]
      %v3637 = vld [vmem:[%s3607 + $0x158] sm:$0xff]
      %v3638 = vld [vmem:[%s3607 + $0x168] sm:$0xff]
      %v3639 = vld [vmem:[%s3607 + $0x170] sm:$0xff]
      %3640 = vst.msk [vmem:[#allocation5 + $0x18] sm:$0xff] %vm381, %v3608
      %3641 = vst.msk [vmem:[#allocation5 + $0x40] sm:$0xff] %vm381, %v3609
      %3642 = vst.msk [vmem:[#allocation5 + $0x68] sm:$0xff] %vm381, %v3610
      %3643 = vst.msk [vmem:[#allocation5 + $0x90] sm:$0xff] %vm381, %v3611
      %3644 = vst.msk [vmem:[#allocation5 + $0xb8] sm:$0xff] %vm381, %v3612
      %3645 = vst.msk [vmem:[#allocation5 + $0xe0] sm:$0xff] %vm381, %v3613
      %3646 = vst.msk [vmem:[#allocation5 + $0x108] sm:$0xff] %vm381, %v3614
      %3647 = vst.msk [vmem:[#allocation5 + $0x130] sm:$0xff] %vm381, %v3615
      %3648 = vst.msk [vmem:[#allocation5 + $0x158] sm:$0xff] %vm381, %v3616
      %3649 = vst.msk [vmem:[#allocation5 + $0x180] sm:$0xff] %vm381, %v3617
      %3650 = vst.msk [vmem:[#allocation5 + $0x1a8] sm:$0xff] %vm381, %v3618
      %3651 = vst.msk [vmem:[#allocation5 + $0x1d0] sm:$0xff] %vm381, %v3619
      %3652 = vst.msk [vmem:[#allocation5 + $0x1f8] sm:$0xff] %vm381, %v3620
      %3653 = vst.msk [vmem:[#allocation5 + $0x220] sm:$0xff] %vm381, %v3621
      %3654 = vst.msk [vmem:[#allocation5 + $0x248] sm:$0xff] %vm381, %v3622
      %3655 = vst.msk [vmem:[#allocation5 + $0x270] sm:$0xff] %vm381, %v3623
      %3656 = vst.msk [vmem:[#allocation5 + $0x298] sm:$0xff] %vm381, %v3624
      %3657 = vst.msk [vmem:[#allocation5 + $0x2c0] sm:$0xff] %vm381, %v3625
      %3658 = vst.msk [vmem:[#allocation5 + $0x2e8] sm:$0xff] %vm381, %v3626
      %3659 = vst.msk [vmem:[#allocation5 + $0x310] sm:$0xff] %vm381, %v3627
      %3660 = vst.msk [vmem:[#allocation5 + $0x338] sm:$0xff] %vm381, %v3628
      %3661 = vst.msk [vmem:[#allocation5 + $0x360] sm:$0xff] %vm381, %v3629
      %3662 = vst.msk [vmem:[#allocation5 + $0x388] sm:$0xff] %vm381, %v3630
      %3663 = vst.msk [vmem:[#allocation5 + $0x3b0] sm:$0xff] %vm381, %v3631
      %3664 = vst.msk [vmem:[#allocation5 + $0x3d8] sm:$0xff] %vm381, %v3632
      %3665 = vst.msk [vmem:[#allocation5 + $0x400] sm:$0xff] %vm381, %v3633
      %3666 = vst.msk [vmem:[#allocation5 + $0x428] sm:$0xff] %vm381, %v3634
      %3667 = vst.msk [vmem:[#allocation5 + $0x450] sm:$0xff] %vm381, %v3635
      %3668 = vst.msk [vmem:[#allocation5 + $0x478] sm:$0xff] %vm381, %v3636
      %3669 = vst.msk [vmem:[#allocation5 + $0x4a0] sm:$0xff] %vm381, %v3637
      %3670 = vst.msk [vmem:[#allocation5 + $0x4c8] sm:$0xff] %vm381, %v3638
      %3671 = vst.msk [vmem:[#allocation5 + $0x4f0] sm:$0xff] %vm381, %v3639
      %v3672 = vld [vmem:[%s3607 + $0x1] sm:$0xff]
      %v3673 = vld [vmem:[%s3607 + $0x9] sm:$0xff]
      %v3674 = vld [vmem:[%s3607 + $0x19] sm:$0xff]
      %v3675 = vld [vmem:[%s3607 + $0x21] sm:$0xff]
      %v3676 = vld [vmem:[%s3607 + $0x31] sm:$0xff]
      %v3677 = vld [vmem:[%s3607 + $0x39] sm:$0xff]
      %v3678 = vld [vmem:[%s3607 + $0x49] sm:$0xff]
      %v3679 = vld [vmem:[%s3607 + $0x51] sm:$0xff]
      %v3680 = vld [vmem:[%s3607 + $0x61] sm:$0xff]
      %v3681 = vld [vmem:[%s3607 + $0x69] sm:$0xff]
      %v3682 = vld [vmem:[%s3607 + $0x79] sm:$0xff]
      %v3683 = vld [vmem:[%s3607 + $0x81] sm:$0xff]
      %v3684 = vld [vmem:[%s3607 + $0x91] sm:$0xff]
      %v3685 = vld [vmem:[%s3607 + $0x99] sm:$0xff]
      %v3686 = vld [vmem:[%s3607 + $0xa9] sm:$0xff]
      %v3687 = vld [vmem:[%s3607 + $0xb1] sm:$0xff]
      %v3688 = vld [vmem:[%s3607 + $0xc1] sm:$0xff]
      %v3689 = vld [vmem:[%s3607 + $0xc9] sm:$0xff]
      %v3690 = vld [vmem:[%s3607 + $0xd9] sm:$0xff]
      %v3691 = vld [vmem:[%s3607 + $0xe1] sm:$0xff]
      %v3692 = vld [vmem:[%s3607 + $0xf1] sm:$0xff]
      %v3693 = vld [vmem:[%s3607 + $0xf9] sm:$0xff]
      %v3694 = vld [vmem:[%s3607 + $0x109] sm:$0xff]
      %v3695 = vld [vmem:[%s3607 + $0x111] sm:$0xff]
      %v3696 = vld [vmem:[%s3607 + $0x121] sm:$0xff]
      %v3697 = vld [vmem:[%s3607 + $0x129] sm:$0xff]
      %v3698 = vld [vmem:[%s3607 + $0x139] sm:$0xff]
      %v3699 = vld [vmem:[%s3607 + $0x141] sm:$0xff]
      %v3700 = vld [vmem:[%s3607 + $0x151] sm:$0xff]
      %v3701 = vld [vmem:[%s3607 + $0x159] sm:$0xff]
      %v3702 = vld [vmem:[%s3607 + $0x169] sm:$0xff]
      %v3703 = vld [vmem:[%s3607 + $0x171] sm:$0xff]
      %3736 = vrot.lane.b32.xlu0 %v3672, 64
      %v3737 = vpop.permute.xlu0 %3736
      %3738 = vrot.lane.b32.xlu0 %v3673, 64
      %v3739 = vpop.permute.xlu0 %3738
      %3740 = vrot.lane.b32.xlu0 %v3674, 64
      %v3741 = vpop.permute.xlu0 %3740
      %3742 = vrot.lane.b32.xlu0 %v3675, 64
      %v3743 = vpop.permute.xlu0 %3742
      %3744 = vrot.lane.b32.xlu0 %v3676, 64
      %v3745 = vpop.permute.xlu0 %3744
      %3746 = vrot.lane.b32.xlu0 %v3677, 64
      %v3747 = vpop.permute.xlu0 %3746
      %3748 = vrot.lane.b32.xlu0 %v3678, 64
      %v3749 = vpop.permute.xlu0 %3748
      %3750 = vrot.lane.b32.xlu0 %v3679, 64
      %v3751 = vpop.permute.xlu0 %3750
      %3752 = vrot.lane.b32.xlu0 %v3680, 64
      %v3753 = vpop.permute.xlu0 %3752
      %3754 = vrot.lane.b32.xlu0 %v3681, 64
      %v3755 = vpop.permute.xlu0 %3754
      %3756 = vrot.lane.b32.xlu0 %v3682, 64
      %v3757 = vpop.permute.xlu0 %3756
      %3758 = vrot.lane.b32.xlu0 %v3683, 64
      %v3759 = vpop.permute.xlu0 %3758
      %3760 = vrot.lane.b32.xlu0 %v3684, 64
      %v3761 = vpop.permute.xlu0 %3760
      %3762 = vrot.lane.b32.xlu0 %v3685, 64
      %v3763 = vpop.permute.xlu0 %3762
      %3764 = vrot.lane.b32.xlu0 %v3686, 64
      %v3765 = vpop.permute.xlu0 %3764
      %3766 = vrot.lane.b32.xlu0 %v3687, 64
      %v3767 = vpop.permute.xlu0 %3766
      %3768 = vrot.lane.b32.xlu0 %v3688, 64
      %v3769 = vpop.permute.xlu0 %3768
      %3770 = vrot.lane.b32.xlu0 %v3689, 64
      %v3771 = vpop.permute.xlu0 %3770
      %3772 = vrot.lane.b32.xlu0 %v3690, 64
      %v3773 = vpop.permute.xlu0 %3772
      %3774 = vrot.lane.b32.xlu0 %v3691, 64
      %v3775 = vpop.permute.xlu0 %3774
      %3776 = vrot.lane.b32.xlu0 %v3692, 64
      %v3777 = vpop.permute.xlu0 %3776
      %3778 = vrot.lane.b32.xlu0 %v3693, 64
      %v3779 = vpop.permute.xlu0 %3778
      %3780 = vrot.lane.b32.xlu0 %v3694, 64
      %v3781 = vpop.permute.xlu0 %3780
      %3782 = vrot.lane.b32.xlu0 %v3695, 64
      %v3783 = vpop.permute.xlu0 %3782
      %3784 = vrot.lane.b32.xlu0 %v3696, 64
      %v3785 = vpop.permute.xlu0 %3784
      %3786 = vrot.lane.b32.xlu0 %v3697, 64
      %v3787 = vpop.permute.xlu0 %3786
      %3788 = vrot.lane.b32.xlu0 %v3698, 64
      %v3789 = vpop.permute.xlu0 %3788
      %3790 = vrot.lane.b32.xlu0 %v3699, 64
      %v3791 = vpop.permute.xlu0 %3790
      %3792 = vrot.lane.b32.xlu0 %v3700, 64
      %v3793 = vpop.permute.xlu0 %3792
      %3794 = vrot.lane.b32.xlu0 %v3701, 64
      %v3795 = vpop.permute.xlu0 %3794
      %3796 = vrot.lane.b32.xlu0 %v3702, 64
      %v3797 = vpop.permute.xlu0 %3796
      %3798 = vrot.lane.b32.xlu0 %v3703, 64
      %v3799 = vpop.permute.xlu0 %3798
      %3832 = vst.msk [vmem:[#allocation5 + $0x18] sm:$0xff] %vm3062, %v3737
      %3833 = vst.msk [vmem:[#allocation5 + $0x40] sm:$0xff] %vm3062, %v3739
      %3834 = vst.msk [vmem:[#allocation5 + $0x68] sm:$0xff] %vm3062, %v3741
      %3835 = vst.msk [vmem:[#allocation5 + $0x90] sm:$0xff] %vm3062, %v3743
      %3836 = vst.msk [vmem:[#allocation5 + $0xb8] sm:$0xff] %vm3062, %v3745
      %3837 = vst.msk [vmem:[#allocation5 + $0xe0] sm:$0xff] %vm3062, %v3747
      %3838 = vst.msk [vmem:[#allocation5 + $0x108] sm:$0xff] %vm3062, %v3749
      %3839 = vst.msk [vmem:[#allocation5 + $0x130] sm:$0xff] %vm3062, %v3751
      %3840 = vst.msk [vmem:[#allocation5 + $0x158] sm:$0xff] %vm3062, %v3753
      %3841 = vst.msk [vmem:[#allocation5 + $0x180] sm:$0xff] %vm3062, %v3755
      %3842 = vst.msk [vmem:[#allocation5 + $0x1a8] sm:$0xff] %vm3062, %v3757
      %3843 = vst.msk [vmem:[#allocation5 + $0x1d0] sm:$0xff] %vm3062, %v3759
      %3844 = vst.msk [vmem:[#allocation5 + $0x1f8] sm:$0xff] %vm3062, %v3761
      %3845 = vst.msk [vmem:[#allocation5 + $0x220] sm:$0xff] %vm3062, %v3763
      %3846 = vst.msk [vmem:[#allocation5 + $0x248] sm:$0xff] %vm3062, %v3765
      %3847 = vst.msk [vmem:[#allocation5 + $0x270] sm:$0xff] %vm3062, %v3767
      %3848 = vst.msk [vmem:[#allocation5 + $0x298] sm:$0xff] %vm3062, %v3769
      %3849 = vst.msk [vmem:[#allocation5 + $0x2c0] sm:$0xff] %vm3062, %v3771
      %3850 = vst.msk [vmem:[#allocation5 + $0x2e8] sm:$0xff] %vm3062, %v3773
      %3851 = vst.msk [vmem:[#allocation5 + $0x310] sm:$0xff] %vm3062, %v3775
      %3852 = vst.msk [vmem:[#allocation5 + $0x338] sm:$0xff] %vm3062, %v3777
      %3853 = vst.msk [vmem:[#allocation5 + $0x360] sm:$0xff] %vm3062, %v3779
      %3854 = vst.msk [vmem:[#allocation5 + $0x388] sm:$0xff] %vm3062, %v3781
      %3855 = vst.msk [vmem:[#allocation5 + $0x3b0] sm:$0xff] %vm3062, %v3783
      %3856 = vst.msk [vmem:[#allocation5 + $0x3d8] sm:$0xff] %vm3062, %v3785
      %3857 = vst.msk [vmem:[#allocation5 + $0x400] sm:$0xff] %vm3062, %v3787
      %3858 = vst.msk [vmem:[#allocation5 + $0x428] sm:$0xff] %vm3062, %v3789
      %3859 = vst.msk [vmem:[#allocation5 + $0x450] sm:$0xff] %vm3062, %v3791
      %3860 = vst.msk [vmem:[#allocation5 + $0x478] sm:$0xff] %vm3062, %v3793
      %3861 = vst.msk [vmem:[#allocation5 + $0x4a0] sm:$0xff] %vm3062, %v3795
      %3862 = vst.msk [vmem:[#allocation5 + $0x4c8] sm:$0xff] %vm3062, %v3797
      %3863 = vst.msk [vmem:[#allocation5 + $0x4f0] sm:$0xff] %vm3062, %v3799
      %v3864 = vld [vmem:[%s3607 + $0x2] sm:$0xff]
      %v3865 = vld [vmem:[%s3607 + $0xa] sm:$0xff]
      %v3866 = vld [vmem:[%s3607 + $0x1a] sm:$0xff]
      %v3867 = vld [vmem:[%s3607 + $0x22] sm:$0xff]
      %v3868 = vld [vmem:[%s3607 + $0x32] sm:$0xff]
      %v3869 = vld [vmem:[%s3607 + $0x3a] sm:$0xff]
      %v3870 = vld [vmem:[%s3607 + $0x4a] sm:$0xff]
      %v3871 = vld [vmem:[%s3607 + $0x52] sm:$0xff]
      %v3872 = vld [vmem:[%s3607 + $0x62] sm:$0xff]
      %v3873 = vld [vmem:[%s3607 + $0x6a] sm:$0xff]
      %v3874 = vld [vmem:[%s3607 + $0x7a] sm:$0xff]
      %v3875 = vld [vmem:[%s3607 + $0x82] sm:$0xff]
      %v3876 = vld [vmem:[%s3607 + $0x92] sm:$0xff]
      %v3877 = vld [vmem:[%s3607 + $0x9a] sm:$0xff]
      %v3878 = vld [vmem:[%s3607 + $0xaa] sm:$0xff]
      %v3879 = vld [vmem:[%s3607 + $0xb2] sm:$0xff]
      %v3880 = vld [vmem:[%s3607 + $0xc2] sm:$0xff]
      %v3881 = vld [vmem:[%s3607 + $0xca] sm:$0xff]
      %v3882 = vld [vmem:[%s3607 + $0xda] sm:$0xff]
      %v3883 = vld [vmem:[%s3607 + $0xe2] sm:$0xff]
      %v3884 = vld [vmem:[%s3607 + $0xf2] sm:$0xff]
      %v3885 = vld [vmem:[%s3607 + $0xfa] sm:$0xff]
      %v3886 = vld [vmem:[%s3607 + $0x10a] sm:$0xff]
      %v3887 = vld [vmem:[%s3607 + $0x112] sm:$0xff]
      %v3888 = vld [vmem:[%s3607 + $0x122] sm:$0xff]
      %v3889 = vld [vmem:[%s3607 + $0x12a] sm:$0xff]
      %v3890 = vld [vmem:[%s3607 + $0x13a] sm:$0xff]
      %v3891 = vld [vmem:[%s3607 + $0x142] sm:$0xff]
      %v3892 = vld [vmem:[%s3607 + $0x152] sm:$0xff]
      %v3893 = vld [vmem:[%s3607 + $0x15a] sm:$0xff]
      %v3894 = vld [vmem:[%s3607 + $0x16a] sm:$0xff]
      %v3895 = vld [vmem:[%s3607 + $0x172] sm:$0xff]
      %3896 = vst.msk [vmem:[#allocation5 + $0x20] sm:$0xff] %vm381, %v3864
      %3897 = vst.msk [vmem:[#allocation5 + $0x48] sm:$0xff] %vm381, %v3865
      %3898 = vst.msk [vmem:[#allocation5 + $0x70] sm:$0xff] %vm381, %v3866
      %3899 = vst.msk [vmem:[#allocation5 + $0x98] sm:$0xff] %vm381, %v3867
      %3900 = vst.msk [vmem:[#allocation5 + $0xc0] sm:$0xff] %vm381, %v3868
      %3901 = vst.msk [vmem:[#allocation5 + $0xe8] sm:$0xff] %vm381, %v3869
      %3902 = vst.msk [vmem:[#allocation5 + $0x110] sm:$0xff] %vm381, %v3870
      %3903 = vst.msk [vmem:[#allocation5 + $0x138] sm:$0xff] %vm381, %v3871
      %3904 = vst.msk [vmem:[#allocation5 + $0x160] sm:$0xff] %vm381, %v3872
      %3905 = vst.msk [vmem:[#allocation5 + $0x188] sm:$0xff] %vm381, %v3873
      %3906 = vst.msk [vmem:[#allocation5 + $0x1b0] sm:$0xff] %vm381, %v3874
      %3907 = vst.msk [vmem:[#allocation5 + $0x1d8] sm:$0xff] %vm381, %v3875
      %3908 = vst.msk [vmem:[#allocation5 + $0x200] sm:$0xff] %vm381, %v3876
      %3909 = vst.msk [vmem:[#allocation5 + $0x228] sm:$0xff] %vm381, %v3877
      %3910 = vst.msk [vmem:[#allocation5 + $0x250] sm:$0xff] %vm381, %v3878
      %3911 = vst.msk [vmem:[#allocation5 + $0x278] sm:$0xff] %vm381, %v3879
      %3912 = vst.msk [vmem:[#allocation5 + $0x2a0] sm:$0xff] %vm381, %v3880
      %3913 = vst.msk [vmem:[#allocation5 + $0x2c8] sm:$0xff] %vm381, %v3881
      %3914 = vst.msk [vmem:[#allocation5 + $0x2f0] sm:$0xff] %vm381, %v3882
      %3915 = vst.msk [vmem:[#allocation5 + $0x318] sm:$0xff] %vm381, %v3883
      %3916 = vst.msk [vmem:[#allocation5 + $0x340] sm:$0xff] %vm381, %v3884
      %3917 = vst.msk [vmem:[#allocation5 + $0x368] sm:$0xff] %vm381, %v3885
      %3918 = vst.msk [vmem:[#allocation5 + $0x390] sm:$0xff] %vm381, %v3886
      %3919 = vst.msk [vmem:[#allocation5 + $0x3b8] sm:$0xff] %vm381, %v3887
      %3920 = vst.msk [vmem:[#allocation5 + $0x3e0] sm:$0xff] %vm381, %v3888
      %3921 = vst.msk [vmem:[#allocation5 + $0x408] sm:$0xff] %vm381, %v3889
      %3922 = vst.msk [vmem:[#allocation5 + $0x430] sm:$0xff] %vm381, %v3890
      %3923 = vst.msk [vmem:[#allocation5 + $0x458] sm:$0xff] %vm381, %v3891
      %3924 = vst.msk [vmem:[#allocation5 + $0x480] sm:$0xff] %vm381, %v3892
      %3925 = vst.msk [vmem:[#allocation5 + $0x4a8] sm:$0xff] %vm381, %v3893
      %3926 = vst.msk [vmem:[#allocation5 + $0x4d0] sm:$0xff] %vm381, %v3894
      %3927 = vst.msk [vmem:[#allocation5 + $0x4f8] sm:$0xff] %vm381, %v3895
      %v3928 = vld [vmem:[#allocation5] sm:$0xff]
      %v3929 = vld [vmem:[#allocation5 + $0x8] sm:$0xff]
      %v3930 = vld [vmem:[#allocation5 + $0x10] sm:$0xff]
      %v3931 = vld [vmem:[#allocation5 + $0x18] sm:$0xff]
      %v3932 = vld [vmem:[#allocation5 + $0x20] sm:$0xff]
      %v3933 = vld [vmem:[#allocation5 + $0x28] sm:$0xff]
      %v3934 = vld [vmem:[#allocation5 + $0x30] sm:$0xff]
      %v3935 = vld [vmem:[#allocation5 + $0x38] sm:$0xff]
      %v3936 = vld [vmem:[#allocation5 + $0x40] sm:$0xff]
      %v3937 = vld [vmem:[#allocation5 + $0x48] sm:$0xff]
      %v3938 = vld [vmem:[#allocation5 + $0x50] sm:$0xff]
      %v3939 = vld [vmem:[#allocation5 + $0x58] sm:$0xff]
      %v3940 = vld [vmem:[#allocation5 + $0x60] sm:$0xff]
      %v3941 = vld [vmem:[#allocation5 + $0x68] sm:$0xff]
      %v3942 = vld [vmem:[#allocation5 + $0x70] sm:$0xff]
      %v3943 = vld [vmem:[#allocation5 + $0x78] sm:$0xff]
      %v3944 = vld [vmem:[#allocation5 + $0x80] sm:$0xff]
      %v3945 = vld [vmem:[#allocation5 + $0x88] sm:$0xff]
      %v3946 = vld [vmem:[#allocation5 + $0x90] sm:$0xff]
      %v3947 = vld [vmem:[#allocation5 + $0x98] sm:$0xff]
      %v3948 = vld [vmem:[#allocation5 + $0xa0] sm:$0xff]
      %v3949 = vld [vmem:[#allocation5 + $0xa8] sm:$0xff]
      %v3950 = vld [vmem:[#allocation5 + $0xb0] sm:$0xff]
      %v3951 = vld [vmem:[#allocation5 + $0xb8] sm:$0xff]
      %v3952 = vld [vmem:[#allocation5 + $0xc0] sm:$0xff]
      %v3953 = vld [vmem:[#allocation5 + $0xc8] sm:$0xff]
      %v3954 = vld [vmem:[#allocation5 + $0xd0] sm:$0xff]
      %v3955 = vld [vmem:[#allocation5 + $0xd8] sm:$0xff]
      %v3956 = vld [vmem:[#allocation5 + $0xe0] sm:$0xff]
      %v3957 = vld [vmem:[#allocation5 + $0xe8] sm:$0xff]
      %v3958 = vld [vmem:[#allocation5 + $0xf0] sm:$0xff]
      %v3959 = vld [vmem:[#allocation5 + $0xf8] sm:$0xff]
      %v3960 = vld [vmem:[#allocation5 + $0x100] sm:$0xff]
      %v3961 = vld [vmem:[#allocation5 + $0x108] sm:$0xff]
      %v3962 = vld [vmem:[#allocation5 + $0x110] sm:$0xff]
      %v3963 = vld [vmem:[#allocation5 + $0x118] sm:$0xff]
      %v3964 = vld [vmem:[#allocation5 + $0x120] sm:$0xff]
      %v3965 = vld [vmem:[#allocation5 + $0x128] sm:$0xff]
      %v3966 = vld [vmem:[#allocation5 + $0x130] sm:$0xff]
      %v3967 = vld [vmem:[#allocation5 + $0x138] sm:$0xff]
      %v3968 = vld [vmem:[#allocation5 + $0x140] sm:$0xff]
      %v3969 = vld [vmem:[#allocation5 + $0x148] sm:$0xff]
      %v3970 = vld [vmem:[#allocation5 + $0x150] sm:$0xff]
      %v3971 = vld [vmem:[#allocation5 + $0x158] sm:$0xff]
      %v3972 = vld [vmem:[#allocation5 + $0x160] sm:$0xff]
      %v3973 = vld [vmem:[#allocation5 + $0x168] sm:$0xff]
      %v3974 = vld [vmem:[#allocation5 + $0x170] sm:$0xff]
      %v3975 = vld [vmem:[#allocation5 + $0x178] sm:$0xff]
      %v3976 = vld [vmem:[#allocation5 + $0x180] sm:$0xff]
      %v3977 = vld [vmem:[#allocation5 + $0x188] sm:$0xff]
      %v3978 = vld [vmem:[#allocation5 + $0x190] sm:$0xff]
      %v3979 = vld [vmem:[#allocation5 + $0x198] sm:$0xff]
      %v3980 = vld [vmem:[#allocation5 + $0x1a0] sm:$0xff]
      %v3981 = vld [vmem:[#allocation5 + $0x1a8] sm:$0xff]
      %v3982 = vld [vmem:[#allocation5 + $0x1b0] sm:$0xff]
      %v3983 = vld [vmem:[#allocation5 + $0x1b8] sm:$0xff]
      %v3984 = vld [vmem:[#allocation5 + $0x1c0] sm:$0xff]
      %v3985 = vld [vmem:[#allocation5 + $0x1c8] sm:$0xff]
      %v3986 = vld [vmem:[#allocation5 + $0x1d0] sm:$0xff]
      %v3987 = vld [vmem:[#allocation5 + $0x1d8] sm:$0xff]
      %v3988 = vld [vmem:[#allocation5 + $0x1e0] sm:$0xff]
      %v3989 = vld [vmem:[#allocation5 + $0x1e8] sm:$0xff]
      %v3990 = vld [vmem:[#allocation5 + $0x1f0] sm:$0xff]
      %v3991 = vld [vmem:[#allocation5 + $0x1f8] sm:$0xff]
      %v3992 = vld [vmem:[#allocation5 + $0x200] sm:$0xff]
      %v3993 = vld [vmem:[#allocation5 + $0x208] sm:$0xff]
      %v3994 = vld [vmem:[#allocation5 + $0x210] sm:$0xff]
      %v3995 = vld [vmem:[#allocation5 + $0x218] sm:$0xff]
      %v3996 = vld [vmem:[#allocation5 + $0x220] sm:$0xff]
      %v3997 = vld [vmem:[#allocation5 + $0x228] sm:$0xff]
      %v3998 = vld [vmem:[#allocation5 + $0x230] sm:$0xff]
      %v3999 = vld [vmem:[#allocation5 + $0x238] sm:$0xff]
      %v4000 = vld [vmem:[#allocation5 + $0x240] sm:$0xff]
      %v4001 = vld [vmem:[#allocation5 + $0x248] sm:$0xff]
      %v4002 = vld [vmem:[#allocation5 + $0x250] sm:$0xff]
      %v4003 = vld [vmem:[#allocation5 + $0x258] sm:$0xff]
      %v4004 = vld [vmem:[#allocation5 + $0x260] sm:$0xff]
      %v4005 = vld [vmem:[#allocation5 + $0x268] sm:$0xff]
      %v4006 = vld [vmem:[#allocation5 + $0x270] sm:$0xff]
      %v4007 = vld [vmem:[#allocation5 + $0x278] sm:$0xff]
      %v4008 = vld [vmem:[#allocation5 + $0x280] sm:$0xff]
      %v4009 = vld [vmem:[#allocation5 + $0x288] sm:$0xff]
      %v4010 = vld [vmem:[#allocation5 + $0x290] sm:$0xff]
      %v4011 = vld [vmem:[#allocation5 + $0x298] sm:$0xff]
      %v4012 = vld [vmem:[#allocation5 + $0x2a0] sm:$0xff]
      %v4013 = vld [vmem:[#allocation5 + $0x2a8] sm:$0xff]
      %v4014 = vld [vmem:[#allocation5 + $0x2b0] sm:$0xff]
      %v4015 = vld [vmem:[#allocation5 + $0x2b8] sm:$0xff]
      %v4016 = vld [vmem:[#allocation5 + $0x2c0] sm:$0xff]
      %v4017 = vld [vmem:[#allocation5 + $0x2c8] sm:$0xff]
      %v4018 = vld [vmem:[#allocation5 + $0x2d0] sm:$0xff]
      %v4019 = vld [vmem:[#allocation5 + $0x2d8] sm:$0xff]
      %v4020 = vld [vmem:[#allocation5 + $0x2e0] sm:$0xff]
      %v4021 = vld [vmem:[#allocation5 + $0x2e8] sm:$0xff]
      %v4022 = vld [vmem:[#allocation5 + $0x2f0] sm:$0xff]
      %v4023 = vld [vmem:[#allocation5 + $0x2f8] sm:$0xff]
      %v4024 = vld [vmem:[#allocation5 + $0x300] sm:$0xff]
      %v4025 = vld [vmem:[#allocation5 + $0x308] sm:$0xff]
      %v4026 = vld [vmem:[#allocation5 + $0x310] sm:$0xff]
      %v4027 = vld [vmem:[#allocation5 + $0x318] sm:$0xff]
      %v4028 = vld [vmem:[#allocation5 + $0x320] sm:$0xff]
      %v4029 = vld [vmem:[#allocation5 + $0x328] sm:$0xff]
      %v4030 = vld [vmem:[#allocation5 + $0x330] sm:$0xff]
      %v4031 = vld [vmem:[#allocation5 + $0x338] sm:$0xff]
      %v4032 = vld [vmem:[#allocation5 + $0x340] sm:$0xff]
      %v4033 = vld [vmem:[#allocation5 + $0x348] sm:$0xff]
      %v4034 = vld [vmem:[#allocation5 + $0x350] sm:$0xff]
      %v4035 = vld [vmem:[#allocation5 + $0x358] sm:$0xff]
      %v4036 = vld [vmem:[#allocation5 + $0x360] sm:$0xff]
      %v4037 = vld [vmem:[#allocation5 + $0x368] sm:$0xff]
      %v4038 = vld [vmem:[#allocation5 + $0x370] sm:$0xff]
      %v4039 = vld [vmem:[#allocation5 + $0x378] sm:$0xff]
      %v4040 = vld [vmem:[#allocation5 + $0x380] sm:$0xff]
      %v4041 = vld [vmem:[#allocation5 + $0x388] sm:$0xff]
      %v4042 = vld [vmem:[#allocation5 + $0x390] sm:$0xff]
      %v4043 = vld [vmem:[#allocation5 + $0x398] sm:$0xff]
      %v4044 = vld [vmem:[#allocation5 + $0x3a0] sm:$0xff]
      %v4045 = vld [vmem:[#allocation5 + $0x3a8] sm:$0xff]
      %v4046 = vld [vmem:[#allocation5 + $0x3b0] sm:$0xff]
      %v4047 = vld [vmem:[#allocation5 + $0x3b8] sm:$0xff]
      %v4048 = vld [vmem:[#allocation5 + $0x3c0] sm:$0xff]
      %v4049 = vld [vmem:[#allocation5 + $0x3c8] sm:$0xff]
      %v4050 = vld [vmem:[#allocation5 + $0x3d0] sm:$0xff]
      %v4051 = vld [vmem:[#allocation5 + $0x3d8] sm:$0xff]
      %v4052 = vld [vmem:[#allocation5 + $0x3e0] sm:$0xff]
      %v4053 = vld [vmem:[#allocation5 + $0x3e8] sm:$0xff]
      %v4054 = vld [vmem:[#allocation5 + $0x3f0] sm:$0xff]
      %v4055 = vld [vmem:[#allocation5 + $0x3f8] sm:$0xff]
      %v4056 = vld [vmem:[#allocation5 + $0x400] sm:$0xff]
      %v4057 = vld [vmem:[#allocation5 + $0x408] sm:$0xff]
      %v4058 = vld [vmem:[#allocation5 + $0x410] sm:$0xff]
      %v4059 = vld [vmem:[#allocation5 + $0x418] sm:$0xff]
      %v4060 = vld [vmem:[#allocation5 + $0x420] sm:$0xff]
      %v4061 = vld [vmem:[#allocation5 + $0x428] sm:$0xff]
      %v4062 = vld [vmem:[#allocation5 + $0x430] sm:$0xff]
      %v4063 = vld [vmem:[#allocation5 + $0x438] sm:$0xff]
      %v4064 = vld [vmem:[#allocation5 + $0x440] sm:$0xff]
      %v4065 = vld [vmem:[#allocation5 + $0x448] sm:$0xff]
      %v4066 = vld [vmem:[#allocation5 + $0x450] sm:$0xff]
      %v4067 = vld [vmem:[#allocation5 + $0x458] sm:$0xff]
      %v4068 = vld [vmem:[#allocation5 + $0x460] sm:$0xff]
      %v4069 = vld [vmem:[#allocation5 + $0x468] sm:$0xff]
      %v4070 = vld [vmem:[#allocation5 + $0x470] sm:$0xff]
      %v4071 = vld [vmem:[#allocation5 + $0x478] sm:$0xff]
      %v4072 = vld [vmem:[#allocation5 + $0x480] sm:$0xff]
      %v4073 = vld [vmem:[#allocation5 + $0x488] sm:$0xff]
      %v4074 = vld [vmem:[#allocation5 + $0x490] sm:$0xff]
      %v4075 = vld [vmem:[#allocation5 + $0x498] sm:$0xff]
      %v4076 = vld [vmem:[#allocation5 + $0x4a0] sm:$0xff]
      %v4077 = vld [vmem:[#allocation5 + $0x4a8] sm:$0xff]
      %v4078 = vld [vmem:[#allocation5 + $0x4b0] sm:$0xff]
      %v4079 = vld [vmem:[#allocation5 + $0x4b8] sm:$0xff]
      %v4080 = vld [vmem:[#allocation5 + $0x4c0] sm:$0xff]
      %v4081 = vld [vmem:[#allocation5 + $0x4c8] sm:$0xff]
      %v4082 = vld [vmem:[#allocation5 + $0x4d0] sm:$0xff]
      %v4083 = vld [vmem:[#allocation5 + $0x4d8] sm:$0xff]
      %v4084 = vld [vmem:[#allocation5 + $0x4e0] sm:$0xff]
      %v4085 = vld [vmem:[#allocation5 + $0x4e8] sm:$0xff]
      %v4086 = vld [vmem:[#allocation5 + $0x4f0] sm:$0xff]
      %v4087 = vld [vmem:[#allocation5 + $0x4f8] sm:$0xff]
      %v4088 = vld [vmem:[%s5] sm:$0xff]
      %v4089 = vld [vmem:[%s5 + $0x8] sm:$0xff]
      %v4090 = vld [vmem:[%s5 + $0x10] sm:$0xff]
      %v4091 = vld [vmem:[%s5 + $0x18] sm:$0xff]
      %v4092 = vld [vmem:[%s5 + $0x20] sm:$0xff]
      %v4093 = vld [vmem:[%s5 + $0x28] sm:$0xff]
      %v4094 = vld [vmem:[%s5 + $0x30] sm:$0xff]
      %v4095 = vld [vmem:[%s5 + $0x38] sm:$0xff]
      %v4096 = vld [vmem:[%s5 + $0x40] sm:$0xff]
      %v4097 = vld [vmem:[%s5 + $0x48] sm:$0xff]
      %v4098 = vld [vmem:[%s5 + $0x50] sm:$0xff]
      %v4099 = vld [vmem:[%s5 + $0x58] sm:$0xff]
      %v4100 = vld [vmem:[%s5 + $0x60] sm:$0xff]
      %v4101 = vld [vmem:[%s5 + $0x68] sm:$0xff]
      %v4102 = vld [vmem:[%s5 + $0x70] sm:$0xff]
      %v4103 = vld [vmem:[%s5 + $0x78] sm:$0xff]
      %v4104 = vld [vmem:[%s5 + $0x80] sm:$0xff]
      %v4105 = vld [vmem:[%s5 + $0x88] sm:$0xff]
      %v4106 = vld [vmem:[%s5 + $0x90] sm:$0xff]
      %v4107 = vld [vmem:[%s5 + $0x98] sm:$0xff]
      %v4108 = vld [vmem:[%s5 + $0xa0] sm:$0xff]
      %v4109 = vld [vmem:[%s5 + $0xa8] sm:$0xff]
      %v4110 = vld [vmem:[%s5 + $0xb0] sm:$0xff]
      %v4111 = vld [vmem:[%s5 + $0xb8] sm:$0xff]
      %v4112 = vld [vmem:[%s5 + $0xc0] sm:$0xff]
      %v4113 = vld [vmem:[%s5 + $0xc8] sm:$0xff]
      %v4114 = vld [vmem:[%s5 + $0xd0] sm:$0xff]
      %v4115 = vld [vmem:[%s5 + $0xd8] sm:$0xff]
      %v4116 = vld [vmem:[%s5 + $0xe0] sm:$0xff]
      %v4117 = vld [vmem:[%s5 + $0xe8] sm:$0xff]
      %v4118 = vld [vmem:[%s5 + $0xf0] sm:$0xff]
      %v4119 = vld [vmem:[%s5 + $0xf8] sm:$0xff]
      %v4120 = vld [vmem:[%s5 + $0x100] sm:$0xff]
      %v4121 = vld [vmem:[%s5 + $0x108] sm:$0xff]
      %v4122 = vld [vmem:[%s5 + $0x110] sm:$0xff]
      %v4123 = vld [vmem:[%s5 + $0x118] sm:$0xff]
      %v4124 = vld [vmem:[%s5 + $0x120] sm:$0xff]
      %v4125 = vld [vmem:[%s5 + $0x128] sm:$0xff]
      %v4126 = vld [vmem:[%s5 + $0x130] sm:$0xff]
      %v4127 = vld [vmem:[%s5 + $0x138] sm:$0xff]
      %v4128 = vld [vmem:[%s5 + $0x140] sm:$0xff]
      %v4129 = vld [vmem:[%s5 + $0x148] sm:$0xff]
      %v4130 = vld [vmem:[%s5 + $0x150] sm:$0xff]
      %v4131 = vld [vmem:[%s5 + $0x158] sm:$0xff]
      %v4132 = vld [vmem:[%s5 + $0x160] sm:$0xff]
      %v4133 = vld [vmem:[%s5 + $0x168] sm:$0xff]
      %v4134 = vld [vmem:[%s5 + $0x170] sm:$0xff]
      %v4135 = vld [vmem:[%s5 + $0x178] sm:$0xff]
      %v4136 = vld [vmem:[%s5 + $0x180] sm:$0xff]
      %v4137 = vld [vmem:[%s5 + $0x188] sm:$0xff]
      %v4138 = vld [vmem:[%s5 + $0x190] sm:$0xff]
      %v4139 = vld [vmem:[%s5 + $0x198] sm:$0xff]
      %v4140 = vld [vmem:[%s5 + $0x1a0] sm:$0xff]
      %v4141 = vld [vmem:[%s5 + $0x1a8] sm:$0xff]
      %v4142 = vld [vmem:[%s5 + $0x1b0] sm:$0xff]
      %v4143 = vld [vmem:[%s5 + $0x1b8] sm:$0xff]
      %v4144 = vld [vmem:[%s5 + $0x1c0] sm:$0xff]
      %v4145 = vld [vmem:[%s5 + $0x1c8] sm:$0xff]
      %v4146 = vld [vmem:[%s5 + $0x1d0] sm:$0xff]
      %v4147 = vld [vmem:[%s5 + $0x1d8] sm:$0xff]
      %v4148 = vld [vmem:[%s5 + $0x1e0] sm:$0xff]
      %v4149 = vld [vmem:[%s5 + $0x1e8] sm:$0xff]
      %v4150 = vld [vmem:[%s5 + $0x1f0] sm:$0xff]
      %v4151 = vld [vmem:[%s5 + $0x1f8] sm:$0xff]
      %v4152 = vld [vmem:[%s5 + $0x200] sm:$0xff]
      %v4153 = vld [vmem:[%s5 + $0x208] sm:$0xff]
      %v4154 = vld [vmem:[%s5 + $0x210] sm:$0xff]
      %v4155 = vld [vmem:[%s5 + $0x218] sm:$0xff]
      %v4156 = vld [vmem:[%s5 + $0x220] sm:$0xff]
      %v4157 = vld [vmem:[%s5 + $0x228] sm:$0xff]
      %v4158 = vld [vmem:[%s5 + $0x230] sm:$0xff]
      %v4159 = vld [vmem:[%s5 + $0x238] sm:$0xff]
      %v4160 = vld [vmem:[%s6] sm:$0x1]
      %v4162 = vlaneseq
      %v4163 = vshrl.u32 %v4162, 7
      %v4164 = vsub.s32 0, %v4163
      %v4165 = vrot.slane %v4160, %v4164
      %v4168 = vsel %vm381, %v3932, 0
      %v4171 = vsel %vm381, %v3937, 0
      %v4174 = vsel %vm381, %v3942, 0
      %v4177 = vsel %vm381, %v3947, 0
      %v4180 = vsel %vm381, %v3952, 0
      %v4183 = vsel %vm381, %v3957, 0
      %v4186 = vsel %vm381, %v3962, 0
      %v4189 = vsel %vm381, %v3967, 0
      %v4192 = vsel %vm381, %v3972, 0
      %v4195 = vsel %vm381, %v3977, 0
      %v4198 = vsel %vm381, %v3982, 0
      %v4201 = vsel %vm381, %v3987, 0
      %v4204 = vsel %vm381, %v3992, 0
      %v4207 = vsel %vm381, %v3997, 0
      %v4210 = vsel %vm381, %v4002, 0
      %v4213 = vsel %vm381, %v4007, 0
      %v4216 = vsel %vm381, %v4012, 0
      %v4219 = vsel %vm381, %v4017, 0
      %v4222 = vsel %vm381, %v4022, 0
      %v4225 = vsel %vm381, %v4027, 0
      %v4228 = vsel %vm381, %v4032, 0
      %v4231 = vsel %vm381, %v4037, 0
      %v4234 = vsel %vm381, %v4042, 0
      %v4237 = vsel %vm381, %v4047, 0
      %v4240 = vsel %vm381, %v4052, 0
      %v4243 = vsel %vm381, %v4057, 0
      %v4246 = vsel %vm381, %v4062, 0
      %v4249 = vsel %vm381, %v4067, 0
      %v4252 = vsel %vm381, %v4072, 0
      %v4255 = vsel %vm381, %v4077, 0
      %v4258 = vsel %vm381, %v4082, 0
      %v4261 = vsel %vm381, %v4087, 0
      %4263 = vmatprep.subr.mxu0 0.0
      %4264 = vmatpush1.msra.mxu0 %v4103
      %4265 = vmatprep.subr.mxu0 0.0
      %4266 = vmatpush1.msra.mxu0 %v4102
      %4267 = vmatprep.subr.mxu0 0.0
      %4268 = vmatpush1.msra.mxu0 %v4101
      %4269 = vmatprep.subr.mxu0 0.0
      %4270 = vmatpush1.msra.mxu0 %v4100
      %4271 = vmatprep.subr.mxu0 0.0
      %4272 = vmatpush1.msra.mxu0 %v4099
      %4273 = vmatprep.subr.mxu0 0.0
      %4274 = vmatpush1.msra.mxu0 %v4098
      %4275 = vmatprep.subr.mxu0 0.0
      %4276 = vmatpush1.msra.mxu0 %v4097
      %4277 = vmatprep.subr.mxu0 0.0
      %4278 = vmatpush1.msra.mxu0 %v4096
      %4279 = vmatprep.subr.mxu0 0.0
      %4280 = vmatpush1.msra.mxu0 %v4095
      %4281 = vmatprep.subr.mxu0 0.0
      %4282 = vmatpush1.msra.mxu0 %v4094
      %4283 = vmatprep.subr.mxu0 0.0
      %4284 = vmatpush1.msra.mxu0 %v4093
      %4285 = vmatprep.subr.mxu0 0.0
      %4286 = vmatpush1.msra.mxu0 %v4092
      %4287 = vmatprep.subr.mxu0 0.0
      %4288 = vmatpush1.msra.mxu0 %v4091
      %4289 = vmatprep.subr.mxu0 0.0
      %4290 = vmatpush1.msra.mxu0 %v4090
      %4291 = vmatprep.subr.mxu0 0.0
      %4292 = vmatpush1.msra.mxu0 %v4089
      %4293 = vmatprep.subr.mxu0 0.0
      %4294 = vmatpush1.msra.mxu0 %v4088
      %4295 = vmatprep.subr.mxu0 0.0
      %4296 = vmatpush2.msra.mxu0 %v4119
      %4297 = vmatprep.subr.mxu0 0.0
      %4298 = vmatpush2.msra.mxu0 %v4118
      %4299 = vmatprep.subr.mxu0 0.0
      %4300 = vmatpush2.msra.mxu0 %v4117
      %4301 = vmatprep.subr.mxu0 0.0
      %4302 = vmatpush2.msra.mxu0 %v4116
      %4303 = vmatprep.subr.mxu0 0.0
      %4304 = vmatpush2.msra.mxu0 %v4115
      %4305 = vmatprep.subr.mxu0 0.0
      %4306 = vmatpush2.msra.mxu0 %v4114
      %4307 = vmatprep.subr.mxu0 0.0
      %4308 = vmatpush2.msra.mxu0 %v4113
      %4309 = vmatprep.subr.mxu0 0.0
      %4310 = vmatpush2.msra.mxu0 %v4112
      %4311 = vmatprep.subr.mxu0 0.0
      %4312 = vmatpush2.msra.mxu0 %v4111
      %4313 = vmatprep.subr.mxu0 0.0
      %4314 = vmatpush2.msra.mxu0 %v4110
      %4315 = vmatprep.subr.mxu0 0.0
      %4316 = vmatpush2.msra.mxu0 %v4109
      %4317 = vmatprep.subr.mxu0 0.0
      %4318 = vmatpush2.msra.mxu0 %v4108
      %4319 = vmatprep.subr.mxu0 0.0
      %4320 = vmatpush2.msra.mxu0 %v4107
      %4321 = vmatprep.subr.mxu0 0.0
      %4322 = vmatpush2.msra.mxu0 %v4106
      %4323 = vmatprep.subr.mxu0 0.0
      %4324 = vmatpush2.msra.mxu0 %v4105
      %4325 = vmatprep.subr.mxu0 0.0
      %4326 = vmatpush2.msra.mxu0 %v4104
      %4327 = vmatprep.mubr.f32.mxu0 %v3929
      %4328 = vmatmul.mubr.f32.gmra.mxu0 %v3928
      %v4329 = vpop.f32.mrf.mxu0
      %v4330 = vadd.f32 %v4165, %v4329
      %v4331 = vpop.f32.mrf.mxu0
      %4332 = vmatprep.mubr.f32.mxu0 %v3934
      %4333 = vmatmul.mubr.f32.gmra.mxu0 %v3933
      %v4334 = vpop.f32.mrf.mxu0
      %v4335 = vadd.f32 %v4165, %v4334
      %v4336 = vpop.f32.mrf.mxu0
      %4337 = vmatprep.mubr.f32.mxu0 %v3939
      %4338 = vmatmul.mubr.f32.gmra.mxu0 %v3938
      %v4339 = vpop.f32.mrf.mxu0
      %v4340 = vadd.f32 %v4165, %v4339
      %v4341 = vpop.f32.mrf.mxu0
      %4342 = vmatprep.mubr.f32.mxu0 %v3944
      %4343 = vmatmul.mubr.f32.gmra.mxu0 %v3943
      %v4344 = vpop.f32.mrf.mxu0
      %v4345 = vadd.f32 %v4165, %v4344
      %v4346 = vpop.f32.mrf.mxu0
      %4347 = vmatprep.mubr.f32.mxu0 %v3949
      %4348 = vmatmul.mubr.f32.gmra.mxu0 %v3948
      %v4349 = vpop.f32.mrf.mxu0
      %v4350 = vadd.f32 %v4165, %v4349
      %v4351 = vpop.f32.mrf.mxu0
      %4352 = vmatprep.mubr.f32.mxu0 %v3954
      %4353 = vmatmul.mubr.f32.gmra.mxu0 %v3953
      %v4354 = vpop.f32.mrf.mxu0
      %v4355 = vadd.f32 %v4165, %v4354
      %v4356 = vpop.f32.mrf.mxu0
      %4357 = vmatprep.mubr.f32.mxu0 %v3959
      %4358 = vmatmul.mubr.f32.gmra.mxu0 %v3958
      %v4359 = vpop.f32.mrf.mxu0
      %v4360 = vadd.f32 %v4165, %v4359
      %v4361 = vpop.f32.mrf.mxu0
      %4362 = vmatprep.mubr.f32.mxu0 %v3964
      %4363 = vmatmul.mubr.f32.gmra.mxu0 %v3963
      %v4364 = vpop.f32.mrf.mxu0
      %v4365 = vadd.f32 %v4165, %v4364
      %v4366 = vpop.f32.mrf.mxu0
      %4367 = vmatprep.mubr.f32.mxu0 %v3969
      %4368 = vmatmul.mubr.f32.gmra.mxu0 %v3968
      %v4369 = vpop.f32.mrf.mxu0
      %v4370 = vadd.f32 %v4165, %v4369
      %v4371 = vpop.f32.mrf.mxu0
      %4372 = vmatprep.mubr.f32.mxu0 %v3974
      %4373 = vmatmul.mubr.f32.gmra.mxu0 %v3973
      %v4374 = vpop.f32.mrf.mxu0
      %v4375 = vadd.f32 %v4165, %v4374
      %v4376 = vpop.f32.mrf.mxu0
      %4377 = vmatprep.mubr.f32.mxu0 %v3979
      %4378 = vmatmul.mubr.f32.gmra.mxu0 %v3978
      %v4379 = vpop.f32.mrf.mxu0
      %v4380 = vadd.f32 %v4165, %v4379
      %v4381 = vpop.f32.mrf.mxu0
      %4382 = vmatprep.mubr.f32.mxu0 %v3984
      %4383 = vmatmul.mubr.f32.gmra.mxu0 %v3983
      %v4384 = vpop.f32.mrf.mxu0
      %v4385 = vadd.f32 %v4165, %v4384
      %v4386 = vpop.f32.mrf.mxu0
      %4387 = vmatprep.mubr.f32.mxu0 %v3989
      %4388 = vmatmul.mubr.f32.gmra.mxu0 %v3988
      %v4389 = vpop.f32.mrf.mxu0
      %v4390 = vadd.f32 %v4165, %v4389
      %v4391 = vpop.f32.mrf.mxu0
      %4392 = vmatprep.mubr.f32.mxu0 %v3994
      %4393 = vmatmul.mubr.f32.gmra.mxu0 %v3993
      %v4394 = vpop.f32.mrf.mxu0
      %v4395 = vadd.f32 %v4165, %v4394
      %v4396 = vpop.f32.mrf.mxu0
      %4397 = vmatprep.mubr.f32.mxu0 %v3999
      %4398 = vmatmul.mubr.f32.gmra.mxu0 %v3998
      %v4399 = vpop.f32.mrf.mxu0
      %v4400 = vadd.f32 %v4165, %v4399
      %v4401 = vpop.f32.mrf.mxu0
      %4402 = vmatprep.mubr.f32.mxu0 %v4004
      %4403 = vmatmul.mubr.f32.gmra.mxu0 %v4003
      %v4404 = vpop.f32.mrf.mxu0
      %v4405 = vadd.f32 %v4165, %v4404
      %v4406 = vpop.f32.mrf.mxu0
      %4407 = vmatprep.mubr.f32.mxu0 %v4009
      %4408 = vmatmul.mubr.f32.gmra.mxu0 %v4008
      %v4409 = vpop.f32.mrf.mxu0
      %v4410 = vadd.f32 %v4165, %v4409
      %v4411 = vpop.f32.mrf.mxu0
      %4412 = vmatprep.mubr.f32.mxu0 %v4014
      %4413 = vmatmul.mubr.f32.gmra.mxu0 %v4013
      %v4414 = vpop.f32.mrf.mxu0
      %v4415 = vadd.f32 %v4165, %v4414
      %v4416 = vpop.f32.mrf.mxu0
      %4417 = vmatprep.mubr.f32.mxu0 %v4019
      %4418 = vmatmul.mubr.f32.gmra.mxu0 %v4018
      %v4419 = vpop.f32.mrf.mxu0
      %v4420 = vadd.f32 %v4165, %v4419
      %v4421 = vpop.f32.mrf.mxu0
      %4422 = vmatprep.mubr.f32.mxu0 %v4024
      %4423 = vmatmul.mubr.f32.gmra.mxu0 %v4023
      %v4424 = vpop.f32.mrf.mxu0
      %v4425 = vadd.f32 %v4165, %v4424
      %v4426 = vpop.f32.mrf.mxu0
      %4427 = vmatprep.mubr.f32.mxu0 %v4029
      %4428 = vmatmul.mubr.f32.gmra.mxu0 %v4028
      %v4429 = vpop.f32.mrf.mxu0
      %v4430 = vadd.f32 %v4165, %v4429
      %v4431 = vpop.f32.mrf.mxu0
      %4432 = vmatprep.mubr.f32.mxu0 %v4034
      %4433 = vmatmul.mubr.f32.gmra.mxu0 %v4033
      %v4434 = vpop.f32.mrf.mxu0
      %v4435 = vadd.f32 %v4165, %v4434
      %v4436 = vpop.f32.mrf.mxu0
      %4437 = vmatprep.mubr.f32.mxu0 %v4039
      %4438 = vmatmul.mubr.f32.gmra.mxu0 %v4038
      %v4439 = vpop.f32.mrf.mxu0
      %v4440 = vadd.f32 %v4165, %v4439
      %v4441 = vpop.f32.mrf.mxu0
      %4442 = vmatprep.mubr.f32.mxu0 %v4044
      %4443 = vmatmul.mubr.f32.gmra.mxu0 %v4043
      %v4444 = vpop.f32.mrf.mxu0
      %v4445 = vadd.f32 %v4165, %v4444
      %v4446 = vpop.f32.mrf.mxu0
      %4447 = vmatprep.mubr.f32.mxu0 %v4049
      %4448 = vmatmul.mubr.f32.gmra.mxu0 %v4048
      %v4449 = vpop.f32.mrf.mxu0
      %v4450 = vadd.f32 %v4165, %v4449
      %v4451 = vpop.f32.mrf.mxu0
      %4452 = vmatprep.mubr.f32.mxu0 %v4054
      %4453 = vmatmul.mubr.f32.gmra.mxu0 %v4053
      %v4454 = vpop.f32.mrf.mxu0
      %v4455 = vadd.f32 %v4165, %v4454
      %v4456 = vpop.f32.mrf.mxu0
      %4457 = vmatprep.mubr.f32.mxu0 %v4059
      %4458 = vmatmul.mubr.f32.gmra.mxu0 %v4058
      %v4459 = vpop.f32.mrf.mxu0
      %v4460 = vadd.f32 %v4165, %v4459
      %v4461 = vpop.f32.mrf.mxu0
      %4462 = vmatprep.mubr.f32.mxu0 %v4064
      %4463 = vmatmul.mubr.f32.gmra.mxu0 %v4063
      %v4464 = vpop.f32.mrf.mxu0
      %v4465 = vadd.f32 %v4165, %v4464
      %v4466 = vpop.f32.mrf.mxu0
      %4467 = vmatprep.mubr.f32.mxu0 %v4069
      %4468 = vmatmul.mubr.f32.gmra.mxu0 %v4068
      %v4469 = vpop.f32.mrf.mxu0
      %v4470 = vadd.f32 %v4165, %v4469
      %v4471 = vpop.f32.mrf.mxu0
      %4472 = vmatprep.mubr.f32.mxu0 %v4074
      %4473 = vmatmul.mubr.f32.gmra.mxu0 %v4073
      %v4474 = vpop.f32.mrf.mxu0
      %v4475 = vadd.f32 %v4165, %v4474
      %v4476 = vpop.f32.mrf.mxu0
      %4477 = vmatprep.mubr.f32.mxu0 %v4079
      %4478 = vmatmul.mubr.f32.gmra.mxu0 %v4078
      %v4479 = vpop.f32.mrf.mxu0
      %v4480 = vadd.f32 %v4165, %v4479
      %v4481 = vpop.f32.mrf.mxu0
      %4482 = vmatprep.mubr.f32.mxu0 %v4084
      %4483 = vmatmul.mubr.f32.gmra.mxu0 %v4083
      %v4484 = vpop.f32.mrf.mxu0
      %v4485 = vadd.f32 %v4165, %v4484
      %v4486 = vpop.f32.mrf.mxu0
      %4487 = vdwg.mxu0
      %4488 = vmatprep.subr.mxu0 0.0
      %4489 = vmatpush1.msra.mxu0 %v4135
      %4490 = vmatprep.subr.mxu0 0.0
      %4491 = vmatpush1.msra.mxu0 %v4134
      %4492 = vmatprep.subr.mxu0 0.0
      %4493 = vmatpush1.msra.mxu0 %v4133
      %4494 = vmatprep.subr.mxu0 0.0
      %4495 = vmatpush1.msra.mxu0 %v4132
      %4496 = vmatprep.subr.mxu0 0.0
      %4497 = vmatpush1.msra.mxu0 %v4131
      %4498 = vmatprep.subr.mxu0 0.0
      %4499 = vmatpush1.msra.mxu0 %v4130
      %4500 = vmatprep.subr.mxu0 0.0
      %4501 = vmatpush1.msra.mxu0 %v4129
      %4502 = vmatprep.subr.mxu0 0.0
      %4503 = vmatpush1.msra.mxu0 %v4128
      %4504 = vmatprep.subr.mxu0 0.0
      %4505 = vmatpush1.msra.mxu0 %v4127
      %4506 = vmatprep.subr.mxu0 0.0
      %4507 = vmatpush1.msra.mxu0 %v4126
      %4508 = vmatprep.subr.mxu0 0.0
      %4509 = vmatpush1.msra.mxu0 %v4125
      %4510 = vmatprep.subr.mxu0 0.0
      %4511 = vmatpush1.msra.mxu0 %v4124
      %4512 = vmatprep.subr.mxu0 0.0
      %4513 = vmatpush1.msra.mxu0 %v4123
      %4514 = vmatprep.subr.mxu0 0.0
      %4515 = vmatpush1.msra.mxu0 %v4122
      %4516 = vmatprep.subr.mxu0 0.0
      %4517 = vmatpush1.msra.mxu0 %v4121
      %4518 = vmatprep.subr.mxu0 0.0
      %4519 = vmatpush1.msra.mxu0 %v4120
      %4520 = vmatprep.subr.mxu0 0.0
      %4521 = vmatpush2.msra.mxu0 %v4151
      %4522 = vmatprep.subr.mxu0 0.0
      %4523 = vmatpush2.msra.mxu0 %v4150
      %4524 = vmatprep.subr.mxu0 0.0
      %4525 = vmatpush2.msra.mxu0 %v4149
      %4526 = vmatprep.subr.mxu0 0.0
      %4527 = vmatpush2.msra.mxu0 %v4148
      %4528 = vmatprep.subr.mxu0 0.0
      %4529 = vmatpush2.msra.mxu0 %v4147
      %4530 = vmatprep.subr.mxu0 0.0
      %4531 = vmatpush2.msra.mxu0 %v4146
      %4532 = vmatprep.subr.mxu0 0.0
      %4533 = vmatpush2.msra.mxu0 %v4145
      %4534 = vmatprep.subr.mxu0 0.0
      %4535 = vmatpush2.msra.mxu0 %v4144
      %4536 = vmatprep.subr.mxu0 0.0
      %4537 = vmatpush2.msra.mxu0 %v4143
      %4538 = vmatprep.subr.mxu0 0.0
      %4539 = vmatpush2.msra.mxu0 %v4142
      %4540 = vmatprep.subr.mxu0 0.0
      %4541 = vmatpush2.msra.mxu0 %v4141
      %4542 = vmatprep.subr.mxu0 0.0
      %4543 = vmatpush2.msra.mxu0 %v4140
      %4544 = vmatprep.subr.mxu0 0.0
      %4545 = vmatpush2.msra.mxu0 %v4139
      %4546 = vmatprep.subr.mxu0 0.0
      %4547 = vmatpush2.msra.mxu0 %v4138
      %4548 = vmatprep.subr.mxu0 0.0
      %4549 = vmatpush2.msra.mxu0 %v4137
      %4550 = vmatprep.subr.mxu0 0.0
      %4551 = vmatpush2.msra.mxu0 %v4136
      %4552 = vmatprep.mubr.f32.mxu0 %v3931
      %4553 = vmatmul.mubr.f32.gmra.mxu0 %v3930
      %v4554 = vpop.f32.mrf.mxu0
      %v4555 = vadd.f32 %v4330, %v4554
      %v4556 = vpop.f32.mrf.mxu0
      %4557 = vmatprep.mubr.f32.mxu0 %v3936
      %4558 = vmatmul.mubr.f32.gmra.mxu0 %v3935
      %v4559 = vpop.f32.mrf.mxu0
      %v4560 = vadd.f32 %v4335, %v4559
      %v4561 = vpop.f32.mrf.mxu0
      %4562 = vmatprep.mubr.f32.mxu0 %v3941
      %4563 = vmatmul.mubr.f32.gmra.mxu0 %v3940
      %v4564 = vpop.f32.mrf.mxu0
      %v4565 = vadd.f32 %v4340, %v4564
      %v4566 = vpop.f32.mrf.mxu0
      %4567 = vmatprep.mubr.f32.mxu0 %v3946
      %4568 = vmatmul.mubr.f32.gmra.mxu0 %v3945
      %v4569 = vpop.f32.mrf.mxu0
      %v4570 = vadd.f32 %v4345, %v4569
      %v4571 = vpop.f32.mrf.mxu0
      %4572 = vmatprep.mubr.f32.mxu0 %v3951
      %4573 = vmatmul.mubr.f32.gmra.mxu0 %v3950
      %v4574 = vpop.f32.mrf.mxu0
      %v4575 = vadd.f32 %v4350, %v4574
      %v4576 = vpop.f32.mrf.mxu0
      %4577 = vmatprep.mubr.f32.mxu0 %v3956
      %4578 = vmatmul.mubr.f32.gmra.mxu0 %v3955
      %v4579 = vpop.f32.mrf.mxu0
      %v4580 = vadd.f32 %v4355, %v4579
      %v4581 = vpop.f32.mrf.mxu0
      %4582 = vmatprep.mubr.f32.mxu0 %v3961
      %4583 = vmatmul.mubr.f32.gmra.mxu0 %v3960
      %v4584 = vpop.f32.mrf.mxu0
      %v4585 = vadd.f32 %v4360, %v4584
      %v4586 = vpop.f32.mrf.mxu0
      %4587 = vmatprep.mubr.f32.mxu0 %v3966
      %4588 = vmatmul.mubr.f32.gmra.mxu0 %v3965
      %v4589 = vpop.f32.mrf.mxu0
      %v4590 = vadd.f32 %v4365, %v4589
      %v4591 = vpop.f32.mrf.mxu0
      %4592 = vmatprep.mubr.f32.mxu0 %v3971
      %4593 = vmatmul.mubr.f32.gmra.mxu0 %v3970
      %v4594 = vpop.f32.mrf.mxu0
      %v4595 = vadd.f32 %v4370, %v4594
      %v4596 = vpop.f32.mrf.mxu0
      %4597 = vmatprep.mubr.f32.mxu0 %v3976
      %4598 = vmatmul.mubr.f32.gmra.mxu0 %v3975
      %v4599 = vpop.f32.mrf.mxu0
      %v4600 = vadd.f32 %v4375, %v4599
      %v4601 = vpop.f32.mrf.mxu0
      %4602 = vmatprep.mubr.f32.mxu0 %v3981
      %4603 = vmatmul.mubr.f32.gmra.mxu0 %v3980
      %v4604 = vpop.f32.mrf.mxu0
      %v4605 = vadd.f32 %v4380, %v4604
      %v4606 = vpop.f32.mrf.mxu0
      %4607 = vmatprep.mubr.f32.mxu0 %v3986
      %4608 = vmatmul.mubr.f32.gmra.mxu0 %v3985
      %v4609 = vpop.f32.mrf.mxu0
      %v4610 = vadd.f32 %v4385, %v4609
      %v4611 = vpop.f32.mrf.mxu0
      %4612 = vmatprep.mubr.f32.mxu0 %v3991
      %4613 = vmatmul.mubr.f32.gmra.mxu0 %v3990
      %v4614 = vpop.f32.mrf.mxu0
      %v4615 = vadd.f32 %v4390, %v4614
      %v4616 = vpop.f32.mrf.mxu0
      %4617 = vmatprep.mubr.f32.mxu0 %v3996
      %4618 = vmatmul.mubr.f32.gmra.mxu0 %v3995
      %v4619 = vpop.f32.mrf.mxu0
      %v4620 = vadd.f32 %v4395, %v4619
      %v4621 = vpop.f32.mrf.mxu0
      %4622 = vmatprep.mubr.f32.mxu0 %v4001
      %4623 = vmatmul.mubr.f32.gmra.mxu0 %v4000
      %v4624 = vpop.f32.mrf.mxu0
      %v4625 = vadd.f32 %v4400, %v4624
      %v4626 = vpop.f32.mrf.mxu0
      %4627 = vmatprep.mubr.f32.mxu0 %v4006
      %4628 = vmatmul.mubr.f32.gmra.mxu0 %v4005
      %v4629 = vpop.f32.mrf.mxu0
      %v4630 = vadd.f32 %v4405, %v4629
      %v4631 = vpop.f32.mrf.mxu0
      %4632 = vmatprep.mubr.f32.mxu0 %v4011
      %4633 = vmatmul.mubr.f32.gmra.mxu0 %v4010
      %v4634 = vpop.f32.mrf.mxu0
      %v4635 = vadd.f32 %v4410, %v4634
      %v4636 = vpop.f32.mrf.mxu0
      %4637 = vmatprep.mubr.f32.mxu0 %v4016
      %4638 = vmatmul.mubr.f32.gmra.mxu0 %v4015
      %v4639 = vpop.f32.mrf.mxu0
      %v4640 = vadd.f32 %v4415, %v4639
      %v4641 = vpop.f32.mrf.mxu0
      %4642 = vmatprep.mubr.f32.mxu0 %v4021
      %4643 = vmatmul.mubr.f32.gmra.mxu0 %v4020
      %v4644 = vpop.f32.mrf.mxu0
      %v4645 = vadd.f32 %v4420, %v4644
      %v4646 = vpop.f32.mrf.mxu0
      %4647 = vmatprep.mubr.f32.mxu0 %v4026
      %4648 = vmatmul.mubr.f32.gmra.mxu0 %v4025
      %v4649 = vpop.f32.mrf.mxu0
      %v4650 = vadd.f32 %v4425, %v4649
      %v4651 = vpop.f32.mrf.mxu0
      %4652 = vmatprep.mubr.f32.mxu0 %v4031
      %4653 = vmatmul.mubr.f32.gmra.mxu0 %v4030
      %v4654 = vpop.f32.mrf.mxu0
      %v4655 = vadd.f32 %v4430, %v4654
      %v4656 = vpop.f32.mrf.mxu0
      %4657 = vmatprep.mubr.f32.mxu0 %v4036
      %4658 = vmatmul.mubr.f32.gmra.mxu0 %v4035
      %v4659 = vpop.f32.mrf.mxu0
      %v4660 = vadd.f32 %v4435, %v4659
      %v4661 = vpop.f32.mrf.mxu0
      %4662 = vmatprep.mubr.f32.mxu0 %v4041
      %4663 = vmatmul.mubr.f32.gmra.mxu0 %v4040
      %v4664 = vpop.f32.mrf.mxu0
      %v4665 = vadd.f32 %v4440, %v4664
      %v4666 = vpop.f32.mrf.mxu0
      %4667 = vmatprep.mubr.f32.mxu0 %v4046
      %4668 = vmatmul.mubr.f32.gmra.mxu0 %v4045
      %v4669 = vpop.f32.mrf.mxu0
      %v4670 = vadd.f32 %v4445, %v4669
      %v4671 = vpop.f32.mrf.mxu0
      %4672 = vmatprep.mubr.f32.mxu0 %v4051
      %4673 = vmatmul.mubr.f32.gmra.mxu0 %v4050
      %v4674 = vpop.f32.mrf.mxu0
      %v4675 = vadd.f32 %v4450, %v4674
      %v4676 = vpop.f32.mrf.mxu0
      %4677 = vmatprep.mubr.f32.mxu0 %v4056
      %4678 = vmatmul.mubr.f32.gmra.mxu0 %v4055
      %v4679 = vpop.f32.mrf.mxu0
      %v4680 = vadd.f32 %v4455, %v4679
      %v4681 = vpop.f32.mrf.mxu0
      %4682 = vmatprep.mubr.f32.mxu0 %v4061
      %4683 = vmatmul.mubr.f32.gmra.mxu0 %v4060
      %v4684 = vpop.f32.mrf.mxu0
      %v4685 = vadd.f32 %v4460, %v4684
      %v4686 = vpop.f32.mrf.mxu0
      %4687 = vmatprep.mubr.f32.mxu0 %v4066
      %4688 = vmatmul.mubr.f32.gmra.mxu0 %v4065
      %v4689 = vpop.f32.mrf.mxu0
      %v4690 = vadd.f32 %v4465, %v4689
      %v4691 = vpop.f32.mrf.mxu0
      %4692 = vmatprep.mubr.f32.mxu0 %v4071
      %4693 = vmatmul.mubr.f32.gmra.mxu0 %v4070
      %v4694 = vpop.f32.mrf.mxu0
      %v4695 = vadd.f32 %v4470, %v4694
      %v4696 = vpop.f32.mrf.mxu0
      %4697 = vmatprep.mubr.f32.mxu0 %v4076
      %4698 = vmatmul.mubr.f32.gmra.mxu0 %v4075
      %v4699 = vpop.f32.mrf.mxu0
      %v4700 = vadd.f32 %v4475, %v4699
      %v4701 = vpop.f32.mrf.mxu0
      %4702 = vmatprep.mubr.f32.mxu0 %v4081
      %4703 = vmatmul.mubr.f32.gmra.mxu0 %v4080
      %v4704 = vpop.f32.mrf.mxu0
      %v4705 = vadd.f32 %v4480, %v4704
      %v4706 = vpop.f32.mrf.mxu0
      %4707 = vmatprep.mubr.f32.mxu0 %v4086
      %4708 = vmatmul.mubr.f32.gmra.mxu0 %v4085
      %v4709 = vpop.f32.mrf.mxu0
      %v4710 = vadd.f32 %v4485, %v4709
      %v4711 = vpop.f32.mrf.mxu0
      %4712 = vdwg.mxu0
      %4713 = vmatprep.subr.mxu0 0.0
      %4714 = vmatpush1.msra.mxu0 0.0
      %4715 = vmatprep.subr.mxu0 0.0
      %4716 = vmatpush1.msra.mxu0 0.0
      %4717 = vmatprep.subr.mxu0 0.0
      %4718 = vmatpush1.msra.mxu0 0.0
      %4719 = vmatprep.subr.mxu0 0.0
      %4720 = vmatpush1.msra.mxu0 0.0
      %4721 = vmatprep.subr.mxu0 0.0
      %4722 = vmatpush1.msra.mxu0 0.0
      %4723 = vmatprep.subr.mxu0 0.0
      %4724 = vmatpush1.msra.mxu0 0.0
      %4725 = vmatprep.subr.mxu0 0.0
      %4726 = vmatpush1.msra.mxu0 0.0
      %4727 = vmatprep.subr.mxu0 0.0
      %4728 = vmatpush1.msra.mxu0 0.0
      %4729 = vmatprep.subr.mxu0 0.0
      %4730 = vmatpush1.msra.mxu0 %v4159
      %4731 = vmatprep.subr.mxu0 0.0
      %4732 = vmatpush1.msra.mxu0 %v4158
      %4733 = vmatprep.subr.mxu0 0.0
      %4734 = vmatpush1.msra.mxu0 %v4157
      %4735 = vmatprep.subr.mxu0 0.0
      %4736 = vmatpush1.msra.mxu0 %v4156
      %4737 = vmatprep.subr.mxu0 0.0
      %4738 = vmatpush1.msra.mxu0 %v4155
      %4739 = vmatprep.subr.mxu0 0.0
      %4740 = vmatpush1.msra.mxu0 %v4154
      %4741 = vmatprep.subr.mxu0 0.0
      %4742 = vmatpush1.msra.mxu0 %v4153
      %4743 = vmatprep.subr.mxu0 0.0
      %4744 = vmatpush1.msra.mxu0 %v4152
      %4745 = vmatprep.subr.mxu0 0.0
      %4746 = vmatpush2.msra.mxu0 0.0
      %4747 = vmatprep.subr.mxu0 0.0
      %4748 = vmatpush2.msra.mxu0 0.0
      %4749 = vmatprep.subr.mxu0 0.0
      %4750 = vmatpush2.msra.mxu0 0.0
      %4751 = vmatprep.subr.mxu0 0.0
      %4752 = vmatpush2.msra.mxu0 0.0
      %4753 = vmatprep.subr.mxu0 0.0
      %4754 = vmatpush2.msra.mxu0 0.0
      %4755 = vmatprep.subr.mxu0 0.0
      %4756 = vmatpush2.msra.mxu0 0.0
      %4757 = vmatprep.subr.mxu0 0.0
      %4758 = vmatpush2.msra.mxu0 0.0
      %4759 = vmatprep.subr.mxu0 0.0
      %4760 = vmatpush2.msra.mxu0 0.0
      %4761 = vmatprep.subr.mxu0 0.0
      %4762 = vmatpush2.msra.mxu0 0.0
      %4763 = vmatprep.subr.mxu0 0.0
      %4764 = vmatpush2.msra.mxu0 0.0
      %4765 = vmatprep.subr.mxu0 0.0
      %4766 = vmatpush2.msra.mxu0 0.0
      %4767 = vmatprep.subr.mxu0 0.0
      %4768 = vmatpush2.msra.mxu0 0.0
      %4769 = vmatprep.subr.mxu0 0.0
      %4770 = vmatpush2.msra.mxu0 0.0
      %4771 = vmatprep.subr.mxu0 0.0
      %4772 = vmatpush2.msra.mxu0 0.0
      %4773 = vmatprep.subr.mxu0 0.0
      %4774 = vmatpush2.msra.mxu0 0.0
      %4775 = vmatprep.subr.mxu0 0.0
      %4776 = vmatpush2.msra.mxu0 0.0
      %4777 = vmatprep.mubr.f32.mxu0 0.0
      %4778 = vmatmul.mubr.f32.gmra.mxu0 %v4168
      %v4779 = vpop.f32.mrf.mxu0
      %v4780 = vadd.f32 %v4555, %v4779
      %v4781 = vpop.f32.mrf.mxu0
      %4782 = vmatprep.mubr.f32.mxu0 0.0
      %4783 = vmatmul.mubr.f32.gmra.mxu0 %v4171
      %v4784 = vpop.f32.mrf.mxu0
      %v4785 = vadd.f32 %v4560, %v4784
      %v4786 = vpop.f32.mrf.mxu0
      %4787 = vmatprep.mubr.f32.mxu0 0.0
      %4788 = vmatmul.mubr.f32.gmra.mxu0 %v4174
      %v4789 = vpop.f32.mrf.mxu0
      %v4790 = vadd.f32 %v4565, %v4789
      %v4791 = vpop.f32.mrf.mxu0
      %4792 = vmatprep.mubr.f32.mxu0 0.0
      %4793 = vmatmul.mubr.f32.gmra.mxu0 %v4177
      %v4794 = vpop.f32.mrf.mxu0
      %v4795 = vadd.f32 %v4570, %v4794
      %v4796 = vpop.f32.mrf.mxu0
      %4797 = vmatprep.mubr.f32.mxu0 0.0
      %4798 = vmatmul.mubr.f32.gmra.mxu0 %v4180
      %v4799 = vpop.f32.mrf.mxu0
      %v4800 = vadd.f32 %v4575, %v4799
      %v4801 = vpop.f32.mrf.mxu0
      %4802 = vmatprep.mubr.f32.mxu0 0.0
      %4803 = vmatmul.mubr.f32.gmra.mxu0 %v4183
      %v4804 = vpop.f32.mrf.mxu0
      %v4805 = vadd.f32 %v4580, %v4804
      %v4806 = vpop.f32.mrf.mxu0
      %4807 = vmatprep.mubr.f32.mxu0 0.0
      %4808 = vmatmul.mubr.f32.gmra.mxu0 %v4186
      %v4809 = vpop.f32.mrf.mxu0
      %v4810 = vadd.f32 %v4585, %v4809
      %v4811 = vpop.f32.mrf.mxu0
      %4812 = vmatprep.mubr.f32.mxu0 0.0
      %4813 = vmatmul.mubr.f32.gmra.mxu0 %v4189
      %v4814 = vpop.f32.mrf.mxu0
      %v4815 = vadd.f32 %v4590, %v4814
      %v4816 = vpop.f32.mrf.mxu0
      %4817 = vmatprep.mubr.f32.mxu0 0.0
      %4818 = vmatmul.mubr.f32.gmra.mxu0 %v4192
      %v4819 = vpop.f32.mrf.mxu0
      %v4820 = vadd.f32 %v4595, %v4819
      %v4821 = vpop.f32.mrf.mxu0
      %4822 = vmatprep.mubr.f32.mxu0 0.0
      %4823 = vmatmul.mubr.f32.gmra.mxu0 %v4195
      %v4824 = vpop.f32.mrf.mxu0
      %v4825 = vadd.f32 %v4600, %v4824
      %v4826 = vpop.f32.mrf.mxu0
      %4827 = vmatprep.mubr.f32.mxu0 0.0
      %4828 = vmatmul.mubr.f32.gmra.mxu0 %v4198
      %v4829 = vpop.f32.mrf.mxu0
      %v4830 = vadd.f32 %v4605, %v4829
      %v4831 = vpop.f32.mrf.mxu0
      %4832 = vmatprep.mubr.f32.mxu0 0.0
      %4833 = vmatmul.mubr.f32.gmra.mxu0 %v4201
      %v4834 = vpop.f32.mrf.mxu0
      %v4835 = vadd.f32 %v4610, %v4834
      %v4836 = vpop.f32.mrf.mxu0
      %4837 = vmatprep.mubr.f32.mxu0 0.0
      %4838 = vmatmul.mubr.f32.gmra.mxu0 %v4204
      %v4839 = vpop.f32.mrf.mxu0
      %v4840 = vadd.f32 %v4615, %v4839
      %v4841 = vpop.f32.mrf.mxu0
      %4842 = vmatprep.mubr.f32.mxu0 0.0
      %4843 = vmatmul.mubr.f32.gmra.mxu0 %v4207
      %v4844 = vpop.f32.mrf.mxu0
      %v4845 = vadd.f32 %v4620, %v4844
      %v4846 = vpop.f32.mrf.mxu0
      %4847 = vmatprep.mubr.f32.mxu0 0.0
      %4848 = vmatmul.mubr.f32.gmra.mxu0 %v4210
      %v4849 = vpop.f32.mrf.mxu0
      %v4850 = vadd.f32 %v4625, %v4849
      %v4851 = vpop.f32.mrf.mxu0
      %4852 = vmatprep.mubr.f32.mxu0 0.0
      %4853 = vmatmul.mubr.f32.gmra.mxu0 %v4213
      %v4854 = vpop.f32.mrf.mxu0
      %v4855 = vadd.f32 %v4630, %v4854
      %v4856 = vpop.f32.mrf.mxu0
      %4857 = vmatprep.mubr.f32.mxu0 0.0
      %4858 = vmatmul.mubr.f32.gmra.mxu0 %v4216
      %v4859 = vpop.f32.mrf.mxu0
      %v4860 = vadd.f32 %v4635, %v4859
      %v4861 = vpop.f32.mrf.mxu0
      %4862 = vmatprep.mubr.f32.mxu0 0.0
      %4863 = vmatmul.mubr.f32.gmra.mxu0 %v4219
      %v4864 = vpop.f32.mrf.mxu0
      %v4865 = vadd.f32 %v4640, %v4864
      %v4866 = vpop.f32.mrf.mxu0
      %4867 = vmatprep.mubr.f32.mxu0 0.0
      %4868 = vmatmul.mubr.f32.gmra.mxu0 %v4222
      %v4869 = vpop.f32.mrf.mxu0
      %v4870 = vadd.f32 %v4645, %v4869
      %v4871 = vpop.f32.mrf.mxu0
      %4872 = vmatprep.mubr.f32.mxu0 0.0
      %4873 = vmatmul.mubr.f32.gmra.mxu0 %v4225
      %v4874 = vpop.f32.mrf.mxu0
      %v4875 = vadd.f32 %v4650, %v4874
      %v4876 = vpop.f32.mrf.mxu0
      %4877 = vmatprep.mubr.f32.mxu0 0.0
      %4878 = vmatmul.mubr.f32.gmra.mxu0 %v4228
      %v4879 = vpop.f32.mrf.mxu0
      %v4880 = vadd.f32 %v4655, %v4879
      %v4881 = vpop.f32.mrf.mxu0
      %4882 = vmatprep.mubr.f32.mxu0 0.0
      %4883 = vmatmul.mubr.f32.gmra.mxu0 %v4231
      %v4884 = vpop.f32.mrf.mxu0
      %v4885 = vadd.f32 %v4660, %v4884
      %v4886 = vpop.f32.mrf.mxu0
      %4887 = vmatprep.mubr.f32.mxu0 0.0
      %4888 = vmatmul.mubr.f32.gmra.mxu0 %v4234
      %v4889 = vpop.f32.mrf.mxu0
      %v4890 = vadd.f32 %v4665, %v4889
      %v4891 = vpop.f32.mrf.mxu0
      %4892 = vmatprep.mubr.f32.mxu0 0.0
      %4893 = vmatmul.mubr.f32.gmra.mxu0 %v4237
      %v4894 = vpop.f32.mrf.mxu0
      %v4895 = vadd.f32 %v4670, %v4894
      %v4896 = vpop.f32.mrf.mxu0
      %4897 = vmatprep.mubr.f32.mxu0 0.0
      %4898 = vmatmul.mubr.f32.gmra.mxu0 %v4240
      %v4899 = vpop.f32.mrf.mxu0
      %v4900 = vadd.f32 %v4675, %v4899
      %v4901 = vpop.f32.mrf.mxu0
      %4902 = vmatprep.mubr.f32.mxu0 0.0
      %4903 = vmatmul.mubr.f32.gmra.mxu0 %v4243
      %v4904 = vpop.f32.mrf.mxu0
      %v4905 = vadd.f32 %v4680, %v4904
      %v4906 = vpop.f32.mrf.mxu0
      %4907 = vmatprep.mubr.f32.mxu0 0.0
      %4908 = vmatmul.mubr.f32.gmra.mxu0 %v4246
      %v4909 = vpop.f32.mrf.mxu0
      %v4910 = vadd.f32 %v4685, %v4909
      %v4911 = vpop.f32.mrf.mxu0
      %4912 = vmatprep.mubr.f32.mxu0 0.0
      %4913 = vmatmul.mubr.f32.gmra.mxu0 %v4249
      %v4914 = vpop.f32.mrf.mxu0
      %v4915 = vadd.f32 %v4690, %v4914
      %v4916 = vpop.f32.mrf.mxu0
      %4917 = vmatprep.mubr.f32.mxu0 0.0
      %4918 = vmatmul.mubr.f32.gmra.mxu0 %v4252
      %v4919 = vpop.f32.mrf.mxu0
      %v4920 = vadd.f32 %v4695, %v4919
      %v4921 = vpop.f32.mrf.mxu0
      %4922 = vmatprep.mubr.f32.mxu0 0.0
      %4923 = vmatmul.mubr.f32.gmra.mxu0 %v4255
      %v4924 = vpop.f32.mrf.mxu0
      %v4925 = vadd.f32 %v4700, %v4924
      %v4926 = vpop.f32.mrf.mxu0
      %4927 = vmatprep.mubr.f32.mxu0 0.0
      %4928 = vmatmul.mubr.f32.gmra.mxu0 %v4258
      %v4929 = vpop.f32.mrf.mxu0
      %v4930 = vadd.f32 %v4705, %v4929
      %v4931 = vpop.f32.mrf.mxu0
      %4932 = vmatprep.mubr.f32.mxu0 0.0
      %4933 = vmatmul.mubr.f32.gmra.mxu0 %v4261
      %v4934 = vpop.f32.mrf.mxu0
      %v4935 = vadd.f32 %v4710, %v4934
      %v4936 = vpop.f32.mrf.mxu0
      %4937 = vdwg.mxu0
      %4938 = vst.msk [vmem:[%s707 + $0x1] sm:$0xff] %vm335, %v4780
      %4939 = vst.msk [vmem:[%s707 + $0x9] sm:$0xff] %vm335, %v4785
      %4940 = vst.msk [vmem:[%s707 + $0x19] sm:$0xff] %vm335, %v4790
      %4941 = vst.msk [vmem:[%s707 + $0x21] sm:$0xff] %vm335, %v4795
      %4942 = vst.msk [vmem:[%s707 + $0x31] sm:$0xff] %vm335, %v4800
      %4943 = vst.msk [vmem:[%s707 + $0x39] sm:$0xff] %vm335, %v4805
      %4944 = vst.msk [vmem:[%s707 + $0x49] sm:$0xff] %vm335, %v4810
      %4945 = vst.msk [vmem:[%s707 + $0x51] sm:$0xff] %vm335, %v4815
      %4946 = vst.msk [vmem:[%s707 + $0x61] sm:$0xff] %vm335, %v4820
      %4947 = vst.msk [vmem:[%s707 + $0x69] sm:$0xff] %vm335, %v4825
      %4948 = vst.msk [vmem:[%s707 + $0x79] sm:$0xff] %vm335, %v4830
      %4949 = vst.msk [vmem:[%s707 + $0x81] sm:$0xff] %vm335, %v4835
      %4950 = vst.msk [vmem:[%s707 + $0x91] sm:$0xff] %vm335, %v4840
      %4951 = vst.msk [vmem:[%s707 + $0x99] sm:$0xff] %vm335, %v4845
      %4952 = vst.msk [vmem:[%s707 + $0xa9] sm:$0xff] %vm335, %v4850
      %4953 = vst.msk [vmem:[%s707 + $0xb1] sm:$0xff] %vm335, %v4855
      %4954 = vst.msk [vmem:[%s707 + $0xc1] sm:$0xff] %vm335, %v4860
      %4955 = vst.msk [vmem:[%s707 + $0xc9] sm:$0xff] %vm335, %v4865
      %4956 = vst.msk [vmem:[%s707 + $0xd9] sm:$0xff] %vm335, %v4870
      %4957 = vst.msk [vmem:[%s707 + $0xe1] sm:$0xff] %vm335, %v4875
      %4958 = vst.msk [vmem:[%s707 + $0xf1] sm:$0xff] %vm335, %v4880
      %4959 = vst.msk [vmem:[%s707 + $0xf9] sm:$0xff] %vm335, %v4885
      %4960 = vst.msk [vmem:[%s707 + $0x109] sm:$0xff] %vm335, %v4890
      %4961 = vst.msk [vmem:[%s707 + $0x111] sm:$0xff] %vm335, %v4895
      %4962 = vst.msk [vmem:[%s707 + $0x121] sm:$0xff] %vm335, %v4900
      %4963 = vst.msk [vmem:[%s707 + $0x129] sm:$0xff] %vm335, %v4905
      %4964 = vst.msk [vmem:[%s707 + $0x139] sm:$0xff] %vm335, %v4910
      %4965 = vst.msk [vmem:[%s707 + $0x141] sm:$0xff] %vm335, %v4915
      %4966 = vst.msk [vmem:[%s707 + $0x151] sm:$0xff] %vm335, %v4920
      %4967 = vst.msk [vmem:[%s707 + $0x159] sm:$0xff] %vm335, %v4925
      %4968 = vst.msk [vmem:[%s707 + $0x169] sm:$0xff] %vm335, %v4930
      %4969 = vst.msk [vmem:[%s707 + $0x171] sm:$0xff] %vm335, %v4935
      %v4970 = vld [vmem:[#allocation2] sm:$0xff]
      %v4971 = vld [vmem:[#allocation2 + $0x8] sm:$0xff]
      %v4972 = vld [vmem:[#allocation2 + $0x18] sm:$0xff]
      %v4973 = vld [vmem:[#allocation2 + $0x20] sm:$0xff]
      %v4974 = vld [vmem:[#allocation2 + $0x30] sm:$0xff]
      %v4975 = vld [vmem:[#allocation2 + $0x38] sm:$0xff]
      %v4976 = vld [vmem:[#allocation2 + $0x48] sm:$0xff]
      %v4977 = vld [vmem:[#allocation2 + $0x50] sm:$0xff]
      %v4978 = vld [vmem:[#allocation2 + $0x60] sm:$0xff]
      %v4979 = vld [vmem:[#allocation2 + $0x68] sm:$0xff]
      %v4980 = vld [vmem:[#allocation2 + $0x78] sm:$0xff]
      %v4981 = vld [vmem:[#allocation2 + $0x80] sm:$0xff]
      %v4982 = vld [vmem:[#allocation2 + $0x90] sm:$0xff]
      %v4983 = vld [vmem:[#allocation2 + $0x98] sm:$0xff]
      %v4984 = vld [vmem:[#allocation2 + $0xa8] sm:$0xff]
      %v4985 = vld [vmem:[#allocation2 + $0xb0] sm:$0xff]
      %v4986 = vld [vmem:[#allocation2 + $0xc0] sm:$0xff]
      %v4987 = vld [vmem:[#allocation2 + $0xc8] sm:$0xff]
      %v4988 = vld [vmem:[#allocation2 + $0xd8] sm:$0xff]
      %v4989 = vld [vmem:[#allocation2 + $0xe0] sm:$0xff]
      %v4990 = vld [vmem:[#allocation2 + $0xf0] sm:$0xff]
      %v4991 = vld [vmem:[#allocation2 + $0xf8] sm:$0xff]
      %v4992 = vld [vmem:[#allocation2 + $0x108] sm:$0xff]
      %v4993 = vld [vmem:[#allocation2 + $0x110] sm:$0xff]
      %v4994 = vld [vmem:[#allocation2 + $0x120] sm:$0xff]
      %v4995 = vld [vmem:[#allocation2 + $0x128] sm:$0xff]
      %v4996 = vld [vmem:[#allocation2 + $0x138] sm:$0xff]
      %v4997 = vld [vmem:[#allocation2 + $0x140] sm:$0xff]
      %v4998 = vld [vmem:[#allocation2 + $0x150] sm:$0xff]
      %v4999 = vld [vmem:[#allocation2 + $0x158] sm:$0xff]
      %v5000 = vld [vmem:[#allocation2 + $0x168] sm:$0xff]
      %v5001 = vld [vmem:[#allocation2 + $0x170] sm:$0xff]
      %5002 = vst.msk [vmem:[#allocation4] sm:$0xff] %vm335, %v4970
      %5003 = vst.msk [vmem:[#allocation4 + $0x18] sm:$0xff] %vm335, %v4971
      %5004 = vst.msk [vmem:[#allocation4 + $0x30] sm:$0xff] %vm335, %v4972
      %5005 = vst.msk [vmem:[#allocation4 + $0x48] sm:$0xff] %vm335, %v4973
      %5006 = vst.msk [vmem:[#allocation4 + $0x60] sm:$0xff] %vm335, %v4974
      %5007 = vst.msk [vmem:[#allocation4 + $0x78] sm:$0xff] %vm335, %v4975
      %5008 = vst.msk [vmem:[#allocation4 + $0x90] sm:$0xff] %vm335, %v4976
      %5009 = vst.msk [vmem:[#allocation4 + $0xa8] sm:$0xff] %vm335, %v4977
      %5010 = vst.msk [vmem:[#allocation4 + $0xc0] sm:$0xff] %vm335, %v4978
      %5011 = vst.msk [vmem:[#allocation4 + $0xd8] sm:$0xff] %vm335, %v4979
      %5012 = vst.msk [vmem:[#allocation4 + $0xf0] sm:$0xff] %vm335, %v4980
      %5013 = vst.msk [vmem:[#allocation4 + $0x108] sm:$0xff] %vm335, %v4981
      %5014 = vst.msk [vmem:[#allocation4 + $0x120] sm:$0xff] %vm335, %v4982
      %5015 = vst.msk [vmem:[#allocation4 + $0x138] sm:$0xff] %vm335, %v4983
      %5016 = vst.msk [vmem:[#allocation4 + $0x150] sm:$0xff] %vm335, %v4984
      %5017 = vst.msk [vmem:[#allocation4 + $0x168] sm:$0xff] %vm335, %v4985
      %5018 = vst.msk [vmem:[#allocation4 + $0x180] sm:$0xff] %vm335, %v4986
      %5019 = vst.msk [vmem:[#allocation4 + $0x198] sm:$0xff] %vm335, %v4987
      %5020 = vst.msk [vmem:[#allocation4 + $0x1b0] sm:$0xff] %vm335, %v4988
      %5021 = vst.msk [vmem:[#allocation4 + $0x1c8] sm:$0xff] %vm335, %v4989
      %5022 = vst.msk [vmem:[#allocation4 + $0x1e0] sm:$0xff] %vm335, %v4990
      %5023 = vst.msk [vmem:[#allocation4 + $0x1f8] sm:$0xff] %vm335, %v4991
      %5024 = vst.msk [vmem:[#allocation4 + $0x210] sm:$0xff] %vm335, %v4992
      %5025 = vst.msk [vmem:[#allocation4 + $0x228] sm:$0xff] %vm335, %v4993
      %5026 = vst.msk [vmem:[#allocation4 + $0x240] sm:$0xff] %vm335, %v4994
      %5027 = vst.msk [vmem:[#allocation4 + $0x258] sm:$0xff] %vm335, %v4995
      %5028 = vst.msk [vmem:[#allocation4 + $0x270] sm:$0xff] %vm335, %v4996
      %5029 = vst.msk [vmem:[#allocation4 + $0x288] sm:$0xff] %vm335, %v4997
      %5030 = vst.msk [vmem:[#allocation4 + $0x2a0] sm:$0xff] %vm335, %v4998
      %5031 = vst.msk [vmem:[#allocation4 + $0x2b8] sm:$0xff] %vm335, %v4999
      %5032 = vst.msk [vmem:[#allocation4 + $0x2d0] sm:$0xff] %vm335, %v5000
      %5033 = vst.msk [vmem:[#allocation4 + $0x2e8] sm:$0xff] %vm335, %v5001
      %v5034 = vld [vmem:[#allocation2 + $0x1] sm:$0xff]
      %v5035 = vld [vmem:[#allocation2 + $0x9] sm:$0xff]
      %v5036 = vld [vmem:[#allocation2 + $0x19] sm:$0xff]
      %v5037 = vld [vmem:[#allocation2 + $0x21] sm:$0xff]
      %v5038 = vld [vmem:[#allocation2 + $0x31] sm:$0xff]
      %v5039 = vld [vmem:[#allocation2 + $0x39] sm:$0xff]
      %v5040 = vld [vmem:[#allocation2 + $0x49] sm:$0xff]
      %v5041 = vld [vmem:[#allocation2 + $0x51] sm:$0xff]
      %v5042 = vld [vmem:[#allocation2 + $0x61] sm:$0xff]
      %v5043 = vld [vmem:[#allocation2 + $0x69] sm:$0xff]
      %v5044 = vld [vmem:[#allocation2 + $0x79] sm:$0xff]
      %v5045 = vld [vmem:[#allocation2 + $0x81] sm:$0xff]
      %v5046 = vld [vmem:[#allocation2 + $0x91] sm:$0xff]
      %v5047 = vld [vmem:[#allocation2 + $0x99] sm:$0xff]
      %v5048 = vld [vmem:[#allocation2 + $0xa9] sm:$0xff]
      %v5049 = vld [vmem:[#allocation2 + $0xb1] sm:$0xff]
      %v5050 = vld [vmem:[#allocation2 + $0xc1] sm:$0xff]
      %v5051 = vld [vmem:[#allocation2 + $0xc9] sm:$0xff]
      %v5052 = vld [vmem:[#allocation2 + $0xd9] sm:$0xff]
      %v5053 = vld [vmem:[#allocation2 + $0xe1] sm:$0xff]
      %v5054 = vld [vmem:[#allocation2 + $0xf1] sm:$0xff]
      %v5055 = vld [vmem:[#allocation2 + $0xf9] sm:$0xff]
      %v5056 = vld [vmem:[#allocation2 + $0x109] sm:$0xff]
      %v5057 = vld [vmem:[#allocation2 + $0x111] sm:$0xff]
      %v5058 = vld [vmem:[#allocation2 + $0x121] sm:$0xff]
      %v5059 = vld [vmem:[#allocation2 + $0x129] sm:$0xff]
      %v5060 = vld [vmem:[#allocation2 + $0x139] sm:$0xff]
      %v5061 = vld [vmem:[#allocation2 + $0x141] sm:$0xff]
      %v5062 = vld [vmem:[#allocation2 + $0x151] sm:$0xff]
      %v5063 = vld [vmem:[#allocation2 + $0x159] sm:$0xff]
      %v5064 = vld [vmem:[#allocation2 + $0x169] sm:$0xff]
      %v5065 = vld [vmem:[#allocation2 + $0x171] sm:$0xff]
      %5098 = vrot.lane.b32.xlu0 %v5034, 32
      %v5099 = vpop.permute.xlu0 %5098
      %5100 = vrot.lane.b32.xlu0 %v5035, 32
      %v5101 = vpop.permute.xlu0 %5100
      %5102 = vrot.lane.b32.xlu0 %v5036, 32
      %v5103 = vpop.permute.xlu0 %5102
      %5104 = vrot.lane.b32.xlu0 %v5037, 32
      %v5105 = vpop.permute.xlu0 %5104
      %5106 = vrot.lane.b32.xlu0 %v5038, 32
      %v5107 = vpop.permute.xlu0 %5106
      %5108 = vrot.lane.b32.xlu0 %v5039, 32
      %v5109 = vpop.permute.xlu0 %5108
      %5110 = vrot.lane.b32.xlu0 %v5040, 32
      %v5111 = vpop.permute.xlu0 %5110
      %5112 = vrot.lane.b32.xlu0 %v5041, 32
      %v5113 = vpop.permute.xlu0 %5112
      %5114 = vrot.lane.b32.xlu0 %v5042, 32
      %v5115 = vpop.permute.xlu0 %5114
      %5116 = vrot.lane.b32.xlu0 %v5043, 32
      %v5117 = vpop.permute.xlu0 %5116
      %5118 = vrot.lane.b32.xlu0 %v5044, 32
      %v5119 = vpop.permute.xlu0 %5118
      %5120 = vrot.lane.b32.xlu0 %v5045, 32
      %v5121 = vpop.permute.xlu0 %5120
      %5122 = vrot.lane.b32.xlu0 %v5046, 32
      %v5123 = vpop.permute.xlu0 %5122
      %5124 = vrot.lane.b32.xlu0 %v5047, 32
      %v5125 = vpop.permute.xlu0 %5124
      %5126 = vrot.lane.b32.xlu0 %v5048, 32
      %v5127 = vpop.permute.xlu0 %5126
      %5128 = vrot.lane.b32.xlu0 %v5049, 32
      %v5129 = vpop.permute.xlu0 %5128
      %5130 = vrot.lane.b32.xlu0 %v5050, 32
      %v5131 = vpop.permute.xlu0 %5130
      %5132 = vrot.lane.b32.xlu0 %v5051, 32
      %v5133 = vpop.permute.xlu0 %5132
      %5134 = vrot.lane.b32.xlu0 %v5052, 32
      %v5135 = vpop.permute.xlu0 %5134
      %5136 = vrot.lane.b32.xlu0 %v5053, 32
      %v5137 = vpop.permute.xlu0 %5136
      %5138 = vrot.lane.b32.xlu0 %v5054, 32
      %v5139 = vpop.permute.xlu0 %5138
      %5140 = vrot.lane.b32.xlu0 %v5055, 32
      %v5141 = vpop.permute.xlu0 %5140
      %5142 = vrot.lane.b32.xlu0 %v5056, 32
      %v5143 = vpop.permute.xlu0 %5142
      %5144 = vrot.lane.b32.xlu0 %v5057, 32
      %v5145 = vpop.permute.xlu0 %5144
      %5146 = vrot.lane.b32.xlu0 %v5058, 32
      %v5147 = vpop.permute.xlu0 %5146
      %5148 = vrot.lane.b32.xlu0 %v5059, 32
      %v5149 = vpop.permute.xlu0 %5148
      %5150 = vrot.lane.b32.xlu0 %v5060, 32
      %v5151 = vpop.permute.xlu0 %5150
      %5152 = vrot.lane.b32.xlu0 %v5061, 32
      %v5153 = vpop.permute.xlu0 %5152
      %5154 = vrot.lane.b32.xlu0 %v5062, 32
      %v5155 = vpop.permute.xlu0 %5154
      %5156 = vrot.lane.b32.xlu0 %v5063, 32
      %v5157 = vpop.permute.xlu0 %5156
      %5158 = vrot.lane.b32.xlu0 %v5064, 32
      %v5159 = vpop.permute.xlu0 %5158
      %5160 = vrot.lane.b32.xlu0 %v5065, 32
      %v5161 = vpop.permute.xlu0 %5160
      %5194 = vst.msk [vmem:[#allocation4] sm:$0xff] %vm964, %v5099
      %5195 = vst.msk [vmem:[#allocation4 + $0x18] sm:$0xff] %vm964, %v5101
      %5196 = vst.msk [vmem:[#allocation4 + $0x30] sm:$0xff] %vm964, %v5103
      %5197 = vst.msk [vmem:[#allocation4 + $0x48] sm:$0xff] %vm964, %v5105
      %5198 = vst.msk [vmem:[#allocation4 + $0x60] sm:$0xff] %vm964, %v5107
      %5199 = vst.msk [vmem:[#allocation4 + $0x78] sm:$0xff] %vm964, %v5109
      %5200 = vst.msk [vmem:[#allocation4 + $0x90] sm:$0xff] %vm964, %v5111
      %5201 = vst.msk [vmem:[#allocation4 + $0xa8] sm:$0xff] %vm964, %v5113
      %5202 = vst.msk [vmem:[#allocation4 + $0xc0] sm:$0xff] %vm964, %v5115
      %5203 = vst.msk [vmem:[#allocation4 + $0xd8] sm:$0xff] %vm964, %v5117
      %5204 = vst.msk [vmem:[#allocation4 + $0xf0] sm:$0xff] %vm964, %v5119
      %5205 = vst.msk [vmem:[#allocation4 + $0x108] sm:$0xff] %vm964, %v5121
      %5206 = vst.msk [vmem:[#allocation4 + $0x120] sm:$0xff] %vm964, %v5123
      %5207 = vst.msk [vmem:[#allocation4 + $0x138] sm:$0xff] %vm964, %v5125
      %5208 = vst.msk [vmem:[#allocation4 + $0x150] sm:$0xff] %vm964, %v5127
      %5209 = vst.msk [vmem:[#allocation4 + $0x168] sm:$0xff] %vm964, %v5129
      %5210 = vst.msk [vmem:[#allocation4 + $0x180] sm:$0xff] %vm964, %v5131
      %5211 = vst.msk [vmem:[#allocation4 + $0x198] sm:$0xff] %vm964, %v5133
      %5212 = vst.msk [vmem:[#allocation4 + $0x1b0] sm:$0xff] %vm964, %v5135
      %5213 = vst.msk [vmem:[#allocation4 + $0x1c8] sm:$0xff] %vm964, %v5137
      %5214 = vst.msk [vmem:[#allocation4 + $0x1e0] sm:$0xff] %vm964, %v5139
      %5215 = vst.msk [vmem:[#allocation4 + $0x1f8] sm:$0xff] %vm964, %v5141
      %5216 = vst.msk [vmem:[#allocation4 + $0x210] sm:$0xff] %vm964, %v5143
      %5217 = vst.msk [vmem:[#allocation4 + $0x228] sm:$0xff] %vm964, %v5145
      %5218 = vst.msk [vmem:[#allocation4 + $0x240] sm:$0xff] %vm964, %v5147
      %5219 = vst.msk [vmem:[#allocation4 + $0x258] sm:$0xff] %vm964, %v5149
      %5220 = vst.msk [vmem:[#allocation4 + $0x270] sm:$0xff] %vm964, %v5151
      %5221 = vst.msk [vmem:[#allocation4 + $0x288] sm:$0xff] %vm964, %v5153
      %5222 = vst.msk [vmem:[#allocation4 + $0x2a0] sm:$0xff] %vm964, %v5155
      %5223 = vst.msk [vmem:[#allocation4 + $0x2b8] sm:$0xff] %vm964, %v5157
      %5224 = vst.msk [vmem:[#allocation4 + $0x2d0] sm:$0xff] %vm964, %v5159
      %5225 = vst.msk [vmem:[#allocation4 + $0x2e8] sm:$0xff] %vm964, %v5161
      %v5226 = vld [vmem:[#allocation2 + $0x2] sm:$0xff]
      %v5227 = vld [vmem:[#allocation2 + $0xa] sm:$0xff]
      %v5228 = vld [vmem:[#allocation2 + $0x1a] sm:$0xff]
      %v5229 = vld [vmem:[#allocation2 + $0x22] sm:$0xff]
      %v5230 = vld [vmem:[#allocation2 + $0x32] sm:$0xff]
      %v5231 = vld [vmem:[#allocation2 + $0x3a] sm:$0xff]
      %v5232 = vld [vmem:[#allocation2 + $0x4a] sm:$0xff]
      %v5233 = vld [vmem:[#allocation2 + $0x52] sm:$0xff]
      %v5234 = vld [vmem:[#allocation2 + $0x62] sm:$0xff]
      %v5235 = vld [vmem:[#allocation2 + $0x6a] sm:$0xff]
      %v5236 = vld [vmem:[#allocation2 + $0x7a] sm:$0xff]
      %v5237 = vld [vmem:[#allocation2 + $0x82] sm:$0xff]
      %v5238 = vld [vmem:[#allocation2 + $0x92] sm:$0xff]
      %v5239 = vld [vmem:[#allocation2 + $0x9a] sm:$0xff]
      %v5240 = vld [vmem:[#allocation2 + $0xaa] sm:$0xff]
      %v5241 = vld [vmem:[#allocation2 + $0xb2] sm:$0xff]
      %v5242 = vld [vmem:[#allocation2 + $0xc2] sm:$0xff]
      %v5243 = vld [vmem:[#allocation2 + $0xca] sm:$0xff]
      %v5244 = vld [vmem:[#allocation2 + $0xda] sm:$0xff]
      %v5245 = vld [vmem:[#allocation2 + $0xe2] sm:$0xff]
      %v5246 = vld [vmem:[#allocation2 + $0xf2] sm:$0xff]
      %v5247 = vld [vmem:[#allocation2 + $0xfa] sm:$0xff]
      %v5248 = vld [vmem:[#allocation2 + $0x10a] sm:$0xff]
      %v5249 = vld [vmem:[#allocation2 + $0x112] sm:$0xff]
      %v5250 = vld [vmem:[#allocation2 + $0x122] sm:$0xff]
      %v5251 = vld [vmem:[#allocation2 + $0x12a] sm:$0xff]
      %v5252 = vld [vmem:[#allocation2 + $0x13a] sm:$0xff]
      %v5253 = vld [vmem:[#allocation2 + $0x142] sm:$0xff]
      %v5254 = vld [vmem:[#allocation2 + $0x152] sm:$0xff]
      %v5255 = vld [vmem:[#allocation2 + $0x15a] sm:$0xff]
      %v5256 = vld [vmem:[#allocation2 + $0x16a] sm:$0xff]
      %v5257 = vld [vmem:[#allocation2 + $0x172] sm:$0xff]
      %5290 = vrot.lane.b32.xlu0 %v5226, 64
      %v5291 = vpop.permute.xlu0 %5290
      %5292 = vrot.lane.b32.xlu0 %v5227, 64
      %v5293 = vpop.permute.xlu0 %5292
      %5294 = vrot.lane.b32.xlu0 %v5228, 64
      %v5295 = vpop.permute.xlu0 %5294
      %5296 = vrot.lane.b32.xlu0 %v5229, 64
      %v5297 = vpop.permute.xlu0 %5296
      %5298 = vrot.lane.b32.xlu0 %v5230, 64
      %v5299 = vpop.permute.xlu0 %5298
      %5300 = vrot.lane.b32.xlu0 %v5231, 64
      %v5301 = vpop.permute.xlu0 %5300
      %5302 = vrot.lane.b32.xlu0 %v5232, 64
      %v5303 = vpop.permute.xlu0 %5302
      %5304 = vrot.lane.b32.xlu0 %v5233, 64
      %v5305 = vpop.permute.xlu0 %5304
      %5306 = vrot.lane.b32.xlu0 %v5234, 64
      %v5307 = vpop.permute.xlu0 %5306
      %5308 = vrot.lane.b32.xlu0 %v5235, 64
      %v5309 = vpop.permute.xlu0 %5308
      %5310 = vrot.lane.b32.xlu0 %v5236, 64
      %v5311 = vpop.permute.xlu0 %5310
      %5312 = vrot.lane.b32.xlu0 %v5237, 64
      %v5313 = vpop.permute.xlu0 %5312
      %5314 = vrot.lane.b32.xlu0 %v5238, 64
      %v5315 = vpop.permute.xlu0 %5314
      %5316 = vrot.lane.b32.xlu0 %v5239, 64
      %v5317 = vpop.permute.xlu0 %5316
      %5318 = vrot.lane.b32.xlu0 %v5240, 64
      %v5319 = vpop.permute.xlu0 %5318
      %5320 = vrot.lane.b32.xlu0 %v5241, 64
      %v5321 = vpop.permute.xlu0 %5320
      %5322 = vrot.lane.b32.xlu0 %v5242, 64
      %v5323 = vpop.permute.xlu0 %5322
      %5324 = vrot.lane.b32.xlu0 %v5243, 64
      %v5325 = vpop.permute.xlu0 %5324
      %5326 = vrot.lane.b32.xlu0 %v5244, 64
      %v5327 = vpop.permute.xlu0 %5326
      %5328 = vrot.lane.b32.xlu0 %v5245, 64
      %v5329 = vpop.permute.xlu0 %5328
      %5330 = vrot.lane.b32.xlu0 %v5246, 64
      %v5331 = vpop.permute.xlu0 %5330
      %5332 = vrot.lane.b32.xlu0 %v5247, 64
      %v5333 = vpop.permute.xlu0 %5332
      %5334 = vrot.lane.b32.xlu0 %v5248, 64
      %v5335 = vpop.permute.xlu0 %5334
      %5336 = vrot.lane.b32.xlu0 %v5249, 64
      %v5337 = vpop.permute.xlu0 %5336
      %5338 = vrot.lane.b32.xlu0 %v5250, 64
      %v5339 = vpop.permute.xlu0 %5338
      %5340 = vrot.lane.b32.xlu0 %v5251, 64
      %v5341 = vpop.permute.xlu0 %5340
      %5342 = vrot.lane.b32.xlu0 %v5252, 64
      %v5343 = vpop.permute.xlu0 %5342
      %5344 = vrot.lane.b32.xlu0 %v5253, 64
      %v5345 = vpop.permute.xlu0 %5344
      %5346 = vrot.lane.b32.xlu0 %v5254, 64
      %v5347 = vpop.permute.xlu0 %5346
      %5348 = vrot.lane.b32.xlu0 %v5255, 64
      %v5349 = vpop.permute.xlu0 %5348
      %5350 = vrot.lane.b32.xlu0 %v5256, 64
      %v5351 = vpop.permute.xlu0 %5350
      %5352 = vrot.lane.b32.xlu0 %v5257, 64
      %v5353 = vpop.permute.xlu0 %5352
      %5386 = vst.msk [vmem:[#allocation4] sm:$0xff] %vm1157, %v5291
      %5387 = vst.msk [vmem:[#allocation4 + $0x18] sm:$0xff] %vm1157, %v5293
      %5388 = vst.msk [vmem:[#allocation4 + $0x30] sm:$0xff] %vm1157, %v5295
      %5389 = vst.msk [vmem:[#allocation4 + $0x48] sm:$0xff] %vm1157, %v5297
      %5390 = vst.msk [vmem:[#allocation4 + $0x60] sm:$0xff] %vm1157, %v5299
      %5391 = vst.msk [vmem:[#allocation4 + $0x78] sm:$0xff] %vm1157, %v5301
      %5392 = vst.msk [vmem:[#allocation4 + $0x90] sm:$0xff] %vm1157, %v5303
      %5393 = vst.msk [vmem:[#allocation4 + $0xa8] sm:$0xff] %vm1157, %v5305
      %5394 = vst.msk [vmem:[#allocation4 + $0xc0] sm:$0xff] %vm1157, %v5307
      %5395 = vst.msk [vmem:[#allocation4 + $0xd8] sm:$0xff] %vm1157, %v5309
      %5396 = vst.msk [vmem:[#allocation4 + $0xf0] sm:$0xff] %vm1157, %v5311
      %5397 = vst.msk [vmem:[#allocation4 + $0x108] sm:$0xff] %vm1157, %v5313
      %5398 = vst.msk [vmem:[#allocation4 + $0x120] sm:$0xff] %vm1157, %v5315
      %5399 = vst.msk [vmem:[#allocation4 + $0x138] sm:$0xff] %vm1157, %v5317
      %5400 = vst.msk [vmem:[#allocation4 + $0x150] sm:$0xff] %vm1157, %v5319
      %5401 = vst.msk [vmem:[#allocation4 + $0x168] sm:$0xff] %vm1157, %v5321
      %5402 = vst.msk [vmem:[#allocation4 + $0x180] sm:$0xff] %vm1157, %v5323
      %5403 = vst.msk [vmem:[#allocation4 + $0x198] sm:$0xff] %vm1157, %v5325
      %5404 = vst.msk [vmem:[#allocation4 + $0x1b0] sm:$0xff] %vm1157, %v5327
      %5405 = vst.msk [vmem:[#allocation4 + $0x1c8] sm:$0xff] %vm1157, %v5329
      %5406 = vst.msk [vmem:[#allocation4 + $0x1e0] sm:$0xff] %vm1157, %v5331
      %5407 = vst.msk [vmem:[#allocation4 + $0x1f8] sm:$0xff] %vm1157, %v5333
      %5408 = vst.msk [vmem:[#allocation4 + $0x210] sm:$0xff] %vm1157, %v5335
      %5409 = vst.msk [vmem:[#allocation4 + $0x228] sm:$0xff] %vm1157, %v5337
      %5410 = vst.msk [vmem:[#allocation4 + $0x240] sm:$0xff] %vm1157, %v5339
      %5411 = vst.msk [vmem:[#allocation4 + $0x258] sm:$0xff] %vm1157, %v5341
      %5412 = vst.msk [vmem:[#allocation4 + $0x270] sm:$0xff] %vm1157, %v5343
      %5413 = vst.msk [vmem:[#allocation4 + $0x288] sm:$0xff] %vm1157, %v5345
      %5414 = vst.msk [vmem:[#allocation4 + $0x2a0] sm:$0xff] %vm1157, %v5347
      %5415 = vst.msk [vmem:[#allocation4 + $0x2b8] sm:$0xff] %vm1157, %v5349
      %5416 = vst.msk [vmem:[#allocation4 + $0x2d0] sm:$0xff] %vm1157, %v5351
      %5417 = vst.msk [vmem:[#allocation4 + $0x2e8] sm:$0xff] %vm1157, %v5353
      %v5418 = vld [vmem:[%s707] sm:$0xff]
      %v5419 = vld [vmem:[%s707 + $0x8] sm:$0xff]
      %v5420 = vld [vmem:[%s707 + $0x18] sm:$0xff]
      %v5421 = vld [vmem:[%s707 + $0x20] sm:$0xff]
      %v5422 = vld [vmem:[%s707 + $0x30] sm:$0xff]
      %v5423 = vld [vmem:[%s707 + $0x38] sm:$0xff]
      %v5424 = vld [vmem:[%s707 + $0x48] sm:$0xff]
      %v5425 = vld [vmem:[%s707 + $0x50] sm:$0xff]
      %v5426 = vld [vmem:[%s707 + $0x60] sm:$0xff]
      %v5427 = vld [vmem:[%s707 + $0x68] sm:$0xff]
      %v5428 = vld [vmem:[%s707 + $0x78] sm:$0xff]
      %v5429 = vld [vmem:[%s707 + $0x80] sm:$0xff]
      %v5430 = vld [vmem:[%s707 + $0x90] sm:$0xff]
      %v5431 = vld [vmem:[%s707 + $0x98] sm:$0xff]
      %v5432 = vld [vmem:[%s707 + $0xa8] sm:$0xff]
      %v5433 = vld [vmem:[%s707 + $0xb0] sm:$0xff]
      %v5434 = vld [vmem:[%s707 + $0xc0] sm:$0xff]
      %v5435 = vld [vmem:[%s707 + $0xc8] sm:$0xff]
      %v5436 = vld [vmem:[%s707 + $0xd8] sm:$0xff]
      %v5437 = vld [vmem:[%s707 + $0xe0] sm:$0xff]
      %v5438 = vld [vmem:[%s707 + $0xf0] sm:$0xff]
      %v5439 = vld [vmem:[%s707 + $0xf8] sm:$0xff]
      %v5440 = vld [vmem:[%s707 + $0x108] sm:$0xff]
      %v5441 = vld [vmem:[%s707 + $0x110] sm:$0xff]
      %v5442 = vld [vmem:[%s707 + $0x120] sm:$0xff]
      %v5443 = vld [vmem:[%s707 + $0x128] sm:$0xff]
      %v5444 = vld [vmem:[%s707 + $0x138] sm:$0xff]
      %v5445 = vld [vmem:[%s707 + $0x140] sm:$0xff]
      %v5446 = vld [vmem:[%s707 + $0x150] sm:$0xff]
      %v5447 = vld [vmem:[%s707 + $0x158] sm:$0xff]
      %v5448 = vld [vmem:[%s707 + $0x168] sm:$0xff]
      %v5449 = vld [vmem:[%s707 + $0x170] sm:$0xff]
      %5482 = vrot.lane.b32.xlu0 %v5418, 96
      %v5483 = vpop.permute.xlu0 %5482
      %5484 = vrot.lane.b32.xlu0 %v5419, 96
      %v5485 = vpop.permute.xlu0 %5484
      %5486 = vrot.lane.b32.xlu0 %v5420, 96
      %v5487 = vpop.permute.xlu0 %5486
      %5488 = vrot.lane.b32.xlu0 %v5421, 96
      %v5489 = vpop.permute.xlu0 %5488
      %5490 = vrot.lane.b32.xlu0 %v5422, 96
      %v5491 = vpop.permute.xlu0 %5490
      %5492 = vrot.lane.b32.xlu0 %v5423, 96
      %v5493 = vpop.permute.xlu0 %5492
      %5494 = vrot.lane.b32.xlu0 %v5424, 96
      %v5495 = vpop.permute.xlu0 %5494
      %5496 = vrot.lane.b32.xlu0 %v5425, 96
      %v5497 = vpop.permute.xlu0 %5496
      %5498 = vrot.lane.b32.xlu0 %v5426, 96
      %v5499 = vpop.permute.xlu0 %5498
      %5500 = vrot.lane.b32.xlu0 %v5427, 96
      %v5501 = vpop.permute.xlu0 %5500
      %5502 = vrot.lane.b32.xlu0 %v5428, 96
      %v5503 = vpop.permute.xlu0 %5502
      %5504 = vrot.lane.b32.xlu0 %v5429, 96
      %v5505 = vpop.permute.xlu0 %5504
      %5506 = vrot.lane.b32.xlu0 %v5430, 96
      %v5507 = vpop.permute.xlu0 %5506
      %5508 = vrot.lane.b32.xlu0 %v5431, 96
      %v5509 = vpop.permute.xlu0 %5508
      %5510 = vrot.lane.b32.xlu0 %v5432, 96
      %v5511 = vpop.permute.xlu0 %5510
      %5512 = vrot.lane.b32.xlu0 %v5433, 96
      %v5513 = vpop.permute.xlu0 %5512
      %5514 = vrot.lane.b32.xlu0 %v5434, 96
      %v5515 = vpop.permute.xlu0 %5514
      %5516 = vrot.lane.b32.xlu0 %v5435, 96
      %v5517 = vpop.permute.xlu0 %5516
      %5518 = vrot.lane.b32.xlu0 %v5436, 96
      %v5519 = vpop.permute.xlu0 %5518
      %5520 = vrot.lane.b32.xlu0 %v5437, 96
      %v5521 = vpop.permute.xlu0 %5520
      %5522 = vrot.lane.b32.xlu0 %v5438, 96
      %v5523 = vpop.permute.xlu0 %5522
      %5524 = vrot.lane.b32.xlu0 %v5439, 96
      %v5525 = vpop.permute.xlu0 %5524
      %5526 = vrot.lane.b32.xlu0 %v5440, 96
      %v5527 = vpop.permute.xlu0 %5526
      %5528 = vrot.lane.b32.xlu0 %v5441, 96
      %v5529 = vpop.permute.xlu0 %5528
      %5530 = vrot.lane.b32.xlu0 %v5442, 96
      %v5531 = vpop.permute.xlu0 %5530
      %5532 = vrot.lane.b32.xlu0 %v5443, 96
      %v5533 = vpop.permute.xlu0 %5532
      %5534 = vrot.lane.b32.xlu0 %v5444, 96
      %v5535 = vpop.permute.xlu0 %5534
      %5536 = vrot.lane.b32.xlu0 %v5445, 96
      %v5537 = vpop.permute.xlu0 %5536
      %5538 = vrot.lane.b32.xlu0 %v5446, 96
      %v5539 = vpop.permute.xlu0 %5538
      %5540 = vrot.lane.b32.xlu0 %v5447, 96
      %v5541 = vpop.permute.xlu0 %5540
      %5542 = vrot.lane.b32.xlu0 %v5448, 96
      %v5543 = vpop.permute.xlu0 %5542
      %5544 = vrot.lane.b32.xlu0 %v5449, 96
      %v5545 = vpop.permute.xlu0 %5544
      %5578 = vst.msk [vmem:[#allocation4] sm:$0xff] %vm1350, %v5483
      %5579 = vst.msk [vmem:[#allocation4 + $0x18] sm:$0xff] %vm1350, %v5485
      %5580 = vst.msk [vmem:[#allocation4 + $0x30] sm:$0xff] %vm1350, %v5487
      %5581 = vst.msk [vmem:[#allocation4 + $0x48] sm:$0xff] %vm1350, %v5489
      %5582 = vst.msk [vmem:[#allocation4 + $0x60] sm:$0xff] %vm1350, %v5491
      %5583 = vst.msk [vmem:[#allocation4 + $0x78] sm:$0xff] %vm1350, %v5493
      %5584 = vst.msk [vmem:[#allocation4 + $0x90] sm:$0xff] %vm1350, %v5495
      %5585 = vst.msk [vmem:[#allocation4 + $0xa8] sm:$0xff] %vm1350, %v5497
      %5586 = vst.msk [vmem:[#allocation4 + $0xc0] sm:$0xff] %vm1350, %v5499
      %5587 = vst.msk [vmem:[#allocation4 + $0xd8] sm:$0xff] %vm1350, %v5501
      %5588 = vst.msk [vmem:[#allocation4 + $0xf0] sm:$0xff] %vm1350, %v5503
      %5589 = vst.msk [vmem:[#allocation4 + $0x108] sm:$0xff] %vm1350, %v5505
      %5590 = vst.msk [vmem:[#allocation4 + $0x120] sm:$0xff] %vm1350, %v5507
      %5591 = vst.msk [vmem:[#allocation4 + $0x138] sm:$0xff] %vm1350, %v5509
      %5592 = vst.msk [vmem:[#allocation4 + $0x150] sm:$0xff] %vm1350, %v5511
      %5593 = vst.msk [vmem:[#allocation4 + $0x168] sm:$0xff] %vm1350, %v5513
      %5594 = vst.msk [vmem:[#allocation4 + $0x180] sm:$0xff] %vm1350, %v5515
      %5595 = vst.msk [vmem:[#allocation4 + $0x198] sm:$0xff] %vm1350, %v5517
      %5596 = vst.msk [vmem:[#allocation4 + $0x1b0] sm:$0xff] %vm1350, %v5519
      %5597 = vst.msk [vmem:[#allocation4 + $0x1c8] sm:$0xff] %vm1350, %v5521
      %5598 = vst.msk [vmem:[#allocation4 + $0x1e0] sm:$0xff] %vm1350, %v5523
      %5599 = vst.msk [vmem:[#allocation4 + $0x1f8] sm:$0xff] %vm1350, %v5525
      %5600 = vst.msk [vmem:[#allocation4 + $0x210] sm:$0xff] %vm1350, %v5527
      %5601 = vst.msk [vmem:[#allocation4 + $0x228] sm:$0xff] %vm1350, %v5529
      %5602 = vst.msk [vmem:[#allocation4 + $0x240] sm:$0xff] %vm1350, %v5531
      %5603 = vst.msk [vmem:[#allocation4 + $0x258] sm:$0xff] %vm1350, %v5533
      %5604 = vst.msk [vmem:[#allocation4 + $0x270] sm:$0xff] %vm1350, %v5535
      %5605 = vst.msk [vmem:[#allocation4 + $0x288] sm:$0xff] %vm1350, %v5537
      %5606 = vst.msk [vmem:[#allocation4 + $0x2a0] sm:$0xff] %vm1350, %v5539
      %5607 = vst.msk [vmem:[#allocation4 + $0x2b8] sm:$0xff] %vm1350, %v5541
      %5608 = vst.msk [vmem:[#allocation4 + $0x2d0] sm:$0xff] %vm1350, %v5543
      %5609 = vst.msk [vmem:[#allocation4 + $0x2e8] sm:$0xff] %vm1350, %v5545
      %v5610 = vld [vmem:[%s707 + $0x1] sm:$0xff]
      %v5611 = vld [vmem:[%s707 + $0x9] sm:$0xff]
      %v5612 = vld [vmem:[%s707 + $0x19] sm:$0xff]
      %v5613 = vld [vmem:[%s707 + $0x21] sm:$0xff]
      %v5614 = vld [vmem:[%s707 + $0x31] sm:$0xff]
      %v5615 = vld [vmem:[%s707 + $0x39] sm:$0xff]
      %v5616 = vld [vmem:[%s707 + $0x49] sm:$0xff]
      %v5617 = vld [vmem:[%s707 + $0x51] sm:$0xff]
      %v5618 = vld [vmem:[%s707 + $0x61] sm:$0xff]
      %v5619 = vld [vmem:[%s707 + $0x69] sm:$0xff]
      %v5620 = vld [vmem:[%s707 + $0x79] sm:$0xff]
      %v5621 = vld [vmem:[%s707 + $0x81] sm:$0xff]
      %v5622 = vld [vmem:[%s707 + $0x91] sm:$0xff]
      %v5623 = vld [vmem:[%s707 + $0x99] sm:$0xff]
      %v5624 = vld [vmem:[%s707 + $0xa9] sm:$0xff]
      %v5625 = vld [vmem:[%s707 + $0xb1] sm:$0xff]
      %v5626 = vld [vmem:[%s707 + $0xc1] sm:$0xff]
      %v5627 = vld [vmem:[%s707 + $0xc9] sm:$0xff]
      %v5628 = vld [vmem:[%s707 + $0xd9] sm:$0xff]
      %v5629 = vld [vmem:[%s707 + $0xe1] sm:$0xff]
      %v5630 = vld [vmem:[%s707 + $0xf1] sm:$0xff]
      %v5631 = vld [vmem:[%s707 + $0xf9] sm:$0xff]
      %v5632 = vld [vmem:[%s707 + $0x109] sm:$0xff]
      %v5633 = vld [vmem:[%s707 + $0x111] sm:$0xff]
      %v5634 = vld [vmem:[%s707 + $0x121] sm:$0xff]
      %v5635 = vld [vmem:[%s707 + $0x129] sm:$0xff]
      %v5636 = vld [vmem:[%s707 + $0x139] sm:$0xff]
      %v5637 = vld [vmem:[%s707 + $0x141] sm:$0xff]
      %v5638 = vld [vmem:[%s707 + $0x151] sm:$0xff]
      %v5639 = vld [vmem:[%s707 + $0x159] sm:$0xff]
      %v5640 = vld [vmem:[%s707 + $0x169] sm:$0xff]
      %v5641 = vld [vmem:[%s707 + $0x171] sm:$0xff]
      %5642 = vst.msk [vmem:[#allocation4 + $0x8] sm:$0xff] %vm335, %v5610
      %5643 = vst.msk [vmem:[#allocation4 + $0x20] sm:$0xff] %vm335, %v5611
      %5644 = vst.msk [vmem:[#allocation4 + $0x38] sm:$0xff] %vm335, %v5612
      %5645 = vst.msk [vmem:[#allocation4 + $0x50] sm:$0xff] %vm335, %v5613
      %5646 = vst.msk [vmem:[#allocation4 + $0x68] sm:$0xff] %vm335, %v5614
      %5647 = vst.msk [vmem:[#allocation4 + $0x80] sm:$0xff] %vm335, %v5615
      %5648 = vst.msk [vmem:[#allocation4 + $0x98] sm:$0xff] %vm335, %v5616
      %5649 = vst.msk [vmem:[#allocation4 + $0xb0] sm:$0xff] %vm335, %v5617
      %5650 = vst.msk [vmem:[#allocation4 + $0xc8] sm:$0xff] %vm335, %v5618
      %5651 = vst.msk [vmem:[#allocation4 + $0xe0] sm:$0xff] %vm335, %v5619
      %5652 = vst.msk [vmem:[#allocation4 + $0xf8] sm:$0xff] %vm335, %v5620
      %5653 = vst.msk [vmem:[#allocation4 + $0x110] sm:$0xff] %vm335, %v5621
      %5654 = vst.msk [vmem:[#allocation4 + $0x128] sm:$0xff] %vm335, %v5622
      %5655 = vst.msk [vmem:[#allocation4 + $0x140] sm:$0xff] %vm335, %v5623
      %5656 = vst.msk [vmem:[#allocation4 + $0x158] sm:$0xff] %vm335, %v5624
      %5657 = vst.msk [vmem:[#allocation4 + $0x170] sm:$0xff] %vm335, %v5625
      %5658 = vst.msk [vmem:[#allocation4 + $0x188] sm:$0xff] %vm335, %v5626
      %5659 = vst.msk [vmem:[#allocation4 + $0x1a0] sm:$0xff] %vm335, %v5627
      %5660 = vst.msk [vmem:[#allocation4 + $0x1b8] sm:$0xff] %vm335, %v5628
      %5661 = vst.msk [vmem:[#allocation4 + $0x1d0] sm:$0xff] %vm335, %v5629
      %5662 = vst.msk [vmem:[#allocation4 + $0x1e8] sm:$0xff] %vm335, %v5630
      %5663 = vst.msk [vmem:[#allocation4 + $0x200] sm:$0xff] %vm335, %v5631
      %5664 = vst.msk [vmem:[#allocation4 + $0x218] sm:$0xff] %vm335, %v5632
      %5665 = vst.msk [vmem:[#allocation4 + $0x230] sm:$0xff] %vm335, %v5633
      %5666 = vst.msk [vmem:[#allocation4 + $0x248] sm:$0xff] %vm335, %v5634
      %5667 = vst.msk [vmem:[#allocation4 + $0x260] sm:$0xff] %vm335, %v5635
      %5668 = vst.msk [vmem:[#allocation4 + $0x278] sm:$0xff] %vm335, %v5636
      %5669 = vst.msk [vmem:[#allocation4 + $0x290] sm:$0xff] %vm335, %v5637
      %5670 = vst.msk [vmem:[#allocation4 + $0x2a8] sm:$0xff] %vm335, %v5638
      %5671 = vst.msk [vmem:[#allocation4 + $0x2c0] sm:$0xff] %vm335, %v5639
      %5672 = vst.msk [vmem:[#allocation4 + $0x2d8] sm:$0xff] %vm335, %v5640
      %5673 = vst.msk [vmem:[#allocation4 + $0x2f0] sm:$0xff] %vm335, %v5641
      %v5674 = vld [vmem:[%s707 + $0x2] sm:$0xff]
      %v5675 = vld [vmem:[%s707 + $0xa] sm:$0xff]
      %v5676 = vld [vmem:[%s707 + $0x1a] sm:$0xff]
      %v5677 = vld [vmem:[%s707 + $0x22] sm:$0xff]
      %v5678 = vld [vmem:[%s707 + $0x32] sm:$0xff]
      %v5679 = vld [vmem:[%s707 + $0x3a] sm:$0xff]
      %v5680 = vld [vmem:[%s707 + $0x4a] sm:$0xff]
      %v5681 = vld [vmem:[%s707 + $0x52] sm:$0xff]
      %v5682 = vld [vmem:[%s707 + $0x62] sm:$0xff]
      %v5683 = vld [vmem:[%s707 + $0x6a] sm:$0xff]
      %v5684 = vld [vmem:[%s707 + $0x7a] sm:$0xff]
      %v5685 = vld [vmem:[%s707 + $0x82] sm:$0xff]
      %v5686 = vld [vmem:[%s707 + $0x92] sm:$0xff]
      %v5687 = vld [vmem:[%s707 + $0x9a] sm:$0xff]
      %v5688 = vld [vmem:[%s707 + $0xaa] sm:$0xff]
      %v5689 = vld [vmem:[%s707 + $0xb2] sm:$0xff]
      %v5690 = vld [vmem:[%s707 + $0xc2] sm:$0xff]
      %v5691 = vld [vmem:[%s707 + $0xca] sm:$0xff]
      %v5692 = vld [vmem:[%s707 + $0xda] sm:$0xff]
      %v5693 = vld [vmem:[%s707 + $0xe2] sm:$0xff]
      %v5694 = vld [vmem:[%s707 + $0xf2] sm:$0xff]
      %v5695 = vld [vmem:[%s707 + $0xfa] sm:$0xff]
      %v5696 = vld [vmem:[%s707 + $0x10a] sm:$0xff]
      %v5697 = vld [vmem:[%s707 + $0x112] sm:$0xff]
      %v5698 = vld [vmem:[%s707 + $0x122] sm:$0xff]
      %v5699 = vld [vmem:[%s707 + $0x12a] sm:$0xff]
      %v5700 = vld [vmem:[%s707 + $0x13a] sm:$0xff]
      %v5701 = vld [vmem:[%s707 + $0x142] sm:$0xff]
      %v5702 = vld [vmem:[%s707 + $0x152] sm:$0xff]
      %v5703 = vld [vmem:[%s707 + $0x15a] sm:$0xff]
      %v5704 = vld [vmem:[%s707 + $0x16a] sm:$0xff]
      %v5705 = vld [vmem:[%s707 + $0x172] sm:$0xff]
      %5738 = vrot.lane.b32.xlu0 %v5674, 32
      %v5739 = vpop.permute.xlu0 %5738
      %5740 = vrot.lane.b32.xlu0 %v5675, 32
      %v5741 = vpop.permute.xlu0 %5740
      %5742 = vrot.lane.b32.xlu0 %v5676, 32
      %v5743 = vpop.permute.xlu0 %5742
      %5744 = vrot.lane.b32.xlu0 %v5677, 32
      %v5745 = vpop.permute.xlu0 %5744
      %5746 = vrot.lane.b32.xlu0 %v5678, 32
      %v5747 = vpop.permute.xlu0 %5746
      %5748 = vrot.lane.b32.xlu0 %v5679, 32
      %v5749 = vpop.permute.xlu0 %5748
      %5750 = vrot.lane.b32.xlu0 %v5680, 32
      %v5751 = vpop.permute.xlu0 %5750
      %5752 = vrot.lane.b32.xlu0 %v5681, 32
      %v5753 = vpop.permute.xlu0 %5752
      %5754 = vrot.lane.b32.xlu0 %v5682, 32
      %v5755 = vpop.permute.xlu0 %5754
      %5756 = vrot.lane.b32.xlu0 %v5683, 32
      %v5757 = vpop.permute.xlu0 %5756
      %5758 = vrot.lane.b32.xlu0 %v5684, 32
      %v5759 = vpop.permute.xlu0 %5758
      %5760 = vrot.lane.b32.xlu0 %v5685, 32
      %v5761 = vpop.permute.xlu0 %5760
      %5762 = vrot.lane.b32.xlu0 %v5686, 32
      %v5763 = vpop.permute.xlu0 %5762
      %5764 = vrot.lane.b32.xlu0 %v5687, 32
      %v5765 = vpop.permute.xlu0 %5764
      %5766 = vrot.lane.b32.xlu0 %v5688, 32
      %v5767 = vpop.permute.xlu0 %5766
      %5768 = vrot.lane.b32.xlu0 %v5689, 32
      %v5769 = vpop.permute.xlu0 %5768
      %5770 = vrot.lane.b32.xlu0 %v5690, 32
      %v5771 = vpop.permute.xlu0 %5770
      %5772 = vrot.lane.b32.xlu0 %v5691, 32
      %v5773 = vpop.permute.xlu0 %5772
      %5774 = vrot.lane.b32.xlu0 %v5692, 32
      %v5775 = vpop.permute.xlu0 %5774
      %5776 = vrot.lane.b32.xlu0 %v5693, 32
      %v5777 = vpop.permute.xlu0 %5776
      %5778 = vrot.lane.b32.xlu0 %v5694, 32
      %v5779 = vpop.permute.xlu0 %5778
      %5780 = vrot.lane.b32.xlu0 %v5695, 32
      %v5781 = vpop.permute.xlu0 %5780
      %5782 = vrot.lane.b32.xlu0 %v5696, 32
      %v5783 = vpop.permute.xlu0 %5782
      %5784 = vrot.lane.b32.xlu0 %v5697, 32
      %v5785 = vpop.permute.xlu0 %5784
      %5786 = vrot.lane.b32.xlu0 %v5698, 32
      %v5787 = vpop.permute.xlu0 %5786
      %5788 = vrot.lane.b32.xlu0 %v5699, 32
      %v5789 = vpop.permute.xlu0 %5788
      %5790 = vrot.lane.b32.xlu0 %v5700, 32
      %v5791 = vpop.permute.xlu0 %5790
      %5792 = vrot.lane.b32.xlu0 %v5701, 32
      %v5793 = vpop.permute.xlu0 %5792
      %5794 = vrot.lane.b32.xlu0 %v5702, 32
      %v5795 = vpop.permute.xlu0 %5794
      %5796 = vrot.lane.b32.xlu0 %v5703, 32
      %v5797 = vpop.permute.xlu0 %5796
      %5798 = vrot.lane.b32.xlu0 %v5704, 32
      %v5799 = vpop.permute.xlu0 %5798
      %5800 = vrot.lane.b32.xlu0 %v5705, 32
      %v5801 = vpop.permute.xlu0 %5800
      %5834 = vst.msk [vmem:[#allocation4 + $0x8] sm:$0xff] %vm964, %v5739
      %5835 = vst.msk [vmem:[#allocation4 + $0x20] sm:$0xff] %vm964, %v5741
      %5836 = vst.msk [vmem:[#allocation4 + $0x38] sm:$0xff] %vm964, %v5743
      %5837 = vst.msk [vmem:[#allocation4 + $0x50] sm:$0xff] %vm964, %v5745
      %5838 = vst.msk [vmem:[#allocation4 + $0x68] sm:$0xff] %vm964, %v5747
      %5839 = vst.msk [vmem:[#allocation4 + $0x80] sm:$0xff] %vm964, %v5749
      %5840 = vst.msk [vmem:[#allocation4 + $0x98] sm:$0xff] %vm964, %v5751
      %5841 = vst.msk [vmem:[#allocation4 + $0xb0] sm:$0xff] %vm964, %v5753
      %5842 = vst.msk [vmem:[#allocation4 + $0xc8] sm:$0xff] %vm964, %v5755
      %5843 = vst.msk [vmem:[#allocation4 + $0xe0] sm:$0xff] %vm964, %v5757
      %5844 = vst.msk [vmem:[#allocation4 + $0xf8] sm:$0xff] %vm964, %v5759
      %5845 = vst.msk [vmem:[#allocation4 + $0x110] sm:$0xff] %vm964, %v5761
      %5846 = vst.msk [vmem:[#allocation4 + $0x128] sm:$0xff] %vm964, %v5763
      %5847 = vst.msk [vmem:[#allocation4 + $0x140] sm:$0xff] %vm964, %v5765
      %5848 = vst.msk [vmem:[#allocation4 + $0x158] sm:$0xff] %vm964, %v5767
      %5849 = vst.msk [vmem:[#allocation4 + $0x170] sm:$0xff] %vm964, %v5769
      %5850 = vst.msk [vmem:[#allocation4 + $0x188] sm:$0xff] %vm964, %v5771
      %5851 = vst.msk [vmem:[#allocation4 + $0x1a0] sm:$0xff] %vm964, %v5773
      %5852 = vst.msk [vmem:[#allocation4 + $0x1b8] sm:$0xff] %vm964, %v5775
      %5853 = vst.msk [vmem:[#allocation4 + $0x1d0] sm:$0xff] %vm964, %v5777
      %5854 = vst.msk [vmem:[#allocation4 + $0x1e8] sm:$0xff] %vm964, %v5779
      %5855 = vst.msk [vmem:[#allocation4 + $0x200] sm:$0xff] %vm964, %v5781
      %5856 = vst.msk [vmem:[#allocation4 + $0x218] sm:$0xff] %vm964, %v5783
      %5857 = vst.msk [vmem:[#allocation4 + $0x230] sm:$0xff] %vm964, %v5785
      %5858 = vst.msk [vmem:[#allocation4 + $0x248] sm:$0xff] %vm964, %v5787
      %5859 = vst.msk [vmem:[#allocation4 + $0x260] sm:$0xff] %vm964, %v5789
      %5860 = vst.msk [vmem:[#allocation4 + $0x278] sm:$0xff] %vm964, %v5791
      %5861 = vst.msk [vmem:[#allocation4 + $0x290] sm:$0xff] %vm964, %v5793
      %5862 = vst.msk [vmem:[#allocation4 + $0x2a8] sm:$0xff] %vm964, %v5795
      %5863 = vst.msk [vmem:[#allocation4 + $0x2c0] sm:$0xff] %vm964, %v5797
      %5864 = vst.msk [vmem:[#allocation4 + $0x2d8] sm:$0xff] %vm964, %v5799
      %5865 = vst.msk [vmem:[#allocation4 + $0x2f0] sm:$0xff] %vm964, %v5801
      %v5866 = vld [vmem:[%s1639] sm:$0xff]
      %v5867 = vld [vmem:[%s1639 + $0x8] sm:$0xff]
      %v5868 = vld [vmem:[%s1639 + $0x18] sm:$0xff]
      %v5869 = vld [vmem:[%s1639 + $0x20] sm:$0xff]
      %v5870 = vld [vmem:[%s1639 + $0x30] sm:$0xff]
      %v5871 = vld [vmem:[%s1639 + $0x38] sm:$0xff]
      %v5872 = vld [vmem:[%s1639 + $0x48] sm:$0xff]
      %v5873 = vld [vmem:[%s1639 + $0x50] sm:$0xff]
      %v5874 = vld [vmem:[%s1639 + $0x60] sm:$0xff]
      %v5875 = vld [vmem:[%s1639 + $0x68] sm:$0xff]
      %v5876 = vld [vmem:[%s1639 + $0x78] sm:$0xff]
      %v5877 = vld [vmem:[%s1639 + $0x80] sm:$0xff]
      %v5878 = vld [vmem:[%s1639 + $0x90] sm:$0xff]
      %v5879 = vld [vmem:[%s1639 + $0x98] sm:$0xff]
      %v5880 = vld [vmem:[%s1639 + $0xa8] sm:$0xff]
      %v5881 = vld [vmem:[%s1639 + $0xb0] sm:$0xff]
      %v5882 = vld [vmem:[%s1639 + $0xc0] sm:$0xff]
      %v5883 = vld [vmem:[%s1639 + $0xc8] sm:$0xff]
      %v5884 = vld [vmem:[%s1639 + $0xd8] sm:$0xff]
      %v5885 = vld [vmem:[%s1639 + $0xe0] sm:$0xff]
      %v5886 = vld [vmem:[%s1639 + $0xf0] sm:$0xff]
      %v5887 = vld [vmem:[%s1639 + $0xf8] sm:$0xff]
      %v5888 = vld [vmem:[%s1639 + $0x108] sm:$0xff]
      %v5889 = vld [vmem:[%s1639 + $0x110] sm:$0xff]
      %v5890 = vld [vmem:[%s1639 + $0x120] sm:$0xff]
      %v5891 = vld [vmem:[%s1639 + $0x128] sm:$0xff]
      %v5892 = vld [vmem:[%s1639 + $0x138] sm:$0xff]
      %v5893 = vld [vmem:[%s1639 + $0x140] sm:$0xff]
      %v5894 = vld [vmem:[%s1639 + $0x150] sm:$0xff]
      %v5895 = vld [vmem:[%s1639 + $0x158] sm:$0xff]
      %v5896 = vld [vmem:[%s1639 + $0x168] sm:$0xff]
      %v5897 = vld [vmem:[%s1639 + $0x170] sm:$0xff]
      %5930 = vrot.lane.b32.xlu0 %v5866, 64
      %v5931 = vpop.permute.xlu0 %5930
      %5932 = vrot.lane.b32.xlu0 %v5867, 64
      %v5933 = vpop.permute.xlu0 %5932
      %5934 = vrot.lane.b32.xlu0 %v5868, 64
      %v5935 = vpop.permute.xlu0 %5934
      %5936 = vrot.lane.b32.xlu0 %v5869, 64
      %v5937 = vpop.permute.xlu0 %5936
      %5938 = vrot.lane.b32.xlu0 %v5870, 64
      %v5939 = vpop.permute.xlu0 %5938
      %5940 = vrot.lane.b32.xlu0 %v5871, 64
      %v5941 = vpop.permute.xlu0 %5940
      %5942 = vrot.lane.b32.xlu0 %v5872, 64
      %v5943 = vpop.permute.xlu0 %5942
      %5944 = vrot.lane.b32.xlu0 %v5873, 64
      %v5945 = vpop.permute.xlu0 %5944
      %5946 = vrot.lane.b32.xlu0 %v5874, 64
      %v5947 = vpop.permute.xlu0 %5946
      %5948 = vrot.lane.b32.xlu0 %v5875, 64
      %v5949 = vpop.permute.xlu0 %5948
      %5950 = vrot.lane.b32.xlu0 %v5876, 64
      %v5951 = vpop.permute.xlu0 %5950
      %5952 = vrot.lane.b32.xlu0 %v5877, 64
      %v5953 = vpop.permute.xlu0 %5952
      %5954 = vrot.lane.b32.xlu0 %v5878, 64
      %v5955 = vpop.permute.xlu0 %5954
      %5956 = vrot.lane.b32.xlu0 %v5879, 64
      %v5957 = vpop.permute.xlu0 %5956
      %5958 = vrot.lane.b32.xlu0 %v5880, 64
      %v5959 = vpop.permute.xlu0 %5958
      %5960 = vrot.lane.b32.xlu0 %v5881, 64
      %v5961 = vpop.permute.xlu0 %5960
      %5962 = vrot.lane.b32.xlu0 %v5882, 64
      %v5963 = vpop.permute.xlu0 %5962
      %5964 = vrot.lane.b32.xlu0 %v5883, 64
      %v5965 = vpop.permute.xlu0 %5964
      %5966 = vrot.lane.b32.xlu0 %v5884, 64
      %v5967 = vpop.permute.xlu0 %5966
      %5968 = vrot.lane.b32.xlu0 %v5885, 64
      %v5969 = vpop.permute.xlu0 %5968
      %5970 = vrot.lane.b32.xlu0 %v5886, 64
      %v5971 = vpop.permute.xlu0 %5970
      %5972 = vrot.lane.b32.xlu0 %v5887, 64
      %v5973 = vpop.permute.xlu0 %5972
      %5974 = vrot.lane.b32.xlu0 %v5888, 64
      %v5975 = vpop.permute.xlu0 %5974
      %5976 = vrot.lane.b32.xlu0 %v5889, 64
      %v5977 = vpop.permute.xlu0 %5976
      %5978 = vrot.lane.b32.xlu0 %v5890, 64
      %v5979 = vpop.permute.xlu0 %5978
      %5980 = vrot.lane.b32.xlu0 %v5891, 64
      %v5981 = vpop.permute.xlu0 %5980
      %5982 = vrot.lane.b32.xlu0 %v5892, 64
      %v5983 = vpop.permute.xlu0 %5982
      %5984 = vrot.lane.b32.xlu0 %v5893, 64
      %v5985 = vpop.permute.xlu0 %5984
      %5986 = vrot.lane.b32.xlu0 %v5894, 64
      %v5987 = vpop.permute.xlu0 %5986
      %5988 = vrot.lane.b32.xlu0 %v5895, 64
      %v5989 = vpop.permute.xlu0 %5988
      %5990 = vrot.lane.b32.xlu0 %v5896, 64
      %v5991 = vpop.permute.xlu0 %5990
      %5992 = vrot.lane.b32.xlu0 %v5897, 64
      %v5993 = vpop.permute.xlu0 %5992
      %6026 = vst.msk [vmem:[#allocation4 + $0x8] sm:$0xff] %vm1157, %v5931
      %6027 = vst.msk [vmem:[#allocation4 + $0x20] sm:$0xff] %vm1157, %v5933
      %6028 = vst.msk [vmem:[#allocation4 + $0x38] sm:$0xff] %vm1157, %v5935
      %6029 = vst.msk [vmem:[#allocation4 + $0x50] sm:$0xff] %vm1157, %v5937
      %6030 = vst.msk [vmem:[#allocation4 + $0x68] sm:$0xff] %vm1157, %v5939
      %6031 = vst.msk [vmem:[#allocation4 + $0x80] sm:$0xff] %vm1157, %v5941
      %6032 = vst.msk [vmem:[#allocation4 + $0x98] sm:$0xff] %vm1157, %v5943
      %6033 = vst.msk [vmem:[#allocation4 + $0xb0] sm:$0xff] %vm1157, %v5945
      %6034 = vst.msk [vmem:[#allocation4 + $0xc8] sm:$0xff] %vm1157, %v5947
      %6035 = vst.msk [vmem:[#allocation4 + $0xe0] sm:$0xff] %vm1157, %v5949
      %6036 = vst.msk [vmem:[#allocation4 + $0xf8] sm:$0xff] %vm1157, %v5951
      %6037 = vst.msk [vmem:[#allocation4 + $0x110] sm:$0xff] %vm1157, %v5953
      %6038 = vst.msk [vmem:[#allocation4 + $0x128] sm:$0xff] %vm1157, %v5955
      %6039 = vst.msk [vmem:[#allocation4 + $0x140] sm:$0xff] %vm1157, %v5957
      %6040 = vst.msk [vmem:[#allocation4 + $0x158] sm:$0xff] %vm1157, %v5959
      %6041 = vst.msk [vmem:[#allocation4 + $0x170] sm:$0xff] %vm1157, %v5961
      %6042 = vst.msk [vmem:[#allocation4 + $0x188] sm:$0xff] %vm1157, %v5963
      %6043 = vst.msk [vmem:[#allocation4 + $0x1a0] sm:$0xff] %vm1157, %v5965
      %6044 = vst.msk [vmem:[#allocation4 + $0x1b8] sm:$0xff] %vm1157, %v5967
      %6045 = vst.msk [vmem:[#allocation4 + $0x1d0] sm:$0xff] %vm1157, %v5969
      %6046 = vst.msk [vmem:[#allocation4 + $0x1e8] sm:$0xff] %vm1157, %v5971
      %6047 = vst.msk [vmem:[#allocation4 + $0x200] sm:$0xff] %vm1157, %v5973
      %6048 = vst.msk [vmem:[#allocation4 + $0x218] sm:$0xff] %vm1157, %v5975
      %6049 = vst.msk [vmem:[#allocation4 + $0x230] sm:$0xff] %vm1157, %v5977
      %6050 = vst.msk [vmem:[#allocation4 + $0x248] sm:$0xff] %vm1157, %v5979
      %6051 = vst.msk [vmem:[#allocation4 + $0x260] sm:$0xff] %vm1157, %v5981
      %6052 = vst.msk [vmem:[#allocation4 + $0x278] sm:$0xff] %vm1157, %v5983
      %6053 = vst.msk [vmem:[#allocation4 + $0x290] sm:$0xff] %vm1157, %v5985
      %6054 = vst.msk [vmem:[#allocation4 + $0x2a8] sm:$0xff] %vm1157, %v5987
      %6055 = vst.msk [vmem:[#allocation4 + $0x2c0] sm:$0xff] %vm1157, %v5989
      %6056 = vst.msk [vmem:[#allocation4 + $0x2d8] sm:$0xff] %vm1157, %v5991
      %6057 = vst.msk [vmem:[#allocation4 + $0x2f0] sm:$0xff] %vm1157, %v5993
      %v6058 = vld [vmem:[%s1639 + $0x1] sm:$0xff]
      %v6059 = vld [vmem:[%s1639 + $0x9] sm:$0xff]
      %v6060 = vld [vmem:[%s1639 + $0x19] sm:$0xff]
      %v6061 = vld [vmem:[%s1639 + $0x21] sm:$0xff]
      %v6062 = vld [vmem:[%s1639 + $0x31] sm:$0xff]
      %v6063 = vld [vmem:[%s1639 + $0x39] sm:$0xff]
      %v6064 = vld [vmem:[%s1639 + $0x49] sm:$0xff]
      %v6065 = vld [vmem:[%s1639 + $0x51] sm:$0xff]
      %v6066 = vld [vmem:[%s1639 + $0x61] sm:$0xff]
      %v6067 = vld [vmem:[%s1639 + $0x69] sm:$0xff]
      %v6068 = vld [vmem:[%s1639 + $0x79] sm:$0xff]
      %v6069 = vld [vmem:[%s1639 + $0x81] sm:$0xff]
      %v6070 = vld [vmem:[%s1639 + $0x91] sm:$0xff]
      %v6071 = vld [vmem:[%s1639 + $0x99] sm:$0xff]
      %v6072 = vld [vmem:[%s1639 + $0xa9] sm:$0xff]
      %v6073 = vld [vmem:[%s1639 + $0xb1] sm:$0xff]
      %v6074 = vld [vmem:[%s1639 + $0xc1] sm:$0xff]
      %v6075 = vld [vmem:[%s1639 + $0xc9] sm:$0xff]
      %v6076 = vld [vmem:[%s1639 + $0xd9] sm:$0xff]
      %v6077 = vld [vmem:[%s1639 + $0xe1] sm:$0xff]
      %v6078 = vld [vmem:[%s1639 + $0xf1] sm:$0xff]
      %v6079 = vld [vmem:[%s1639 + $0xf9] sm:$0xff]
      %v6080 = vld [vmem:[%s1639 + $0x109] sm:$0xff]
      %v6081 = vld [vmem:[%s1639 + $0x111] sm:$0xff]
      %v6082 = vld [vmem:[%s1639 + $0x121] sm:$0xff]
      %v6083 = vld [vmem:[%s1639 + $0x129] sm:$0xff]
      %v6084 = vld [vmem:[%s1639 + $0x139] sm:$0xff]
      %v6085 = vld [vmem:[%s1639 + $0x141] sm:$0xff]
      %v6086 = vld [vmem:[%s1639 + $0x151] sm:$0xff]
      %v6087 = vld [vmem:[%s1639 + $0x159] sm:$0xff]
      %v6088 = vld [vmem:[%s1639 + $0x169] sm:$0xff]
      %v6089 = vld [vmem:[%s1639 + $0x171] sm:$0xff]
      %6122 = vrot.lane.b32.xlu0 %v6058, 96
      %v6123 = vpop.permute.xlu0 %6122
      %6124 = vrot.lane.b32.xlu0 %v6059, 96
      %v6125 = vpop.permute.xlu0 %6124
      %6126 = vrot.lane.b32.xlu0 %v6060, 96
      %v6127 = vpop.permute.xlu0 %6126
      %6128 = vrot.lane.b32.xlu0 %v6061, 96
      %v6129 = vpop.permute.xlu0 %6128
      %6130 = vrot.lane.b32.xlu0 %v6062, 96
      %v6131 = vpop.permute.xlu0 %6130
      %6132 = vrot.lane.b32.xlu0 %v6063, 96
      %v6133 = vpop.permute.xlu0 %6132
      %6134 = vrot.lane.b32.xlu0 %v6064, 96
      %v6135 = vpop.permute.xlu0 %6134
      %6136 = vrot.lane.b32.xlu0 %v6065, 96
      %v6137 = vpop.permute.xlu0 %6136
      %6138 = vrot.lane.b32.xlu0 %v6066, 96
      %v6139 = vpop.permute.xlu0 %6138
      %6140 = vrot.lane.b32.xlu0 %v6067, 96
      %v6141 = vpop.permute.xlu0 %6140
      %6142 = vrot.lane.b32.xlu0 %v6068, 96
      %v6143 = vpop.permute.xlu0 %6142
      %6144 = vrot.lane.b32.xlu0 %v6069, 96
      %v6145 = vpop.permute.xlu0 %6144
      %6146 = vrot.lane.b32.xlu0 %v6070, 96
      %v6147 = vpop.permute.xlu0 %6146
      %6148 = vrot.lane.b32.xlu0 %v6071, 96
      %v6149 = vpop.permute.xlu0 %6148
      %6150 = vrot.lane.b32.xlu0 %v6072, 96
      %v6151 = vpop.permute.xlu0 %6150
      %6152 = vrot.lane.b32.xlu0 %v6073, 96
      %v6153 = vpop.permute.xlu0 %6152
      %6154 = vrot.lane.b32.xlu0 %v6074, 96
      %v6155 = vpop.permute.xlu0 %6154
      %6156 = vrot.lane.b32.xlu0 %v6075, 96
      %v6157 = vpop.permute.xlu0 %6156
      %6158 = vrot.lane.b32.xlu0 %v6076, 96
      %v6159 = vpop.permute.xlu0 %6158
      %6160 = vrot.lane.b32.xlu0 %v6077, 96
      %v6161 = vpop.permute.xlu0 %6160
      %6162 = vrot.lane.b32.xlu0 %v6078, 96
      %v6163 = vpop.permute.xlu0 %6162
      %6164 = vrot.lane.b32.xlu0 %v6079, 96
      %v6165 = vpop.permute.xlu0 %6164
      %6166 = vrot.lane.b32.xlu0 %v6080, 96
      %v6167 = vpop.permute.xlu0 %6166
      %6168 = vrot.lane.b32.xlu0 %v6081, 96
      %v6169 = vpop.permute.xlu0 %6168
      %6170 = vrot.lane.b32.xlu0 %v6082, 96
      %v6171 = vpop.permute.xlu0 %6170
      %6172 = vrot.lane.b32.xlu0 %v6083, 96
      %v6173 = vpop.permute.xlu0 %6172
      %6174 = vrot.lane.b32.xlu0 %v6084, 96
      %v6175 = vpop.permute.xlu0 %6174
      %6176 = vrot.lane.b32.xlu0 %v6085, 96
      %v6177 = vpop.permute.xlu0 %6176
      %6178 = vrot.lane.b32.xlu0 %v6086, 96
      %v6179 = vpop.permute.xlu0 %6178
      %6180 = vrot.lane.b32.xlu0 %v6087, 96
      %v6181 = vpop.permute.xlu0 %6180
      %6182 = vrot.lane.b32.xlu0 %v6088, 96
      %v6183 = vpop.permute.xlu0 %6182
      %6184 = vrot.lane.b32.xlu0 %v6089, 96
      %v6185 = vpop.permute.xlu0 %6184
      %6218 = vst.msk [vmem:[#allocation4 + $0x8] sm:$0xff] %vm1350, %v6123
      %6219 = vst.msk [vmem:[#allocation4 + $0x20] sm:$0xff] %vm1350, %v6125
      %6220 = vst.msk [vmem:[#allocation4 + $0x38] sm:$0xff] %vm1350, %v6127
      %6221 = vst.msk [vmem:[#allocation4 + $0x50] sm:$0xff] %vm1350, %v6129
      %6222 = vst.msk [vmem:[#allocation4 + $0x68] sm:$0xff] %vm1350, %v6131
      %6223 = vst.msk [vmem:[#allocation4 + $0x80] sm:$0xff] %vm1350, %v6133
      %6224 = vst.msk [vmem:[#allocation4 + $0x98] sm:$0xff] %vm1350, %v6135
      %6225 = vst.msk [vmem:[#allocation4 + $0xb0] sm:$0xff] %vm1350, %v6137
      %6226 = vst.msk [vmem:[#allocation4 + $0xc8] sm:$0xff] %vm1350, %v6139
      %6227 = vst.msk [vmem:[#allocation4 + $0xe0] sm:$0xff] %vm1350, %v6141
      %6228 = vst.msk [vmem:[#allocation4 + $0xf8] sm:$0xff] %vm1350, %v6143
      %6229 = vst.msk [vmem:[#allocation4 + $0x110] sm:$0xff] %vm1350, %v6145
      %6230 = vst.msk [vmem:[#allocation4 + $0x128] sm:$0xff] %vm1350, %v6147
      %6231 = vst.msk [vmem:[#allocation4 + $0x140] sm:$0xff] %vm1350, %v6149
      %6232 = vst.msk [vmem:[#allocation4 + $0x158] sm:$0xff] %vm1350, %v6151
      %6233 = vst.msk [vmem:[#allocation4 + $0x170] sm:$0xff] %vm1350, %v6153
      %6234 = vst.msk [vmem:[#allocation4 + $0x188] sm:$0xff] %vm1350, %v6155
      %6235 = vst.msk [vmem:[#allocation4 + $0x1a0] sm:$0xff] %vm1350, %v6157
      %6236 = vst.msk [vmem:[#allocation4 + $0x1b8] sm:$0xff] %vm1350, %v6159
      %6237 = vst.msk [vmem:[#allocation4 + $0x1d0] sm:$0xff] %vm1350, %v6161
      %6238 = vst.msk [vmem:[#allocation4 + $0x1e8] sm:$0xff] %vm1350, %v6163
      %6239 = vst.msk [vmem:[#allocation4 + $0x200] sm:$0xff] %vm1350, %v6165
      %6240 = vst.msk [vmem:[#allocation4 + $0x218] sm:$0xff] %vm1350, %v6167
      %6241 = vst.msk [vmem:[#allocation4 + $0x230] sm:$0xff] %vm1350, %v6169
      %6242 = vst.msk [vmem:[#allocation4 + $0x248] sm:$0xff] %vm1350, %v6171
      %6243 = vst.msk [vmem:[#allocation4 + $0x260] sm:$0xff] %vm1350, %v6173
      %6244 = vst.msk [vmem:[#allocation4 + $0x278] sm:$0xff] %vm1350, %v6175
      %6245 = vst.msk [vmem:[#allocation4 + $0x290] sm:$0xff] %vm1350, %v6177
      %6246 = vst.msk [vmem:[#allocation4 + $0x2a8] sm:$0xff] %vm1350, %v6179
      %6247 = vst.msk [vmem:[#allocation4 + $0x2c0] sm:$0xff] %vm1350, %v6181
      %6248 = vst.msk [vmem:[#allocation4 + $0x2d8] sm:$0xff] %vm1350, %v6183
      %6249 = vst.msk [vmem:[#allocation4 + $0x2f0] sm:$0xff] %vm1350, %v6185
      %v6250 = vld [vmem:[%s1639 + $0x2] sm:$0xff]
      %v6251 = vld [vmem:[%s1639 + $0xa] sm:$0xff]
      %v6252 = vld [vmem:[%s1639 + $0x1a] sm:$0xff]
      %v6253 = vld [vmem:[%s1639 + $0x22] sm:$0xff]
      %v6254 = vld [vmem:[%s1639 + $0x32] sm:$0xff]
      %v6255 = vld [vmem:[%s1639 + $0x3a] sm:$0xff]
      %v6256 = vld [vmem:[%s1639 + $0x4a] sm:$0xff]
      %v6257 = vld [vmem:[%s1639 + $0x52] sm:$0xff]
      %v6258 = vld [vmem:[%s1639 + $0x62] sm:$0xff]
      %v6259 = vld [vmem:[%s1639 + $0x6a] sm:$0xff]
      %v6260 = vld [vmem:[%s1639 + $0x7a] sm:$0xff]
      %v6261 = vld [vmem:[%s1639 + $0x82] sm:$0xff]
      %v6262 = vld [vmem:[%s1639 + $0x92] sm:$0xff]
      %v6263 = vld [vmem:[%s1639 + $0x9a] sm:$0xff]
      %v6264 = vld [vmem:[%s1639 + $0xaa] sm:$0xff]
      %v6265 = vld [vmem:[%s1639 + $0xb2] sm:$0xff]
      %v6266 = vld [vmem:[%s1639 + $0xc2] sm:$0xff]
      %v6267 = vld [vmem:[%s1639 + $0xca] sm:$0xff]
      %v6268 = vld [vmem:[%s1639 + $0xda] sm:$0xff]
      %v6269 = vld [vmem:[%s1639 + $0xe2] sm:$0xff]
      %v6270 = vld [vmem:[%s1639 + $0xf2] sm:$0xff]
      %v6271 = vld [vmem:[%s1639 + $0xfa] sm:$0xff]
      %v6272 = vld [vmem:[%s1639 + $0x10a] sm:$0xff]
      %v6273 = vld [vmem:[%s1639 + $0x112] sm:$0xff]
      %v6274 = vld [vmem:[%s1639 + $0x122] sm:$0xff]
      %v6275 = vld [vmem:[%s1639 + $0x12a] sm:$0xff]
      %v6276 = vld [vmem:[%s1639 + $0x13a] sm:$0xff]
      %v6277 = vld [vmem:[%s1639 + $0x142] sm:$0xff]
      %v6278 = vld [vmem:[%s1639 + $0x152] sm:$0xff]
      %v6279 = vld [vmem:[%s1639 + $0x15a] sm:$0xff]
      %v6280 = vld [vmem:[%s1639 + $0x16a] sm:$0xff]
      %v6281 = vld [vmem:[%s1639 + $0x172] sm:$0xff]
      %6282 = vst.msk [vmem:[#allocation4 + $0x10] sm:$0xff] %vm335, %v6250
      %6283 = vst.msk [vmem:[#allocation4 + $0x28] sm:$0xff] %vm335, %v6251
      %6284 = vst.msk [vmem:[#allocation4 + $0x40] sm:$0xff] %vm335, %v6252
      %6285 = vst.msk [vmem:[#allocation4 + $0x58] sm:$0xff] %vm335, %v6253
      %6286 = vst.msk [vmem:[#allocation4 + $0x70] sm:$0xff] %vm335, %v6254
      %6287 = vst.msk [vmem:[#allocation4 + $0x88] sm:$0xff] %vm335, %v6255
      %6288 = vst.msk [vmem:[#allocation4 + $0xa0] sm:$0xff] %vm335, %v6256
      %6289 = vst.msk [vmem:[#allocation4 + $0xb8] sm:$0xff] %vm335, %v6257
      %6290 = vst.msk [vmem:[#allocation4 + $0xd0] sm:$0xff] %vm335, %v6258
      %6291 = vst.msk [vmem:[#allocation4 + $0xe8] sm:$0xff] %vm335, %v6259
      %6292 = vst.msk [vmem:[#allocation4 + $0x100] sm:$0xff] %vm335, %v6260
      %6293 = vst.msk [vmem:[#allocation4 + $0x118] sm:$0xff] %vm335, %v6261
      %6294 = vst.msk [vmem:[#allocation4 + $0x130] sm:$0xff] %vm335, %v6262
      %6295 = vst.msk [vmem:[#allocation4 + $0x148] sm:$0xff] %vm335, %v6263
      %6296 = vst.msk [vmem:[#allocation4 + $0x160] sm:$0xff] %vm335, %v6264
      %6297 = vst.msk [vmem:[#allocation4 + $0x178] sm:$0xff] %vm335, %v6265
      %6298 = vst.msk [vmem:[#allocation4 + $0x190] sm:$0xff] %vm335, %v6266
      %6299 = vst.msk [vmem:[#allocation4 + $0x1a8] sm:$0xff] %vm335, %v6267
      %6300 = vst.msk [vmem:[#allocation4 + $0x1c0] sm:$0xff] %vm335, %v6268
      %6301 = vst.msk [vmem:[#allocation4 + $0x1d8] sm:$0xff] %vm335, %v6269
      %6302 = vst.msk [vmem:[#allocation4 + $0x1f0] sm:$0xff] %vm335, %v6270
      %6303 = vst.msk [vmem:[#allocation4 + $0x208] sm:$0xff] %vm335, %v6271
      %6304 = vst.msk [vmem:[#allocation4 + $0x220] sm:$0xff] %vm335, %v6272
      %6305 = vst.msk [vmem:[#allocation4 + $0x238] sm:$0xff] %vm335, %v6273
      %6306 = vst.msk [vmem:[#allocation4 + $0x250] sm:$0xff] %vm335, %v6274
      %6307 = vst.msk [vmem:[#allocation4 + $0x268] sm:$0xff] %vm335, %v6275
      %6308 = vst.msk [vmem:[#allocation4 + $0x280] sm:$0xff] %vm335, %v6276
      %6309 = vst.msk [vmem:[#allocation4 + $0x298] sm:$0xff] %vm335, %v6277
      %6310 = vst.msk [vmem:[#allocation4 + $0x2b0] sm:$0xff] %vm335, %v6278
      %6311 = vst.msk [vmem:[#allocation4 + $0x2c8] sm:$0xff] %vm335, %v6279
      %6312 = vst.msk [vmem:[#allocation4 + $0x2e0] sm:$0xff] %vm335, %v6280
      %6313 = vst.msk [vmem:[#allocation4 + $0x2f8] sm:$0xff] %vm335, %v6281
      %v6314 = vld [vmem:[#allocation4] sm:$0xff]
      %v6315 = vld [vmem:[#allocation4 + $0x8] sm:$0xff]
      %v6316 = vld [vmem:[#allocation4 + $0x10] sm:$0xff]
      %v6317 = vld [vmem:[#allocation4 + $0x18] sm:$0xff]
      %v6318 = vld [vmem:[#allocation4 + $0x20] sm:$0xff]
      %v6319 = vld [vmem:[#allocation4 + $0x28] sm:$0xff]
      %v6320 = vld [vmem:[#allocation4 + $0x30] sm:$0xff]
      %v6321 = vld [vmem:[#allocation4 + $0x38] sm:$0xff]
      %v6322 = vld [vmem:[#allocation4 + $0x40] sm:$0xff]
      %v6323 = vld [vmem:[#allocation4 + $0x48] sm:$0xff]
      %v6324 = vld [vmem:[#allocation4 + $0x50] sm:$0xff]
      %v6325 = vld [vmem:[#allocation4 + $0x58] sm:$0xff]
      %v6326 = vld [vmem:[#allocation4 + $0x60] sm:$0xff]
      %v6327 = vld [vmem:[#allocation4 + $0x68] sm:$0xff]
      %v6328 = vld [vmem:[#allocation4 + $0x70] sm:$0xff]
      %v6329 = vld [vmem:[#allocation4 + $0x78] sm:$0xff]
      %v6330 = vld [vmem:[#allocation4 + $0x80] sm:$0xff]
      %v6331 = vld [vmem:[#allocation4 + $0x88] sm:$0xff]
      %v6332 = vld [vmem:[#allocation4 + $0x90] sm:$0xff]
      %v6333 = vld [vmem:[#allocation4 + $0x98] sm:$0xff]
      %v6334 = vld [vmem:[#allocation4 + $0xa0] sm:$0xff]
      %v6335 = vld [vmem:[#allocation4 + $0xa8] sm:$0xff]
      %v6336 = vld [vmem:[#allocation4 + $0xb0] sm:$0xff]
      %v6337 = vld [vmem:[#allocation4 + $0xb8] sm:$0xff]
      %v6338 = vld [vmem:[#allocation4 + $0xc0] sm:$0xff]
      %v6339 = vld [vmem:[#allocation4 + $0xc8] sm:$0xff]
      %v6340 = vld [vmem:[#allocation4 + $0xd0] sm:$0xff]
      %v6341 = vld [vmem:[#allocation4 + $0xd8] sm:$0xff]
      %v6342 = vld [vmem:[#allocation4 + $0xe0] sm:$0xff]
      %v6343 = vld [vmem:[#allocation4 + $0xe8] sm:$0xff]
      %v6344 = vld [vmem:[#allocation4 + $0xf0] sm:$0xff]
      %v6345 = vld [vmem:[#allocation4 + $0xf8] sm:$0xff]
      %v6346 = vld [vmem:[#allocation4 + $0x100] sm:$0xff]
      %v6347 = vld [vmem:[#allocation4 + $0x108] sm:$0xff]
      %v6348 = vld [vmem:[#allocation4 + $0x110] sm:$0xff]
      %v6349 = vld [vmem:[#allocation4 + $0x118] sm:$0xff]
      %v6350 = vld [vmem:[#allocation4 + $0x120] sm:$0xff]
      %v6351 = vld [vmem:[#allocation4 + $0x128] sm:$0xff]
      %v6352 = vld [vmem:[#allocation4 + $0x130] sm:$0xff]
      %v6353 = vld [vmem:[#allocation4 + $0x138] sm:$0xff]
      %v6354 = vld [vmem:[#allocation4 + $0x140] sm:$0xff]
      %v6355 = vld [vmem:[#allocation4 + $0x148] sm:$0xff]
      %v6356 = vld [vmem:[#allocation4 + $0x150] sm:$0xff]
      %v6357 = vld [vmem:[#allocation4 + $0x158] sm:$0xff]
      %v6358 = vld [vmem:[#allocation4 + $0x160] sm:$0xff]
      %v6359 = vld [vmem:[#allocation4 + $0x168] sm:$0xff]
      %v6360 = vld [vmem:[#allocation4 + $0x170] sm:$0xff]
      %v6361 = vld [vmem:[#allocation4 + $0x178] sm:$0xff]
      %v6362 = vld [vmem:[#allocation4 + $0x180] sm:$0xff]
      %v6363 = vld [vmem:[#allocation4 + $0x188] sm:$0xff]
      %v6364 = vld [vmem:[#allocation4 + $0x190] sm:$0xff]
      %v6365 = vld [vmem:[#allocation4 + $0x198] sm:$0xff]
      %v6366 = vld [vmem:[#allocation4 + $0x1a0] sm:$0xff]
      %v6367 = vld [vmem:[#allocation4 + $0x1a8] sm:$0xff]
      %v6368 = vld [vmem:[#allocation4 + $0x1b0] sm:$0xff]
      %v6369 = vld [vmem:[#allocation4 + $0x1b8] sm:$0xff]
      %v6370 = vld [vmem:[#allocation4 + $0x1c0] sm:$0xff]
      %v6371 = vld [vmem:[#allocation4 + $0x1c8] sm:$0xff]
      %v6372 = vld [vmem:[#allocation4 + $0x1d0] sm:$0xff]
      %v6373 = vld [vmem:[#allocation4 + $0x1d8] sm:$0xff]
      %v6374 = vld [vmem:[#allocation4 + $0x1e0] sm:$0xff]
      %v6375 = vld [vmem:[#allocation4 + $0x1e8] sm:$0xff]
      %v6376 = vld [vmem:[#allocation4 + $0x1f0] sm:$0xff]
      %v6377 = vld [vmem:[#allocation4 + $0x1f8] sm:$0xff]
      %v6378 = vld [vmem:[#allocation4 + $0x200] sm:$0xff]
      %v6379 = vld [vmem:[#allocation4 + $0x208] sm:$0xff]
      %v6380 = vld [vmem:[#allocation4 + $0x210] sm:$0xff]
      %v6381 = vld [vmem:[#allocation4 + $0x218] sm:$0xff]
      %v6382 = vld [vmem:[#allocation4 + $0x220] sm:$0xff]
      %v6383 = vld [vmem:[#allocation4 + $0x228] sm:$0xff]
      %v6384 = vld [vmem:[#allocation4 + $0x230] sm:$0xff]
      %v6385 = vld [vmem:[#allocation4 + $0x238] sm:$0xff]
      %v6386 = vld [vmem:[#allocation4 + $0x240] sm:$0xff]
      %v6387 = vld [vmem:[#allocation4 + $0x248] sm:$0xff]
      %v6388 = vld [vmem:[#allocation4 + $0x250] sm:$0xff]
      %v6389 = vld [vmem:[#allocation4 + $0x258] sm:$0xff]
      %v6390 = vld [vmem:[#allocation4 + $0x260] sm:$0xff]
      %v6391 = vld [vmem:[#allocation4 + $0x268] sm:$0xff]
      %v6392 = vld [vmem:[#allocation4 + $0x270] sm:$0xff]
      %v6393 = vld [vmem:[#allocation4 + $0x278] sm:$0xff]
      %v6394 = vld [vmem:[#allocation4 + $0x280] sm:$0xff]
      %v6395 = vld [vmem:[#allocation4 + $0x288] sm:$0xff]
      %v6396 = vld [vmem:[#allocation4 + $0x290] sm:$0xff]
      %v6397 = vld [vmem:[#allocation4 + $0x298] sm:$0xff]
      %v6398 = vld [vmem:[#allocation4 + $0x2a0] sm:$0xff]
      %v6399 = vld [vmem:[#allocation4 + $0x2a8] sm:$0xff]
      %v6400 = vld [vmem:[#allocation4 + $0x2b0] sm:$0xff]
      %v6401 = vld [vmem:[#allocation4 + $0x2b8] sm:$0xff]
      %v6402 = vld [vmem:[#allocation4 + $0x2c0] sm:$0xff]
      %v6403 = vld [vmem:[#allocation4 + $0x2c8] sm:$0xff]
      %v6404 = vld [vmem:[#allocation4 + $0x2d0] sm:$0xff]
      %v6405 = vld [vmem:[#allocation4 + $0x2d8] sm:$0xff]
      %v6406 = vld [vmem:[#allocation4 + $0x2e0] sm:$0xff]
      %v6407 = vld [vmem:[#allocation4 + $0x2e8] sm:$0xff]
      %v6408 = vld [vmem:[#allocation4 + $0x2f0] sm:$0xff]
      %v6409 = vld [vmem:[#allocation4 + $0x2f8] sm:$0xff]
      %v6410 = vld [vmem:[%s7] sm:$0xff]
      %v6411 = vld [vmem:[%s7 + $0x8] sm:$0xff]
      %v6412 = vld [vmem:[%s7 + $0x10] sm:$0xff]
      %v6413 = vld [vmem:[%s7 + $0x18] sm:$0xff]
      %v6414 = vld [vmem:[%s7 + $0x20] sm:$0xff]
      %v6415 = vld [vmem:[%s7 + $0x28] sm:$0xff]
      %v6416 = vld [vmem:[%s7 + $0x30] sm:$0xff]
      %v6417 = vld [vmem:[%s7 + $0x38] sm:$0xff]
      %v6418 = vld [vmem:[%s7 + $0x40] sm:$0xff]
      %v6419 = vld [vmem:[%s7 + $0x48] sm:$0xff]
      %v6420 = vld [vmem:[%s7 + $0x50] sm:$0xff]
      %v6421 = vld [vmem:[%s7 + $0x58] sm:$0xff]
      %v6422 = vld [vmem:[%s7 + $0x60] sm:$0xff]
      %v6423 = vld [vmem:[%s7 + $0x68] sm:$0xff]
      %v6424 = vld [vmem:[%s7 + $0x70] sm:$0xff]
      %v6425 = vld [vmem:[%s7 + $0x78] sm:$0xff]
      %v6426 = vld [vmem:[%s7 + $0x80] sm:$0xff]
      %v6427 = vld [vmem:[%s7 + $0x88] sm:$0xff]
      %v6428 = vld [vmem:[%s7 + $0x90] sm:$0xff]
      %v6429 = vld [vmem:[%s7 + $0x98] sm:$0xff]
      %v6430 = vld [vmem:[%s7 + $0xa0] sm:$0xff]
      %v6431 = vld [vmem:[%s7 + $0xa8] sm:$0xff]
      %v6432 = vld [vmem:[%s7 + $0xb0] sm:$0xff]
      %v6433 = vld [vmem:[%s7 + $0xb8] sm:$0xff]
      %v6434 = vld [vmem:[%s7 + $0xc0] sm:$0xff]
      %v6435 = vld [vmem:[%s7 + $0xc8] sm:$0xff]
      %v6436 = vld [vmem:[%s7 + $0xd0] sm:$0xff]
      %v6437 = vld [vmem:[%s7 + $0xd8] sm:$0xff]
      %v6438 = vld [vmem:[%s7 + $0xe0] sm:$0xff]
      %v6439 = vld [vmem:[%s7 + $0xe8] sm:$0xff]
      %v6440 = vld [vmem:[%s7 + $0xf0] sm:$0xff]
      %v6441 = vld [vmem:[%s7 + $0xf8] sm:$0xff]
      %v6442 = vld [vmem:[%s7 + $0x100] sm:$0xff]
      %v6443 = vld [vmem:[%s7 + $0x108] sm:$0xff]
      %v6444 = vld [vmem:[%s7 + $0x110] sm:$0xff]
      %v6445 = vld [vmem:[%s7 + $0x118] sm:$0xff]
      %v6446 = vld [vmem:[%s8] sm:$0x1]
      %v6448 = vlaneseq
      %v6449 = vshrl.u32 %v6448, 7
      %v6450 = vsub.s32 0, %v6449
      %v6451 = vrot.slane %v6446, %v6450
      %v6454 = vsel %vm335, %v6316, 0
      %v6457 = vsel %vm335, %v6319, 0
      %v6460 = vsel %vm335, %v6322, 0
      %v6463 = vsel %vm335, %v6325, 0
      %v6466 = vsel %vm335, %v6328, 0
      %v6469 = vsel %vm335, %v6331, 0
      %v6472 = vsel %vm335, %v6334, 0
      %v6475 = vsel %vm335, %v6337, 0
      %v6478 = vsel %vm335, %v6340, 0
      %v6481 = vsel %vm335, %v6343, 0
      %v6484 = vsel %vm335, %v6346, 0
      %v6487 = vsel %vm335, %v6349, 0
      %v6490 = vsel %vm335, %v6352, 0
      %v6493 = vsel %vm335, %v6355, 0
      %v6496 = vsel %vm335, %v6358, 0
      %v6499 = vsel %vm335, %v6361, 0
      %v6502 = vsel %vm335, %v6364, 0
      %v6505 = vsel %vm335, %v6367, 0
      %v6508 = vsel %vm335, %v6370, 0
      %v6511 = vsel %vm335, %v6373, 0
      %v6514 = vsel %vm335, %v6376, 0
      %v6517 = vsel %vm335, %v6379, 0
      %v6520 = vsel %vm335, %v6382, 0
      %v6523 = vsel %vm335, %v6385, 0
      %v6526 = vsel %vm335, %v6388, 0
      %v6529 = vsel %vm335, %v6391, 0
      %v6532 = vsel %vm335, %v6394, 0
      %v6535 = vsel %vm335, %v6397, 0
      %v6538 = vsel %vm335, %v6400, 0
      %v6541 = vsel %vm335, %v6403, 0
      %v6544 = vsel %vm335, %v6406, 0
      %v6547 = vsel %vm335, %v6409, 0
      %6549 = vmatprep.subr.mxu0 0.0
      %6550 = vmatpush1.msra.mxu0 %v6425
      %6551 = vmatprep.subr.mxu0 0.0
      %6552 = vmatpush1.msra.mxu0 %v6424
      %6553 = vmatprep.subr.mxu0 0.0
      %6554 = vmatpush1.msra.mxu0 %v6423
      %6555 = vmatprep.subr.mxu0 0.0
      %6556 = vmatpush1.msra.mxu0 %v6422
      %6557 = vmatprep.subr.mxu0 0.0
      %6558 = vmatpush1.msra.mxu0 %v6421
      %6559 = vmatprep.subr.mxu0 0.0
      %6560 = vmatpush1.msra.mxu0 %v6420
      %6561 = vmatprep.subr.mxu0 0.0
      %6562 = vmatpush1.msra.mxu0 %v6419
      %6563 = vmatprep.subr.mxu0 0.0
      %6564 = vmatpush1.msra.mxu0 %v6418
      %6565 = vmatprep.subr.mxu0 0.0
      %6566 = vmatpush1.msra.mxu0 %v6417
      %6567 = vmatprep.subr.mxu0 0.0
      %6568 = vmatpush1.msra.mxu0 %v6416
      %6569 = vmatprep.subr.mxu0 0.0
      %6570 = vmatpush1.msra.mxu0 %v6415
      %6571 = vmatprep.subr.mxu0 0.0
      %6572 = vmatpush1.msra.mxu0 %v6414
      %6573 = vmatprep.subr.mxu0 0.0
      %6574 = vmatpush1.msra.mxu0 %v6413
      %6575 = vmatprep.subr.mxu0 0.0
      %6576 = vmatpush1.msra.mxu0 %v6412
      %6577 = vmatprep.subr.mxu0 0.0
      %6578 = vmatpush1.msra.mxu0 %v6411
      %6579 = vmatprep.subr.mxu0 0.0
      %6580 = vmatpush1.msra.mxu0 %v6410
      %6581 = vmatprep.subr.mxu0 0.0
      %6582 = vmatpush2.msra.mxu0 %v6441
      %6583 = vmatprep.subr.mxu0 0.0
      %6584 = vmatpush2.msra.mxu0 %v6440
      %6585 = vmatprep.subr.mxu0 0.0
      %6586 = vmatpush2.msra.mxu0 %v6439
      %6587 = vmatprep.subr.mxu0 0.0
      %6588 = vmatpush2.msra.mxu0 %v6438
      %6589 = vmatprep.subr.mxu0 0.0
      %6590 = vmatpush2.msra.mxu0 %v6437
      %6591 = vmatprep.subr.mxu0 0.0
      %6592 = vmatpush2.msra.mxu0 %v6436
      %6593 = vmatprep.subr.mxu0 0.0
      %6594 = vmatpush2.msra.mxu0 %v6435
      %6595 = vmatprep.subr.mxu0 0.0
      %6596 = vmatpush2.msra.mxu0 %v6434
      %6597 = vmatprep.subr.mxu0 0.0
      %6598 = vmatpush2.msra.mxu0 %v6433
      %6599 = vmatprep.subr.mxu0 0.0
      %6600 = vmatpush2.msra.mxu0 %v6432
      %6601 = vmatprep.subr.mxu0 0.0
      %6602 = vmatpush2.msra.mxu0 %v6431
      %6603 = vmatprep.subr.mxu0 0.0
      %6604 = vmatpush2.msra.mxu0 %v6430
      %6605 = vmatprep.subr.mxu0 0.0
      %6606 = vmatpush2.msra.mxu0 %v6429
      %6607 = vmatprep.subr.mxu0 0.0
      %6608 = vmatpush2.msra.mxu0 %v6428
      %6609 = vmatprep.subr.mxu0 0.0
      %6610 = vmatpush2.msra.mxu0 %v6427
      %6611 = vmatprep.subr.mxu0 0.0
      %6612 = vmatpush2.msra.mxu0 %v6426
      %6613 = vmatprep.mubr.f32.mxu0 %v6315
      %6614 = vmatmul.mubr.f32.gmra.mxu0 %v6314
      %v6615 = vpop.f32.mrf.mxu0
      %v6616 = vadd.f32 %v6451, %v6615
      %v6617 = vpop.f32.mrf.mxu0
      %6618 = vmatprep.mubr.f32.mxu0 %v6318
      %6619 = vmatmul.mubr.f32.gmra.mxu0 %v6317
      %v6620 = vpop.f32.mrf.mxu0
      %v6621 = vadd.f32 %v6451, %v6620
      %v6622 = vpop.f32.mrf.mxu0
      %6623 = vmatprep.mubr.f32.mxu0 %v6321
      %6624 = vmatmul.mubr.f32.gmra.mxu0 %v6320
      %v6625 = vpop.f32.mrf.mxu0
      %v6626 = vadd.f32 %v6451, %v6625
      %v6627 = vpop.f32.mrf.mxu0
      %6628 = vmatprep.mubr.f32.mxu0 %v6324
      %6629 = vmatmul.mubr.f32.gmra.mxu0 %v6323
      %v6630 = vpop.f32.mrf.mxu0
      %v6631 = vadd.f32 %v6451, %v6630
      %v6632 = vpop.f32.mrf.mxu0
      %6633 = vmatprep.mubr.f32.mxu0 %v6327
      %6634 = vmatmul.mubr.f32.gmra.mxu0 %v6326
      %v6635 = vpop.f32.mrf.mxu0
      %v6636 = vadd.f32 %v6451, %v6635
      %v6637 = vpop.f32.mrf.mxu0
      %6638 = vmatprep.mubr.f32.mxu0 %v6330
      %6639 = vmatmul.mubr.f32.gmra.mxu0 %v6329
      %v6640 = vpop.f32.mrf.mxu0
      %v6641 = vadd.f32 %v6451, %v6640
      %v6642 = vpop.f32.mrf.mxu0
      %6643 = vmatprep.mubr.f32.mxu0 %v6333
      %6644 = vmatmul.mubr.f32.gmra.mxu0 %v6332
      %v6645 = vpop.f32.mrf.mxu0
      %v6646 = vadd.f32 %v6451, %v6645
      %v6647 = vpop.f32.mrf.mxu0
      %6648 = vmatprep.mubr.f32.mxu0 %v6336
      %6649 = vmatmul.mubr.f32.gmra.mxu0 %v6335
      %v6650 = vpop.f32.mrf.mxu0
      %v6651 = vadd.f32 %v6451, %v6650
      %v6652 = vpop.f32.mrf.mxu0
      %6653 = vmatprep.mubr.f32.mxu0 %v6339
      %6654 = vmatmul.mubr.f32.gmra.mxu0 %v6338
      %v6655 = vpop.f32.mrf.mxu0
      %v6656 = vadd.f32 %v6451, %v6655
      %v6657 = vpop.f32.mrf.mxu0
      %6658 = vmatprep.mubr.f32.mxu0 %v6342
      %6659 = vmatmul.mubr.f32.gmra.mxu0 %v6341
      %v6660 = vpop.f32.mrf.mxu0
      %v6661 = vadd.f32 %v6451, %v6660
      %v6662 = vpop.f32.mrf.mxu0
      %6663 = vmatprep.mubr.f32.mxu0 %v6345
      %6664 = vmatmul.mubr.f32.gmra.mxu0 %v6344
      %v6665 = vpop.f32.mrf.mxu0
      %v6666 = vadd.f32 %v6451, %v6665
      %v6667 = vpop.f32.mrf.mxu0
      %6668 = vmatprep.mubr.f32.mxu0 %v6348
      %6669 = vmatmul.mubr.f32.gmra.mxu0 %v6347
      %v6670 = vpop.f32.mrf.mxu0
      %v6671 = vadd.f32 %v6451, %v6670
      %v6672 = vpop.f32.mrf.mxu0
      %6673 = vmatprep.mubr.f32.mxu0 %v6351
      %6674 = vmatmul.mubr.f32.gmra.mxu0 %v6350
      %v6675 = vpop.f32.mrf.mxu0
      %v6676 = vadd.f32 %v6451, %v6675
      %v6677 = vpop.f32.mrf.mxu0
      %6678 = vmatprep.mubr.f32.mxu0 %v6354
      %6679 = vmatmul.mubr.f32.gmra.mxu0 %v6353
      %v6680 = vpop.f32.mrf.mxu0
      %v6681 = vadd.f32 %v6451, %v6680
      %v6682 = vpop.f32.mrf.mxu0
      %6683 = vmatprep.mubr.f32.mxu0 %v6357
      %6684 = vmatmul.mubr.f32.gmra.mxu0 %v6356
      %v6685 = vpop.f32.mrf.mxu0
      %v6686 = vadd.f32 %v6451, %v6685
      %v6687 = vpop.f32.mrf.mxu0
      %6688 = vmatprep.mubr.f32.mxu0 %v6360
      %6689 = vmatmul.mubr.f32.gmra.mxu0 %v6359
      %v6690 = vpop.f32.mrf.mxu0
      %v6691 = vadd.f32 %v6451, %v6690
      %v6692 = vpop.f32.mrf.mxu0
      %6693 = vmatprep.mubr.f32.mxu0 %v6363
      %6694 = vmatmul.mubr.f32.gmra.mxu0 %v6362
      %v6695 = vpop.f32.mrf.mxu0
      %v6696 = vadd.f32 %v6451, %v6695
      %v6697 = vpop.f32.mrf.mxu0
      %6698 = vmatprep.mubr.f32.mxu0 %v6366
      %6699 = vmatmul.mubr.f32.gmra.mxu0 %v6365
      %v6700 = vpop.f32.mrf.mxu0
      %v6701 = vadd.f32 %v6451, %v6700
      %v6702 = vpop.f32.mrf.mxu0
      %6703 = vmatprep.mubr.f32.mxu0 %v6369
      %6704 = vmatmul.mubr.f32.gmra.mxu0 %v6368
      %v6705 = vpop.f32.mrf.mxu0
      %v6706 = vadd.f32 %v6451, %v6705
      %v6707 = vpop.f32.mrf.mxu0
      %6708 = vmatprep.mubr.f32.mxu0 %v6372
      %6709 = vmatmul.mubr.f32.gmra.mxu0 %v6371
      %v6710 = vpop.f32.mrf.mxu0
      %v6711 = vadd.f32 %v6451, %v6710
      %v6712 = vpop.f32.mrf.mxu0
      %6713 = vmatprep.mubr.f32.mxu0 %v6375
      %6714 = vmatmul.mubr.f32.gmra.mxu0 %v6374
      %v6715 = vpop.f32.mrf.mxu0
      %v6716 = vadd.f32 %v6451, %v6715
      %v6717 = vpop.f32.mrf.mxu0
      %6718 = vmatprep.mubr.f32.mxu0 %v6378
      %6719 = vmatmul.mubr.f32.gmra.mxu0 %v6377
      %v6720 = vpop.f32.mrf.mxu0
      %v6721 = vadd.f32 %v6451, %v6720
      %v6722 = vpop.f32.mrf.mxu0
      %6723 = vmatprep.mubr.f32.mxu0 %v6381
      %6724 = vmatmul.mubr.f32.gmra.mxu0 %v6380
      %v6725 = vpop.f32.mrf.mxu0
      %v6726 = vadd.f32 %v6451, %v6725
      %v6727 = vpop.f32.mrf.mxu0
      %6728 = vmatprep.mubr.f32.mxu0 %v6384
      %6729 = vmatmul.mubr.f32.gmra.mxu0 %v6383
      %v6730 = vpop.f32.mrf.mxu0
      %v6731 = vadd.f32 %v6451, %v6730
      %v6732 = vpop.f32.mrf.mxu0
      %6733 = vmatprep.mubr.f32.mxu0 %v6387
      %6734 = vmatmul.mubr.f32.gmra.mxu0 %v6386
      %v6735 = vpop.f32.mrf.mxu0
      %v6736 = vadd.f32 %v6451, %v6735
      %v6737 = vpop.f32.mrf.mxu0
      %6738 = vmatprep.mubr.f32.mxu0 %v6390
      %6739 = vmatmul.mubr.f32.gmra.mxu0 %v6389
      %v6740 = vpop.f32.mrf.mxu0
      %v6741 = vadd.f32 %v6451, %v6740
      %v6742 = vpop.f32.mrf.mxu0
      %6743 = vmatprep.mubr.f32.mxu0 %v6393
      %6744 = vmatmul.mubr.f32.gmra.mxu0 %v6392
      %v6745 = vpop.f32.mrf.mxu0
      %v6746 = vadd.f32 %v6451, %v6745
      %v6747 = vpop.f32.mrf.mxu0
      %6748 = vmatprep.mubr.f32.mxu0 %v6396
      %6749 = vmatmul.mubr.f32.gmra.mxu0 %v6395
      %v6750 = vpop.f32.mrf.mxu0
      %v6751 = vadd.f32 %v6451, %v6750
      %v6752 = vpop.f32.mrf.mxu0
      %6753 = vmatprep.mubr.f32.mxu0 %v6399
      %6754 = vmatmul.mubr.f32.gmra.mxu0 %v6398
      %v6755 = vpop.f32.mrf.mxu0
      %v6756 = vadd.f32 %v6451, %v6755
      %v6757 = vpop.f32.mrf.mxu0
      %6758 = vmatprep.mubr.f32.mxu0 %v6402
      %6759 = vmatmul.mubr.f32.gmra.mxu0 %v6401
      %v6760 = vpop.f32.mrf.mxu0
      %v6761 = vadd.f32 %v6451, %v6760
      %v6762 = vpop.f32.mrf.mxu0
      %6763 = vmatprep.mubr.f32.mxu0 %v6405
      %6764 = vmatmul.mubr.f32.gmra.mxu0 %v6404
      %v6765 = vpop.f32.mrf.mxu0
      %v6766 = vadd.f32 %v6451, %v6765
      %v6767 = vpop.f32.mrf.mxu0
      %6768 = vmatprep.mubr.f32.mxu0 %v6408
      %6769 = vmatmul.mubr.f32.gmra.mxu0 %v6407
      %v6770 = vpop.f32.mrf.mxu0
      %v6771 = vadd.f32 %v6451, %v6770
      %v6772 = vpop.f32.mrf.mxu0
      %6773 = vdwg.mxu0
      %6774 = vmatprep.subr.mxu0 0.0
      %6775 = vmatpush1.msra.mxu0 0.0
      %6776 = vmatprep.subr.mxu0 0.0
      %6777 = vmatpush1.msra.mxu0 0.0
      %6778 = vmatprep.subr.mxu0 0.0
      %6779 = vmatpush1.msra.mxu0 0.0
      %6780 = vmatprep.subr.mxu0 0.0
      %6781 = vmatpush1.msra.mxu0 0.0
      %6782 = vmatprep.subr.mxu0 0.0
      %6783 = vmatpush1.msra.mxu0 0.0
      %6784 = vmatprep.subr.mxu0 0.0
      %6785 = vmatpush1.msra.mxu0 0.0
      %6786 = vmatprep.subr.mxu0 0.0
      %6787 = vmatpush1.msra.mxu0 0.0
      %6788 = vmatprep.subr.mxu0 0.0
      %6789 = vmatpush1.msra.mxu0 0.0
      %6790 = vmatprep.subr.mxu0 0.0
      %6791 = vmatpush1.msra.mxu0 0.0
      %6792 = vmatprep.subr.mxu0 0.0
      %6793 = vmatpush1.msra.mxu0 0.0
      %6794 = vmatprep.subr.mxu0 0.0
      %6795 = vmatpush1.msra.mxu0 0.0
      %6796 = vmatprep.subr.mxu0 0.0
      %6797 = vmatpush1.msra.mxu0 0.0
      %6798 = vmatprep.subr.mxu0 0.0
      %6799 = vmatpush1.msra.mxu0 %v6445
      %6800 = vmatprep.subr.mxu0 0.0
      %6801 = vmatpush1.msra.mxu0 %v6444
      %6802 = vmatprep.subr.mxu0 0.0
      %6803 = vmatpush1.msra.mxu0 %v6443
      %6804 = vmatprep.subr.mxu0 0.0
      %6805 = vmatpush1.msra.mxu0 %v6442
      %6806 = vmatprep.subr.mxu0 0.0
      %6807 = vmatpush2.msra.mxu0 0.0
      %6808 = vmatprep.subr.mxu0 0.0
      %6809 = vmatpush2.msra.mxu0 0.0
      %6810 = vmatprep.subr.mxu0 0.0
      %6811 = vmatpush2.msra.mxu0 0.0
      %6812 = vmatprep.subr.mxu0 0.0
      %6813 = vmatpush2.msra.mxu0 0.0
      %6814 = vmatprep.subr.mxu0 0.0
      %6815 = vmatpush2.msra.mxu0 0.0
      %6816 = vmatprep.subr.mxu0 0.0
      %6817 = vmatpush2.msra.mxu0 0.0
      %6818 = vmatprep.subr.mxu0 0.0
      %6819 = vmatpush2.msra.mxu0 0.0
      %6820 = vmatprep.subr.mxu0 0.0
      %6821 = vmatpush2.msra.mxu0 0.0
      %6822 = vmatprep.subr.mxu0 0.0
      %6823 = vmatpush2.msra.mxu0 0.0
      %6824 = vmatprep.subr.mxu0 0.0
      %6825 = vmatpush2.msra.mxu0 0.0
      %6826 = vmatprep.subr.mxu0 0.0
      %6827 = vmatpush2.msra.mxu0 0.0
      %6828 = vmatprep.subr.mxu0 0.0
      %6829 = vmatpush2.msra.mxu0 0.0
      %6830 = vmatprep.subr.mxu0 0.0
      %6831 = vmatpush2.msra.mxu0 0.0
      %6832 = vmatprep.subr.mxu0 0.0
      %6833 = vmatpush2.msra.mxu0 0.0
      %6834 = vmatprep.subr.mxu0 0.0
      %6835 = vmatpush2.msra.mxu0 0.0
      %6836 = vmatprep.subr.mxu0 0.0
      %6837 = vmatpush2.msra.mxu0 0.0
      %6838 = vmatprep.mubr.f32.mxu0 0.0
      %6839 = vmatmul.mubr.f32.gmra.mxu0 %v6454
      %v6840 = vpop.f32.mrf.mxu0
      %v6841 = vadd.f32 %v6616, %v6840
      %v6842 = vpop.f32.mrf.mxu0
      %6843 = vmatprep.mubr.f32.mxu0 0.0
      %6844 = vmatmul.mubr.f32.gmra.mxu0 %v6457
      %v6845 = vpop.f32.mrf.mxu0
      %v6846 = vadd.f32 %v6621, %v6845
      %v6847 = vpop.f32.mrf.mxu0
      %6848 = vmatprep.mubr.f32.mxu0 0.0
      %6849 = vmatmul.mubr.f32.gmra.mxu0 %v6460
      %v6850 = vpop.f32.mrf.mxu0
      %v6851 = vadd.f32 %v6626, %v6850
      %v6852 = vpop.f32.mrf.mxu0
      %6853 = vmatprep.mubr.f32.mxu0 0.0
      %6854 = vmatmul.mubr.f32.gmra.mxu0 %v6463
      %v6855 = vpop.f32.mrf.mxu0
      %v6856 = vadd.f32 %v6631, %v6855
      %v6857 = vpop.f32.mrf.mxu0
      %6858 = vmatprep.mubr.f32.mxu0 0.0
      %6859 = vmatmul.mubr.f32.gmra.mxu0 %v6466
      %v6860 = vpop.f32.mrf.mxu0
      %v6861 = vadd.f32 %v6636, %v6860
      %v6862 = vpop.f32.mrf.mxu0
      %6863 = vmatprep.mubr.f32.mxu0 0.0
      %6864 = vmatmul.mubr.f32.gmra.mxu0 %v6469
      %v6865 = vpop.f32.mrf.mxu0
      %v6866 = vadd.f32 %v6641, %v6865
      %v6867 = vpop.f32.mrf.mxu0
      %6868 = vmatprep.mubr.f32.mxu0 0.0
      %6869 = vmatmul.mubr.f32.gmra.mxu0 %v6472
      %v6870 = vpop.f32.mrf.mxu0
      %v6871 = vadd.f32 %v6646, %v6870
      %v6872 = vpop.f32.mrf.mxu0
      %6873 = vmatprep.mubr.f32.mxu0 0.0
      %6874 = vmatmul.mubr.f32.gmra.mxu0 %v6475
      %v6875 = vpop.f32.mrf.mxu0
      %v6876 = vadd.f32 %v6651, %v6875
      %v6877 = vpop.f32.mrf.mxu0
      %6878 = vmatprep.mubr.f32.mxu0 0.0
      %6879 = vmatmul.mubr.f32.gmra.mxu0 %v6478
      %v6880 = vpop.f32.mrf.mxu0
      %v6881 = vadd.f32 %v6656, %v6880
      %v6882 = vpop.f32.mrf.mxu0
      %6883 = vmatprep.mubr.f32.mxu0 0.0
      %6884 = vmatmul.mubr.f32.gmra.mxu0 %v6481
      %v6885 = vpop.f32.mrf.mxu0
      %v6886 = vadd.f32 %v6661, %v6885
      %v6887 = vpop.f32.mrf.mxu0
      %6888 = vmatprep.mubr.f32.mxu0 0.0
      %6889 = vmatmul.mubr.f32.gmra.mxu0 %v6484
      %v6890 = vpop.f32.mrf.mxu0
      %v6891 = vadd.f32 %v6666, %v6890
      %v6892 = vpop.f32.mrf.mxu0
      %6893 = vmatprep.mubr.f32.mxu0 0.0
      %6894 = vmatmul.mubr.f32.gmra.mxu0 %v6487
      %v6895 = vpop.f32.mrf.mxu0
      %v6896 = vadd.f32 %v6671, %v6895
      %v6897 = vpop.f32.mrf.mxu0
      %6898 = vmatprep.mubr.f32.mxu0 0.0
      %6899 = vmatmul.mubr.f32.gmra.mxu0 %v6490
      %v6900 = vpop.f32.mrf.mxu0
      %v6901 = vadd.f32 %v6676, %v6900
      %v6902 = vpop.f32.mrf.mxu0
      %6903 = vmatprep.mubr.f32.mxu0 0.0
      %6904 = vmatmul.mubr.f32.gmra.mxu0 %v6493
      %v6905 = vpop.f32.mrf.mxu0
      %v6906 = vadd.f32 %v6681, %v6905
      %v6907 = vpop.f32.mrf.mxu0
      %6908 = vmatprep.mubr.f32.mxu0 0.0
      %6909 = vmatmul.mubr.f32.gmra.mxu0 %v6496
      %v6910 = vpop.f32.mrf.mxu0
      %v6911 = vadd.f32 %v6686, %v6910
      %v6912 = vpop.f32.mrf.mxu0
      %6913 = vmatprep.mubr.f32.mxu0 0.0
      %6914 = vmatmul.mubr.f32.gmra.mxu0 %v6499
      %v6915 = vpop.f32.mrf.mxu0
      %v6916 = vadd.f32 %v6691, %v6915
      %v6917 = vpop.f32.mrf.mxu0
      %6918 = vmatprep.mubr.f32.mxu0 0.0
      %6919 = vmatmul.mubr.f32.gmra.mxu0 %v6502
      %v6920 = vpop.f32.mrf.mxu0
      %v6921 = vadd.f32 %v6696, %v6920
      %v6922 = vpop.f32.mrf.mxu0
      %6923 = vmatprep.mubr.f32.mxu0 0.0
      %6924 = vmatmul.mubr.f32.gmra.mxu0 %v6505
      %v6925 = vpop.f32.mrf.mxu0
      %v6926 = vadd.f32 %v6701, %v6925
      %v6927 = vpop.f32.mrf.mxu0
      %6928 = vmatprep.mubr.f32.mxu0 0.0
      %6929 = vmatmul.mubr.f32.gmra.mxu0 %v6508
      %v6930 = vpop.f32.mrf.mxu0
      %v6931 = vadd.f32 %v6706, %v6930
      %v6932 = vpop.f32.mrf.mxu0
      %6933 = vmatprep.mubr.f32.mxu0 0.0
      %6934 = vmatmul.mubr.f32.gmra.mxu0 %v6511
      %v6935 = vpop.f32.mrf.mxu0
      %v6936 = vadd.f32 %v6711, %v6935
      %v6937 = vpop.f32.mrf.mxu0
      %6938 = vmatprep.mubr.f32.mxu0 0.0
      %6939 = vmatmul.mubr.f32.gmra.mxu0 %v6514
      %v6940 = vpop.f32.mrf.mxu0
      %v6941 = vadd.f32 %v6716, %v6940
      %v6942 = vpop.f32.mrf.mxu0
      %6943 = vmatprep.mubr.f32.mxu0 0.0
      %6944 = vmatmul.mubr.f32.gmra.mxu0 %v6517
      %v6945 = vpop.f32.mrf.mxu0
      %v6946 = vadd.f32 %v6721, %v6945
      %v6947 = vpop.f32.mrf.mxu0
      %6948 = vmatprep.mubr.f32.mxu0 0.0
      %6949 = vmatmul.mubr.f32.gmra.mxu0 %v6520
      %v6950 = vpop.f32.mrf.mxu0
      %v6951 = vadd.f32 %v6726, %v6950
      %v6952 = vpop.f32.mrf.mxu0
      %6953 = vmatprep.mubr.f32.mxu0 0.0
      %6954 = vmatmul.mubr.f32.gmra.mxu0 %v6523
      %v6955 = vpop.f32.mrf.mxu0
      %v6956 = vadd.f32 %v6731, %v6955
      %v6957 = vpop.f32.mrf.mxu0
      %6958 = vmatprep.mubr.f32.mxu0 0.0
      %6959 = vmatmul.mubr.f32.gmra.mxu0 %v6526
      %v6960 = vpop.f32.mrf.mxu0
      %v6961 = vadd.f32 %v6736, %v6960
      %v6962 = vpop.f32.mrf.mxu0
      %6963 = vmatprep.mubr.f32.mxu0 0.0
      %6964 = vmatmul.mubr.f32.gmra.mxu0 %v6529
      %v6965 = vpop.f32.mrf.mxu0
      %v6966 = vadd.f32 %v6741, %v6965
      %v6967 = vpop.f32.mrf.mxu0
      %6968 = vmatprep.mubr.f32.mxu0 0.0
      %6969 = vmatmul.mubr.f32.gmra.mxu0 %v6532
      %v6970 = vpop.f32.mrf.mxu0
      %v6971 = vadd.f32 %v6746, %v6970
      %v6972 = vpop.f32.mrf.mxu0
      %6973 = vmatprep.mubr.f32.mxu0 0.0
      %6974 = vmatmul.mubr.f32.gmra.mxu0 %v6535
      %v6975 = vpop.f32.mrf.mxu0
      %v6976 = vadd.f32 %v6751, %v6975
      %v6977 = vpop.f32.mrf.mxu0
      %6978 = vmatprep.mubr.f32.mxu0 0.0
      %6979 = vmatmul.mubr.f32.gmra.mxu0 %v6538
      %v6980 = vpop.f32.mrf.mxu0
      %v6981 = vadd.f32 %v6756, %v6980
      %v6982 = vpop.f32.mrf.mxu0
      %6983 = vmatprep.mubr.f32.mxu0 0.0
      %6984 = vmatmul.mubr.f32.gmra.mxu0 %v6541
      %v6985 = vpop.f32.mrf.mxu0
      %v6986 = vadd.f32 %v6761, %v6985
      %v6987 = vpop.f32.mrf.mxu0
      %6988 = vmatprep.mubr.f32.mxu0 0.0
      %6989 = vmatmul.mubr.f32.gmra.mxu0 %v6544
      %v6990 = vpop.f32.mrf.mxu0
      %v6991 = vadd.f32 %v6766, %v6990
      %v6992 = vpop.f32.mrf.mxu0
      %6993 = vmatprep.mubr.f32.mxu0 0.0
      %6994 = vmatmul.mubr.f32.gmra.mxu0 %v6547
      %v6995 = vpop.f32.mrf.mxu0
      %v6996 = vadd.f32 %v6771, %v6995
      %v6997 = vpop.f32.mrf.mxu0
      %6998 = vdwg.mxu0
      %v6999 = vtanh.pop %v6841
      %v7000 = vtanh.pop %v6846
      %v7001 = vtanh.pop %v6851
      %v7002 = vtanh.pop %v6856
      %v7003 = vtanh.pop %v6861
      %v7004 = vtanh.pop %v6866
      %v7005 = vtanh.pop %v6871
      %v7006 = vtanh.pop %v6876
      %v7007 = vtanh.pop %v6881
      %v7008 = vtanh.pop %v6886
      %v7009 = vtanh.pop %v6891
      %v7010 = vtanh.pop %v6896
      %v7011 = vtanh.pop %v6901
      %v7012 = vtanh.pop %v6906
      %v7013 = vtanh.pop %v6911
      %v7014 = vtanh.pop %v6916
      %v7015 = vtanh.pop %v6921
      %v7016 = vtanh.pop %v6926
      %v7017 = vtanh.pop %v6931
      %v7018 = vtanh.pop %v6936
      %v7019 = vtanh.pop %v6941
      %v7020 = vtanh.pop %v6946
      %v7021 = vtanh.pop %v6951
      %v7022 = vtanh.pop %v6956
      %v7023 = vtanh.pop %v6961
      %v7024 = vtanh.pop %v6966
      %v7025 = vtanh.pop %v6971
      %v7026 = vtanh.pop %v6976
      %v7027 = vtanh.pop %v6981
      %v7028 = vtanh.pop %v6986
      %v7029 = vtanh.pop %v6991
      %v7030 = vtanh.pop %v6996
      %7031 = vxpose.xlu0.b32.start [1/16] %v6999, 128
      %7032 = vxpose.xlu0.b32.cont [2/16] %v7000, 128
      %7033 = vxpose.xlu0.b32.cont [3/16] %v7001, 128
      %7034 = vxpose.xlu0.b32.cont [4/16] %v7002, 128
      %7035 = vxpose.xlu0.b32.cont [5/16] %v7003, 128
      %7036 = vxpose.xlu0.b32.cont [6/16] %v7004, 128
      %7037 = vxpose.xlu0.b32.cont [7/16] %v7005, 128
      %7038 = vxpose.xlu0.b32.cont [8/16] %v7006, 128
      %7039 = vxpose.xlu0.b32.cont [9/16] %v7007, 128
      %7040 = vxpose.xlu0.b32.cont [10/16] %v7008, 128
      %7041 = vxpose.xlu0.b32.cont [11/16] %v7009, 128
      %7042 = vxpose.xlu0.b32.cont [12/16] %v7010, 128
      %7043 = vxpose.xlu0.b32.cont [13/16] %v7011, 128
      %7044 = vxpose.xlu0.b32.cont [14/16] %v7012, 128
      %7045 = vxpose.xlu0.b32.cont [15/16] %v7013, 128
      %7046 = vxpose.xlu0.b32.end [16/16] %v7014, 128
      %v7047 = vpop.trf.xlu0
      %v7048 = vpop.trf.xlu0
      %v7049 = vpop.trf.xlu0
      %v7050 = vpop.trf.xlu0
      %v7051 = vpop.trf.xlu0
      %v7052 = vpop.trf.xlu0
      %v7053 = vpop.trf.xlu0
      %v7054 = vpop.trf.xlu0
      %v7055 = vpop.trf.xlu0
      %v7056 = vpop.trf.xlu0
      %v7057 = vpop.trf.xlu0
      %v7058 = vpop.trf.xlu0
      %v7059 = vpop.trf.xlu0
      %v7060 = vpop.trf.xlu0
      %v7061 = vpop.trf.xlu0
      %v7062 = vpop.trf.xlu0
      %7063 = vxpose.xlu0.b32.start [1/16] %v7015, 128
      %7064 = vxpose.xlu0.b32.cont [2/16] %v7016, 128
      %7065 = vxpose.xlu0.b32.cont [3/16] %v7017, 128
      %7066 = vxpose.xlu0.b32.cont [4/16] %v7018, 128
      %7067 = vxpose.xlu0.b32.cont [5/16] %v7019, 128
      %7068 = vxpose.xlu0.b32.cont [6/16] %v7020, 128
      %7069 = vxpose.xlu0.b32.cont [7/16] %v7021, 128
      %7070 = vxpose.xlu0.b32.cont [8/16] %v7022, 128
      %7071 = vxpose.xlu0.b32.cont [9/16] %v7023, 128
      %7072 = vxpose.xlu0.b32.cont [10/16] %v7024, 128
      %7073 = vxpose.xlu0.b32.cont [11/16] %v7025, 128
      %7074 = vxpose.xlu0.b32.cont [12/16] %v7026, 128
      %7075 = vxpose.xlu0.b32.cont [13/16] %v7027, 128
      %7076 = vxpose.xlu0.b32.cont [14/16] %v7028, 128
      %7077 = vxpose.xlu0.b32.cont [15/16] %v7029, 128
      %7078 = vxpose.xlu0.b32.end [16/16] %v7030, 128
      %v7079 = vpop.trf.xlu0
      %v7080 = vpop.trf.xlu0
      %v7081 = vpop.trf.xlu0
      %v7082 = vpop.trf.xlu0
      %v7083 = vpop.trf.xlu0
      %v7084 = vpop.trf.xlu0
      %v7085 = vpop.trf.xlu0
      %v7086 = vpop.trf.xlu0
      %v7087 = vpop.trf.xlu0
      %v7088 = vpop.trf.xlu0
      %v7089 = vpop.trf.xlu0
      %v7090 = vpop.trf.xlu0
      %v7091 = vpop.trf.xlu0
      %v7092 = vpop.trf.xlu0
      %v7093 = vpop.trf.xlu0
      %v7094 = vpop.trf.xlu0
      %v7097 = vcombine.low %v7047, %v7079
      %7099 = vst [vmem:[%s334] sm:$0x77] %v7097
      %p7100 = scmp.lt.s32.totalorder %s20, 1
      %s7101 = scalar_select %p7100, %s20, 1
      %s7102 = smul.addr %s7101, 2
      %s7103 = smul.addr %s7102, 4
      %s7104 = scalar_lea.vmem %s9, %s7103
      // Predicated region
      $region57: #{regressor_forward.1} parent=55 // pred_check
        %p7105 = pneg %p232
      $region58: #{regressor_forward.1} parent=55 // pred_check_branch
        %7107 = sbr.rel (%p7105) target = $region60
      $region59: #{regressor_forward.1} parent=55 // pred_region
        _
      $region60: #{regressor_forward.1} parent=55 // pred_fallthru
        _
    $region56: #{regressor_forward.1} parent=5 // pred_fallthru
      _
    %p7108 = scmp.le.s32.totalorder 2, %s15
    // Predicated region
    $region61: #{regressor_forward.1} parent=5 // pred_check
      %p7109 = pneg %p7108
    $region62: #{regressor_forward.1} parent=5 // pred_check_branch
      %7111 = sbr.rel (%p7109) target = $region64
    $region63: #{regressor_forward.1} parent=5 // pred_region
      %s7112 = ssub.s32 %s15, 2
      // Predicated region
      $region65: #{regressor_forward.1} parent=63 // pred_check
        %p7113 = pneg %p238
      $region66: #{regressor_forward.1} parent=63 // pred_check_branch
        %7115 = sbr.rel (%p7113) target = $region68
      $region67: #{regressor_forward.1} parent=63 // pred_region
        %p7116 = scmp.lt.s32.totalorder %s21, 1
        %s7117 = scalar_select %p7116, %s21, 1
        %s7118 = smul.addr %s7117, 2
        %s7119 = smul.addr %s7118, 4
        %s7120 = scalar_lea.vmem %s9, %s7119
      $region68: #{regressor_forward.1} parent=63 // pred_fallthru
        _
    $region64: #{regressor_forward.1} parent=5 // pred_fallthru
      _
  $region6: #{regressor_forward.1} parent=0 // loop_footer
    %s19 = sadd.s32 1, %s15
  $region7: #{regressor_forward.1} parent=0 // loop_footer_branch
    %14 = sbr.rel target = $region3
  $region8: #{regressor_forward.1} parent=0 // loop_exit
    _

</llo_original>
